<compile_context>
chip_gen: v7x
topology: tpu7x:2x2x1
jax: 0.10.0
libtpu: 0.0.40
codegen_flags: <defaults>
</compile_context>

<pallas_src>
import functools

import jax
import jax.numpy as jnp
from jax import lax
from jax.experimental import pallas as pl
from jax.experimental.pallas import tpu as pltpu

NEG_SLOPE = 0.01   # default negative_slope of nn.LeakyReLU / F.leaky_relu
BN_EPS = 1e-5      # default eps of nn.BatchNorm2d


def _round_up(x, m):
    return (x + m - 1) // m * m


def _fold_bn(gamma, beta, mean, var):
    """Fold BatchNorm (running stats, eval mode) into per-channel scale/bias (f32)."""
    scale = gamma.astype(jnp.float32) / jnp.sqrt(var.astype(jnp.float32) + BN_EPS)
    bias = beta.astype(jnp.float32) - mean.astype(jnp.float32) * scale
    return scale.reshape(1, -1), bias.reshape(1, -1)


def _block_body(xload, mask_ref, w1_ref, s1_ref, b1_ref, w2_ref, s2_ref, b2_ref,
                out_ref, h1_ref, *, d, w2c, band_h, width):
    """Shared per-band compute.

    xload(off, n) -> (n, Cin) slice of the halo'd flat input band starting at flat
    offset `off` (compute dtype).  out_ref block is (1, band_h, W, Cout).
    """
    L1 = (band_h + 2) * w2c           # conv1 / h1 positions (band rows -1..band_h)
    L2 = band_h * w2c                 # conv2 / output positions
    Cout = w1_ref.shape[2]

    # ---- conv1 (3x3, dilation d, padding d): 9 shifted contiguous slices -> MXU dots
    acc = jnp.zeros((L1, Cout), jnp.float32)
    for ky in range(3):
        for kx in range(3):
            off = ky * d * w2c + kx * d
            acc = acc + jnp.dot(xload(off, L1), w1_ref[ky * 3 + kx],
                                preferred_element_type=jnp.float32)

    # ---- BN1 (folded) + LeakyReLU; zero every position outside the image so the
    #      scratch doubles as conv2's zero padding (single store, no full zero-fill).
    h1 = acc * s1_ref[...] + b1_ref[...]
    h1 = jnp.where(h1 >= 0, h1, NEG_SLOPE * h1)
    h1 = h1 * mask_ref[0]
    h1_ref[:L1, :] = h1.astype(h1_ref.dtype)
    # conv2's last tap reads 2 elements past L1: keep one slack row defined.
    h1_ref[L1:, :] = jnp.zeros((h1_ref.shape[0] - L1, Cout), h1_ref.dtype)

    # ---- conv2 (3x3, padding 1, dilation 1)
    acc2 = jnp.zeros((L2, Cout), jnp.float32)
    for ky in range(3):
        for kx in range(3):
            off = ky * w2c + kx
            acc2 = acc2 + jnp.dot(h1_ref[off:off + L2, :], w2_ref[ky * 3 + kx],
                                  preferred_element_type=jnp.float32)

    # ---- BN2 + residual (interior of the SAME halo'd input) + LeakyReLU, all f32.
    h2 = acc2 * s2_ref[...] + b2_ref[...]
    r_off = (d + 1) * w2c + (d + 1)
    h2 = h2 + xload(r_off, L2).astype(jnp.float32)
    h2 = jnp.where(h2 >= 0, h2, NEG_SLOPE * h2)
    h2 = h2.astype(out_ref.dtype)

    # ---- Store the W valid columns of each row straight into the dense NHWC output
    #      block: no post-kernel crop pass and no garbage-column writeback.
    for r in range(band_h):
        out_ref[0, r] = h2[r * w2c:r * w2c + width, :]


def _kernel_resident(x_ref, mask_ref, w1_ref, s1_ref, b1_ref, w2_ref, s2_ref,
                     b2_ref, out_ref, h1_ref, *, d, w2c, band_h, width):
    """Path A: whole (flattened, halo'd) sample arrives as an auto-pipelined block."""
    _block_body(lambda off, n: x_ref[0, off:off + n, :],
                mask_ref, w1_ref, s1_ref, b1_ref, w2_ref, s2_ref, b2_ref,
                out_ref, h1_ref, d=d, w2c=w2c, band_h=band_h, width=width)


def _kernel_banded(x_hbm_ref, mask_ref, w1_ref, s1_ref, b1_ref, w2_ref, s2_ref,
                   b2_ref, out_ref, xband_ref, h1_ref, *, d, w2c, band_h, width):
    """Path B: x stays in HBM; DMA just this step's halo'd row band into VMEM."""
    n = pl.program_id(0)
    b = pl.program_id(1)
    start = pl.multiple_of(b * (band_h * w2c), 8)     # w2c is a multiple of 8
    pltpu.sync_copy(x_hbm_ref.at[n, pl.ds(start, xband_ref.shape[0]), :], xband_ref)
    _block_body(lambda off, m: xband_ref[off:off + m, :],
                mask_ref, w1_ref, s1_ref, b1_ref, w2_ref, s2_ref, b2_ref,
                out_ref, h1_ref, d=d, w2c=w2c, band_h=band_h, width=width)


def basic_block_pallas_nhwc(x_nhwc, params, dilation=1, *, band_h=None,
                            compute_dtype=jnp.bfloat16, out_dtype=None):
    """Fused BasicBlock forward, NHWC in / NHWC out (keep chains of blocks in NHWC).

    params = (w1, g1, b1, m1, v1, w2, g2, b2, m2, v2); conv weights in PyTorch OIHW.
    compute_dtype=jnp.float32 gives strict PyTorch parity; bf16 is the fast path.
    out_dtype defaults to compute_dtype (cheapest for chained blocks).
    """
    w1_pt, g1, be1, m1, v1, w2_pt, g2, be2, m2, v2 = params
    N, H, W, Cin = x_nhwc.shape
    Cout = w1_pt.shape[0]
    d = int(dilation)
    halo = d + 1                            # conv1 halo (d) + conv2 halo (1)
    out_dtype = compute_dtype if out_dtype is None else out_dtype

    # Flat row stride: width + both conv halos, rounded up to the sublane tile so
    # ky*w2c tap offsets and the band DMA start stay aligned.
    w2c = _round_up(W + 2 * halo, 8)

    in_isz = jnp.dtype(compute_dtype).itemsize
    out_isz = jnp.dtype(out_dtype).itemsize

    def vmem_need(bh):
        l1 = (bh + 2) * w2c
        blen = (bh + 2 * halo + 1) * w2c
        x_b = blen * Cin * in_isz
        out_b = bh * W * Cout * out_isz
        mask_b = l1 * 4
        w_b = 9 * (Cin + Cout) * Cout * in_isz + 4 * Cout * 4
        h1_b = (l1 + w2c) * Cout * in_isz
        tmp_b = 2 * l1 * Cout * 4           # f32 conv accumulators / epilogue temps
        return 2 * (x_b + out_b + mask_b + w_b) + h1_b + tmp_b   # 2x: double buffering

    # Per-generation VMEM budget (v7x: 64 MiB per TensorCore, v5e/v6e: 128 MiB).
    try:
        vmem_cap = int(pltpu.get_tpu_info().vmem_capacity_bytes)
    except Exception:                        # conservative fallback (v7x per-TC)
        vmem_cap = 64 * 2 ** 20
    budget = int(0.70 * vmem_cap)            # headroom for Mosaic internals

    if band_h is None:
        band_h = H
        if N == 1 and H >= 16:               # keep both v7x TensorCores busy at batch 1
            band_h = -(-H // 2)
        while band_h > 1 and vmem_need(band_h) > budget:
            band_h = max(1, band_h // 2)
    band_h = max(1, min(int(band_h), H))

    nb = pl.cdiv(H, band_h)
    Hp = nb * band_h
    L1 = (band_h + 2) * w2c
    band_len = (band_h + 2 * halo + 1) * w2c  # flat rows of x per band (+1 slack row)

    # Zero-pad once (conv padding + dtype cast) and flatten rows: (N, Rtot*w2c, Cin).
    xpad = jnp.pad(x_nhwc.astype(compute_dtype),
                   ((0, 0), (halo, halo + (Hp - H) + 1),
                    (halo, w2c - W - halo), (0, 0)))
    rtot = Hp + 2 * halo + 1
    x_flat = xpad.reshape(N, rtot * w2c, Cin)

    # Per-band conv1-output validity mask (also provides conv2's zero padding).
    rows = jnp.arange(band_h + 2)[None, :] + jnp.arange(nb)[:, None] * band_h - 1
    cols = jnp.arange(w2c)[None, :]
    row_ok = (rows >= 0) & (rows < H)                    # (nb, band_h+2)
    col_ok = (cols >= 1) & (cols <= W)                   # (1, w2c)
    mask = (row_ok[:, :, None] & col_ok[:, None, :]).astype(jnp.float32)
    mask = mask.reshape(nb, L1, 1)

    # Conv weights OIHW -> (tap, Cin, Cout); BatchNorm folded into f32 scale/bias.
    w1 = jnp.transpose(w1_pt, (2, 3, 1, 0)).reshape(9, Cin, Cout).astype(compute_dtype)
    w2 = jnp.transpose(w2_pt, (2, 3, 1, 0)).reshape(9, Cout, Cout).astype(compute_dtype)
    s1, b1 = _fold_bn(g1, be1, m1, v1)
    s2, b2 = _fold_bn(g2, be2, m2, v2)

    need = vmem_need(band_h)
    vmem_limit = int(min(max(need + (4 << 20), 32 << 20), int(0.9 * vmem_cap)))

    flops = int(2 * 9 * N * nb * (L1 * Cin * Cout + band_h * w2c * Cout * Cout))
    bytes_accessed = int(N * nb * band_len * Cin * in_isz
                         + N * Hp * W * Cout * out_isz
                         + (w1.size + w2.size) * in_isz + mask.size * 4)
    cost = pl.CostEstimate(flops=flops, transcendentals=0,
                           bytes_accessed=bytes_accessed)

    common = dict(d=d, w2c=w2c, band_h=band_h, width=W)

    if nb == 1:
        # ---- Path A: whole image per grid step, auto-pipelined blocks ------------
        grid = (N,)
        kernel = functools.partial(_kernel_resident, **common)
        in_specs = [
            pl.BlockSpec((1, band_len, Cin), lambda n: (n, 0, 0)),
            pl.BlockSpec((1, L1, 1), lambda n: (0, 0, 0)),
            pl.BlockSpec((9, Cin, Cout), lambda n: (0, 0, 0)),
            pl.BlockSpec((1, Cout), lambda n: (0, 0)),
            pl.BlockSpec((1, Cout), lambda n: (0, 0)),
            pl.BlockSpec((9, Cout, Cout), lambda n: (0, 0, 0)),
            pl.BlockSpec((1, Cout), lambda n: (0, 0)),
            pl.BlockSpec((1, Cout), lambda n: (0, 0)),
        ]
        out_specs = pl.BlockSpec((1, band_h, W, Cout), lambda n: (n, 0, 0, 0))
        scratch_shapes = [pltpu.VMEM((L1 + w2c, Cout), compute_dtype)]
        dims = ("parallel",)
    else:
        # ---- Path B: x stays in HBM, in-kernel band DMA (no halo duplication) ----
        grid = (N, nb)
        kernel = functools.partial(_kernel_banded, **common)
        in_specs = [
            pl.BlockSpec(memory_space=pl.ANY),
            pl.BlockSpec((1, L1, 1), lambda n, b: (b, 0, 0)),
            pl.BlockSpec((9, Cin, Cout), lambda n, b: (0, 0, 0)),
            pl.BlockSpec((1, Cout), lambda n, b: (0, 0)),
            pl.BlockSpec((1, Cout), lambda n, b: (0, 0)),
            pl.BlockSpec((9, Cout, Cout), lambda n, b: (0, 0, 0)),
            pl.BlockSpec((1, Cout), lambda n, b: (0, 0)),
            pl.BlockSpec((1, Cout), lambda n, b: (0, 0)),
        ]
        out_specs = pl.BlockSpec((1, band_h, W, Cout), lambda n, b: (n, b, 0, 0))
        scratch_shapes = [pltpu.VMEM((band_len, Cin), compute_dtype),
                          pltpu.VMEM((L1 + w2c, Cout), compute_dtype)]
        dims = ("parallel", "parallel")

    out = pl.pallas_call(
        kernel,
        out_shape=jax.ShapeDtypeStruct((N, Hp, W, Cout), out_dtype),
        grid=grid,
        in_specs=in_specs,
        out_specs=out_specs,
        scratch_shapes=scratch_shapes,
        compiler_params=pltpu.CompilerParams(
            dimension_semantics=dims, vmem_limit_bytes=vmem_limit),
        cost_estimate=cost,
    )(x_flat, mask, w1, s1, b1, w2, s2, b2)

    if Hp != H:
        out = out[:, :H]
    return out


def basic_block_pallas(x_nchw, params, dilation=1, *, band_h=None,
                       compute_dtype=jnp.bfloat16, out_dtype=None):
    """NCHW wrapper (PyTorch layout).  Prefer basic_block_pallas_nhwc in chains."""
    x = jnp.transpose(x_nchw, (0, 2, 3, 1))
    out = basic_block_pallas_nhwc(x, params, dilation, band_h=band_h,
                                  compute_dtype=compute_dtype, out_dtype=out_dtype)
    return jnp.transpose(out, (0, 3, 1, 2))


# ---------------- pure-JAX reference (for correctness check) ----------------
def basic_block_ref_nhwc(x, params, dilation=1, compute_dtype=jnp.float32):
    """Reference that quantizes at the same points as the kernel (x, w, h1)."""
    w1_pt, g1, be1, m1, v1, w2_pt, g2, be2, m2, v2 = params
    cdt = compute_dtype
    xq = x.astype(cdt)

    def conv3x3(h, w_pt, pad, dil):
        w = jnp.transpose(w_pt, (2, 3, 1, 0)).astype(cdt)      # OIHW -> HWIO
        return lax.conv_general_dilated(
            h, w, (1, 1), [(pad, pad), (pad, pad)], rhs_dilation=(dil, dil),
            dimension_numbers=("NHWC", "HWIO", "NHWC"),
            precision=lax.Precision.HIGHEST,
            preferred_element_type=jnp.float32)

    def bn(h, g, b, m, v):
        return (h - m) / jnp.sqrt(v + BN_EPS) * g + b

    def lrelu(h):
        return jnp.where(h >= 0, h, NEG_SLOPE * h)

    h1 = lrelu(bn(conv3x3(xq, w1_pt, dilation, dilation), g1, be1, m1, v1))
    h1 = h1.astype(cdt)                                        # matches scratch dtype
    out = bn(conv3x3(h1, w2_pt, 1, 1), g2, be2, m2, v2)
    out = lrelu(out + xq.astype(jnp.float32))
    return out


def basic_block_ref(x_nchw, params, dilation=1, compute_dtype=jnp.float32):
    x = jnp.transpose(x_nchw, (0, 2, 3, 1))
    out = basic_block_ref_nhwc(x, params, dilation, compute_dtype)
    return jnp.transpose(out, (0, 3, 1, 2))


if __name__ == "__main__":
    # Small shapes consistent with BasicBlock(inplanes=4, planes=4, stride=1).
    N, C, H, W = 2, 4, 16, 16
    key = jax.random.PRNGKey(0)
    ks = jax.random.split(key, 11)

    x = jax.random.normal(ks[0], (N, C, H, W), jnp.float32)
    w1 = 0.2 * jax.random.normal(ks[1], (C, C, 3, 3), jnp.float32)
    w2 = 0.2 * jax.random.normal(ks[2], (C, C, 3, 3), jnp.float32)
    g1 = jax.random.uniform(ks[3], (C,), jnp.float32, 0.5, 1.5)
    b1 = 0.1 * jax.random.normal(ks[4], (C,), jnp.float32)
    m1 = 0.1 * jax.random.normal(ks[5], (C,), jnp.float32)
    v1 = jax.random.uniform(ks[6], (C,), jnp.float32, 0.5, 1.5)
    g2 = jax.random.uniform(ks[7], (C,), jnp.float32, 0.5, 1.5)
    b2 = 0.1 * jax.random.normal(ks[8], (C,), jnp.float32)
    m2 = 0.1 * jax.random.normal(ks[9], (C,), jnp.float32)
    v2 = jax.random.uniform(ks[10], (C,), jnp.float32, 0.5, 1.5)
    params = (w1, g1, b1, m1, v1, w2, g2, b2, m2, v2)

    def check(dil, bh, cdt, odt, rtol, atol):
        out = jax.block_until_ready(
            basic_block_pallas(x, params, dilation=dil, band_h=bh,
                               compute_dtype=cdt, out_dtype=odt))
        ref = jax.block_until_ready(
            basic_block_ref(x, params, dilation=dil, compute_dtype=cdt))
        assert out.shape == (N, C, H, W), out.shape
        ref = ref.astype(out.dtype).astype(jnp.float32)
        outf = out.astype(jnp.float32)
        err = float(jnp.max(jnp.abs(outf - ref)))
        assert jnp.allclose(outf, ref, rtol=rtol, atol=atol), (dil, bh, cdt, err)

    # 1) default path (whole image per step), exact f32 matmuls -> tight check.
    check(dil=1, bh=None, cdt=jnp.float32, odt=jnp.float32, rtol=1e-4, atol=1e-4)
    # 2) dilation=2 halo, still whole-image path -> tight check.
    check(dil=2, bh=None, cdt=jnp.float32, odt=jnp.float32, rtol=1e-4, atol=1e-4)
    # 3) banded fallback path (forced small band, uneven H/band_h, in-kernel DMA).
    check(dil=2, bh=6, cdt=jnp.float32, odt=jnp.float32, rtol=1e-4, atol=1e-4)
    # 4) production config: bf16 MXU matmuls, bf16 output, vs bf16-matched reference.
    check(dil=1, bh=None, cdt=jnp.bfloat16, odt=None, rtol=2e-2, atol=2e-2)

    print("KERNEL_OK")
</pallas_src>

<mosaic_0001>
module attributes {stable_mosaic.version = 11 : i64} {
  func.func @_kernel_resident(%arg0: i32, %arg1: memref<1x504x4xf32, #tpu.memory_space<vmem>>, %arg2: memref<1x432x1xf32, #tpu.memory_space<vmem>>, %arg3: memref<9x4x4xf32, #tpu.memory_space<vmem>>, %arg4: memref<1x4xf32, #tpu.memory_space<vmem>>, %arg5: memref<1x4xf32, #tpu.memory_space<vmem>>, %arg6: memref<9x4x4xf32, #tpu.memory_space<vmem>>, %arg7: memref<1x4xf32, #tpu.memory_space<vmem>>, %arg8: memref<1x4xf32, #tpu.memory_space<vmem>>, %arg9: memref<1x16x16x4xf32, #tpu.memory_space<vmem>>, %arg10: memref<456x4xf32, #tpu.memory_space<vmem>>) attributes {dimension_semantics = [#tpu.dimension_semantics<parallel>], iteration_bounds = array<i64: 2>, scalar_prefetch = 0 : i64, scratch_operands = 1 : i64, tpu.core_type = #tpu.core_type<tc>, window_params = [{transform_indices = @transform_0, window_bounds = array<i64: 1, 504, 4>}, {pipeline_mode = #tpu.pipeline_mode<synchronous>, transform_indices = @transform_1, window_bounds = array<i64: 1, 432, 1>}, {pipeline_mode = #tpu.pipeline_mode<synchronous>, transform_indices = @transform_2, window_bounds = array<i64: 9, 4, 4>}, {pipeline_mode = #tpu.pipeline_mode<synchronous>, transform_indices = @transform_3, window_bounds = array<i64: 1, 4>}, {pipeline_mode = #tpu.pipeline_mode<synchronous>, transform_indices = @transform_4, window_bounds = array<i64: 1, 4>}, {pipeline_mode = #tpu.pipeline_mode<synchronous>, transform_indices = @transform_5, window_bounds = array<i64: 9, 4, 4>}, {pipeline_mode = #tpu.pipeline_mode<synchronous>, transform_indices = @transform_6, window_bounds = array<i64: 1, 4>}, {pipeline_mode = #tpu.pipeline_mode<synchronous>, transform_indices = @transform_7, window_bounds = array<i64: 1, 4>}, {transform_indices = @transform_8, window_bounds = array<i64: 1, 16, 16, 4>}]} {
    %cst = arith.constant 0.000000e+00 : f32
    %0 = vector.broadcast %cst : f32 to vector<432x4xf32>
    %c0 = arith.constant 0 : index
    %c0_0 = arith.constant 0 : index
    %c0_1 = arith.constant 0 : index
    %1 = vector.load %arg1[%c0, %c0_0, %c0_1] : memref<1x504x4xf32, #tpu.memory_space<vmem>>, vector<1x432x4xf32>
    %2 = vector.shape_cast %1 : vector<1x432x4xf32> to vector<432x4xf32>
    %c0_2 = arith.constant 0 : index
    %c0_3 = arith.constant 0 : index
    %c0_4 = arith.constant 0 : index
    %3 = vector.load %arg3[%c0_2, %c0_3, %c0_4] : memref<9x4x4xf32, #tpu.memory_space<vmem>>, vector<1x4x4xf32>
    %4 = vector.shape_cast %3 : vector<1x4x4xf32> to vector<4x4xf32>
    %cst_5 = arith.constant dense<0.000000e+00> : vector<432x4xf32>
    %5 = tpu.matmul %2, %4, %cst_5 {dimension_numbers = #tpu.dot_dimension_numbers<[1], [0], [0], [1], [0, 0, 1, 1], [], []>} : vector<432x4xf32>, vector<4x4xf32>, vector<432x4xf32> -> vector<432x4xf32>
    %6 = arith.addf %0, %5 : vector<432x4xf32>
    %c0_6 = arith.constant 0 : index
    %c1 = arith.constant 1 : index
    %c0_7 = arith.constant 0 : index
    %7 = vector.load %arg1[%c0_6, %c1, %c0_7] : memref<1x504x4xf32, #tpu.memory_space<vmem>>, vector<1x432x4xf32>
    %8 = vector.shape_cast %7 : vector<1x432x4xf32> to vector<432x4xf32>
    %c1_8 = arith.constant 1 : index
    %c0_9 = arith.constant 0 : index
    %c0_10 = arith.constant 0 : index
    %9 = vector.load %arg3[%c1_8, %c0_9, %c0_10] : memref<9x4x4xf32, #tpu.memory_space<vmem>>, vector<1x4x4xf32>
    %10 = vector.shape_cast %9 : vector<1x4x4xf32> to vector<4x4xf32>
    %cst_11 = arith.constant dense<0.000000e+00> : vector<432x4xf32>
    %11 = tpu.matmul %8, %10, %cst_11 {dimension_numbers = #tpu.dot_dimension_numbers<[1], [0], [0], [1], [0, 0, 1, 1], [], []>} : vector<432x4xf32>, vector<4x4xf32>, vector<432x4xf32> -> vector<432x4xf32>
    %12 = arith.addf %6, %11 : vector<432x4xf32>
    %c0_12 = arith.constant 0 : index
    %c2 = arith.constant 2 : index
    %c0_13 = arith.constant 0 : index
    %13 = vector.load %arg1[%c0_12, %c2, %c0_13] : memref<1x504x4xf32, #tpu.memory_space<vmem>>, vector<1x432x4xf32>
    %14 = vector.shape_cast %13 : vector<1x432x4xf32> to vector<432x4xf32>
    %c2_14 = arith.constant 2 : index
    %c0_15 = arith.constant 0 : index
    %c0_16 = arith.constant 0 : index
    %15 = vector.load %arg3[%c2_14, %c0_15, %c0_16] : memref<9x4x4xf32, #tpu.memory_space<vmem>>, vector<1x4x4xf32>
    %16 = vector.shape_cast %15 : vector<1x4x4xf32> to vector<4x4xf32>
    %cst_17 = arith.constant dense<0.000000e+00> : vector<432x4xf32>
    %17 = tpu.matmul %14, %16, %cst_17 {dimension_numbers = #tpu.dot_dimension_numbers<[1], [0], [0], [1], [0, 0, 1, 1], [], []>} : vector<432x4xf32>, vector<4x4xf32>, vector<432x4xf32> -> vector<432x4xf32>
    %18 = arith.addf %12, %17 : vector<432x4xf32>
    %c0_18 = arith.constant 0 : index
    %c24 = arith.constant 24 : index
    %c0_19 = arith.constant 0 : index
    %19 = vector.load %arg1[%c0_18, %c24, %c0_19] : memref<1x504x4xf32, #tpu.memory_space<vmem>>, vector<1x432x4xf32>
    %20 = vector.shape_cast %19 : vector<1x432x4xf32> to vector<432x4xf32>
    %c3 = arith.constant 3 : index
    %c0_20 = arith.constant 0 : index
    %c0_21 = arith.constant 0 : index
    %21 = vector.load %arg3[%c3, %c0_20, %c0_21] : memref<9x4x4xf32, #tpu.memory_space<vmem>>, vector<1x4x4xf32>
    %22 = vector.shape_cast %21 : vector<1x4x4xf32> to vector<4x4xf32>
    %cst_22 = arith.constant dense<0.000000e+00> : vector<432x4xf32>
    %23 = tpu.matmul %20, %22, %cst_22 {dimension_numbers = #tpu.dot_dimension_numbers<[1], [0], [0], [1], [0, 0, 1, 1], [], []>} : vector<432x4xf32>, vector<4x4xf32>, vector<432x4xf32> -> vector<432x4xf32>
    %24 = arith.addf %18, %23 : vector<432x4xf32>
    %c0_23 = arith.constant 0 : index
    %c25 = arith.constant 25 : index
    %c0_24 = arith.constant 0 : index
    %25 = vector.load %arg1[%c0_23, %c25, %c0_24] : memref<1x504x4xf32, #tpu.memory_space<vmem>>, vector<1x432x4xf32>
    %26 = vector.shape_cast %25 : vector<1x432x4xf32> to vector<432x4xf32>
    %c4 = arith.constant 4 : index
    %c0_25 = arith.constant 0 : index
    %c0_26 = arith.constant 0 : index
    %27 = vector.load %arg3[%c4, %c0_25, %c0_26] : memref<9x4x4xf32, #tpu.memory_space<vmem>>, vector<1x4x4xf32>
    %28 = vector.shape_cast %27 : vector<1x4x4xf32> to vector<4x4xf32>
    %cst_27 = arith.constant dense<0.000000e+00> : vector<432x4xf32>
    %29 = tpu.matmul %26, %28, %cst_27 {dimension_numbers = #tpu.dot_dimension_numbers<[1], [0], [0], [1], [0, 0, 1, 1], [], []>} : vector<432x4xf32>, vector<4x4xf32>, vector<432x4xf32> -> vector<432x4xf32>
    %30 = arith.addf %24, %29 : vector<432x4xf32>
    %c0_28 = arith.constant 0 : index
    %c26 = arith.constant 26 : index
    %c0_29 = arith.constant 0 : index
    %31 = vector.load %arg1[%c0_28, %c26, %c0_29] : memref<1x504x4xf32, #tpu.memory_space<vmem>>, vector<1x432x4xf32>
    %32 = vector.shape_cast %31 : vector<1x432x4xf32> to vector<432x4xf32>
    %c5 = arith.constant 5 : index
    %c0_30 = arith.constant 0 : index
    %c0_31 = arith.constant 0 : index
    %33 = vector.load %arg3[%c5, %c0_30, %c0_31] : memref<9x4x4xf32, #tpu.memory_space<vmem>>, vector<1x4x4xf32>
    %34 = vector.shape_cast %33 : vector<1x4x4xf32> to vector<4x4xf32>
    %cst_32 = arith.constant dense<0.000000e+00> : vector<432x4xf32>
    %35 = tpu.matmul %32, %34, %cst_32 {dimension_numbers = #tpu.dot_dimension_numbers<[1], [0], [0], [1], [0, 0, 1, 1], [], []>} : vector<432x4xf32>, vector<4x4xf32>, vector<432x4xf32> -> vector<432x4xf32>
    %36 = arith.addf %30, %35 : vector<432x4xf32>
    %c0_33 = arith.constant 0 : index
    %c48 = arith.constant 48 : index
    %c0_34 = arith.constant 0 : index
    %37 = vector.load %arg1[%c0_33, %c48, %c0_34] : memref<1x504x4xf32, #tpu.memory_space<vmem>>, vector<1x432x4xf32>
    %38 = vector.shape_cast %37 : vector<1x432x4xf32> to vector<432x4xf32>
    %c6 = arith.constant 6 : index
    %c0_35 = arith.constant 0 : index
    %c0_36 = arith.constant 0 : index
    %39 = vector.load %arg3[%c6, %c0_35, %c0_36] : memref<9x4x4xf32, #tpu.memory_space<vmem>>, vector<1x4x4xf32>
    %40 = vector.shape_cast %39 : vector<1x4x4xf32> to vector<4x4xf32>
    %cst_37 = arith.constant dense<0.000000e+00> : vector<432x4xf32>
    %41 = tpu.matmul %38, %40, %cst_37 {dimension_numbers = #tpu.dot_dimension_numbers<[1], [0], [0], [1], [0, 0, 1, 1], [], []>} : vector<432x4xf32>, vector<4x4xf32>, vector<432x4xf32> -> vector<432x4xf32>
    %42 = arith.addf %36, %41 : vector<432x4xf32>
    %c0_38 = arith.constant 0 : index
    %c49 = arith.constant 49 : index
    %c0_39 = arith.constant 0 : index
    %43 = vector.load %arg1[%c0_38, %c49, %c0_39] : memref<1x504x4xf32, #tpu.memory_space<vmem>>, vector<1x432x4xf32>
    %44 = vector.shape_cast %43 : vector<1x432x4xf32> to vector<432x4xf32>
    %c7 = arith.constant 7 : index
    %c0_40 = arith.constant 0 : index
    %c0_41 = arith.constant 0 : index
    %45 = vector.load %arg3[%c7, %c0_40, %c0_41] : memref<9x4x4xf32, #tpu.memory_space<vmem>>, vector<1x4x4xf32>
    %46 = vector.shape_cast %45 : vector<1x4x4xf32> to vector<4x4xf32>
    %cst_42 = arith.constant dense<0.000000e+00> : vector<432x4xf32>
    %47 = tpu.matmul %44, %46, %cst_42 {dimension_numbers = #tpu.dot_dimension_numbers<[1], [0], [0], [1], [0, 0, 1, 1], [], []>} : vector<432x4xf32>, vector<4x4xf32>, vector<432x4xf32> -> vector<432x4xf32>
    %48 = arith.addf %42, %47 : vector<432x4xf32>
    %c0_43 = arith.constant 0 : index
    %c50 = arith.constant 50 : index
    %c0_44 = arith.constant 0 : index
    %49 = vector.load %arg1[%c0_43, %c50, %c0_44] : memref<1x504x4xf32, #tpu.memory_space<vmem>>, vector<1x432x4xf32>
    %50 = vector.shape_cast %49 : vector<1x432x4xf32> to vector<432x4xf32>
    %c8 = arith.constant 8 : index
    %c0_45 = arith.constant 0 : index
    %c0_46 = arith.constant 0 : index
    %51 = vector.load %arg3[%c8, %c0_45, %c0_46] : memref<9x4x4xf32, #tpu.memory_space<vmem>>, vector<1x4x4xf32>
    %52 = vector.shape_cast %51 : vector<1x4x4xf32> to vector<4x4xf32>
    %cst_47 = arith.constant dense<0.000000e+00> : vector<432x4xf32>
    %53 = tpu.matmul %50, %52, %cst_47 {dimension_numbers = #tpu.dot_dimension_numbers<[1], [0], [0], [1], [0, 0, 1, 1], [], []>} : vector<432x4xf32>, vector<4x4xf32>, vector<432x4xf32> -> vector<432x4xf32>
    %54 = arith.addf %48, %53 : vector<432x4xf32>
    %c0_48 = arith.constant 0 : index
    %c0_49 = arith.constant 0 : index
    %55 = vector.load %arg4[%c0_48, %c0_49] : memref<1x4xf32, #tpu.memory_space<vmem>>, vector<1x4xf32>
    %56 = vector.broadcast %55 : vector<1x4xf32> to vector<432x4xf32>
    %57 = arith.mulf %54, %56 : vector<432x4xf32>
    %c0_50 = arith.constant 0 : index
    %c0_51 = arith.constant 0 : index
    %58 = vector.load %arg5[%c0_50, %c0_51] : memref<1x4xf32, #tpu.memory_space<vmem>>, vector<1x4xf32>
    %59 = vector.broadcast %58 : vector<1x4xf32> to vector<432x4xf32>
    %60 = arith.addf %57, %59 : vector<432x4xf32>
    %cst_52 = arith.constant 0.000000e+00 : f32
    %61 = vector.broadcast %cst_52 : f32 to vector<432x4xf32>
    %62 = arith.cmpf oge, %60, %61 : vector<432x4xf32>
    %cst_53 = arith.constant 0.00999999977 : f32
    %63 = vector.broadcast %cst_53 : f32 to vector<432x4xf32>
    %64 = arith.mulf %63, %60 : vector<432x4xf32>
    %65 = arith.select %62, %60, %64 : vector<432x4xi1>, vector<432x4xf32>
    %c0_54 = arith.constant 0 : index
    %c0_55 = arith.constant 0 : index
    %c0_56 = arith.constant 0 : index
    %66 = vector.load %arg2[%c0_54, %c0_55, %c0_56] : memref<1x432x1xf32, #tpu.memory_space<vmem>>, vector<1x432x1xf32>
    %67 = vector.shape_cast %66 : vector<1x432x1xf32> to vector<432x1xf32>
    %68 = vector.broadcast %67 : vector<432x1xf32> to vector<432x4xf32>
    %69 = arith.mulf %65, %68 : vector<432x4xf32>
    %c0_57 = arith.constant 0 : index
    %c0_58 = arith.constant 0 : index
    %70 = vector.load %arg10[%c0_57, %c0_58] : memref<456x4xf32, #tpu.memory_space<vmem>>, vector<432x4xf32>
    tpu.vector_store %arg10[%c0_57, %c0_58], %69 {strides = array<i32>} : memref<456x4xf32, #tpu.memory_space<vmem>>, vector<432x4xf32>,
    %cst_59 = arith.constant 0.000000e+00 : f32
    %71 = vector.broadcast %cst_59 : f32 to vector<24x4xf32>
    %c432 = arith.constant 432 : index
    %c0_60 = arith.constant 0 : index
    %72 = vector.load %arg10[%c432, %c0_60] : memref<456x4xf32, #tpu.memory_space<vmem>>, vector<24x4xf32>
    tpu.vector_store %arg10[%c432, %c0_60], %71 {strides = array<i32>} : memref<456x4xf32, #tpu.memory_space<vmem>>, vector<24x4xf32>,
    %cst_61 = arith.constant 0.000000e+00 : f32
    %73 = vector.broadcast %cst_61 : f32 to vector<384x4xf32>
    %c0_62 = arith.constant 0 : index
    %c0_63 = arith.constant 0 : index
    %74 = vector.load %arg10[%c0_62, %c0_63] : memref<456x4xf32, #tpu.memory_space<vmem>>, vector<384x4xf32>
    %c0_64 = arith.constant 0 : index
    %c0_65 = arith.constant 0 : index
    %c0_66 = arith.constant 0 : index
    %75 = vector.load %arg6[%c0_64, %c0_65, %c0_66] : memref<9x4x4xf32, #tpu.memory_space<vmem>>, vector<1x4x4xf32>
    %76 = vector.shape_cast %75 : vector<1x4x4xf32> to vector<4x4xf32>
    %cst_67 = arith.constant dense<0.000000e+00> : vector<384x4xf32>
    %77 = tpu.matmul %74, %76, %cst_67 {dimension_numbers = #tpu.dot_dimension_numbers<[1], [0], [0], [1], [0, 0, 1, 1], [], []>} : vector<384x4xf32>, vector<4x4xf32>, vector<384x4xf32> -> vector<384x4xf32>
    %78 = arith.addf %73, %77 : vector<384x4xf32>
    %c1_68 = arith.constant 1 : index
    %c0_69 = arith.constant 0 : index
    %79 = vector.load %arg10[%c1_68, %c0_69] : memref<456x4xf32, #tpu.memory_space<vmem>>, vector<384x4xf32>
    %c1_70 = arith.constant 1 : index
    %c0_71 = arith.constant 0 : index
    %c0_72 = arith.constant 0 : index
    %80 = vector.load %arg6[%c1_70, %c0_71, %c0_72] : memref<9x4x4xf32, #tpu.memory_space<vmem>>, vector<1x4x4xf32>
    %81 = vector.shape_cast %80 : vector<1x4x4xf32> to vector<4x4xf32>
    %cst_73 = arith.constant dense<0.000000e+00> : vector<384x4xf32>
    %82 = tpu.matmul %79, %81, %cst_73 {dimension_numbers = #tpu.dot_dimension_numbers<[1], [0], [0], [1], [0, 0, 1, 1], [], []>} : vector<384x4xf32>, vector<4x4xf32>, vector<384x4xf32> -> vector<384x4xf32>
    %83 = arith.addf %78, %82 : vector<384x4xf32>
    %c2_74 = arith.constant 2 : index
    %c0_75 = arith.constant 0 : index
    %84 = vector.load %arg10[%c2_74, %c0_75] : memref<456x4xf32, #tpu.memory_space<vmem>>, vector<384x4xf32>
    %c2_76 = arith.constant 2 : index
    %c0_77 = arith.constant 0 : index
    %c0_78 = arith.constant 0 : index
    %85 = vector.load %arg6[%c2_76, %c0_77, %c0_78] : memref<9x4x4xf32, #tpu.memory_space<vmem>>, vector<1x4x4xf32>
    %86 = vector.shape_cast %85 : vector<1x4x4xf32> to vector<4x4xf32>
    %cst_79 = arith.constant dense<0.000000e+00> : vector<384x4xf32>
    %87 = tpu.matmul %84, %86, %cst_79 {dimension_numbers = #tpu.dot_dimension_numbers<[1], [0], [0], [1], [0, 0, 1, 1], [], []>} : vector<384x4xf32>, vector<4x4xf32>, vector<384x4xf32> -> vector<384x4xf32>
    %88 = arith.addf %83, %87 : vector<384x4xf32>
    %c24_80 = arith.constant 24 : index
    %c0_81 = arith.constant 0 : index
    %89 = vector.load %arg10[%c24_80, %c0_81] : memref<456x4xf32, #tpu.memory_space<vmem>>, vector<384x4xf32>
    %c3_82 = arith.constant 3 : index
    %c0_83 = arith.constant 0 : index
    %c0_84 = arith.constant 0 : index
    %90 = vector.load %arg6[%c3_82, %c0_83, %c0_84] : memref<9x4x4xf32, #tpu.memory_space<vmem>>, vector<1x4x4xf32>
    %91 = vector.shape_cast %90 : vector<1x4x4xf32> to vector<4x4xf32>
    %cst_85 = arith.constant dense<0.000000e+00> : vector<384x4xf32>
    %92 = tpu.matmul %89, %91, %cst_85 {dimension_numbers = #tpu.dot_dimension_numbers<[1], [0], [0], [1], [0, 0, 1, 1], [], []>} : vector<384x4xf32>, vector<4x4xf32>, vector<384x4xf32> -> vector<384x4xf32>
    %93 = arith.addf %88, %92 : vector<384x4xf32>
    %c25_86 = arith.constant 25 : index
    %c0_87 = arith.constant 0 : index
    %94 = vector.load %arg10[%c25_86, %c0_87] : memref<456x4xf32, #tpu.memory_space<vmem>>, vector<384x4xf32>
    %c4_88 = arith.constant 4 : index
    %c0_89 = arith.constant 0 : index
    %c0_90 = arith.constant 0 : index
    %95 = vector.load %arg6[%c4_88, %c0_89, %c0_90] : memref<9x4x4xf32, #tpu.memory_space<vmem>>, vector<1x4x4xf32>
    %96 = vector.shape_cast %95 : vector<1x4x4xf32> to vector<4x4xf32>
    %cst_91 = arith.constant dense<0.000000e+00> : vector<384x4xf32>
    %97 = tpu.matmul %94, %96, %cst_91 {dimension_numbers = #tpu.dot_dimension_numbers<[1], [0], [0], [1], [0, 0, 1, 1], [], []>} : vector<384x4xf32>, vector<4x4xf32>, vector<384x4xf32> -> vector<384x4xf32>
    %98 = arith.addf %93, %97 : vector<384x4xf32>
    %c26_92 = arith.constant 26 : index
    %c0_93 = arith.constant 0 : index
    %99 = vector.load %arg10[%c26_92, %c0_93] : memref<456x4xf32, #tpu.memory_space<vmem>>, vector<384x4xf32>
    %c5_94 = arith.constant 5 : index
    %c0_95 = arith.constant 0 : index
    %c0_96 = arith.constant 0 : index
    %100 = vector.load %arg6[%c5_94, %c0_95, %c0_96] : memref<9x4x4xf32, #tpu.memory_space<vmem>>, vector<1x4x4xf32>
    %101 = vector.shape_cast %100 : vector<1x4x4xf32> to vector<4x4xf32>
    %cst_97 = arith.constant dense<0.000000e+00> : vector<384x4xf32>
    %102 = tpu.matmul %99, %101, %cst_97 {dimension_numbers = #tpu.dot_dimension_numbers<[1], [0], [0], [1], [0, 0, 1, 1], [], []>} : vector<384x4xf32>, vector<4x4xf32>, vector<384x4xf32> -> vector<384x4xf32>
    %103 = arith.addf %98, %102 : vector<384x4xf32>
    %c48_98 = arith.constant 48 : index
    %c0_99 = arith.constant 0 : index
    %104 = vector.load %arg10[%c48_98, %c0_99] : memref<456x4xf32, #tpu.memory_space<vmem>>, vector<384x4xf32>
    %c6_100 = arith.constant 6 : index
    %c0_101 = arith.constant 0 : index
    %c0_102 = arith.constant 0 : index
    %105 = vector.load %arg6[%c6_100, %c0_101, %c0_102] : memref<9x4x4xf32, #tpu.memory_space<vmem>>, vector<1x4x4xf32>
    %106 = vector.shape_cast %105 : vector<1x4x4xf32> to vector<4x4xf32>
    %cst_103 = arith.constant dense<0.000000e+00> : vector<384x4xf32>
    %107 = tpu.matmul %104, %106, %cst_103 {dimension_numbers = #tpu.dot_dimension_numbers<[1], [0], [0], [1], [0, 0, 1, 1], [], []>} : vector<384x4xf32>, vector<4x4xf32>, vector<384x4xf32> -> vector<384x4xf32>
    %108 = arith.addf %103, %107 : vector<384x4xf32>
    %c49_104 = arith.constant 49 : index
    %c0_105 = arith.constant 0 : index
    %109 = vector.load %arg10[%c49_104, %c0_105] : memref<456x4xf32, #tpu.memory_space<vmem>>, vector<384x4xf32>
    %c7_106 = arith.constant 7 : index
    %c0_107 = arith.constant 0 : index
    %c0_108 = arith.constant 0 : index
    %110 = vector.load %arg6[%c7_106, %c0_107, %c0_108] : memref<9x4x4xf32, #tpu.memory_space<vmem>>, vector<1x4x4xf32>
    %111 = vector.shape_cast %110 : vector<1x4x4xf32> to vector<4x4xf32>
    %cst_109 = arith.constant dense<0.000000e+00> : vector<384x4xf32>
    %112 = tpu.matmul %109, %111, %cst_109 {dimension_numbers = #tpu.dot_dimension_numbers<[1], [0], [0], [1], [0, 0, 1, 1], [], []>} : vector<384x4xf32>, vector<4x4xf32>, vector<384x4xf32> -> vector<384x4xf32>
    %113 = arith.addf %108, %112 : vector<384x4xf32>
    %c50_110 = arith.constant 50 : index
    %c0_111 = arith.constant 0 : index
    %114 = vector.load %arg10[%c50_110, %c0_111] : memref<456x4xf32, #tpu.memory_space<vmem>>, vector<384x4xf32>
    %c8_112 = arith.constant 8 : index
    %c0_113 = arith.constant 0 : index
    %c0_114 = arith.constant 0 : index
    %115 = vector.load %arg6[%c8_112, %c0_113, %c0_114] : memref<9x4x4xf32, #tpu.memory_space<vmem>>, vector<1x4x4xf32>
    %116 = vector.shape_cast %115 : vector<1x4x4xf32> to vector<4x4xf32>
    %cst_115 = arith.constant dense<0.000000e+00> : vector<384x4xf32>
    %117 = tpu.matmul %114, %116, %cst_115 {dimension_numbers = #tpu.dot_dimension_numbers<[1], [0], [0], [1], [0, 0, 1, 1], [], []>} : vector<384x4xf32>, vector<4x4xf32>, vector<384x4xf32> -> vector<384x4xf32>
    %118 = arith.addf %113, %117 : vector<384x4xf32>
    %c0_116 = arith.constant 0 : index
    %c0_117 = arith.constant 0 : index
    %119 = vector.load %arg7[%c0_116, %c0_117] : memref<1x4xf32, #tpu.memory_space<vmem>>, vector<1x4xf32>
    %120 = vector.broadcast %119 : vector<1x4xf32> to vector<384x4xf32>
    %121 = arith.mulf %118, %120 : vector<384x4xf32>
    %c0_118 = arith.constant 0 : index
    %c0_119 = arith.constant 0 : index
    %122 = vector.load %arg8[%c0_118, %c0_119] : memref<1x4xf32, #tpu.memory_space<vmem>>, vector<1x4xf32>
    %123 = vector.broadcast %122 : vector<1x4xf32> to vector<384x4xf32>
    %124 = arith.addf %121, %123 : vector<384x4xf32>
    %c0_120 = arith.constant 0 : index
    %c50_121 = arith.constant 50 : index
    %c0_122 = arith.constant 0 : index
    %125 = vector.load %arg1[%c0_120, %c50_121, %c0_122] : memref<1x504x4xf32, #tpu.memory_space<vmem>>, vector<1x384x4xf32>
    %126 = vector.shape_cast %125 : vector<1x384x4xf32> to vector<384x4xf32>
    %127 = arith.addf %124, %126 : vector<384x4xf32>
    %cst_123 = arith.constant 0.000000e+00 : f32
    %128 = vector.broadcast %cst_123 : f32 to vector<384x4xf32>
    %129 = arith.cmpf oge, %127, %128 : vector<384x4xf32>
    %cst_124 = arith.constant 0.00999999977 : f32
    %130 = vector.broadcast %cst_124 : f32 to vector<384x4xf32>
    %131 = arith.mulf %130, %127 : vector<384x4xf32>
    %132 = arith.select %129, %127, %131 : vector<384x4xi1>, vector<384x4xf32>
    %133 = vector.extract_strided_slice %132 {offsets = [0, 0], sizes = [16, 4], strides = [1, 1]} : vector<384x4xf32> to vector<16x4xf32>
    %c0_125 = arith.constant 0 : index
    %c0_126 = arith.constant 0 : index
    %c0_127 = arith.constant 0 : index
    %c0_128 = arith.constant 0 : index
    %134 = vector.load %arg9[%c0_125, %c0_126, %c0_127, %c0_128] : memref<1x16x16x4xf32, #tpu.memory_space<vmem>>, vector<1x1x16x4xf32>
    %135 = vector.shape_cast %134 : vector<1x1x16x4xf32> to vector<16x4xf32>
    %136 = vector.shape_cast %133 : vector<16x4xf32> to vector<1x1x16x4xf32>
    tpu.vector_store %arg9[%c0_125, %c0_126, %c0_127, %c0_128], %136 {strides = array<i32>} : memref<1x16x16x4xf32, #tpu.memory_space<vmem>>, vector<1x1x16x4xf32>,
    %137 = vector.extract_strided_slice %132 {offsets = [24, 0], sizes = [16, 4], strides = [1, 1]} : vector<384x4xf32> to vector<16x4xf32>
    %c0_129 = arith.constant 0 : index
    %c1_130 = arith.constant 1 : index
    %c0_131 = arith.constant 0 : index
    %c0_132 = arith.constant 0 : index
    %138 = vector.load %arg9[%c0_129, %c1_130, %c0_131, %c0_132] : memref<1x16x16x4xf32, #tpu.memory_space<vmem>>, vector<1x1x16x4xf32>
    %139 = vector.shape_cast %138 : vector<1x1x16x4xf32> to vector<16x4xf32>
    %140 = vector.shape_cast %137 : vector<16x4xf32> to vector<1x1x16x4xf32>
    tpu.vector_store %arg9[%c0_129, %c1_130, %c0_131, %c0_132], %140 {strides = array<i32>} : memref<1x16x16x4xf32, #tpu.memory_space<vmem>>, vector<1x1x16x4xf32>,
    %141 = vector.extract_strided_slice %132 {offsets = [48, 0], sizes = [16, 4], strides = [1, 1]} : vector<384x4xf32> to vector<16x4xf32>
    %c0_133 = arith.constant 0 : index
    %c2_134 = arith.constant 2 : index
    %c0_135 = arith.constant 0 : index
    %c0_136 = arith.constant 0 : index
    %142 = vector.load %arg9[%c0_133, %c2_134, %c0_135, %c0_136] : memref<1x16x16x4xf32, #tpu.memory_space<vmem>>, vector<1x1x16x4xf32>
    %143 = vector.shape_cast %142 : vector<1x1x16x4xf32> to vector<16x4xf32>
    %144 = vector.shape_cast %141 : vector<16x4xf32> to vector<1x1x16x4xf32>
    tpu.vector_store %arg9[%c0_133, %c2_134, %c0_135, %c0_136], %144 {strides = array<i32>} : memref<1x16x16x4xf32, #tpu.memory_space<vmem>>, vector<1x1x16x4xf32>,
    %145 = vector.extract_strided_slice %132 {offsets = [72, 0], sizes = [16, 4], strides = [1, 1]} : vector<384x4xf32> to vector<16x4xf32>
    %c0_137 = arith.constant 0 : index
    %c3_138 = arith.constant 3 : index
    %c0_139 = arith.constant 0 : index
    %c0_140 = arith.constant 0 : index
    %146 = vector.load %arg9[%c0_137, %c3_138, %c0_139, %c0_140] : memref<1x16x16x4xf32, #tpu.memory_space<vmem>>, vector<1x1x16x4xf32>
    %147 = vector.shape_cast %146 : vector<1x1x16x4xf32> to vector<16x4xf32>
    %148 = vector.shape_cast %145 : vector<16x4xf32> to vector<1x1x16x4xf32>
    tpu.vector_store %arg9[%c0_137, %c3_138, %c0_139, %c0_140], %148 {strides = array<i32>} : memref<1x16x16x4xf32, #tpu.memory_space<vmem>>, vector<1x1x16x4xf32>,
    %149 = vector.extract_strided_slice %132 {offsets = [96, 0], sizes = [16, 4], strides = [1, 1]} : vector<384x4xf32> to vector<16x4xf32>
    %c0_141 = arith.constant 0 : index
    %c4_142 = arith.constant 4 : index
    %c0_143 = arith.constant 0 : index
    %c0_144 = arith.constant 0 : index
    %150 = vector.load %arg9[%c0_141, %c4_142, %c0_143, %c0_144] : memref<1x16x16x4xf32, #tpu.memory_space<vmem>>, vector<1x1x16x4xf32>
    %151 = vector.shape_cast %150 : vector<1x1x16x4xf32> to vector<16x4xf32>
    %152 = vector.shape_cast %149 : vector<16x4xf32> to vector<1x1x16x4xf32>
    tpu.vector_store %arg9[%c0_141, %c4_142, %c0_143, %c0_144], %152 {strides = array<i32>} : memref<1x16x16x4xf32, #tpu.memory_space<vmem>>, vector<1x1x16x4xf32>,
    %153 = vector.extract_strided_slice %132 {offsets = [120, 0], sizes = [16, 4], strides = [1, 1]} : vector<384x4xf32> to vector<16x4xf32>
    %c0_145 = arith.constant 0 : index
    %c5_146 = arith.constant 5 : index
    %c0_147 = arith.constant 0 : index
    %c0_148 = arith.constant 0 : index
    %154 = vector.load %arg9[%c0_145, %c5_146, %c0_147, %c0_148] : memref<1x16x16x4xf32, #tpu.memory_space<vmem>>, vector<1x1x16x4xf32>
    %155 = vector.shape_cast %154 : vector<1x1x16x4xf32> to vector<16x4xf32>
    %156 = vector.shape_cast %153 : vector<16x4xf32> to vector<1x1x16x4xf32>
    tpu.vector_store %arg9[%c0_145, %c5_146, %c0_147, %c0_148], %156 {strides = array<i32>} : memref<1x16x16x4xf32, #tpu.memory_space<vmem>>, vector<1x1x16x4xf32>,
    %157 = vector.extract_strided_slice %132 {offsets = [144, 0], sizes = [16, 4], strides = [1, 1]} : vector<384x4xf32> to vector<16x4xf32>
    %c0_149 = arith.constant 0 : index
    %c6_150 = arith.constant 6 : index
    %c0_151 = arith.constant 0 : index
    %c0_152 = arith.constant 0 : index
    %158 = vector.load %arg9[%c0_149, %c6_150, %c0_151, %c0_152] : memref<1x16x16x4xf32, #tpu.memory_space<vmem>>, vector<1x1x16x4xf32>
    %159 = vector.shape_cast %158 : vector<1x1x16x4xf32> to vector<16x4xf32>
    %160 = vector.shape_cast %157 : vector<16x4xf32> to vector<1x1x16x4xf32>
    tpu.vector_store %arg9[%c0_149, %c6_150, %c0_151, %c0_152], %160 {strides = array<i32>} : memref<1x16x16x4xf32, #tpu.memory_space<vmem>>, vector<1x1x16x4xf32>,
    %161 = vector.extract_strided_slice %132 {offsets = [168, 0], sizes = [16, 4], strides = [1, 1]} : vector<384x4xf32> to vector<16x4xf32>
    %c0_153 = arith.constant 0 : index
    %c7_154 = arith.constant 7 : index
    %c0_155 = arith.constant 0 : index
    %c0_156 = arith.constant 0 : index
    %162 = vector.load %arg9[%c0_153, %c7_154, %c0_155, %c0_156] : memref<1x16x16x4xf32, #tpu.memory_space<vmem>>, vector<1x1x16x4xf32>
    %163 = vector.shape_cast %162 : vector<1x1x16x4xf32> to vector<16x4xf32>
    %164 = vector.shape_cast %161 : vector<16x4xf32> to vector<1x1x16x4xf32>
    tpu.vector_store %arg9[%c0_153, %c7_154, %c0_155, %c0_156], %164 {strides = array<i32>} : memref<1x16x16x4xf32, #tpu.memory_space<vmem>>, vector<1x1x16x4xf32>,
    %165 = vector.extract_strided_slice %132 {offsets = [192, 0], sizes = [16, 4], strides = [1, 1]} : vector<384x4xf32> to vector<16x4xf32>
    %c0_157 = arith.constant 0 : index
    %c8_158 = arith.constant 8 : index
    %c0_159 = arith.constant 0 : index
    %c0_160 = arith.constant 0 : index
    %166 = vector.load %arg9[%c0_157, %c8_158, %c0_159, %c0_160] : memref<1x16x16x4xf32, #tpu.memory_space<vmem>>, vector<1x1x16x4xf32>
    %167 = vector.shape_cast %166 : vector<1x1x16x4xf32> to vector<16x4xf32>
    %168 = vector.shape_cast %165 : vector<16x4xf32> to vector<1x1x16x4xf32>
    tpu.vector_store %arg9[%c0_157, %c8_158, %c0_159, %c0_160], %168 {strides = array<i32>} : memref<1x16x16x4xf32, #tpu.memory_space<vmem>>, vector<1x1x16x4xf32>,
    %169 = vector.extract_strided_slice %132 {offsets = [216, 0], sizes = [16, 4], strides = [1, 1]} : vector<384x4xf32> to vector<16x4xf32>
    %c0_161 = arith.constant 0 : index
    %c9 = arith.constant 9 : index
    %c0_162 = arith.constant 0 : index
    %c0_163 = arith.constant 0 : index
    %170 = vector.load %arg9[%c0_161, %c9, %c0_162, %c0_163] : memref<1x16x16x4xf32, #tpu.memory_space<vmem>>, vector<1x1x16x4xf32>
    %171 = vector.shape_cast %170 : vector<1x1x16x4xf32> to vector<16x4xf32>
    %172 = vector.shape_cast %169 : vector<16x4xf32> to vector<1x1x16x4xf32>
    tpu.vector_store %arg9[%c0_161, %c9, %c0_162, %c0_163], %172 {strides = array<i32>} : memref<1x16x16x4xf32, #tpu.memory_space<vmem>>, vector<1x1x16x4xf32>,
    %173 = vector.extract_strided_slice %132 {offsets = [240, 0], sizes = [16, 4], strides = [1, 1]} : vector<384x4xf32> to vector<16x4xf32>
    %c0_164 = arith.constant 0 : index
    %c10 = arith.constant 10 : index
    %c0_165 = arith.constant 0 : index
    %c0_166 = arith.constant 0 : index
    %174 = vector.load %arg9[%c0_164, %c10, %c0_165, %c0_166] : memref<1x16x16x4xf32, #tpu.memory_space<vmem>>, vector<1x1x16x4xf32>
    %175 = vector.shape_cast %174 : vector<1x1x16x4xf32> to vector<16x4xf32>
    %176 = vector.shape_cast %173 : vector<16x4xf32> to vector<1x1x16x4xf32>
    tpu.vector_store %arg9[%c0_164, %c10, %c0_165, %c0_166], %176 {strides = array<i32>} : memref<1x16x16x4xf32, #tpu.memory_space<vmem>>, vector<1x1x16x4xf32>,
    %177 = vector.extract_strided_slice %132 {offsets = [264, 0], sizes = [16, 4], strides = [1, 1]} : vector<384x4xf32> to vector<16x4xf32>
    %c0_167 = arith.constant 0 : index
    %c11 = arith.constant 11 : index
    %c0_168 = arith.constant 0 : index
    %c0_169 = arith.constant 0 : index
    %178 = vector.load %arg9[%c0_167, %c11, %c0_168, %c0_169] : memref<1x16x16x4xf32, #tpu.memory_space<vmem>>, vector<1x1x16x4xf32>
    %179 = vector.shape_cast %178 : vector<1x1x16x4xf32> to vector<16x4xf32>
    %180 = vector.shape_cast %177 : vector<16x4xf32> to vector<1x1x16x4xf32>
    tpu.vector_store %arg9[%c0_167, %c11, %c0_168, %c0_169], %180 {strides = array<i32>} : memref<1x16x16x4xf32, #tpu.memory_space<vmem>>, vector<1x1x16x4xf32>,
    %181 = vector.extract_strided_slice %132 {offsets = [288, 0], sizes = [16, 4], strides = [1, 1]} : vector<384x4xf32> to vector<16x4xf32>
    %c0_170 = arith.constant 0 : index
    %c12 = arith.constant 12 : index
    %c0_171 = arith.constant 0 : index
    %c0_172 = arith.constant 0 : index
    %182 = vector.load %arg9[%c0_170, %c12, %c0_171, %c0_172] : memref<1x16x16x4xf32, #tpu.memory_space<vmem>>, vector<1x1x16x4xf32>
    %183 = vector.shape_cast %182 : vector<1x1x16x4xf32> to vector<16x4xf32>
    %184 = vector.shape_cast %181 : vector<16x4xf32> to vector<1x1x16x4xf32>
    tpu.vector_store %arg9[%c0_170, %c12, %c0_171, %c0_172], %184 {strides = array<i32>} : memref<1x16x16x4xf32, #tpu.memory_space<vmem>>, vector<1x1x16x4xf32>,
    %185 = vector.extract_strided_slice %132 {offsets = [312, 0], sizes = [16, 4], strides = [1, 1]} : vector<384x4xf32> to vector<16x4xf32>
    %c0_173 = arith.constant 0 : index
    %c13 = arith.constant 13 : index
    %c0_174 = arith.constant 0 : index
    %c0_175 = arith.constant 0 : index
    %186 = vector.load %arg9[%c0_173, %c13, %c0_174, %c0_175] : memref<1x16x16x4xf32, #tpu.memory_space<vmem>>, vector<1x1x16x4xf32>
    %187 = vector.shape_cast %186 : vector<1x1x16x4xf32> to vector<16x4xf32>
    %188 = vector.shape_cast %185 : vector<16x4xf32> to vector<1x1x16x4xf32>
    tpu.vector_store %arg9[%c0_173, %c13, %c0_174, %c0_175], %188 {strides = array<i32>} : memref<1x16x16x4xf32, #tpu.memory_space<vmem>>, vector<1x1x16x4xf32>,
    %189 = vector.extract_strided_slice %132 {offsets = [336, 0], sizes = [16, 4], strides = [1, 1]} : vector<384x4xf32> to vector<16x4xf32>
    %c0_176 = arith.constant 0 : index
    %c14 = arith.constant 14 : index
    %c0_177 = arith.constant 0 : index
    %c0_178 = arith.constant 0 : index
    %190 = vector.load %arg9[%c0_176, %c14, %c0_177, %c0_178] : memref<1x16x16x4xf32, #tpu.memory_space<vmem>>, vector<1x1x16x4xf32>
    %191 = vector.shape_cast %190 : vector<1x1x16x4xf32> to vector<16x4xf32>
    %192 = vector.shape_cast %189 : vector<16x4xf32> to vector<1x1x16x4xf32>
    tpu.vector_store %arg9[%c0_176, %c14, %c0_177, %c0_178], %192 {strides = array<i32>} : memref<1x16x16x4xf32, #tpu.memory_space<vmem>>, vector<1x1x16x4xf32>,
    %193 = vector.extract_strided_slice %132 {offsets = [360, 0], sizes = [16, 4], strides = [1, 1]} : vector<384x4xf32> to vector<16x4xf32>
    %c0_179 = arith.constant 0 : index
    %c15 = arith.constant 15 : index
    %c0_180 = arith.constant 0 : index
    %c0_181 = arith.constant 0 : index
    %194 = vector.load %arg9[%c0_179, %c15, %c0_180, %c0_181] : memref<1x16x16x4xf32, #tpu.memory_space<vmem>>, vector<1x1x16x4xf32>
    %195 = vector.shape_cast %194 : vector<1x1x16x4xf32> to vector<16x4xf32>
    %196 = vector.shape_cast %193 : vector<16x4xf32> to vector<1x1x16x4xf32>
    tpu.vector_store %arg9[%c0_179, %c15, %c0_180, %c0_181], %196 {strides = array<i32>} : memref<1x16x16x4xf32, #tpu.memory_space<vmem>>, vector<1x1x16x4xf32>,
    return
  }
  func.func @transform_0(%arg0: i32) -> (i32, i32, i32) {
    %c0_i32 = arith.constant 0 : i32
    %c0_i32_0 = arith.constant 0 : i32
    %c0_i32_1 = arith.constant 0 : i32
    return %arg0, %c0_i32, %c0_i32_0 : i32, i32, i32
  }
  func.func @transform_1(%arg0: i32) -> (i32, i32, i32) {
    %c0_i32 = arith.constant 0 : i32
    %c0_i32_0 = arith.constant 0 : i32
    %c0_i32_1 = arith.constant 0 : i32
    %c0_i32_2 = arith.constant 0 : i32
    return %c0_i32, %c0_i32_0, %c0_i32_1 : i32, i32, i32
  }
  func.func @transform_2(%arg0: i32) -> (i32, i32, i32) {
    %c0_i32 = arith.constant 0 : i32
    %c0_i32_0 = arith.constant 0 : i32
    %c0_i32_1 = arith.constant 0 : i32
    %c0_i32_2 = arith.constant 0 : i32
    return %c0_i32, %c0_i32_0, %c0_i32_1 : i32, i32, i32
  }
  func.func @transform_3(%arg0: i32) -> (i32, i32) {
    %c0_i32 = arith.constant 0 : i32
    %c0_i32_0 = arith.constant 0 : i32
    %c0_i32_1 = arith.constant 0 : i32
    return %c0_i32, %c0_i32_0 : i32, i32
  }
  func.func @transform_4(%arg0: i32) -> (i32, i32) {
    %c0_i32 = arith.constant 0 : i32
    %c0_i32_0 = arith.constant 0 : i32
    %c0_i32_1 = arith.constant 0 : i32
    return %c0_i32, %c0_i32_0 : i32, i32
  }
  func.func @transform_5(%arg0: i32) -> (i32, i32, i32) {
    %c0_i32 = arith.constant 0 : i32
    %c0_i32_0 = arith.constant 0 : i32
    %c0_i32_1 = arith.constant 0 : i32
    %c0_i32_2 = arith.constant 0 : i32
    return %c0_i32, %c0_i32_0, %c0_i32_1 : i32, i32, i32
  }
  func.func @transform_6(%arg0: i32) -> (i32, i32) {
    %c0_i32 = arith.constant 0 : i32
    %c0_i32_0 = arith.constant 0 : i32
    %c0_i32_1 = arith.constant 0 : i32
    return %c0_i32, %c0_i32_0 : i32, i32
  }
  func.func @transform_7(%arg0: i32) -> (i32, i32) {
    %c0_i32 = arith.constant 0 : i32
    %c0_i32_0 = arith.constant 0 : i32
    %c0_i32_1 = arith.constant 0 : i32
    return %c0_i32, %c0_i32_0 : i32, i32
  }
  func.func @transform_8(%arg0: i32) -> (i32, i32, i32, i32) {
    %c0_i32 = arith.constant 0 : i32
    %c0_i32_0 = arith.constant 0 : i32
    %c0_i32_1 = arith.constant 0 : i32
    %c0_i32_2 = arith.constant 0 : i32
    return %arg0, %c0_i32, %c0_i32_0, %c0_i32_1 : i32, i32, i32, i32
  }
}

</mosaic_0001>

<llo_original>
// kernel: tpu_custom_call.1
$region0: #{tpu_custom_call.1}
  #allocation0 [shape = 'u32[]', space=smem, size = 0x4, offset = 0x4, fixed_abs, tag = 'smem constant byte address 0x4 - core index']
  #allocation1 [shape = 'u32[144,128]{1,0:T(1,128)}', space=vmem, size = 0x12000, scoped, tag = 'internal scratch']
  #allocation2 [shape = 'f32[456,4]{1,0:T(8,128)}', space=vmem, size = 0x39000, scoped, tag = 'scratch operand']
  %s0 = inlined_call_operand.vmem [shape: f32[2,504,4], index: 0, kind: input, shape index: {}]
  %s1 = inlined_call_operand.vmem [shape: f32[1,432,1], index: 1, kind: input, shape index: {}]
  %s2 = inlined_call_operand.vmem [shape: f32[9,4,4], index: 2, kind: input, shape index: {}]
  %s3 = inlined_call_operand.vmem [shape: f32[1,4], index: 3, kind: input, shape index: {}]
  %s4 = inlined_call_operand.vmem [shape: f32[1,4], index: 4, kind: input, shape index: {}]
  %s5 = inlined_call_operand.vmem [shape: f32[9,4,4], index: 5, kind: input, shape index: {}]
  %s6 = inlined_call_operand.vmem [shape: f32[1,4], index: 6, kind: input, shape index: {}]
  %s7 = inlined_call_operand.vmem [shape: f32[1,4], index: 7, kind: input, shape index: {}]
  %s8 = inlined_call_operand.vmem [shape: f32[2,16,16,4], index: 8, kind: output, shape index: {}]
  %s9 = sld [smem:[#allocation0]]
  $region65: #{tpu_custom_call.1} parent=0
    _
  %s11 = ssub.s32 1, %s9
  %s12 = scalar_select 0, %s11, %s9
  loop: start=0, step=1, limit=4
  $region2: #{tpu_custom_call.1} parent=0 // loop_pre_header
    _
  $region3: #{tpu_custom_call.1} parent=0 // loop_header
    %s14 = sphi 0, %s18
    %p15 = scmp.ge.s32.totalorder %s14, 4
    %s24 = sphi 0, %s26
    %s27 = sphi 0, %s24
    %s28 = sphi 0, %s27
    %s44 = sphi 0, %s28
    %s48 = sphi 0, %s48
    %s50 = sphi 0, %s48
    %s51 = sphi 0, %s50
    %s65 = sphi 0, %s51
    %s69 = sphi 0, %s69
    %s71 = sphi 0, %s69
    %s72 = sphi 0, %s71
    %s86 = sphi 0, %s72
    %s90 = sphi 0, %s90
    %s92 = sphi 0, %s90
    %s93 = sphi 0, %s92
    %s107 = sphi 0, %s93
    %s111 = sphi 0, %s111
    %s113 = sphi 0, %s111
    %s114 = sphi 0, %s113
    %s128 = sphi 0, %s114
    %s132 = sphi 0, %s132
    %s134 = sphi 0, %s132
    %s135 = sphi 0, %s134
    %s149 = sphi 0, %s135
    %s153 = sphi 0, %s153
    %s155 = sphi 0, %s153
    %s156 = sphi 0, %s155
    %s170 = sphi 0, %s156
    %s174 = sphi 0, %s174
    %s176 = sphi 0, %s174
    %s177 = sphi 0, %s176
    %s191 = sphi 0, %s177
    %s197 = sphi 0, %s199
    %s200 = sphi 0, %s197
    %s201 = sphi 0, %s200
    %s217 = sphi 0, %s201
  $region4: #{tpu_custom_call.1} parent=0 // loop_header_branch
    %17 = sbr.rel (%p15) target = $region8
  $region5: #{tpu_custom_call.1} parent=0 // loop_body
    %s19 = ssub.s32 %s14, 1
    %s20 = ssub.s32 %s14, 2
    %s21 = sadd.s32 %s14, 1
    %s22 = ssub.s32 %s14, %s21
    %p23 = scmp.eq.s32.totalorder %s22, 0
    %s25 = sadd.s32 %s24, 1
    %s26 = scalar_select %p23, %s24, %s25
    %p29 = pneg %p23
    %p30 = scmp.eq.s32.totalorder %s14, 1
    %p31 = por %p29, %p30
    %p32 = scmp.ne.s32.totalorder %s24, %s27
    %p33 = scmp.eq.s32.totalorder %s14, 0
    %p34 = por %p32, %p33
    %p35 = scmp.ne.s32.totalorder %s24, %s27
    %p36 = scmp.eq.s32.totalorder %s19, 1
    %p37 = por %p35, %p36
    %p38 = scmp.ne.s32.totalorder %s27, %s28
    %p39 = scmp.eq.s32.totalorder %s19, 0
    %p40 = por %p38, %p39
    %p41 = scmp.ne.s32.totalorder %s27, %s28
    %p42 = scmp.eq.s32.totalorder %s20, 1
    %p43 = por %p41, %p42
    %p45 = scmp.ne.s32.totalorder %s28, %s44
    %p46 = scmp.eq.s32.totalorder %s20, 0
    %p47 = por %p45, %p46
    %s49 = sadd.s32 %s48, 1
    %p52 = scmp.eq.s32.totalorder %s14, 1
    %p53 = scmp.ne.s32.totalorder %s48, %s50
    %p54 = scmp.eq.s32.totalorder %s14, 0
    %p55 = por %p53, %p54
    %p56 = scmp.ne.s32.totalorder %s48, %s50
    %p57 = scmp.eq.s32.totalorder %s19, 1
    %p58 = por %p56, %p57
    %p59 = scmp.ne.s32.totalorder %s50, %s51
    %p60 = scmp.eq.s32.totalorder %s19, 0
    %p61 = por %p59, %p60
    %p62 = scmp.ne.s32.totalorder %s50, %s51
    %p63 = scmp.eq.s32.totalorder %s20, 1
    %p64 = por %p62, %p63
    %p66 = scmp.ne.s32.totalorder %s51, %s65
    %p67 = scmp.eq.s32.totalorder %s20, 0
    %p68 = por %p66, %p67
    %s70 = sadd.s32 %s69, 1
    %p73 = scmp.eq.s32.totalorder %s14, 1
    %p74 = scmp.ne.s32.totalorder %s69, %s71
    %p75 = scmp.eq.s32.totalorder %s14, 0
    %p76 = por %p74, %p75
    %p77 = scmp.ne.s32.totalorder %s69, %s71
    %p78 = scmp.eq.s32.totalorder %s19, 1
    %p79 = por %p77, %p78
    %p80 = scmp.ne.s32.totalorder %s71, %s72
    %p81 = scmp.eq.s32.totalorder %s19, 0
    %p82 = por %p80, %p81
    %p83 = scmp.ne.s32.totalorder %s71, %s72
    %p84 = scmp.eq.s32.totalorder %s20, 1
    %p85 = por %p83, %p84
    %p87 = scmp.ne.s32.totalorder %s72, %s86
    %p88 = scmp.eq.s32.totalorder %s20, 0
    %p89 = por %p87, %p88
    %s91 = sadd.s32 %s90, 1
    %p94 = scmp.eq.s32.totalorder %s14, 1
    %p95 = scmp.ne.s32.totalorder %s90, %s92
    %p96 = scmp.eq.s32.totalorder %s14, 0
    %p97 = por %p95, %p96
    %p98 = scmp.ne.s32.totalorder %s90, %s92
    %p99 = scmp.eq.s32.totalorder %s19, 1
    %p100 = por %p98, %p99
    %p101 = scmp.ne.s32.totalorder %s92, %s93
    %p102 = scmp.eq.s32.totalorder %s19, 0
    %p103 = por %p101, %p102
    %p104 = scmp.ne.s32.totalorder %s92, %s93
    %p105 = scmp.eq.s32.totalorder %s20, 1
    %p106 = por %p104, %p105
    %p108 = scmp.ne.s32.totalorder %s93, %s107
    %p109 = scmp.eq.s32.totalorder %s20, 0
    %p110 = por %p108, %p109
    %s112 = sadd.s32 %s111, 1
    %p115 = scmp.eq.s32.totalorder %s14, 1
    %p116 = scmp.ne.s32.totalorder %s111, %s113
    %p117 = scmp.eq.s32.totalorder %s14, 0
    %p118 = por %p116, %p117
    %p119 = scmp.ne.s32.totalorder %s111, %s113
    %p120 = scmp.eq.s32.totalorder %s19, 1
    %p121 = por %p119, %p120
    %p122 = scmp.ne.s32.totalorder %s113, %s114
    %p123 = scmp.eq.s32.totalorder %s19, 0
    %p124 = por %p122, %p123
    %p125 = scmp.ne.s32.totalorder %s113, %s114
    %p126 = scmp.eq.s32.totalorder %s20, 1
    %p127 = por %p125, %p126
    %p129 = scmp.ne.s32.totalorder %s114, %s128
    %p130 = scmp.eq.s32.totalorder %s20, 0
    %p131 = por %p129, %p130
    %s133 = sadd.s32 %s132, 1
    %p136 = scmp.eq.s32.totalorder %s14, 1
    %p137 = scmp.ne.s32.totalorder %s132, %s134
    %p138 = scmp.eq.s32.totalorder %s14, 0
    %p139 = por %p137, %p138
    %p140 = scmp.ne.s32.totalorder %s132, %s134
    %p141 = scmp.eq.s32.totalorder %s19, 1
    %p142 = por %p140, %p141
    %p143 = scmp.ne.s32.totalorder %s134, %s135
    %p144 = scmp.eq.s32.totalorder %s19, 0
    %p145 = por %p143, %p144
    %p146 = scmp.ne.s32.totalorder %s134, %s135
    %p147 = scmp.eq.s32.totalorder %s20, 1
    %p148 = por %p146, %p147
    %p150 = scmp.ne.s32.totalorder %s135, %s149
    %p151 = scmp.eq.s32.totalorder %s20, 0
    %p152 = por %p150, %p151
    %s154 = sadd.s32 %s153, 1
    %p157 = scmp.eq.s32.totalorder %s14, 1
    %p158 = scmp.ne.s32.totalorder %s153, %s155
    %p159 = scmp.eq.s32.totalorder %s14, 0
    %p160 = por %p158, %p159
    %p161 = scmp.ne.s32.totalorder %s153, %s155
    %p162 = scmp.eq.s32.totalorder %s19, 1
    %p163 = por %p161, %p162
    %p164 = scmp.ne.s32.totalorder %s155, %s156
    %p165 = scmp.eq.s32.totalorder %s19, 0
    %p166 = por %p164, %p165
    %p167 = scmp.ne.s32.totalorder %s155, %s156
    %p168 = scmp.eq.s32.totalorder %s20, 1
    %p169 = por %p167, %p168
    %p171 = scmp.ne.s32.totalorder %s156, %s170
    %p172 = scmp.eq.s32.totalorder %s20, 0
    %p173 = por %p171, %p172
    %s175 = sadd.s32 %s174, 1
    %p178 = scmp.eq.s32.totalorder %s14, 1
    %p179 = scmp.ne.s32.totalorder %s174, %s176
    %p180 = scmp.eq.s32.totalorder %s14, 0
    %p181 = por %p179, %p180
    %p182 = scmp.ne.s32.totalorder %s174, %s176
    %p183 = scmp.eq.s32.totalorder %s19, 1
    %p184 = por %p182, %p183
    %p185 = scmp.ne.s32.totalorder %s176, %s177
    %p186 = scmp.eq.s32.totalorder %s19, 0
    %p187 = por %p185, %p186
    %p188 = scmp.ne.s32.totalorder %s176, %s177
    %p189 = scmp.eq.s32.totalorder %s20, 1
    %p190 = por %p188, %p189
    %p192 = scmp.ne.s32.totalorder %s177, %s191
    %p193 = scmp.eq.s32.totalorder %s20, 0
    %p194 = por %p192, %p193
    %s195 = ssub.s32 %s14, %s21
    %p196 = scmp.eq.s32.totalorder %s195, 0
    %s198 = sadd.s32 %s197, 1
    %s199 = scalar_select %p196, %s197, %s198
    %p202 = pneg %p196
    %p203 = scmp.eq.s32.totalorder %s14, 1
    %p204 = por %p202, %p203
    %p205 = scmp.ne.s32.totalorder %s197, %s200
    %p206 = scmp.eq.s32.totalorder %s14, 0
    %p207 = por %p205, %p206
    %p208 = scmp.ne.s32.totalorder %s197, %s200
    %p209 = scmp.eq.s32.totalorder %s19, 1
    %p210 = por %p208, %p209
    %p211 = scmp.ne.s32.totalorder %s200, %s201
    %p212 = scmp.eq.s32.totalorder %s19, 0
    %p213 = por %p211, %p212
    %p214 = scmp.ne.s32.totalorder %s200, %s201
    %p215 = scmp.eq.s32.totalorder %s20, 1
    %p216 = por %p214, %p215
    %p218 = scmp.ne.s32.totalorder %s201, %s217
    %p219 = scmp.eq.s32.totalorder %s20, 0
    %p220 = por %p218, %p219
    %p221 = scmp.le.s32.totalorder 1, %s14
    %p222 = scmp.lt.s32.totalorder %s14, 3
    %p223 = pnand %p221, %p222
    %p224 = pneg %p223
    // Predicated region
    $region9: #{tpu_custom_call.1} parent=5 // pred_check
      _
    $region10: #{tpu_custom_call.1} parent=5 // pred_check_branch
      %226 = sbr.rel (%p223) target = $region12
    $region11: #{tpu_custom_call.1} parent=5 // pred_region
      %s227 = ssub.s32 %s14, 1
      // Predicated region
      $region13: #{tpu_custom_call.1} parent=11 // pred_check
        %p228 = pneg %p61
      $region14: #{tpu_custom_call.1} parent=11 // pred_check_branch
        %230 = sbr.rel (%p228) target = $region16
      $region15: #{tpu_custom_call.1} parent=11 // pred_region
        _
      $region16: #{tpu_custom_call.1} parent=11 // pred_fallthru
        _
      // Predicated region
      $region17: #{tpu_custom_call.1} parent=11 // pred_check
        %p231 = pneg %p82
      $region18: #{tpu_custom_call.1} parent=11 // pred_check_branch
        %233 = sbr.rel (%p231) target = $region20
      $region19: #{tpu_custom_call.1} parent=11 // pred_region
        _
      $region20: #{tpu_custom_call.1} parent=11 // pred_fallthru
        _
      // Predicated region
      $region21: #{tpu_custom_call.1} parent=11 // pred_check
        %p234 = pneg %p103
      $region22: #{tpu_custom_call.1} parent=11 // pred_check_branch
        %236 = sbr.rel (%p234) target = $region24
      $region23: #{tpu_custom_call.1} parent=11 // pred_region
        _
      $region24: #{tpu_custom_call.1} parent=11 // pred_fallthru
        _
      // Predicated region
      $region25: #{tpu_custom_call.1} parent=11 // pred_check
        %p237 = pneg %p124
      $region26: #{tpu_custom_call.1} parent=11 // pred_check_branch
        %239 = sbr.rel (%p237) target = $region28
      $region27: #{tpu_custom_call.1} parent=11 // pred_region
        _
      $region28: #{tpu_custom_call.1} parent=11 // pred_fallthru
        _
      // Predicated region
      $region29: #{tpu_custom_call.1} parent=11 // pred_check
        %p240 = pneg %p145
      $region30: #{tpu_custom_call.1} parent=11 // pred_check_branch
        %242 = sbr.rel (%p240) target = $region32
      $region31: #{tpu_custom_call.1} parent=11 // pred_region
        _
      $region32: #{tpu_custom_call.1} parent=11 // pred_fallthru
        _
      // Predicated region
      $region33: #{tpu_custom_call.1} parent=11 // pred_check
        %p243 = pneg %p166
      $region34: #{tpu_custom_call.1} parent=11 // pred_check_branch
        %245 = sbr.rel (%p243) target = $region36
      $region35: #{tpu_custom_call.1} parent=11 // pred_region
        _
      $region36: #{tpu_custom_call.1} parent=11 // pred_fallthru
        _
      // Predicated region
      $region37: #{tpu_custom_call.1} parent=11 // pred_check
        %p246 = pneg %p187
      $region38: #{tpu_custom_call.1} parent=11 // pred_check_branch
        %248 = sbr.rel (%p246) target = $region40
      $region39: #{tpu_custom_call.1} parent=11 // pred_region
        _
      $region40: #{tpu_custom_call.1} parent=11 // pred_fallthru
        _
    $region12: #{tpu_custom_call.1} parent=5 // pred_fallthru
      _
    %p249 = scmp.lt.s32.totalorder %s14, 2
    // Predicated region
    $region41: #{tpu_custom_call.1} parent=5 // pred_check
      %p250 = pneg %p249
    $region42: #{tpu_custom_call.1} parent=5 // pred_check_branch
      %252 = sbr.rel (%p250) target = $region44
    $region43: #{tpu_custom_call.1} parent=5 // pred_region
      // Predicated region
      $region45: #{tpu_custom_call.1} parent=43 // pred_check
        %p253 = pneg %p34
      $region46: #{tpu_custom_call.1} parent=43 // pred_check_branch
        %255 = sbr.rel (%p253) target = $region48
      $region47: #{tpu_custom_call.1} parent=43 // pred_region
        %p256 = scmp.lt.s32.totalorder %s14, 1
        %s257 = scalar_select %p256, %s14, 1
        %s258 = smul.addr %s257, 63
        %s259 = smul.addr %s258, 8
        %s260 = scalar_lea.vmem %s0, %s259
      $region48: #{tpu_custom_call.1} parent=43 // pred_fallthru
        _
    $region44: #{tpu_custom_call.1} parent=5 // pred_fallthru
      _
    %p261 = scmp.le.s32.totalorder 1, %s14
    %p262 = scmp.lt.s32.totalorder %s14, 3
    %p263 = pnand %p261, %p262
    %p264 = pneg %p263
    // Predicated region
    $region49: #{tpu_custom_call.1} parent=5 // pred_check
      _
    $region50: #{tpu_custom_call.1} parent=5 // pred_check_branch
      %266 = sbr.rel (%p263) target = $region52
    $region51: #{tpu_custom_call.1} parent=5 // pred_region
      %s267 = ssub.s32 %s14, 1
      %p268 = scmp.lt.s32.totalorder %s19, 1
      %s269 = scalar_select %p268, %s19, 1
      %s270 = smul.addr %s269, 63
      %s271 = smul.addr %s270, 8
      %s272 = scalar_lea.vmem %s0, %s271
      %p273 = pneg %p40
      %p274 = pneg %p37
      %p275 = pneg %p61
      %p276 = pneg %p58
      %p277 = pneg %p82
      %p278 = pneg %p79
      %p279 = pneg %p103
      %p280 = pneg %p100
      %p281 = pneg %p124
      %p282 = pneg %p121
      %p283 = pneg %p145
      %p284 = pneg %p142
      %p285 = pneg %p166
      %p286 = pneg %p163
      %p287 = pneg %p187
      %p288 = pneg %p184
      %p289 = pneg %p213
      %p290 = pneg %p210
      %p291 = scmp.lt.s32.totalorder %s19, 1
      %s292 = scalar_select %p291, %s19, 1
      %s293 = smul.addr %s292, 32
      %s294 = smul.addr %s293, 8
      %s295 = scalar_lea.vmem %s8, %s294
      %p296 = scmp.lt.s32.totalorder %s19, 1
      %s297 = scalar_select %p296, %s19, 1
      %s298 = smul.addr %s297, 63
      %s299 = smul.addr %s298, 8
      %s300 = scalar_lea.vmem %s0, %s299
      %p301 = scmp.lt.s32.totalorder %s19, 1
      %s302 = scalar_select %p301, %s19, 1
      %s303 = smul.addr %s302, 32
      %s304 = smul.addr %s303, 8
      %s305 = scalar_lea.vmem %s8, %s304
      %v306 = vld [vmem:[%s300] sm:$0xff]
      %v307 = vld [vmem:[%s300 + $0x8] sm:$0xff]
      %v308 = vld [vmem:[%s300 + $0x10] sm:$0xff]
      %v309 = vld [vmem:[%s300 + $0x18] sm:$0xff]
      %v310 = vld [vmem:[%s300 + $0x20] sm:$0xff]
      %v311 = vld [vmem:[%s300 + $0x28] sm:$0xff]
      %v312 = vld [vmem:[%s300 + $0x30] sm:$0xff]
      %v313 = vld [vmem:[%s300 + $0x38] sm:$0xff]
      %v314 = vld [vmem:[%s300 + $0x40] sm:$0xff]
      %v315 = vld [vmem:[%s300 + $0x48] sm:$0xff]
      %v316 = vld [vmem:[%s300 + $0x50] sm:$0xff]
      %v317 = vld [vmem:[%s300 + $0x58] sm:$0xff]
      %v318 = vld [vmem:[%s300 + $0x60] sm:$0xff]
      %v319 = vld [vmem:[%s300 + $0x68] sm:$0xff]
      %v320 = vld [vmem:[%s300 + $0x70] sm:$0xff]
      %v321 = vld [vmem:[%s300 + $0x78] sm:$0xff]
      %v322 = vld [vmem:[%s300 + $0x80] sm:$0xff]
      %v323 = vld [vmem:[%s300 + $0x88] sm:$0xff]
      %v324 = vld [vmem:[%s300 + $0x90] sm:$0xff]
      %v325 = vld [vmem:[%s300 + $0x98] sm:$0xff]
      %v326 = vld [vmem:[%s300 + $0xa0] sm:$0xff]
      %v327 = vld [vmem:[%s300 + $0xa8] sm:$0xff]
      %v328 = vld [vmem:[%s300 + $0xb0] sm:$0xff]
      %v329 = vld [vmem:[%s300 + $0xb8] sm:$0xff]
      %v330 = vld [vmem:[%s300 + $0xc0] sm:$0xff]
      %v331 = vld [vmem:[%s300 + $0xc8] sm:$0xff]
      %v332 = vld [vmem:[%s300 + $0xd0] sm:$0xff]
      %v333 = vld [vmem:[%s300 + $0xd8] sm:$0xff]
      %v334 = vld [vmem:[%s300 + $0xe0] sm:$0xff]
      %v335 = vld [vmem:[%s300 + $0xe8] sm:$0xff]
      %v336 = vld [vmem:[%s300 + $0xf0] sm:$0xff]
      %v337 = vld [vmem:[%s300 + $0xf8] sm:$0xff]
      %v338 = vld [vmem:[%s300 + $0x100] sm:$0xff]
      %v339 = vld [vmem:[%s300 + $0x108] sm:$0xff]
      %v340 = vld [vmem:[%s300 + $0x110] sm:$0xff]
      %v341 = vld [vmem:[%s300 + $0x118] sm:$0xff]
      %v342 = vld [vmem:[%s300 + $0x120] sm:$0xff]
      %v343 = vld [vmem:[%s300 + $0x128] sm:$0xff]
      %v344 = vld [vmem:[%s300 + $0x130] sm:$0xff]
      %v345 = vld [vmem:[%s300 + $0x138] sm:$0xff]
      %v346 = vld [vmem:[%s300 + $0x140] sm:$0xff]
      %v347 = vld [vmem:[%s300 + $0x148] sm:$0xff]
      %v348 = vld [vmem:[%s300 + $0x150] sm:$0xff]
      %v349 = vld [vmem:[%s300 + $0x158] sm:$0xff]
      %v350 = vld [vmem:[%s300 + $0x160] sm:$0xff]
      %v351 = vld [vmem:[%s300 + $0x168] sm:$0xff]
      %v352 = vld [vmem:[%s300 + $0x170] sm:$0xff]
      %v353 = vld [vmem:[%s300 + $0x178] sm:$0xff]
      %v354 = vld [vmem:[%s300 + $0x180] sm:$0xff]
      %v355 = vld [vmem:[%s300 + $0x188] sm:$0xff]
      %v356 = vld [vmem:[%s300 + $0x190] sm:$0xff]
      %v357 = vld [vmem:[%s300 + $0x198] sm:$0xff]
      %v358 = vld [vmem:[%s300 + $0x1a0] sm:$0xff]
      %v359 = vld [vmem:[%s300 + $0x1a8] sm:$0xff]
      %v360 = vld [vmem:[%s2] sm:$0xf]
      %v361 = vld [vmem:[%s300 + $0x1] sm:$0xff]
      %v362 = vld [vmem:[%s300 + $0x9] sm:$0xff]
      %v363 = vld [vmem:[%s300 + $0x11] sm:$0xff]
      %v364 = vld [vmem:[%s300 + $0x19] sm:$0xff]
      %v365 = vld [vmem:[%s300 + $0x21] sm:$0xff]
      %v366 = vld [vmem:[%s300 + $0x29] sm:$0xff]
      %v367 = vld [vmem:[%s300 + $0x31] sm:$0xff]
      %v368 = vld [vmem:[%s300 + $0x39] sm:$0xff]
      %v369 = vld [vmem:[%s300 + $0x41] sm:$0xff]
      %v370 = vld [vmem:[%s300 + $0x49] sm:$0xff]
      %v371 = vld [vmem:[%s300 + $0x51] sm:$0xff]
      %v372 = vld [vmem:[%s300 + $0x59] sm:$0xff]
      %v373 = vld [vmem:[%s300 + $0x61] sm:$0xff]
      %v374 = vld [vmem:[%s300 + $0x69] sm:$0xff]
      %v375 = vld [vmem:[%s300 + $0x71] sm:$0xff]
      %v376 = vld [vmem:[%s300 + $0x79] sm:$0xff]
      %v377 = vld [vmem:[%s300 + $0x81] sm:$0xff]
      %v378 = vld [vmem:[%s300 + $0x89] sm:$0xff]
      %v379 = vld [vmem:[%s300 + $0x91] sm:$0xff]
      %v380 = vld [vmem:[%s300 + $0x99] sm:$0xff]
      %v381 = vld [vmem:[%s300 + $0xa1] sm:$0xff]
      %v382 = vld [vmem:[%s300 + $0xa9] sm:$0xff]
      %v383 = vld [vmem:[%s300 + $0xb1] sm:$0xff]
      %v384 = vld [vmem:[%s300 + $0xb9] sm:$0xff]
      %v385 = vld [vmem:[%s300 + $0xc1] sm:$0xff]
      %v386 = vld [vmem:[%s300 + $0xc9] sm:$0xff]
      %v387 = vld [vmem:[%s300 + $0xd1] sm:$0xff]
      %v388 = vld [vmem:[%s300 + $0xd9] sm:$0xff]
      %v389 = vld [vmem:[%s300 + $0xe1] sm:$0xff]
      %v390 = vld [vmem:[%s300 + $0xe9] sm:$0xff]
      %v391 = vld [vmem:[%s300 + $0xf1] sm:$0xff]
      %v392 = vld [vmem:[%s300 + $0xf9] sm:$0xff]
      %v393 = vld [vmem:[%s300 + $0x101] sm:$0xff]
      %v394 = vld [vmem:[%s300 + $0x109] sm:$0xff]
      %v395 = vld [vmem:[%s300 + $0x111] sm:$0xff]
      %v396 = vld [vmem:[%s300 + $0x119] sm:$0xff]
      %v397 = vld [vmem:[%s300 + $0x121] sm:$0xff]
      %v398 = vld [vmem:[%s300 + $0x129] sm:$0xff]
      %v399 = vld [vmem:[%s300 + $0x131] sm:$0xff]
      %v400 = vld [vmem:[%s300 + $0x139] sm:$0xff]
      %v401 = vld [vmem:[%s300 + $0x141] sm:$0xff]
      %v402 = vld [vmem:[%s300 + $0x149] sm:$0xff]
      %v403 = vld [vmem:[%s300 + $0x151] sm:$0xff]
      %v404 = vld [vmem:[%s300 + $0x159] sm:$0xff]
      %v405 = vld [vmem:[%s300 + $0x161] sm:$0xff]
      %v406 = vld [vmem:[%s300 + $0x169] sm:$0xff]
      %v407 = vld [vmem:[%s300 + $0x171] sm:$0xff]
      %v408 = vld [vmem:[%s300 + $0x179] sm:$0xff]
      %v409 = vld [vmem:[%s300 + $0x181] sm:$0xff]
      %v410 = vld [vmem:[%s300 + $0x189] sm:$0xff]
      %v411 = vld [vmem:[%s300 + $0x191] sm:$0xff]
      %v412 = vld [vmem:[%s300 + $0x199] sm:$0xff]
      %v413 = vld [vmem:[%s300 + $0x1a1] sm:$0xff]
      %v414 = vld [vmem:[%s300 + $0x1a9] sm:$0xff]
      %s415 = scalar_lea.vmem %s2, 4
      %v416 = vld [vmem:[%s415] sm:$0xf]
      %vm417 = vcmask 31744
      %v419 = vsel %vm417, %v361, 0
      %v422 = vsel %vm417, %v362, 0
      %v425 = vsel %vm417, %v363, 0
      %v428 = vsel %vm417, %v364, 0
      %v431 = vsel %vm417, %v365, 0
      %v434 = vsel %vm417, %v366, 0
      %v437 = vsel %vm417, %v367, 0
      %v440 = vsel %vm417, %v368, 0
      %v443 = vsel %vm417, %v369, 0
      %v446 = vsel %vm417, %v370, 0
      %v449 = vsel %vm417, %v371, 0
      %v452 = vsel %vm417, %v372, 0
      %v455 = vsel %vm417, %v373, 0
      %v458 = vsel %vm417, %v374, 0
      %v461 = vsel %vm417, %v375, 0
      %v464 = vsel %vm417, %v376, 0
      %v467 = vsel %vm417, %v377, 0
      %v470 = vsel %vm417, %v378, 0
      %v473 = vsel %vm417, %v379, 0
      %v476 = vsel %vm417, %v380, 0
      %v479 = vsel %vm417, %v381, 0
      %v482 = vsel %vm417, %v382, 0
      %v485 = vsel %vm417, %v383, 0
      %v488 = vsel %vm417, %v384, 0
      %v491 = vsel %vm417, %v385, 0
      %v494 = vsel %vm417, %v386, 0
      %v497 = vsel %vm417, %v387, 0
      %v500 = vsel %vm417, %v388, 0
      %v503 = vsel %vm417, %v389, 0
      %v506 = vsel %vm417, %v390, 0
      %v509 = vsel %vm417, %v391, 0
      %v512 = vsel %vm417, %v392, 0
      %v515 = vsel %vm417, %v393, 0
      %v518 = vsel %vm417, %v394, 0
      %v521 = vsel %vm417, %v395, 0
      %v524 = vsel %vm417, %v396, 0
      %v527 = vsel %vm417, %v397, 0
      %v530 = vsel %vm417, %v398, 0
      %v533 = vsel %vm417, %v399, 0
      %v536 = vsel %vm417, %v400, 0
      %v539 = vsel %vm417, %v401, 0
      %v542 = vsel %vm417, %v402, 0
      %v545 = vsel %vm417, %v403, 0
      %v548 = vsel %vm417, %v404, 0
      %v551 = vsel %vm417, %v405, 0
      %v554 = vsel %vm417, %v406, 0
      %v557 = vsel %vm417, %v407, 0
      %v560 = vsel %vm417, %v408, 0
      %v563 = vsel %vm417, %v409, 0
      %v566 = vsel %vm417, %v410, 0
      %v569 = vsel %vm417, %v411, 0
      %v572 = vsel %vm417, %v412, 0
      %v575 = vsel %vm417, %v413, 0
      %v578 = vsel %vm417, %v414, 0
      %vm580 = vcmask 1043456
      %v582 = vsel %vm580, %v416, 0
      %584 = vmatprep.subr.mxu0 0.0
      %585 = vmatpush1.msra.mxu0 %v582
      %586 = vmatprep.subr.mxu0 0.0
      %587 = vmatpush1.msra.mxu0 0.0
      %588 = vmatprep.subr.mxu0 0.0
      %589 = vmatpush1.msra.mxu0 0.0
      %590 = vmatprep.subr.mxu0 0.0
      %591 = vmatpush1.msra.mxu0 0.0
      %592 = vmatprep.subr.mxu0 0.0
      %593 = vmatpush1.msra.mxu0 0.0
      %594 = vmatprep.subr.mxu0 0.0
      %595 = vmatpush1.msra.mxu0 0.0
      %596 = vmatprep.subr.mxu0 0.0
      %597 = vmatpush1.msra.mxu0 0.0
      %598 = vmatprep.subr.mxu0 0.0
      %599 = vmatpush1.msra.mxu0 0.0
      %600 = vmatprep.subr.mxu0 0.0
      %601 = vmatpush1.msra.mxu0 0.0
      %602 = vmatprep.subr.mxu0 0.0
      %603 = vmatpush1.msra.mxu0 0.0
      %604 = vmatprep.subr.mxu0 0.0
      %605 = vmatpush1.msra.mxu0 0.0
      %606 = vmatprep.subr.mxu0 0.0
      %607 = vmatpush1.msra.mxu0 0.0
      %608 = vmatprep.subr.mxu0 0.0
      %609 = vmatpush1.msra.mxu0 0.0
      %610 = vmatprep.subr.mxu0 0.0
      %611 = vmatpush1.msra.mxu0 0.0
      %612 = vmatprep.subr.mxu0 0.0
      %613 = vmatpush1.msra.mxu0 0.0
      %614 = vmatprep.subr.mxu0 0.0
      %615 = vmatpush1.msra.mxu0 0.0
      %616 = vmatprep.subr.mxu0 0.0
      %617 = vmatpush1.msra.mxu0 0.0
      %618 = vmatprep.subr.mxu0 0.0
      %619 = vmatpush1.msra.mxu0 0.0
      %620 = vmatprep.subr.mxu0 0.0
      %621 = vmatpush1.msra.mxu0 0.0
      %622 = vmatprep.subr.mxu0 0.0
      %623 = vmatpush1.msra.mxu0 0.0
      %624 = vmatprep.subr.mxu0 0.0
      %625 = vmatpush1.msra.mxu0 0.0
      %626 = vmatprep.subr.mxu0 0.0
      %627 = vmatpush1.msra.mxu0 0.0
      %628 = vmatprep.subr.mxu0 0.0
      %629 = vmatpush1.msra.mxu0 0.0
      %630 = vmatprep.subr.mxu0 0.0
      %631 = vmatpush1.msra.mxu0 0.0
      %632 = vmatprep.subr.mxu0 0.0
      %633 = vmatpush1.msra.mxu0 0.0
      %634 = vmatprep.subr.mxu0 0.0
      %635 = vmatpush1.msra.mxu0 0.0
      %636 = vmatprep.subr.mxu0 0.0
      %637 = vmatpush1.msra.mxu0 0.0
      %638 = vmatprep.subr.mxu0 0.0
      %639 = vmatpush1.msra.mxu0 0.0
      %640 = vmatprep.subr.mxu0 0.0
      %641 = vmatpush1.msra.mxu0 0.0
      %642 = vmatprep.subr.mxu0 0.0
      %643 = vmatpush1.msra.mxu0 0.0
      %644 = vmatprep.subr.mxu0 0.0
      %645 = vmatpush1.msra.mxu0 0.0
      %646 = vmatprep.subr.mxu0 0.0
      %647 = vmatpush1.msra.mxu0 0.0
      %648 = vmatprep.mubr.f32.mxu0 0.0
      %649 = vmatmul.mubr.f32.gmra.mrb[0].mxu0 %v419
      %v650 = vpop.f32.mrb[0].mxu0
      %v651 = vadd.f32 0.0, %v650
      %v652 = vpop.f32.mrb[0].mxu0
      %653 = vmatprep.mubr.f32.mxu0 0.0
      %654 = vmatmul.mubr.f32.gmra.mrb[0].mxu0 %v422
      %v655 = vpop.f32.mrb[0].mxu0
      %v656 = vadd.f32 0.0, %v655
      %v657 = vpop.f32.mrb[0].mxu0
      %658 = vmatprep.mubr.f32.mxu0 0.0
      %659 = vmatmul.mubr.f32.gmra.mrb[0].mxu0 %v425
      %v660 = vpop.f32.mrb[0].mxu0
      %v661 = vadd.f32 0.0, %v660
      %v662 = vpop.f32.mrb[0].mxu0
      %663 = vmatprep.mubr.f32.mxu0 0.0
      %664 = vmatmul.mubr.f32.gmra.mrb[0].mxu0 %v428
      %v665 = vpop.f32.mrb[0].mxu0
      %v666 = vadd.f32 0.0, %v665
      %v667 = vpop.f32.mrb[0].mxu0
      %668 = vmatprep.mubr.f32.mxu0 0.0
      %669 = vmatmul.mubr.f32.gmra.mrb[0].mxu0 %v431
      %v670 = vpop.f32.mrb[0].mxu0
      %v671 = vadd.f32 0.0, %v670
      %v672 = vpop.f32.mrb[0].mxu0
      %673 = vmatprep.mubr.f32.mxu0 0.0
      %674 = vmatmul.mubr.f32.gmra.mrb[0].mxu0 %v434
      %v675 = vpop.f32.mrb[0].mxu0
      %v676 = vadd.f32 0.0, %v675
      %v677 = vpop.f32.mrb[0].mxu0
      %678 = vmatprep.mubr.f32.mxu0 0.0
      %679 = vmatmul.mubr.f32.gmra.mrb[0].mxu0 %v437
      %v680 = vpop.f32.mrb[0].mxu0
      %v681 = vadd.f32 0.0, %v680
      %v682 = vpop.f32.mrb[0].mxu0
      %683 = vmatprep.mubr.f32.mxu0 0.0
      %684 = vmatmul.mubr.f32.gmra.mrb[0].mxu0 %v440
      %v685 = vpop.f32.mrb[0].mxu0
      %v686 = vadd.f32 0.0, %v685
      %v687 = vpop.f32.mrb[0].mxu0
      %688 = vmatprep.mubr.f32.mxu0 0.0
      %689 = vmatmul.mubr.f32.gmra.mrb[0].mxu0 %v443
      %v690 = vpop.f32.mrb[0].mxu0
      %v691 = vadd.f32 0.0, %v690
      %v692 = vpop.f32.mrb[0].mxu0
      %693 = vmatprep.mubr.f32.mxu0 0.0
      %694 = vmatmul.mubr.f32.gmra.mrb[0].mxu0 %v446
      %v695 = vpop.f32.mrb[0].mxu0
      %v696 = vadd.f32 0.0, %v695
      %v697 = vpop.f32.mrb[0].mxu0
      %698 = vmatprep.mubr.f32.mxu0 0.0
      %699 = vmatmul.mubr.f32.gmra.mrb[0].mxu0 %v449
      %v700 = vpop.f32.mrb[0].mxu0
      %v701 = vadd.f32 0.0, %v700
      %v702 = vpop.f32.mrb[0].mxu0
      %703 = vmatprep.mubr.f32.mxu0 0.0
      %704 = vmatmul.mubr.f32.gmra.mrb[0].mxu0 %v452
      %v705 = vpop.f32.mrb[0].mxu0
      %v706 = vadd.f32 0.0, %v705
      %v707 = vpop.f32.mrb[0].mxu0
      %708 = vmatprep.mubr.f32.mxu0 0.0
      %709 = vmatmul.mubr.f32.gmra.mrb[0].mxu0 %v455
      %v710 = vpop.f32.mrb[0].mxu0
      %v711 = vadd.f32 0.0, %v710
      %v712 = vpop.f32.mrb[0].mxu0
      %713 = vmatprep.mubr.f32.mxu0 0.0
      %714 = vmatmul.mubr.f32.gmra.mrb[0].mxu0 %v458
      %v715 = vpop.f32.mrb[0].mxu0
      %v716 = vadd.f32 0.0, %v715
      %v717 = vpop.f32.mrb[0].mxu0
      %718 = vmatprep.mubr.f32.mxu0 0.0
      %719 = vmatmul.mubr.f32.gmra.mrb[0].mxu0 %v461
      %v720 = vpop.f32.mrb[0].mxu0
      %v721 = vadd.f32 0.0, %v720
      %v722 = vpop.f32.mrb[0].mxu0
      %723 = vmatprep.mubr.f32.mxu0 0.0
      %724 = vmatmul.mubr.f32.gmra.mrb[0].mxu0 %v464
      %v725 = vpop.f32.mrb[0].mxu0
      %v726 = vadd.f32 0.0, %v725
      %v727 = vpop.f32.mrb[0].mxu0
      %728 = vmatprep.mubr.f32.mxu0 0.0
      %729 = vmatmul.mubr.f32.gmra.mrb[0].mxu0 %v467
      %v730 = vpop.f32.mrb[0].mxu0
      %v731 = vadd.f32 0.0, %v730
      %v732 = vpop.f32.mrb[0].mxu0
      %733 = vmatprep.mubr.f32.mxu0 0.0
      %734 = vmatmul.mubr.f32.gmra.mrb[0].mxu0 %v470
      %v735 = vpop.f32.mrb[0].mxu0
      %v736 = vadd.f32 0.0, %v735
      %v737 = vpop.f32.mrb[0].mxu0
      %738 = vmatprep.mubr.f32.mxu0 0.0
      %739 = vmatmul.mubr.f32.gmra.mrb[0].mxu0 %v473
      %v740 = vpop.f32.mrb[0].mxu0
      %v741 = vadd.f32 0.0, %v740
      %v742 = vpop.f32.mrb[0].mxu0
      %743 = vmatprep.mubr.f32.mxu0 0.0
      %744 = vmatmul.mubr.f32.gmra.mrb[0].mxu0 %v476
      %v745 = vpop.f32.mrb[0].mxu0
      %v746 = vadd.f32 0.0, %v745
      %v747 = vpop.f32.mrb[0].mxu0
      %748 = vmatprep.mubr.f32.mxu0 0.0
      %749 = vmatmul.mubr.f32.gmra.mrb[0].mxu0 %v479
      %v750 = vpop.f32.mrb[0].mxu0
      %v751 = vadd.f32 0.0, %v750
      %v752 = vpop.f32.mrb[0].mxu0
      %753 = vmatprep.mubr.f32.mxu0 0.0
      %754 = vmatmul.mubr.f32.gmra.mrb[0].mxu0 %v482
      %v755 = vpop.f32.mrb[0].mxu0
      %v756 = vadd.f32 0.0, %v755
      %v757 = vpop.f32.mrb[0].mxu0
      %758 = vmatprep.mubr.f32.mxu0 0.0
      %759 = vmatmul.mubr.f32.gmra.mrb[0].mxu0 %v485
      %v760 = vpop.f32.mrb[0].mxu0
      %v761 = vadd.f32 0.0, %v760
      %v762 = vpop.f32.mrb[0].mxu0
      %763 = vmatprep.mubr.f32.mxu0 0.0
      %764 = vmatmul.mubr.f32.gmra.mrb[0].mxu0 %v488
      %v765 = vpop.f32.mrb[0].mxu0
      %v766 = vadd.f32 0.0, %v765
      %v767 = vpop.f32.mrb[0].mxu0
      %768 = vmatprep.mubr.f32.mxu0 0.0
      %769 = vmatmul.mubr.f32.gmra.mrb[0].mxu0 %v491
      %v770 = vpop.f32.mrb[0].mxu0
      %v771 = vadd.f32 0.0, %v770
      %v772 = vpop.f32.mrb[0].mxu0
      %773 = vmatprep.mubr.f32.mxu0 0.0
      %774 = vmatmul.mubr.f32.gmra.mrb[0].mxu0 %v494
      %v775 = vpop.f32.mrb[0].mxu0
      %v776 = vadd.f32 0.0, %v775
      %v777 = vpop.f32.mrb[0].mxu0
      %778 = vmatprep.mubr.f32.mxu0 0.0
      %779 = vmatmul.mubr.f32.gmra.mrb[0].mxu0 %v497
      %v780 = vpop.f32.mrb[0].mxu0
      %v781 = vadd.f32 0.0, %v780
      %v782 = vpop.f32.mrb[0].mxu0
      %783 = vmatprep.mubr.f32.mxu0 0.0
      %784 = vmatmul.mubr.f32.gmra.mrb[0].mxu0 %v500
      %v785 = vpop.f32.mrb[0].mxu0
      %v786 = vadd.f32 0.0, %v785
      %v787 = vpop.f32.mrb[0].mxu0
      %788 = vmatprep.mubr.f32.mxu0 0.0
      %789 = vmatmul.mubr.f32.gmra.mrb[0].mxu0 %v503
      %v790 = vpop.f32.mrb[0].mxu0
      %v791 = vadd.f32 0.0, %v790
      %v792 = vpop.f32.mrb[0].mxu0
      %793 = vmatprep.mubr.f32.mxu0 0.0
      %794 = vmatmul.mubr.f32.gmra.mrb[0].mxu0 %v506
      %v795 = vpop.f32.mrb[0].mxu0
      %v796 = vadd.f32 0.0, %v795
      %v797 = vpop.f32.mrb[0].mxu0
      %798 = vmatprep.mubr.f32.mxu0 0.0
      %799 = vmatmul.mubr.f32.gmra.mrb[0].mxu0 %v509
      %v800 = vpop.f32.mrb[0].mxu0
      %v801 = vadd.f32 0.0, %v800
      %v802 = vpop.f32.mrb[0].mxu0
      %803 = vmatprep.mubr.f32.mxu0 0.0
      %804 = vmatmul.mubr.f32.gmra.mrb[0].mxu0 %v512
      %v805 = vpop.f32.mrb[0].mxu0
      %v806 = vadd.f32 0.0, %v805
      %v807 = vpop.f32.mrb[0].mxu0
      %808 = vmatprep.mubr.f32.mxu0 0.0
      %809 = vmatmul.mubr.f32.gmra.mrb[0].mxu0 %v515
      %v810 = vpop.f32.mrb[0].mxu0
      %v811 = vadd.f32 0.0, %v810
      %v812 = vpop.f32.mrb[0].mxu0
      %813 = vmatprep.mubr.f32.mxu0 0.0
      %814 = vmatmul.mubr.f32.gmra.mrb[0].mxu0 %v518
      %v815 = vpop.f32.mrb[0].mxu0
      %v816 = vadd.f32 0.0, %v815
      %v817 = vpop.f32.mrb[0].mxu0
      %818 = vmatprep.mubr.f32.mxu0 0.0
      %819 = vmatmul.mubr.f32.gmra.mrb[0].mxu0 %v521
      %v820 = vpop.f32.mrb[0].mxu0
      %v821 = vadd.f32 0.0, %v820
      %v822 = vpop.f32.mrb[0].mxu0
      %823 = vmatprep.mubr.f32.mxu0 0.0
      %824 = vmatmul.mubr.f32.gmra.mrb[0].mxu0 %v524
      %v825 = vpop.f32.mrb[0].mxu0
      %v826 = vadd.f32 0.0, %v825
      %v827 = vpop.f32.mrb[0].mxu0
      %828 = vmatprep.mubr.f32.mxu0 0.0
      %829 = vmatmul.mubr.f32.gmra.mrb[0].mxu0 %v527
      %v830 = vpop.f32.mrb[0].mxu0
      %v831 = vadd.f32 0.0, %v830
      %v832 = vpop.f32.mrb[0].mxu0
      %833 = vmatprep.mubr.f32.mxu0 0.0
      %834 = vmatmul.mubr.f32.gmra.mrb[0].mxu0 %v530
      %v835 = vpop.f32.mrb[0].mxu0
      %v836 = vadd.f32 0.0, %v835
      %v837 = vpop.f32.mrb[0].mxu0
      %838 = vmatprep.mubr.f32.mxu0 0.0
      %839 = vmatmul.mubr.f32.gmra.mrb[0].mxu0 %v533
      %v840 = vpop.f32.mrb[0].mxu0
      %v841 = vadd.f32 0.0, %v840
      %v842 = vpop.f32.mrb[0].mxu0
      %843 = vmatprep.mubr.f32.mxu0 0.0
      %844 = vmatmul.mubr.f32.gmra.mrb[0].mxu0 %v536
      %v845 = vpop.f32.mrb[0].mxu0
      %v846 = vadd.f32 0.0, %v845
      %v847 = vpop.f32.mrb[0].mxu0
      %848 = vmatprep.mubr.f32.mxu0 0.0
      %849 = vmatmul.mubr.f32.gmra.mrb[0].mxu0 %v539
      %v850 = vpop.f32.mrb[0].mxu0
      %v851 = vadd.f32 0.0, %v850
      %v852 = vpop.f32.mrb[0].mxu0
      %853 = vmatprep.mubr.f32.mxu0 0.0
      %854 = vmatmul.mubr.f32.gmra.mrb[0].mxu0 %v542
      %v855 = vpop.f32.mrb[0].mxu0
      %v856 = vadd.f32 0.0, %v855
      %v857 = vpop.f32.mrb[0].mxu0
      %858 = vmatprep.mubr.f32.mxu0 0.0
      %859 = vmatmul.mubr.f32.gmra.mrb[0].mxu0 %v545
      %v860 = vpop.f32.mrb[0].mxu0
      %v861 = vadd.f32 0.0, %v860
      %v862 = vpop.f32.mrb[0].mxu0
      %863 = vmatprep.mubr.f32.mxu0 0.0
      %864 = vmatmul.mubr.f32.gmra.mrb[0].mxu0 %v548
      %v865 = vpop.f32.mrb[0].mxu0
      %v866 = vadd.f32 0.0, %v865
      %v867 = vpop.f32.mrb[0].mxu0
      %868 = vmatprep.mubr.f32.mxu0 0.0
      %869 = vmatmul.mubr.f32.gmra.mrb[0].mxu0 %v551
      %v870 = vpop.f32.mrb[0].mxu0
      %v871 = vadd.f32 0.0, %v870
      %v872 = vpop.f32.mrb[0].mxu0
      %873 = vmatprep.mubr.f32.mxu0 0.0
      %874 = vmatmul.mubr.f32.gmra.mrb[0].mxu0 %v554
      %v875 = vpop.f32.mrb[0].mxu0
      %v876 = vadd.f32 0.0, %v875
      %v877 = vpop.f32.mrb[0].mxu0
      %878 = vmatprep.mubr.f32.mxu0 0.0
      %879 = vmatmul.mubr.f32.gmra.mrb[0].mxu0 %v557
      %v880 = vpop.f32.mrb[0].mxu0
      %v881 = vadd.f32 0.0, %v880
      %v882 = vpop.f32.mrb[0].mxu0
      %883 = vmatprep.mubr.f32.mxu0 0.0
      %884 = vmatmul.mubr.f32.gmra.mrb[0].mxu0 %v560
      %v885 = vpop.f32.mrb[0].mxu0
      %v886 = vadd.f32 0.0, %v885
      %v887 = vpop.f32.mrb[0].mxu0
      %888 = vmatprep.mubr.f32.mxu0 0.0
      %889 = vmatmul.mubr.f32.gmra.mrb[0].mxu0 %v563
      %v890 = vpop.f32.mrb[0].mxu0
      %v891 = vadd.f32 0.0, %v890
      %v892 = vpop.f32.mrb[0].mxu0
      %893 = vmatprep.mubr.f32.mxu0 0.0
      %894 = vmatmul.mubr.f32.gmra.mrb[0].mxu0 %v566
      %v895 = vpop.f32.mrb[0].mxu0
      %v896 = vadd.f32 0.0, %v895
      %v897 = vpop.f32.mrb[0].mxu0
      %898 = vmatprep.mubr.f32.mxu0 0.0
      %899 = vmatmul.mubr.f32.gmra.mrb[0].mxu0 %v569
      %v900 = vpop.f32.mrb[0].mxu0
      %v901 = vadd.f32 0.0, %v900
      %v902 = vpop.f32.mrb[0].mxu0
      %903 = vmatprep.mubr.f32.mxu0 0.0
      %904 = vmatmul.mubr.f32.gmra.mrb[0].mxu0 %v572
      %v905 = vpop.f32.mrb[0].mxu0
      %v906 = vadd.f32 0.0, %v905
      %v907 = vpop.f32.mrb[0].mxu0
      %908 = vmatprep.mubr.f32.mxu0 0.0
      %909 = vmatmul.mubr.f32.gmra.mrb[0].mxu0 %v575
      %v910 = vpop.f32.mrb[0].mxu0
      %v911 = vadd.f32 0.0, %v910
      %v912 = vpop.f32.mrb[0].mxu0
      %913 = vmatprep.mubr.f32.mxu0 0.0
      %914 = vmatmul.mubr.f32.gmra.mrb[0].mxu0 %v578
      %v915 = vpop.f32.mrb[0].mxu0
      %v916 = vadd.f32 0.0, %v915
      %v917 = vpop.f32.mrb[0].mxu0
      %918 = vdwg.mxu0
      %v920 = vsel %vm417, %v306, 0
      %v923 = vsel %vm417, %v307, 0
      %v926 = vsel %vm417, %v308, 0
      %v929 = vsel %vm417, %v309, 0
      %v932 = vsel %vm417, %v310, 0
      %v935 = vsel %vm417, %v311, 0
      %v938 = vsel %vm417, %v312, 0
      %v941 = vsel %vm417, %v313, 0
      %v944 = vsel %vm417, %v314, 0
      %v947 = vsel %vm417, %v315, 0
      %v950 = vsel %vm417, %v316, 0
      %v953 = vsel %vm417, %v317, 0
      %v956 = vsel %vm417, %v318, 0
      %v959 = vsel %vm417, %v319, 0
      %v962 = vsel %vm417, %v320, 0
      %v965 = vsel %vm417, %v321, 0
      %v968 = vsel %vm417, %v322, 0
      %v971 = vsel %vm417, %v323, 0
      %v974 = vsel %vm417, %v324, 0
      %v977 = vsel %vm417, %v325, 0
      %v980 = vsel %vm417, %v326, 0
      %v983 = vsel %vm417, %v327, 0
      %v986 = vsel %vm417, %v328, 0
      %v989 = vsel %vm417, %v329, 0
      %v992 = vsel %vm417, %v330, 0
      %v995 = vsel %vm417, %v331, 0
      %v998 = vsel %vm417, %v332, 0
      %v1001 = vsel %vm417, %v333, 0
      %v1004 = vsel %vm417, %v334, 0
      %v1007 = vsel %vm417, %v335, 0
      %v1010 = vsel %vm417, %v336, 0
      %v1013 = vsel %vm417, %v337, 0
      %v1016 = vsel %vm417, %v338, 0
      %v1019 = vsel %vm417, %v339, 0
      %v1022 = vsel %vm417, %v340, 0
      %v1025 = vsel %vm417, %v341, 0
      %v1028 = vsel %vm417, %v342, 0
      %v1031 = vsel %vm417, %v343, 0
      %v1034 = vsel %vm417, %v344, 0
      %v1037 = vsel %vm417, %v345, 0
      %v1040 = vsel %vm417, %v346, 0
      %v1043 = vsel %vm417, %v347, 0
      %v1046 = vsel %vm417, %v348, 0
      %v1049 = vsel %vm417, %v349, 0
      %v1052 = vsel %vm417, %v350, 0
      %v1055 = vsel %vm417, %v351, 0
      %v1058 = vsel %vm417, %v352, 0
      %v1061 = vsel %vm417, %v353, 0
      %v1064 = vsel %vm417, %v354, 0
      %v1067 = vsel %vm417, %v355, 0
      %v1070 = vsel %vm417, %v356, 0
      %v1073 = vsel %vm417, %v357, 0
      %v1076 = vsel %vm417, %v358, 0
      %v1079 = vsel %vm417, %v359, 0
      %v1082 = vsel %vm580, %v360, 0
      %1084 = vmatprep.subr.mxu0 0.0
      %1085 = vmatpush1.msra.mxu0 %v1082
      %1086 = vmatprep.subr.mxu0 0.0
      %1087 = vmatpush1.msra.mxu0 0.0
      %1088 = vmatprep.subr.mxu0 0.0
      %1089 = vmatpush1.msra.mxu0 0.0
      %1090 = vmatprep.subr.mxu0 0.0
      %1091 = vmatpush1.msra.mxu0 0.0
      %1092 = vmatprep.subr.mxu0 0.0
      %1093 = vmatpush1.msra.mxu0 0.0
      %1094 = vmatprep.subr.mxu0 0.0
      %1095 = vmatpush1.msra.mxu0 0.0
      %1096 = vmatprep.subr.mxu0 0.0
      %1097 = vmatpush1.msra.mxu0 0.0
      %1098 = vmatprep.subr.mxu0 0.0
      %1099 = vmatpush1.msra.mxu0 0.0
      %1100 = vmatprep.subr.mxu0 0.0
      %1101 = vmatpush1.msra.mxu0 0.0
      %1102 = vmatprep.subr.mxu0 0.0
      %1103 = vmatpush1.msra.mxu0 0.0
      %1104 = vmatprep.subr.mxu0 0.0
      %1105 = vmatpush1.msra.mxu0 0.0
      %1106 = vmatprep.subr.mxu0 0.0
      %1107 = vmatpush1.msra.mxu0 0.0
      %1108 = vmatprep.subr.mxu0 0.0
      %1109 = vmatpush1.msra.mxu0 0.0
      %1110 = vmatprep.subr.mxu0 0.0
      %1111 = vmatpush1.msra.mxu0 0.0
      %1112 = vmatprep.subr.mxu0 0.0
      %1113 = vmatpush1.msra.mxu0 0.0
      %1114 = vmatprep.subr.mxu0 0.0
      %1115 = vmatpush1.msra.mxu0 0.0
      %1116 = vmatprep.subr.mxu0 0.0
      %1117 = vmatpush1.msra.mxu0 0.0
      %1118 = vmatprep.subr.mxu0 0.0
      %1119 = vmatpush1.msra.mxu0 0.0
      %1120 = vmatprep.subr.mxu0 0.0
      %1121 = vmatpush1.msra.mxu0 0.0
      %1122 = vmatprep.subr.mxu0 0.0
      %1123 = vmatpush1.msra.mxu0 0.0
      %1124 = vmatprep.subr.mxu0 0.0
      %1125 = vmatpush1.msra.mxu0 0.0
      %1126 = vmatprep.subr.mxu0 0.0
      %1127 = vmatpush1.msra.mxu0 0.0
      %1128 = vmatprep.subr.mxu0 0.0
      %1129 = vmatpush1.msra.mxu0 0.0
      %1130 = vmatprep.subr.mxu0 0.0
      %1131 = vmatpush1.msra.mxu0 0.0
      %1132 = vmatprep.subr.mxu0 0.0
      %1133 = vmatpush1.msra.mxu0 0.0
      %1134 = vmatprep.subr.mxu0 0.0
      %1135 = vmatpush1.msra.mxu0 0.0
      %1136 = vmatprep.subr.mxu0 0.0
      %1137 = vmatpush1.msra.mxu0 0.0
      %1138 = vmatprep.subr.mxu0 0.0
      %1139 = vmatpush1.msra.mxu0 0.0
      %1140 = vmatprep.subr.mxu0 0.0
      %1141 = vmatpush1.msra.mxu0 0.0
      %1142 = vmatprep.subr.mxu0 0.0
      %1143 = vmatpush1.msra.mxu0 0.0
      %1144 = vmatprep.subr.mxu0 0.0
      %1145 = vmatpush1.msra.mxu0 0.0
      %1146 = vmatprep.subr.mxu0 0.0
      %1147 = vmatpush1.msra.mxu0 0.0
      %1148 = vmatprep.mubr.f32.mxu0 0.0
      %1149 = vmatmul.mubr.f32.gmra.mrb[0].mxu0 %v920
      %v1150 = vpop.f32.mrb[0].mxu0
      %v1151 = vadd.f32 %v651, %v1150
      %v1152 = vpop.f32.mrb[0].mxu0
      %1153 = vmatprep.mubr.f32.mxu0 0.0
      %1154 = vmatmul.mubr.f32.gmra.mrb[0].mxu0 %v923
      %v1155 = vpop.f32.mrb[0].mxu0
      %v1156 = vadd.f32 %v656, %v1155
      %v1157 = vpop.f32.mrb[0].mxu0
      %1158 = vmatprep.mubr.f32.mxu0 0.0
      %1159 = vmatmul.mubr.f32.gmra.mrb[0].mxu0 %v926
      %v1160 = vpop.f32.mrb[0].mxu0
      %v1161 = vadd.f32 %v661, %v1160
      %v1162 = vpop.f32.mrb[0].mxu0
      %1163 = vmatprep.mubr.f32.mxu0 0.0
      %1164 = vmatmul.mubr.f32.gmra.mrb[0].mxu0 %v929
      %v1165 = vpop.f32.mrb[0].mxu0
      %v1166 = vadd.f32 %v666, %v1165
      %v1167 = vpop.f32.mrb[0].mxu0
      %1168 = vmatprep.mubr.f32.mxu0 0.0
      %1169 = vmatmul.mubr.f32.gmra.mrb[0].mxu0 %v932
      %v1170 = vpop.f32.mrb[0].mxu0
      %v1171 = vadd.f32 %v671, %v1170
      %v1172 = vpop.f32.mrb[0].mxu0
      %1173 = vmatprep.mubr.f32.mxu0 0.0
      %1174 = vmatmul.mubr.f32.gmra.mrb[0].mxu0 %v935
      %v1175 = vpop.f32.mrb[0].mxu0
      %v1176 = vadd.f32 %v676, %v1175
      %v1177 = vpop.f32.mrb[0].mxu0
      %1178 = vmatprep.mubr.f32.mxu0 0.0
      %1179 = vmatmul.mubr.f32.gmra.mrb[0].mxu0 %v938
      %v1180 = vpop.f32.mrb[0].mxu0
      %v1181 = vadd.f32 %v681, %v1180
      %v1182 = vpop.f32.mrb[0].mxu0
      %1183 = vmatprep.mubr.f32.mxu0 0.0
      %1184 = vmatmul.mubr.f32.gmra.mrb[0].mxu0 %v941
      %v1185 = vpop.f32.mrb[0].mxu0
      %v1186 = vadd.f32 %v686, %v1185
      %v1187 = vpop.f32.mrb[0].mxu0
      %1188 = vmatprep.mubr.f32.mxu0 0.0
      %1189 = vmatmul.mubr.f32.gmra.mrb[0].mxu0 %v944
      %v1190 = vpop.f32.mrb[0].mxu0
      %v1191 = vadd.f32 %v691, %v1190
      %v1192 = vpop.f32.mrb[0].mxu0
      %1193 = vmatprep.mubr.f32.mxu0 0.0
      %1194 = vmatmul.mubr.f32.gmra.mrb[0].mxu0 %v947
      %v1195 = vpop.f32.mrb[0].mxu0
      %v1196 = vadd.f32 %v696, %v1195
      %v1197 = vpop.f32.mrb[0].mxu0
      %1198 = vmatprep.mubr.f32.mxu0 0.0
      %1199 = vmatmul.mubr.f32.gmra.mrb[0].mxu0 %v950
      %v1200 = vpop.f32.mrb[0].mxu0
      %v1201 = vadd.f32 %v701, %v1200
      %v1202 = vpop.f32.mrb[0].mxu0
      %1203 = vmatprep.mubr.f32.mxu0 0.0
      %1204 = vmatmul.mubr.f32.gmra.mrb[0].mxu0 %v953
      %v1205 = vpop.f32.mrb[0].mxu0
      %v1206 = vadd.f32 %v706, %v1205
      %v1207 = vpop.f32.mrb[0].mxu0
      %1208 = vmatprep.mubr.f32.mxu0 0.0
      %1209 = vmatmul.mubr.f32.gmra.mrb[0].mxu0 %v956
      %v1210 = vpop.f32.mrb[0].mxu0
      %v1211 = vadd.f32 %v711, %v1210
      %v1212 = vpop.f32.mrb[0].mxu0
      %1213 = vmatprep.mubr.f32.mxu0 0.0
      %1214 = vmatmul.mubr.f32.gmra.mrb[0].mxu0 %v959
      %v1215 = vpop.f32.mrb[0].mxu0
      %v1216 = vadd.f32 %v716, %v1215
      %v1217 = vpop.f32.mrb[0].mxu0
      %1218 = vmatprep.mubr.f32.mxu0 0.0
      %1219 = vmatmul.mubr.f32.gmra.mrb[0].mxu0 %v962
      %v1220 = vpop.f32.mrb[0].mxu0
      %v1221 = vadd.f32 %v721, %v1220
      %v1222 = vpop.f32.mrb[0].mxu0
      %1223 = vmatprep.mubr.f32.mxu0 0.0
      %1224 = vmatmul.mubr.f32.gmra.mrb[0].mxu0 %v965
      %v1225 = vpop.f32.mrb[0].mxu0
      %v1226 = vadd.f32 %v726, %v1225
      %v1227 = vpop.f32.mrb[0].mxu0
      %1228 = vmatprep.mubr.f32.mxu0 0.0
      %1229 = vmatmul.mubr.f32.gmra.mrb[0].mxu0 %v968
      %v1230 = vpop.f32.mrb[0].mxu0
      %v1231 = vadd.f32 %v731, %v1230
      %v1232 = vpop.f32.mrb[0].mxu0
      %1233 = vmatprep.mubr.f32.mxu0 0.0
      %1234 = vmatmul.mubr.f32.gmra.mrb[0].mxu0 %v971
      %v1235 = vpop.f32.mrb[0].mxu0
      %v1236 = vadd.f32 %v736, %v1235
      %v1237 = vpop.f32.mrb[0].mxu0
      %1238 = vmatprep.mubr.f32.mxu0 0.0
      %1239 = vmatmul.mubr.f32.gmra.mrb[0].mxu0 %v974
      %v1240 = vpop.f32.mrb[0].mxu0
      %v1241 = vadd.f32 %v741, %v1240
      %v1242 = vpop.f32.mrb[0].mxu0
      %1243 = vmatprep.mubr.f32.mxu0 0.0
      %1244 = vmatmul.mubr.f32.gmra.mrb[0].mxu0 %v977
      %v1245 = vpop.f32.mrb[0].mxu0
      %v1246 = vadd.f32 %v746, %v1245
      %v1247 = vpop.f32.mrb[0].mxu0
      %1248 = vmatprep.mubr.f32.mxu0 0.0
      %1249 = vmatmul.mubr.f32.gmra.mrb[0].mxu0 %v980
      %v1250 = vpop.f32.mrb[0].mxu0
      %v1251 = vadd.f32 %v751, %v1250
      %v1252 = vpop.f32.mrb[0].mxu0
      %1253 = vmatprep.mubr.f32.mxu0 0.0
      %1254 = vmatmul.mubr.f32.gmra.mrb[0].mxu0 %v983
      %v1255 = vpop.f32.mrb[0].mxu0
      %v1256 = vadd.f32 %v756, %v1255
      %v1257 = vpop.f32.mrb[0].mxu0
      %1258 = vmatprep.mubr.f32.mxu0 0.0
      %1259 = vmatmul.mubr.f32.gmra.mrb[0].mxu0 %v986
      %v1260 = vpop.f32.mrb[0].mxu0
      %v1261 = vadd.f32 %v761, %v1260
      %v1262 = vpop.f32.mrb[0].mxu0
      %1263 = vmatprep.mubr.f32.mxu0 0.0
      %1264 = vmatmul.mubr.f32.gmra.mrb[0].mxu0 %v989
      %v1265 = vpop.f32.mrb[0].mxu0
      %v1266 = vadd.f32 %v766, %v1265
      %v1267 = vpop.f32.mrb[0].mxu0
      %1268 = vmatprep.mubr.f32.mxu0 0.0
      %1269 = vmatmul.mubr.f32.gmra.mrb[0].mxu0 %v992
      %v1270 = vpop.f32.mrb[0].mxu0
      %v1271 = vadd.f32 %v771, %v1270
      %v1272 = vpop.f32.mrb[0].mxu0
      %1273 = vmatprep.mubr.f32.mxu0 0.0
      %1274 = vmatmul.mubr.f32.gmra.mrb[0].mxu0 %v995
      %v1275 = vpop.f32.mrb[0].mxu0
      %v1276 = vadd.f32 %v776, %v1275
      %v1277 = vpop.f32.mrb[0].mxu0
      %1278 = vmatprep.mubr.f32.mxu0 0.0
      %1279 = vmatmul.mubr.f32.gmra.mrb[0].mxu0 %v998
      %v1280 = vpop.f32.mrb[0].mxu0
      %v1281 = vadd.f32 %v781, %v1280
      %v1282 = vpop.f32.mrb[0].mxu0
      %1283 = vmatprep.mubr.f32.mxu0 0.0
      %1284 = vmatmul.mubr.f32.gmra.mrb[0].mxu0 %v1001
      %v1285 = vpop.f32.mrb[0].mxu0
      %v1286 = vadd.f32 %v786, %v1285
      %v1287 = vpop.f32.mrb[0].mxu0
      %1288 = vmatprep.mubr.f32.mxu0 0.0
      %1289 = vmatmul.mubr.f32.gmra.mrb[0].mxu0 %v1004
      %v1290 = vpop.f32.mrb[0].mxu0
      %v1291 = vadd.f32 %v791, %v1290
      %v1292 = vpop.f32.mrb[0].mxu0
      %1293 = vmatprep.mubr.f32.mxu0 0.0
      %1294 = vmatmul.mubr.f32.gmra.mrb[0].mxu0 %v1007
      %v1295 = vpop.f32.mrb[0].mxu0
      %v1296 = vadd.f32 %v796, %v1295
      %v1297 = vpop.f32.mrb[0].mxu0
      %1298 = vmatprep.mubr.f32.mxu0 0.0
      %1299 = vmatmul.mubr.f32.gmra.mrb[0].mxu0 %v1010
      %v1300 = vpop.f32.mrb[0].mxu0
      %v1301 = vadd.f32 %v801, %v1300
      %v1302 = vpop.f32.mrb[0].mxu0
      %1303 = vmatprep.mubr.f32.mxu0 0.0
      %1304 = vmatmul.mubr.f32.gmra.mrb[0].mxu0 %v1013
      %v1305 = vpop.f32.mrb[0].mxu0
      %v1306 = vadd.f32 %v806, %v1305
      %v1307 = vpop.f32.mrb[0].mxu0
      %1308 = vmatprep.mubr.f32.mxu0 0.0
      %1309 = vmatmul.mubr.f32.gmra.mrb[0].mxu0 %v1016
      %v1310 = vpop.f32.mrb[0].mxu0
      %v1311 = vadd.f32 %v811, %v1310
      %v1312 = vpop.f32.mrb[0].mxu0
      %1313 = vmatprep.mubr.f32.mxu0 0.0
      %1314 = vmatmul.mubr.f32.gmra.mrb[0].mxu0 %v1019
      %v1315 = vpop.f32.mrb[0].mxu0
      %v1316 = vadd.f32 %v816, %v1315
      %v1317 = vpop.f32.mrb[0].mxu0
      %1318 = vmatprep.mubr.f32.mxu0 0.0
      %1319 = vmatmul.mubr.f32.gmra.mrb[0].mxu0 %v1022
      %v1320 = vpop.f32.mrb[0].mxu0
      %v1321 = vadd.f32 %v821, %v1320
      %v1322 = vpop.f32.mrb[0].mxu0
      %1323 = vmatprep.mubr.f32.mxu0 0.0
      %1324 = vmatmul.mubr.f32.gmra.mrb[0].mxu0 %v1025
      %v1325 = vpop.f32.mrb[0].mxu0
      %v1326 = vadd.f32 %v826, %v1325
      %v1327 = vpop.f32.mrb[0].mxu0
      %1328 = vmatprep.mubr.f32.mxu0 0.0
      %1329 = vmatmul.mubr.f32.gmra.mrb[0].mxu0 %v1028
      %v1330 = vpop.f32.mrb[0].mxu0
      %v1331 = vadd.f32 %v831, %v1330
      %v1332 = vpop.f32.mrb[0].mxu0
      %1333 = vmatprep.mubr.f32.mxu0 0.0
      %1334 = vmatmul.mubr.f32.gmra.mrb[0].mxu0 %v1031
      %v1335 = vpop.f32.mrb[0].mxu0
      %v1336 = vadd.f32 %v836, %v1335
      %v1337 = vpop.f32.mrb[0].mxu0
      %1338 = vmatprep.mubr.f32.mxu0 0.0
      %1339 = vmatmul.mubr.f32.gmra.mrb[0].mxu0 %v1034
      %v1340 = vpop.f32.mrb[0].mxu0
      %v1341 = vadd.f32 %v841, %v1340
      %v1342 = vpop.f32.mrb[0].mxu0
      %1343 = vmatprep.mubr.f32.mxu0 0.0
      %1344 = vmatmul.mubr.f32.gmra.mrb[0].mxu0 %v1037
      %v1345 = vpop.f32.mrb[0].mxu0
      %v1346 = vadd.f32 %v846, %v1345
      %v1347 = vpop.f32.mrb[0].mxu0
      %1348 = vmatprep.mubr.f32.mxu0 0.0
      %1349 = vmatmul.mubr.f32.gmra.mrb[0].mxu0 %v1040
      %v1350 = vpop.f32.mrb[0].mxu0
      %v1351 = vadd.f32 %v851, %v1350
      %v1352 = vpop.f32.mrb[0].mxu0
      %1353 = vmatprep.mubr.f32.mxu0 0.0
      %1354 = vmatmul.mubr.f32.gmra.mrb[0].mxu0 %v1043
      %v1355 = vpop.f32.mrb[0].mxu0
      %v1356 = vadd.f32 %v856, %v1355
      %v1357 = vpop.f32.mrb[0].mxu0
      %1358 = vmatprep.mubr.f32.mxu0 0.0
      %1359 = vmatmul.mubr.f32.gmra.mrb[0].mxu0 %v1046
      %v1360 = vpop.f32.mrb[0].mxu0
      %v1361 = vadd.f32 %v861, %v1360
      %v1362 = vpop.f32.mrb[0].mxu0
      %1363 = vmatprep.mubr.f32.mxu0 0.0
      %1364 = vmatmul.mubr.f32.gmra.mrb[0].mxu0 %v1049
      %v1365 = vpop.f32.mrb[0].mxu0
      %v1366 = vadd.f32 %v866, %v1365
      %v1367 = vpop.f32.mrb[0].mxu0
      %1368 = vmatprep.mubr.f32.mxu0 0.0
      %1369 = vmatmul.mubr.f32.gmra.mrb[0].mxu0 %v1052
      %v1370 = vpop.f32.mrb[0].mxu0
      %v1371 = vadd.f32 %v871, %v1370
      %v1372 = vpop.f32.mrb[0].mxu0
      %1373 = vmatprep.mubr.f32.mxu0 0.0
      %1374 = vmatmul.mubr.f32.gmra.mrb[0].mxu0 %v1055
      %v1375 = vpop.f32.mrb[0].mxu0
      %v1376 = vadd.f32 %v876, %v1375
      %v1377 = vpop.f32.mrb[0].mxu0
      %1378 = vmatprep.mubr.f32.mxu0 0.0
      %1379 = vmatmul.mubr.f32.gmra.mrb[0].mxu0 %v1058
      %v1380 = vpop.f32.mrb[0].mxu0
      %v1381 = vadd.f32 %v881, %v1380
      %v1382 = vpop.f32.mrb[0].mxu0
      %1383 = vmatprep.mubr.f32.mxu0 0.0
      %1384 = vmatmul.mubr.f32.gmra.mrb[0].mxu0 %v1061
      %v1385 = vpop.f32.mrb[0].mxu0
      %v1386 = vadd.f32 %v886, %v1385
      %v1387 = vpop.f32.mrb[0].mxu0
      %1388 = vmatprep.mubr.f32.mxu0 0.0
      %1389 = vmatmul.mubr.f32.gmra.mrb[0].mxu0 %v1064
      %v1390 = vpop.f32.mrb[0].mxu0
      %v1391 = vadd.f32 %v891, %v1390
      %v1392 = vpop.f32.mrb[0].mxu0
      %1393 = vmatprep.mubr.f32.mxu0 0.0
      %1394 = vmatmul.mubr.f32.gmra.mrb[0].mxu0 %v1067
      %v1395 = vpop.f32.mrb[0].mxu0
      %v1396 = vadd.f32 %v896, %v1395
      %v1397 = vpop.f32.mrb[0].mxu0
      %1398 = vmatprep.mubr.f32.mxu0 0.0
      %1399 = vmatmul.mubr.f32.gmra.mrb[0].mxu0 %v1070
      %v1400 = vpop.f32.mrb[0].mxu0
      %v1401 = vadd.f32 %v901, %v1400
      %v1402 = vpop.f32.mrb[0].mxu0
      %1403 = vmatprep.mubr.f32.mxu0 0.0
      %1404 = vmatmul.mubr.f32.gmra.mrb[0].mxu0 %v1073
      %v1405 = vpop.f32.mrb[0].mxu0
      %v1406 = vadd.f32 %v906, %v1405
      %v1407 = vpop.f32.mrb[0].mxu0
      %1408 = vmatprep.mubr.f32.mxu0 0.0
      %1409 = vmatmul.mubr.f32.gmra.mrb[0].mxu0 %v1076
      %v1410 = vpop.f32.mrb[0].mxu0
      %v1411 = vadd.f32 %v911, %v1410
      %v1412 = vpop.f32.mrb[0].mxu0
      %1413 = vmatprep.mubr.f32.mxu0 0.0
      %1414 = vmatmul.mubr.f32.gmra.mrb[0].mxu0 %v1079
      %v1415 = vpop.f32.mrb[0].mxu0
      %v1416 = vadd.f32 %v916, %v1415
      %v1417 = vpop.f32.mrb[0].mxu0
      %1418 = vdwg.mxu0
      %v1419 = vld [vmem:[%s300 + $0x2] sm:$0xff]
      %v1420 = vld [vmem:[%s300 + $0xa] sm:$0xff]
      %v1421 = vld [vmem:[%s300 + $0x12] sm:$0xff]
      %v1422 = vld [vmem:[%s300 + $0x1a] sm:$0xff]
      %v1423 = vld [vmem:[%s300 + $0x22] sm:$0xff]
      %v1424 = vld [vmem:[%s300 + $0x2a] sm:$0xff]
      %v1425 = vld [vmem:[%s300 + $0x32] sm:$0xff]
      %v1426 = vld [vmem:[%s300 + $0x3a] sm:$0xff]
      %v1427 = vld [vmem:[%s300 + $0x42] sm:$0xff]
      %v1428 = vld [vmem:[%s300 + $0x4a] sm:$0xff]
      %v1429 = vld [vmem:[%s300 + $0x52] sm:$0xff]
      %v1430 = vld [vmem:[%s300 + $0x5a] sm:$0xff]
      %v1431 = vld [vmem:[%s300 + $0x62] sm:$0xff]
      %v1432 = vld [vmem:[%s300 + $0x6a] sm:$0xff]
      %v1433 = vld [vmem:[%s300 + $0x72] sm:$0xff]
      %v1434 = vld [vmem:[%s300 + $0x7a] sm:$0xff]
      %v1435 = vld [vmem:[%s300 + $0x82] sm:$0xff]
      %v1436 = vld [vmem:[%s300 + $0x8a] sm:$0xff]
      %v1437 = vld [vmem:[%s300 + $0x92] sm:$0xff]
      %v1438 = vld [vmem:[%s300 + $0x9a] sm:$0xff]
      %v1439 = vld [vmem:[%s300 + $0xa2] sm:$0xff]
      %v1440 = vld [vmem:[%s300 + $0xaa] sm:$0xff]
      %v1441 = vld [vmem:[%s300 + $0xb2] sm:$0xff]
      %v1442 = vld [vmem:[%s300 + $0xba] sm:$0xff]
      %v1443 = vld [vmem:[%s300 + $0xc2] sm:$0xff]
      %v1444 = vld [vmem:[%s300 + $0xca] sm:$0xff]
      %v1445 = vld [vmem:[%s300 + $0xd2] sm:$0xff]
      %v1446 = vld [vmem:[%s300 + $0xda] sm:$0xff]
      %v1447 = vld [vmem:[%s300 + $0xe2] sm:$0xff]
      %v1448 = vld [vmem:[%s300 + $0xea] sm:$0xff]
      %v1449 = vld [vmem:[%s300 + $0xf2] sm:$0xff]
      %v1450 = vld [vmem:[%s300 + $0xfa] sm:$0xff]
      %v1451 = vld [vmem:[%s300 + $0x102] sm:$0xff]
      %v1452 = vld [vmem:[%s300 + $0x10a] sm:$0xff]
      %v1453 = vld [vmem:[%s300 + $0x112] sm:$0xff]
      %v1454 = vld [vmem:[%s300 + $0x11a] sm:$0xff]
      %v1455 = vld [vmem:[%s300 + $0x122] sm:$0xff]
      %v1456 = vld [vmem:[%s300 + $0x12a] sm:$0xff]
      %v1457 = vld [vmem:[%s300 + $0x132] sm:$0xff]
      %v1458 = vld [vmem:[%s300 + $0x13a] sm:$0xff]
      %v1459 = vld [vmem:[%s300 + $0x142] sm:$0xff]
      %v1460 = vld [vmem:[%s300 + $0x14a] sm:$0xff]
      %v1461 = vld [vmem:[%s300 + $0x152] sm:$0xff]
      %v1462 = vld [vmem:[%s300 + $0x15a] sm:$0xff]
      %v1463 = vld [vmem:[%s300 + $0x162] sm:$0xff]
      %v1464 = vld [vmem:[%s300 + $0x16a] sm:$0xff]
      %v1465 = vld [vmem:[%s300 + $0x172] sm:$0xff]
      %v1466 = vld [vmem:[%s300 + $0x17a] sm:$0xff]
      %v1467 = vld [vmem:[%s300 + $0x182] sm:$0xff]
      %v1468 = vld [vmem:[%s300 + $0x18a] sm:$0xff]
      %v1469 = vld [vmem:[%s300 + $0x192] sm:$0xff]
      %v1470 = vld [vmem:[%s300 + $0x19a] sm:$0xff]
      %v1471 = vld [vmem:[%s300 + $0x1a2] sm:$0xff]
      %v1472 = vld [vmem:[%s300 + $0x1aa] sm:$0xff]
      %s1473 = scalar_lea.vmem %s2, 8
      %v1474 = vld [vmem:[%s1473] sm:$0xf]
      %v1476 = vsel %vm417, %v1419, 0
      %v1479 = vsel %vm417, %v1420, 0
      %v1482 = vsel %vm417, %v1421, 0
      %v1485 = vsel %vm417, %v1422, 0
      %v1488 = vsel %vm417, %v1423, 0
      %v1491 = vsel %vm417, %v1424, 0
      %v1494 = vsel %vm417, %v1425, 0
      %v1497 = vsel %vm417, %v1426, 0
      %v1500 = vsel %vm417, %v1427, 0
      %v1503 = vsel %vm417, %v1428, 0
      %v1506 = vsel %vm417, %v1429, 0
      %v1509 = vsel %vm417, %v1430, 0
      %v1512 = vsel %vm417, %v1431, 0
      %v1515 = vsel %vm417, %v1432, 0
      %v1518 = vsel %vm417, %v1433, 0
      %v1521 = vsel %vm417, %v1434, 0
      %v1524 = vsel %vm417, %v1435, 0
      %v1527 = vsel %vm417, %v1436, 0
      %v1530 = vsel %vm417, %v1437, 0
      %v1533 = vsel %vm417, %v1438, 0
      %v1536 = vsel %vm417, %v1439, 0
      %v1539 = vsel %vm417, %v1440, 0
      %v1542 = vsel %vm417, %v1441, 0
      %v1545 = vsel %vm417, %v1442, 0
      %v1548 = vsel %vm417, %v1443, 0
      %v1551 = vsel %vm417, %v1444, 0
      %v1554 = vsel %vm417, %v1445, 0
      %v1557 = vsel %vm417, %v1446, 0
      %v1560 = vsel %vm417, %v1447, 0
      %v1563 = vsel %vm417, %v1448, 0
      %v1566 = vsel %vm417, %v1449, 0
      %v1569 = vsel %vm417, %v1450, 0
      %v1572 = vsel %vm417, %v1451, 0
      %v1575 = vsel %vm417, %v1452, 0
      %v1578 = vsel %vm417, %v1453, 0
      %v1581 = vsel %vm417, %v1454, 0
      %v1584 = vsel %vm417, %v1455, 0
      %v1587 = vsel %vm417, %v1456, 0
      %v1590 = vsel %vm417, %v1457, 0
      %v1593 = vsel %vm417, %v1458, 0
      %v1596 = vsel %vm417, %v1459, 0
      %v1599 = vsel %vm417, %v1460, 0
      %v1602 = vsel %vm417, %v1461, 0
      %v1605 = vsel %vm417, %v1462, 0
      %v1608 = vsel %vm417, %v1463, 0
      %v1611 = vsel %vm417, %v1464, 0
      %v1614 = vsel %vm417, %v1465, 0
      %v1617 = vsel %vm417, %v1466, 0
      %v1620 = vsel %vm417, %v1467, 0
      %v1623 = vsel %vm417, %v1468, 0
      %v1626 = vsel %vm417, %v1469, 0
      %v1629 = vsel %vm417, %v1470, 0
      %v1632 = vsel %vm417, %v1471, 0
      %v1635 = vsel %vm417, %v1472, 0
      %v1638 = vsel %vm580, %v1474, 0
      %1640 = vmatprep.subr.mxu0 0.0
      %1641 = vmatpush1.msra.mxu0 %v1638
      %1642 = vmatprep.subr.mxu0 0.0
      %1643 = vmatpush1.msra.mxu0 0.0
      %1644 = vmatprep.subr.mxu0 0.0
      %1645 = vmatpush1.msra.mxu0 0.0
      %1646 = vmatprep.subr.mxu0 0.0
      %1647 = vmatpush1.msra.mxu0 0.0
      %1648 = vmatprep.subr.mxu0 0.0
      %1649 = vmatpush1.msra.mxu0 0.0
      %1650 = vmatprep.subr.mxu0 0.0
      %1651 = vmatpush1.msra.mxu0 0.0
      %1652 = vmatprep.subr.mxu0 0.0
      %1653 = vmatpush1.msra.mxu0 0.0
      %1654 = vmatprep.subr.mxu0 0.0
      %1655 = vmatpush1.msra.mxu0 0.0
      %1656 = vmatprep.subr.mxu0 0.0
      %1657 = vmatpush1.msra.mxu0 0.0
      %1658 = vmatprep.subr.mxu0 0.0
      %1659 = vmatpush1.msra.mxu0 0.0
      %1660 = vmatprep.subr.mxu0 0.0
      %1661 = vmatpush1.msra.mxu0 0.0
      %1662 = vmatprep.subr.mxu0 0.0
      %1663 = vmatpush1.msra.mxu0 0.0
      %1664 = vmatprep.subr.mxu0 0.0
      %1665 = vmatpush1.msra.mxu0 0.0
      %1666 = vmatprep.subr.mxu0 0.0
      %1667 = vmatpush1.msra.mxu0 0.0
      %1668 = vmatprep.subr.mxu0 0.0
      %1669 = vmatpush1.msra.mxu0 0.0
      %1670 = vmatprep.subr.mxu0 0.0
      %1671 = vmatpush1.msra.mxu0 0.0
      %1672 = vmatprep.subr.mxu0 0.0
      %1673 = vmatpush1.msra.mxu0 0.0
      %1674 = vmatprep.subr.mxu0 0.0
      %1675 = vmatpush1.msra.mxu0 0.0
      %1676 = vmatprep.subr.mxu0 0.0
      %1677 = vmatpush1.msra.mxu0 0.0
      %1678 = vmatprep.subr.mxu0 0.0
      %1679 = vmatpush1.msra.mxu0 0.0
      %1680 = vmatprep.subr.mxu0 0.0
      %1681 = vmatpush1.msra.mxu0 0.0
      %1682 = vmatprep.subr.mxu0 0.0
      %1683 = vmatpush1.msra.mxu0 0.0
      %1684 = vmatprep.subr.mxu0 0.0
      %1685 = vmatpush1.msra.mxu0 0.0
      %1686 = vmatprep.subr.mxu0 0.0
      %1687 = vmatpush1.msra.mxu0 0.0
      %1688 = vmatprep.subr.mxu0 0.0
      %1689 = vmatpush1.msra.mxu0 0.0
      %1690 = vmatprep.subr.mxu0 0.0
      %1691 = vmatpush1.msra.mxu0 0.0
      %1692 = vmatprep.subr.mxu0 0.0
      %1693 = vmatpush1.msra.mxu0 0.0
      %1694 = vmatprep.subr.mxu0 0.0
      %1695 = vmatpush1.msra.mxu0 0.0
      %1696 = vmatprep.subr.mxu0 0.0
      %1697 = vmatpush1.msra.mxu0 0.0
      %1698 = vmatprep.subr.mxu0 0.0
      %1699 = vmatpush1.msra.mxu0 0.0
      %1700 = vmatprep.subr.mxu0 0.0
      %1701 = vmatpush1.msra.mxu0 0.0
      %1702 = vmatprep.subr.mxu0 0.0
      %1703 = vmatpush1.msra.mxu0 0.0
      %1704 = vmatprep.mubr.f32.mxu0 0.0
      %1705 = vmatmul.mubr.f32.gmra.mrb[0].mxu0 %v1476
      %v1706 = vpop.f32.mrb[0].mxu0
      %v1707 = vadd.f32 0.0, %v1706
      %v1708 = vpop.f32.mrb[0].mxu0
      %1709 = vmatprep.mubr.f32.mxu0 0.0
      %1710 = vmatmul.mubr.f32.gmra.mrb[0].mxu0 %v1479
      %v1711 = vpop.f32.mrb[0].mxu0
      %v1712 = vadd.f32 0.0, %v1711
      %v1713 = vpop.f32.mrb[0].mxu0
      %1714 = vmatprep.mubr.f32.mxu0 0.0
      %1715 = vmatmul.mubr.f32.gmra.mrb[0].mxu0 %v1482
      %v1716 = vpop.f32.mrb[0].mxu0
      %v1717 = vadd.f32 0.0, %v1716
      %v1718 = vpop.f32.mrb[0].mxu0
      %1719 = vmatprep.mubr.f32.mxu0 0.0
      %1720 = vmatmul.mubr.f32.gmra.mrb[0].mxu0 %v1485
      %v1721 = vpop.f32.mrb[0].mxu0
      %v1722 = vadd.f32 0.0, %v1721
      %v1723 = vpop.f32.mrb[0].mxu0
      %1724 = vmatprep.mubr.f32.mxu0 0.0
      %1725 = vmatmul.mubr.f32.gmra.mrb[0].mxu0 %v1488
      %v1726 = vpop.f32.mrb[0].mxu0
      %v1727 = vadd.f32 0.0, %v1726
      %v1728 = vpop.f32.mrb[0].mxu0
      %1729 = vmatprep.mubr.f32.mxu0 0.0
      %1730 = vmatmul.mubr.f32.gmra.mrb[0].mxu0 %v1491
      %v1731 = vpop.f32.mrb[0].mxu0
      %v1732 = vadd.f32 0.0, %v1731
      %v1733 = vpop.f32.mrb[0].mxu0
      %1734 = vmatprep.mubr.f32.mxu0 0.0
      %1735 = vmatmul.mubr.f32.gmra.mrb[0].mxu0 %v1494
      %v1736 = vpop.f32.mrb[0].mxu0
      %v1737 = vadd.f32 0.0, %v1736
      %v1738 = vpop.f32.mrb[0].mxu0
      %1739 = vmatprep.mubr.f32.mxu0 0.0
      %1740 = vmatmul.mubr.f32.gmra.mrb[0].mxu0 %v1497
      %v1741 = vpop.f32.mrb[0].mxu0
      %v1742 = vadd.f32 0.0, %v1741
      %v1743 = vpop.f32.mrb[0].mxu0
      %1744 = vmatprep.mubr.f32.mxu0 0.0
      %1745 = vmatmul.mubr.f32.gmra.mrb[0].mxu0 %v1500
      %v1746 = vpop.f32.mrb[0].mxu0
      %v1747 = vadd.f32 0.0, %v1746
      %v1748 = vpop.f32.mrb[0].mxu0
      %1749 = vmatprep.mubr.f32.mxu0 0.0
      %1750 = vmatmul.mubr.f32.gmra.mrb[0].mxu0 %v1503
      %v1751 = vpop.f32.mrb[0].mxu0
      %v1752 = vadd.f32 0.0, %v1751
      %v1753 = vpop.f32.mrb[0].mxu0
      %1754 = vmatprep.mubr.f32.mxu0 0.0
      %1755 = vmatmul.mubr.f32.gmra.mrb[0].mxu0 %v1506
      %v1756 = vpop.f32.mrb[0].mxu0
      %v1757 = vadd.f32 0.0, %v1756
      %v1758 = vpop.f32.mrb[0].mxu0
      %1759 = vmatprep.mubr.f32.mxu0 0.0
      %1760 = vmatmul.mubr.f32.gmra.mrb[0].mxu0 %v1509
      %v1761 = vpop.f32.mrb[0].mxu0
      %v1762 = vadd.f32 0.0, %v1761
      %v1763 = vpop.f32.mrb[0].mxu0
      %1764 = vmatprep.mubr.f32.mxu0 0.0
      %1765 = vmatmul.mubr.f32.gmra.mrb[0].mxu0 %v1512
      %v1766 = vpop.f32.mrb[0].mxu0
      %v1767 = vadd.f32 0.0, %v1766
      %v1768 = vpop.f32.mrb[0].mxu0
      %1769 = vmatprep.mubr.f32.mxu0 0.0
      %1770 = vmatmul.mubr.f32.gmra.mrb[0].mxu0 %v1515
      %v1771 = vpop.f32.mrb[0].mxu0
      %v1772 = vadd.f32 0.0, %v1771
      %v1773 = vpop.f32.mrb[0].mxu0
      %1774 = vmatprep.mubr.f32.mxu0 0.0
      %1775 = vmatmul.mubr.f32.gmra.mrb[0].mxu0 %v1518
      %v1776 = vpop.f32.mrb[0].mxu0
      %v1777 = vadd.f32 0.0, %v1776
      %v1778 = vpop.f32.mrb[0].mxu0
      %1779 = vmatprep.mubr.f32.mxu0 0.0
      %1780 = vmatmul.mubr.f32.gmra.mrb[0].mxu0 %v1521
      %v1781 = vpop.f32.mrb[0].mxu0
      %v1782 = vadd.f32 0.0, %v1781
      %v1783 = vpop.f32.mrb[0].mxu0
      %1784 = vmatprep.mubr.f32.mxu0 0.0
      %1785 = vmatmul.mubr.f32.gmra.mrb[0].mxu0 %v1524
      %v1786 = vpop.f32.mrb[0].mxu0
      %v1787 = vadd.f32 0.0, %v1786
      %v1788 = vpop.f32.mrb[0].mxu0
      %1789 = vmatprep.mubr.f32.mxu0 0.0
      %1790 = vmatmul.mubr.f32.gmra.mrb[0].mxu0 %v1527
      %v1791 = vpop.f32.mrb[0].mxu0
      %v1792 = vadd.f32 0.0, %v1791
      %v1793 = vpop.f32.mrb[0].mxu0
      %1794 = vmatprep.mubr.f32.mxu0 0.0
      %1795 = vmatmul.mubr.f32.gmra.mrb[0].mxu0 %v1530
      %v1796 = vpop.f32.mrb[0].mxu0
      %v1797 = vadd.f32 0.0, %v1796
      %v1798 = vpop.f32.mrb[0].mxu0
      %1799 = vmatprep.mubr.f32.mxu0 0.0
      %1800 = vmatmul.mubr.f32.gmra.mrb[0].mxu0 %v1533
      %v1801 = vpop.f32.mrb[0].mxu0
      %v1802 = vadd.f32 0.0, %v1801
      %v1803 = vpop.f32.mrb[0].mxu0
      %1804 = vmatprep.mubr.f32.mxu0 0.0
      %1805 = vmatmul.mubr.f32.gmra.mrb[0].mxu0 %v1536
      %v1806 = vpop.f32.mrb[0].mxu0
      %v1807 = vadd.f32 0.0, %v1806
      %v1808 = vpop.f32.mrb[0].mxu0
      %1809 = vmatprep.mubr.f32.mxu0 0.0
      %1810 = vmatmul.mubr.f32.gmra.mrb[0].mxu0 %v1539
      %v1811 = vpop.f32.mrb[0].mxu0
      %v1812 = vadd.f32 0.0, %v1811
      %v1813 = vpop.f32.mrb[0].mxu0
      %1814 = vmatprep.mubr.f32.mxu0 0.0
      %1815 = vmatmul.mubr.f32.gmra.mrb[0].mxu0 %v1542
      %v1816 = vpop.f32.mrb[0].mxu0
      %v1817 = vadd.f32 0.0, %v1816
      %v1818 = vpop.f32.mrb[0].mxu0
      %1819 = vmatprep.mubr.f32.mxu0 0.0
      %1820 = vmatmul.mubr.f32.gmra.mrb[0].mxu0 %v1545
      %v1821 = vpop.f32.mrb[0].mxu0
      %v1822 = vadd.f32 0.0, %v1821
      %v1823 = vpop.f32.mrb[0].mxu0
      %1824 = vmatprep.mubr.f32.mxu0 0.0
      %1825 = vmatmul.mubr.f32.gmra.mrb[0].mxu0 %v1548
      %v1826 = vpop.f32.mrb[0].mxu0
      %v1827 = vadd.f32 0.0, %v1826
      %v1828 = vpop.f32.mrb[0].mxu0
      %1829 = vmatprep.mubr.f32.mxu0 0.0
      %1830 = vmatmul.mubr.f32.gmra.mrb[0].mxu0 %v1551
      %v1831 = vpop.f32.mrb[0].mxu0
      %v1832 = vadd.f32 0.0, %v1831
      %v1833 = vpop.f32.mrb[0].mxu0
      %1834 = vmatprep.mubr.f32.mxu0 0.0
      %1835 = vmatmul.mubr.f32.gmra.mrb[0].mxu0 %v1554
      %v1836 = vpop.f32.mrb[0].mxu0
      %v1837 = vadd.f32 0.0, %v1836
      %v1838 = vpop.f32.mrb[0].mxu0
      %1839 = vmatprep.mubr.f32.mxu0 0.0
      %1840 = vmatmul.mubr.f32.gmra.mrb[0].mxu0 %v1557
      %v1841 = vpop.f32.mrb[0].mxu0
      %v1842 = vadd.f32 0.0, %v1841
      %v1843 = vpop.f32.mrb[0].mxu0
      %1844 = vmatprep.mubr.f32.mxu0 0.0
      %1845 = vmatmul.mubr.f32.gmra.mrb[0].mxu0 %v1560
      %v1846 = vpop.f32.mrb[0].mxu0
      %v1847 = vadd.f32 0.0, %v1846
      %v1848 = vpop.f32.mrb[0].mxu0
      %1849 = vmatprep.mubr.f32.mxu0 0.0
      %1850 = vmatmul.mubr.f32.gmra.mrb[0].mxu0 %v1563
      %v1851 = vpop.f32.mrb[0].mxu0
      %v1852 = vadd.f32 0.0, %v1851
      %v1853 = vpop.f32.mrb[0].mxu0
      %1854 = vmatprep.mubr.f32.mxu0 0.0
      %1855 = vmatmul.mubr.f32.gmra.mrb[0].mxu0 %v1566
      %v1856 = vpop.f32.mrb[0].mxu0
      %v1857 = vadd.f32 0.0, %v1856
      %v1858 = vpop.f32.mrb[0].mxu0
      %1859 = vmatprep.mubr.f32.mxu0 0.0
      %1860 = vmatmul.mubr.f32.gmra.mrb[0].mxu0 %v1569
      %v1861 = vpop.f32.mrb[0].mxu0
      %v1862 = vadd.f32 0.0, %v1861
      %v1863 = vpop.f32.mrb[0].mxu0
      %1864 = vmatprep.mubr.f32.mxu0 0.0
      %1865 = vmatmul.mubr.f32.gmra.mrb[0].mxu0 %v1572
      %v1866 = vpop.f32.mrb[0].mxu0
      %v1867 = vadd.f32 0.0, %v1866
      %v1868 = vpop.f32.mrb[0].mxu0
      %1869 = vmatprep.mubr.f32.mxu0 0.0
      %1870 = vmatmul.mubr.f32.gmra.mrb[0].mxu0 %v1575
      %v1871 = vpop.f32.mrb[0].mxu0
      %v1872 = vadd.f32 0.0, %v1871
      %v1873 = vpop.f32.mrb[0].mxu0
      %1874 = vmatprep.mubr.f32.mxu0 0.0
      %1875 = vmatmul.mubr.f32.gmra.mrb[0].mxu0 %v1578
      %v1876 = vpop.f32.mrb[0].mxu0
      %v1877 = vadd.f32 0.0, %v1876
      %v1878 = vpop.f32.mrb[0].mxu0
      %1879 = vmatprep.mubr.f32.mxu0 0.0
      %1880 = vmatmul.mubr.f32.gmra.mrb[0].mxu0 %v1581
      %v1881 = vpop.f32.mrb[0].mxu0
      %v1882 = vadd.f32 0.0, %v1881
      %v1883 = vpop.f32.mrb[0].mxu0
      %1884 = vmatprep.mubr.f32.mxu0 0.0
      %1885 = vmatmul.mubr.f32.gmra.mrb[0].mxu0 %v1584
      %v1886 = vpop.f32.mrb[0].mxu0
      %v1887 = vadd.f32 0.0, %v1886
      %v1888 = vpop.f32.mrb[0].mxu0
      %1889 = vmatprep.mubr.f32.mxu0 0.0
      %1890 = vmatmul.mubr.f32.gmra.mrb[0].mxu0 %v1587
      %v1891 = vpop.f32.mrb[0].mxu0
      %v1892 = vadd.f32 0.0, %v1891
      %v1893 = vpop.f32.mrb[0].mxu0
      %1894 = vmatprep.mubr.f32.mxu0 0.0
      %1895 = vmatmul.mubr.f32.gmra.mrb[0].mxu0 %v1590
      %v1896 = vpop.f32.mrb[0].mxu0
      %v1897 = vadd.f32 0.0, %v1896
      %v1898 = vpop.f32.mrb[0].mxu0
      %1899 = vmatprep.mubr.f32.mxu0 0.0
      %1900 = vmatmul.mubr.f32.gmra.mrb[0].mxu0 %v1593
      %v1901 = vpop.f32.mrb[0].mxu0
      %v1902 = vadd.f32 0.0, %v1901
      %v1903 = vpop.f32.mrb[0].mxu0
      %1904 = vmatprep.mubr.f32.mxu0 0.0
      %1905 = vmatmul.mubr.f32.gmra.mrb[0].mxu0 %v1596
      %v1906 = vpop.f32.mrb[0].mxu0
      %v1907 = vadd.f32 0.0, %v1906
      %v1908 = vpop.f32.mrb[0].mxu0
      %1909 = vmatprep.mubr.f32.mxu0 0.0
      %1910 = vmatmul.mubr.f32.gmra.mrb[0].mxu0 %v1599
      %v1911 = vpop.f32.mrb[0].mxu0
      %v1912 = vadd.f32 0.0, %v1911
      %v1913 = vpop.f32.mrb[0].mxu0
      %1914 = vmatprep.mubr.f32.mxu0 0.0
      %1915 = vmatmul.mubr.f32.gmra.mrb[0].mxu0 %v1602
      %v1916 = vpop.f32.mrb[0].mxu0
      %v1917 = vadd.f32 0.0, %v1916
      %v1918 = vpop.f32.mrb[0].mxu0
      %1919 = vmatprep.mubr.f32.mxu0 0.0
      %1920 = vmatmul.mubr.f32.gmra.mrb[0].mxu0 %v1605
      %v1921 = vpop.f32.mrb[0].mxu0
      %v1922 = vadd.f32 0.0, %v1921
      %v1923 = vpop.f32.mrb[0].mxu0
      %1924 = vmatprep.mubr.f32.mxu0 0.0
      %1925 = vmatmul.mubr.f32.gmra.mrb[0].mxu0 %v1608
      %v1926 = vpop.f32.mrb[0].mxu0
      %v1927 = vadd.f32 0.0, %v1926
      %v1928 = vpop.f32.mrb[0].mxu0
      %1929 = vmatprep.mubr.f32.mxu0 0.0
      %1930 = vmatmul.mubr.f32.gmra.mrb[0].mxu0 %v1611
      %v1931 = vpop.f32.mrb[0].mxu0
      %v1932 = vadd.f32 0.0, %v1931
      %v1933 = vpop.f32.mrb[0].mxu0
      %1934 = vmatprep.mubr.f32.mxu0 0.0
      %1935 = vmatmul.mubr.f32.gmra.mrb[0].mxu0 %v1614
      %v1936 = vpop.f32.mrb[0].mxu0
      %v1937 = vadd.f32 0.0, %v1936
      %v1938 = vpop.f32.mrb[0].mxu0
      %1939 = vmatprep.mubr.f32.mxu0 0.0
      %1940 = vmatmul.mubr.f32.gmra.mrb[0].mxu0 %v1617
      %v1941 = vpop.f32.mrb[0].mxu0
      %v1942 = vadd.f32 0.0, %v1941
      %v1943 = vpop.f32.mrb[0].mxu0
      %1944 = vmatprep.mubr.f32.mxu0 0.0
      %1945 = vmatmul.mubr.f32.gmra.mrb[0].mxu0 %v1620
      %v1946 = vpop.f32.mrb[0].mxu0
      %v1947 = vadd.f32 0.0, %v1946
      %v1948 = vpop.f32.mrb[0].mxu0
      %1949 = vmatprep.mubr.f32.mxu0 0.0
      %1950 = vmatmul.mubr.f32.gmra.mrb[0].mxu0 %v1623
      %v1951 = vpop.f32.mrb[0].mxu0
      %v1952 = vadd.f32 0.0, %v1951
      %v1953 = vpop.f32.mrb[0].mxu0
      %1954 = vmatprep.mubr.f32.mxu0 0.0
      %1955 = vmatmul.mubr.f32.gmra.mrb[0].mxu0 %v1626
      %v1956 = vpop.f32.mrb[0].mxu0
      %v1957 = vadd.f32 0.0, %v1956
      %v1958 = vpop.f32.mrb[0].mxu0
      %1959 = vmatprep.mubr.f32.mxu0 0.0
      %1960 = vmatmul.mubr.f32.gmra.mrb[0].mxu0 %v1629
      %v1961 = vpop.f32.mrb[0].mxu0
      %v1962 = vadd.f32 0.0, %v1961
      %v1963 = vpop.f32.mrb[0].mxu0
      %1964 = vmatprep.mubr.f32.mxu0 0.0
      %1965 = vmatmul.mubr.f32.gmra.mrb[0].mxu0 %v1632
      %v1966 = vpop.f32.mrb[0].mxu0
      %v1967 = vadd.f32 0.0, %v1966
      %v1968 = vpop.f32.mrb[0].mxu0
      %1969 = vmatprep.mubr.f32.mxu0 0.0
      %1970 = vmatmul.mubr.f32.gmra.mrb[0].mxu0 %v1635
      %v1971 = vpop.f32.mrb[0].mxu0
      %v1972 = vadd.f32 0.0, %v1971
      %v1973 = vpop.f32.mrb[0].mxu0
      %1974 = vdwg.mxu0
      %v1975 = vadd.f32 %v1151, %v1707
      %v1976 = vadd.f32 %v1156, %v1712
      %v1977 = vadd.f32 %v1161, %v1717
      %v1978 = vadd.f32 %v1166, %v1722
      %v1979 = vadd.f32 %v1171, %v1727
      %v1980 = vadd.f32 %v1176, %v1732
      %v1981 = vadd.f32 %v1181, %v1737
      %v1982 = vadd.f32 %v1186, %v1742
      %v1983 = vadd.f32 %v1191, %v1747
      %v1984 = vadd.f32 %v1196, %v1752
      %v1985 = vadd.f32 %v1201, %v1757
      %v1986 = vadd.f32 %v1206, %v1762
      %v1987 = vadd.f32 %v1211, %v1767
      %v1988 = vadd.f32 %v1216, %v1772
      %v1989 = vadd.f32 %v1221, %v1777
      %v1990 = vadd.f32 %v1226, %v1782
      %v1991 = vadd.f32 %v1231, %v1787
      %v1992 = vadd.f32 %v1236, %v1792
      %v1993 = vadd.f32 %v1241, %v1797
      %v1994 = vadd.f32 %v1246, %v1802
      %v1995 = vadd.f32 %v1251, %v1807
      %v1996 = vadd.f32 %v1256, %v1812
      %v1997 = vadd.f32 %v1261, %v1817
      %v1998 = vadd.f32 %v1266, %v1822
      %v1999 = vadd.f32 %v1271, %v1827
      %v2000 = vadd.f32 %v1276, %v1832
      %v2001 = vadd.f32 %v1281, %v1837
      %v2002 = vadd.f32 %v1286, %v1842
      %v2003 = vadd.f32 %v1291, %v1847
      %v2004 = vadd.f32 %v1296, %v1852
      %v2005 = vadd.f32 %v1301, %v1857
      %v2006 = vadd.f32 %v1306, %v1862
      %v2007 = vadd.f32 %v1311, %v1867
      %v2008 = vadd.f32 %v1316, %v1872
      %v2009 = vadd.f32 %v1321, %v1877
      %v2010 = vadd.f32 %v1326, %v1882
      %v2011 = vadd.f32 %v1331, %v1887
      %v2012 = vadd.f32 %v1336, %v1892
      %v2013 = vadd.f32 %v1341, %v1897
      %v2014 = vadd.f32 %v1346, %v1902
      %v2015 = vadd.f32 %v1351, %v1907
      %v2016 = vadd.f32 %v1356, %v1912
      %v2017 = vadd.f32 %v1361, %v1917
      %v2018 = vadd.f32 %v1366, %v1922
      %v2019 = vadd.f32 %v1371, %v1927
      %v2020 = vadd.f32 %v1376, %v1932
      %v2021 = vadd.f32 %v1381, %v1937
      %v2022 = vadd.f32 %v1386, %v1942
      %v2023 = vadd.f32 %v1391, %v1947
      %v2024 = vadd.f32 %v1396, %v1952
      %v2025 = vadd.f32 %v1401, %v1957
      %v2026 = vadd.f32 %v1406, %v1962
      %v2027 = vadd.f32 %v1411, %v1967
      %v2028 = vadd.f32 %v1416, %v1972
      %v2029 = vld [vmem:[%s300 + $0x18] sm:$0xff]
      %v2030 = vld [vmem:[%s300 + $0x20] sm:$0xff]
      %v2031 = vld [vmem:[%s300 + $0x28] sm:$0xff]
      %v2032 = vld [vmem:[%s300 + $0x30] sm:$0xff]
      %v2033 = vld [vmem:[%s300 + $0x38] sm:$0xff]
      %v2034 = vld [vmem:[%s300 + $0x40] sm:$0xff]
      %v2035 = vld [vmem:[%s300 + $0x48] sm:$0xff]
      %v2036 = vld [vmem:[%s300 + $0x50] sm:$0xff]
      %v2037 = vld [vmem:[%s300 + $0x58] sm:$0xff]
      %v2038 = vld [vmem:[%s300 + $0x60] sm:$0xff]
      %v2039 = vld [vmem:[%s300 + $0x68] sm:$0xff]
      %v2040 = vld [vmem:[%s300 + $0x70] sm:$0xff]
      %v2041 = vld [vmem:[%s300 + $0x78] sm:$0xff]
      %v2042 = vld [vmem:[%s300 + $0x80] sm:$0xff]
      %v2043 = vld [vmem:[%s300 + $0x88] sm:$0xff]
      %v2044 = vld [vmem:[%s300 + $0x90] sm:$0xff]
      %v2045 = vld [vmem:[%s300 + $0x98] sm:$0xff]
      %v2046 = vld [vmem:[%s300 + $0xa0] sm:$0xff]
      %v2047 = vld [vmem:[%s300 + $0xa8] sm:$0xff]
      %v2048 = vld [vmem:[%s300 + $0xb0] sm:$0xff]
      %v2049 = vld [vmem:[%s300 + $0xb8] sm:$0xff]
      %v2050 = vld [vmem:[%s300 + $0xc0] sm:$0xff]
      %v2051 = vld [vmem:[%s300 + $0xc8] sm:$0xff]
      %v2052 = vld [vmem:[%s300 + $0xd0] sm:$0xff]
      %v2053 = vld [vmem:[%s300 + $0xd8] sm:$0xff]
      %v2054 = vld [vmem:[%s300 + $0xe0] sm:$0xff]
      %v2055 = vld [vmem:[%s300 + $0xe8] sm:$0xff]
      %v2056 = vld [vmem:[%s300 + $0xf0] sm:$0xff]
      %v2057 = vld [vmem:[%s300 + $0xf8] sm:$0xff]
      %v2058 = vld [vmem:[%s300 + $0x100] sm:$0xff]
      %v2059 = vld [vmem:[%s300 + $0x108] sm:$0xff]
      %v2060 = vld [vmem:[%s300 + $0x110] sm:$0xff]
      %v2061 = vld [vmem:[%s300 + $0x118] sm:$0xff]
      %v2062 = vld [vmem:[%s300 + $0x120] sm:$0xff]
      %v2063 = vld [vmem:[%s300 + $0x128] sm:$0xff]
      %v2064 = vld [vmem:[%s300 + $0x130] sm:$0xff]
      %v2065 = vld [vmem:[%s300 + $0x138] sm:$0xff]
      %v2066 = vld [vmem:[%s300 + $0x140] sm:$0xff]
      %v2067 = vld [vmem:[%s300 + $0x148] sm:$0xff]
      %v2068 = vld [vmem:[%s300 + $0x150] sm:$0xff]
      %v2069 = vld [vmem:[%s300 + $0x158] sm:$0xff]
      %v2070 = vld [vmem:[%s300 + $0x160] sm:$0xff]
      %v2071 = vld [vmem:[%s300 + $0x168] sm:$0xff]
      %v2072 = vld [vmem:[%s300 + $0x170] sm:$0xff]
      %v2073 = vld [vmem:[%s300 + $0x178] sm:$0xff]
      %v2074 = vld [vmem:[%s300 + $0x180] sm:$0xff]
      %v2075 = vld [vmem:[%s300 + $0x188] sm:$0xff]
      %v2076 = vld [vmem:[%s300 + $0x190] sm:$0xff]
      %v2077 = vld [vmem:[%s300 + $0x198] sm:$0xff]
      %v2078 = vld [vmem:[%s300 + $0x1a0] sm:$0xff]
      %v2079 = vld [vmem:[%s300 + $0x1a8] sm:$0xff]
      %v2080 = vld [vmem:[%s300 + $0x1b0] sm:$0xff]
      %v2081 = vld [vmem:[%s300 + $0x1b8] sm:$0xff]
      %v2082 = vld [vmem:[%s300 + $0x1c0] sm:$0xff]
      %s2083 = scalar_lea.vmem %s2, 12
      %v2084 = vld [vmem:[%s2083] sm:$0xf]
      %v2086 = vsel %vm417, %v2029, 0
      %v2089 = vsel %vm417, %v2030, 0
      %v2092 = vsel %vm417, %v2031, 0
      %v2095 = vsel %vm417, %v2032, 0
      %v2098 = vsel %vm417, %v2033, 0
      %v2101 = vsel %vm417, %v2034, 0
      %v2104 = vsel %vm417, %v2035, 0
      %v2107 = vsel %vm417, %v2036, 0
      %v2110 = vsel %vm417, %v2037, 0
      %v2113 = vsel %vm417, %v2038, 0
      %v2116 = vsel %vm417, %v2039, 0
      %v2119 = vsel %vm417, %v2040, 0
      %v2122 = vsel %vm417, %v2041, 0
      %v2125 = vsel %vm417, %v2042, 0
      %v2128 = vsel %vm417, %v2043, 0
      %v2131 = vsel %vm417, %v2044, 0
      %v2134 = vsel %vm417, %v2045, 0
      %v2137 = vsel %vm417, %v2046, 0
      %v2140 = vsel %vm417, %v2047, 0
      %v2143 = vsel %vm417, %v2048, 0
      %v2146 = vsel %vm417, %v2049, 0
      %v2149 = vsel %vm417, %v2050, 0
      %v2152 = vsel %vm417, %v2051, 0
      %v2155 = vsel %vm417, %v2052, 0
      %v2158 = vsel %vm417, %v2053, 0
      %v2161 = vsel %vm417, %v2054, 0
      %v2164 = vsel %vm417, %v2055, 0
      %v2167 = vsel %vm417, %v2056, 0
      %v2170 = vsel %vm417, %v2057, 0
      %v2173 = vsel %vm417, %v2058, 0
      %v2176 = vsel %vm417, %v2059, 0
      %v2179 = vsel %vm417, %v2060, 0
      %v2182 = vsel %vm417, %v2061, 0
      %v2185 = vsel %vm417, %v2062, 0
      %v2188 = vsel %vm417, %v2063, 0
      %v2191 = vsel %vm417, %v2064, 0
      %v2194 = vsel %vm417, %v2065, 0
      %v2197 = vsel %vm417, %v2066, 0
      %v2200 = vsel %vm417, %v2067, 0
      %v2203 = vsel %vm417, %v2068, 0
      %v2206 = vsel %vm417, %v2069, 0
      %v2209 = vsel %vm417, %v2070, 0
      %v2212 = vsel %vm417, %v2071, 0
      %v2215 = vsel %vm417, %v2072, 0
      %v2218 = vsel %vm417, %v2073, 0
      %v2221 = vsel %vm417, %v2074, 0
      %v2224 = vsel %vm417, %v2075, 0
      %v2227 = vsel %vm417, %v2076, 0
      %v2230 = vsel %vm417, %v2077, 0
      %v2233 = vsel %vm417, %v2078, 0
      %v2236 = vsel %vm417, %v2079, 0
      %v2239 = vsel %vm417, %v2080, 0
      %v2242 = vsel %vm417, %v2081, 0
      %v2245 = vsel %vm417, %v2082, 0
      %v2248 = vsel %vm580, %v2084, 0
      %2250 = vmatprep.subr.mxu0 0.0
      %2251 = vmatpush1.msra.mxu0 %v2248
      %2252 = vmatprep.subr.mxu0 0.0
      %2253 = vmatpush1.msra.mxu0 0.0
      %2254 = vmatprep.subr.mxu0 0.0
      %2255 = vmatpush1.msra.mxu0 0.0
      %2256 = vmatprep.subr.mxu0 0.0
      %2257 = vmatpush1.msra.mxu0 0.0
      %2258 = vmatprep.subr.mxu0 0.0
      %2259 = vmatpush1.msra.mxu0 0.0
      %2260 = vmatprep.subr.mxu0 0.0
      %2261 = vmatpush1.msra.mxu0 0.0
      %2262 = vmatprep.subr.mxu0 0.0
      %2263 = vmatpush1.msra.mxu0 0.0
      %2264 = vmatprep.subr.mxu0 0.0
      %2265 = vmatpush1.msra.mxu0 0.0
      %2266 = vmatprep.subr.mxu0 0.0
      %2267 = vmatpush1.msra.mxu0 0.0
      %2268 = vmatprep.subr.mxu0 0.0
      %2269 = vmatpush1.msra.mxu0 0.0
      %2270 = vmatprep.subr.mxu0 0.0
      %2271 = vmatpush1.msra.mxu0 0.0
      %2272 = vmatprep.subr.mxu0 0.0
      %2273 = vmatpush1.msra.mxu0 0.0
      %2274 = vmatprep.subr.mxu0 0.0
      %2275 = vmatpush1.msra.mxu0 0.0
      %2276 = vmatprep.subr.mxu0 0.0
      %2277 = vmatpush1.msra.mxu0 0.0
      %2278 = vmatprep.subr.mxu0 0.0
      %2279 = vmatpush1.msra.mxu0 0.0
      %2280 = vmatprep.subr.mxu0 0.0
      %2281 = vmatpush1.msra.mxu0 0.0
      %2282 = vmatprep.subr.mxu0 0.0
      %2283 = vmatpush1.msra.mxu0 0.0
      %2284 = vmatprep.subr.mxu0 0.0
      %2285 = vmatpush1.msra.mxu0 0.0
      %2286 = vmatprep.subr.mxu0 0.0
      %2287 = vmatpush1.msra.mxu0 0.0
      %2288 = vmatprep.subr.mxu0 0.0
      %2289 = vmatpush1.msra.mxu0 0.0
      %2290 = vmatprep.subr.mxu0 0.0
      %2291 = vmatpush1.msra.mxu0 0.0
      %2292 = vmatprep.subr.mxu0 0.0
      %2293 = vmatpush1.msra.mxu0 0.0
      %2294 = vmatprep.subr.mxu0 0.0
      %2295 = vmatpush1.msra.mxu0 0.0
      %2296 = vmatprep.subr.mxu0 0.0
      %2297 = vmatpush1.msra.mxu0 0.0
      %2298 = vmatprep.subr.mxu0 0.0
      %2299 = vmatpush1.msra.mxu0 0.0
      %2300 = vmatprep.subr.mxu0 0.0
      %2301 = vmatpush1.msra.mxu0 0.0
      %2302 = vmatprep.subr.mxu0 0.0
      %2303 = vmatpush1.msra.mxu0 0.0
      %2304 = vmatprep.subr.mxu0 0.0
      %2305 = vmatpush1.msra.mxu0 0.0
      %2306 = vmatprep.subr.mxu0 0.0
      %2307 = vmatpush1.msra.mxu0 0.0
      %2308 = vmatprep.subr.mxu0 0.0
      %2309 = vmatpush1.msra.mxu0 0.0
      %2310 = vmatprep.subr.mxu0 0.0
      %2311 = vmatpush1.msra.mxu0 0.0
      %2312 = vmatprep.subr.mxu0 0.0
      %2313 = vmatpush1.msra.mxu0 0.0
      %2314 = vmatprep.mubr.f32.mxu0 0.0
      %2315 = vmatmul.mubr.f32.gmra.mrb[0].mxu0 %v2086
      %v2316 = vpop.f32.mrb[0].mxu0
      %v2317 = vadd.f32 0.0, %v2316
      %v2318 = vpop.f32.mrb[0].mxu0
      %2319 = vmatprep.mubr.f32.mxu0 0.0
      %2320 = vmatmul.mubr.f32.gmra.mrb[0].mxu0 %v2089
      %v2321 = vpop.f32.mrb[0].mxu0
      %v2322 = vadd.f32 0.0, %v2321
      %v2323 = vpop.f32.mrb[0].mxu0
      %2324 = vmatprep.mubr.f32.mxu0 0.0
      %2325 = vmatmul.mubr.f32.gmra.mrb[0].mxu0 %v2092
      %v2326 = vpop.f32.mrb[0].mxu0
      %v2327 = vadd.f32 0.0, %v2326
      %v2328 = vpop.f32.mrb[0].mxu0
      %2329 = vmatprep.mubr.f32.mxu0 0.0
      %2330 = vmatmul.mubr.f32.gmra.mrb[0].mxu0 %v2095
      %v2331 = vpop.f32.mrb[0].mxu0
      %v2332 = vadd.f32 0.0, %v2331
      %v2333 = vpop.f32.mrb[0].mxu0
      %2334 = vmatprep.mubr.f32.mxu0 0.0
      %2335 = vmatmul.mubr.f32.gmra.mrb[0].mxu0 %v2098
      %v2336 = vpop.f32.mrb[0].mxu0
      %v2337 = vadd.f32 0.0, %v2336
      %v2338 = vpop.f32.mrb[0].mxu0
      %2339 = vmatprep.mubr.f32.mxu0 0.0
      %2340 = vmatmul.mubr.f32.gmra.mrb[0].mxu0 %v2101
      %v2341 = vpop.f32.mrb[0].mxu0
      %v2342 = vadd.f32 0.0, %v2341
      %v2343 = vpop.f32.mrb[0].mxu0
      %2344 = vmatprep.mubr.f32.mxu0 0.0
      %2345 = vmatmul.mubr.f32.gmra.mrb[0].mxu0 %v2104
      %v2346 = vpop.f32.mrb[0].mxu0
      %v2347 = vadd.f32 0.0, %v2346
      %v2348 = vpop.f32.mrb[0].mxu0
      %2349 = vmatprep.mubr.f32.mxu0 0.0
      %2350 = vmatmul.mubr.f32.gmra.mrb[0].mxu0 %v2107
      %v2351 = vpop.f32.mrb[0].mxu0
      %v2352 = vadd.f32 0.0, %v2351
      %v2353 = vpop.f32.mrb[0].mxu0
      %2354 = vmatprep.mubr.f32.mxu0 0.0
      %2355 = vmatmul.mubr.f32.gmra.mrb[0].mxu0 %v2110
      %v2356 = vpop.f32.mrb[0].mxu0
      %v2357 = vadd.f32 0.0, %v2356
      %v2358 = vpop.f32.mrb[0].mxu0
      %2359 = vmatprep.mubr.f32.mxu0 0.0
      %2360 = vmatmul.mubr.f32.gmra.mrb[0].mxu0 %v2113
      %v2361 = vpop.f32.mrb[0].mxu0
      %v2362 = vadd.f32 0.0, %v2361
      %v2363 = vpop.f32.mrb[0].mxu0
      %2364 = vmatprep.mubr.f32.mxu0 0.0
      %2365 = vmatmul.mubr.f32.gmra.mrb[0].mxu0 %v2116
      %v2366 = vpop.f32.mrb[0].mxu0
      %v2367 = vadd.f32 0.0, %v2366
      %v2368 = vpop.f32.mrb[0].mxu0
      %2369 = vmatprep.mubr.f32.mxu0 0.0
      %2370 = vmatmul.mubr.f32.gmra.mrb[0].mxu0 %v2119
      %v2371 = vpop.f32.mrb[0].mxu0
      %v2372 = vadd.f32 0.0, %v2371
      %v2373 = vpop.f32.mrb[0].mxu0
      %2374 = vmatprep.mubr.f32.mxu0 0.0
      %2375 = vmatmul.mubr.f32.gmra.mrb[0].mxu0 %v2122
      %v2376 = vpop.f32.mrb[0].mxu0
      %v2377 = vadd.f32 0.0, %v2376
      %v2378 = vpop.f32.mrb[0].mxu0
      %2379 = vmatprep.mubr.f32.mxu0 0.0
      %2380 = vmatmul.mubr.f32.gmra.mrb[0].mxu0 %v2125
      %v2381 = vpop.f32.mrb[0].mxu0
      %v2382 = vadd.f32 0.0, %v2381
      %v2383 = vpop.f32.mrb[0].mxu0
      %2384 = vmatprep.mubr.f32.mxu0 0.0
      %2385 = vmatmul.mubr.f32.gmra.mrb[0].mxu0 %v2128
      %v2386 = vpop.f32.mrb[0].mxu0
      %v2387 = vadd.f32 0.0, %v2386
      %v2388 = vpop.f32.mrb[0].mxu0
      %2389 = vmatprep.mubr.f32.mxu0 0.0
      %2390 = vmatmul.mubr.f32.gmra.mrb[0].mxu0 %v2131
      %v2391 = vpop.f32.mrb[0].mxu0
      %v2392 = vadd.f32 0.0, %v2391
      %v2393 = vpop.f32.mrb[0].mxu0
      %2394 = vmatprep.mubr.f32.mxu0 0.0
      %2395 = vmatmul.mubr.f32.gmra.mrb[0].mxu0 %v2134
      %v2396 = vpop.f32.mrb[0].mxu0
      %v2397 = vadd.f32 0.0, %v2396
      %v2398 = vpop.f32.mrb[0].mxu0
      %2399 = vmatprep.mubr.f32.mxu0 0.0
      %2400 = vmatmul.mubr.f32.gmra.mrb[0].mxu0 %v2137
      %v2401 = vpop.f32.mrb[0].mxu0
      %v2402 = vadd.f32 0.0, %v2401
      %v2403 = vpop.f32.mrb[0].mxu0
      %2404 = vmatprep.mubr.f32.mxu0 0.0
      %2405 = vmatmul.mubr.f32.gmra.mrb[0].mxu0 %v2140
      %v2406 = vpop.f32.mrb[0].mxu0
      %v2407 = vadd.f32 0.0, %v2406
      %v2408 = vpop.f32.mrb[0].mxu0
      %2409 = vmatprep.mubr.f32.mxu0 0.0
      %2410 = vmatmul.mubr.f32.gmra.mrb[0].mxu0 %v2143
      %v2411 = vpop.f32.mrb[0].mxu0
      %v2412 = vadd.f32 0.0, %v2411
      %v2413 = vpop.f32.mrb[0].mxu0
      %2414 = vmatprep.mubr.f32.mxu0 0.0
      %2415 = vmatmul.mubr.f32.gmra.mrb[0].mxu0 %v2146
      %v2416 = vpop.f32.mrb[0].mxu0
      %v2417 = vadd.f32 0.0, %v2416
      %v2418 = vpop.f32.mrb[0].mxu0
      %2419 = vmatprep.mubr.f32.mxu0 0.0
      %2420 = vmatmul.mubr.f32.gmra.mrb[0].mxu0 %v2149
      %v2421 = vpop.f32.mrb[0].mxu0
      %v2422 = vadd.f32 0.0, %v2421
      %v2423 = vpop.f32.mrb[0].mxu0
      %2424 = vmatprep.mubr.f32.mxu0 0.0
      %2425 = vmatmul.mubr.f32.gmra.mrb[0].mxu0 %v2152
      %v2426 = vpop.f32.mrb[0].mxu0
      %v2427 = vadd.f32 0.0, %v2426
      %v2428 = vpop.f32.mrb[0].mxu0
      %2429 = vmatprep.mubr.f32.mxu0 0.0
      %2430 = vmatmul.mubr.f32.gmra.mrb[0].mxu0 %v2155
      %v2431 = vpop.f32.mrb[0].mxu0
      %v2432 = vadd.f32 0.0, %v2431
      %v2433 = vpop.f32.mrb[0].mxu0
      %2434 = vmatprep.mubr.f32.mxu0 0.0
      %2435 = vmatmul.mubr.f32.gmra.mrb[0].mxu0 %v2158
      %v2436 = vpop.f32.mrb[0].mxu0
      %v2437 = vadd.f32 0.0, %v2436
      %v2438 = vpop.f32.mrb[0].mxu0
      %2439 = vmatprep.mubr.f32.mxu0 0.0
      %2440 = vmatmul.mubr.f32.gmra.mrb[0].mxu0 %v2161
      %v2441 = vpop.f32.mrb[0].mxu0
      %v2442 = vadd.f32 0.0, %v2441
      %v2443 = vpop.f32.mrb[0].mxu0
      %2444 = vmatprep.mubr.f32.mxu0 0.0
      %2445 = vmatmul.mubr.f32.gmra.mrb[0].mxu0 %v2164
      %v2446 = vpop.f32.mrb[0].mxu0
      %v2447 = vadd.f32 0.0, %v2446
      %v2448 = vpop.f32.mrb[0].mxu0
      %2449 = vmatprep.mubr.f32.mxu0 0.0
      %2450 = vmatmul.mubr.f32.gmra.mrb[0].mxu0 %v2167
      %v2451 = vpop.f32.mrb[0].mxu0
      %v2452 = vadd.f32 0.0, %v2451
      %v2453 = vpop.f32.mrb[0].mxu0
      %2454 = vmatprep.mubr.f32.mxu0 0.0
      %2455 = vmatmul.mubr.f32.gmra.mrb[0].mxu0 %v2170
      %v2456 = vpop.f32.mrb[0].mxu0
      %v2457 = vadd.f32 0.0, %v2456
      %v2458 = vpop.f32.mrb[0].mxu0
      %2459 = vmatprep.mubr.f32.mxu0 0.0
      %2460 = vmatmul.mubr.f32.gmra.mrb[0].mxu0 %v2173
      %v2461 = vpop.f32.mrb[0].mxu0
      %v2462 = vadd.f32 0.0, %v2461
      %v2463 = vpop.f32.mrb[0].mxu0
      %2464 = vmatprep.mubr.f32.mxu0 0.0
      %2465 = vmatmul.mubr.f32.gmra.mrb[0].mxu0 %v2176
      %v2466 = vpop.f32.mrb[0].mxu0
      %v2467 = vadd.f32 0.0, %v2466
      %v2468 = vpop.f32.mrb[0].mxu0
      %2469 = vmatprep.mubr.f32.mxu0 0.0
      %2470 = vmatmul.mubr.f32.gmra.mrb[0].mxu0 %v2179
      %v2471 = vpop.f32.mrb[0].mxu0
      %v2472 = vadd.f32 0.0, %v2471
      %v2473 = vpop.f32.mrb[0].mxu0
      %2474 = vmatprep.mubr.f32.mxu0 0.0
      %2475 = vmatmul.mubr.f32.gmra.mrb[0].mxu0 %v2182
      %v2476 = vpop.f32.mrb[0].mxu0
      %v2477 = vadd.f32 0.0, %v2476
      %v2478 = vpop.f32.mrb[0].mxu0
      %2479 = vmatprep.mubr.f32.mxu0 0.0
      %2480 = vmatmul.mubr.f32.gmra.mrb[0].mxu0 %v2185
      %v2481 = vpop.f32.mrb[0].mxu0
      %v2482 = vadd.f32 0.0, %v2481
      %v2483 = vpop.f32.mrb[0].mxu0
      %2484 = vmatprep.mubr.f32.mxu0 0.0
      %2485 = vmatmul.mubr.f32.gmra.mrb[0].mxu0 %v2188
      %v2486 = vpop.f32.mrb[0].mxu0
      %v2487 = vadd.f32 0.0, %v2486
      %v2488 = vpop.f32.mrb[0].mxu0
      %2489 = vmatprep.mubr.f32.mxu0 0.0
      %2490 = vmatmul.mubr.f32.gmra.mrb[0].mxu0 %v2191
      %v2491 = vpop.f32.mrb[0].mxu0
      %v2492 = vadd.f32 0.0, %v2491
      %v2493 = vpop.f32.mrb[0].mxu0
      %2494 = vmatprep.mubr.f32.mxu0 0.0
      %2495 = vmatmul.mubr.f32.gmra.mrb[0].mxu0 %v2194
      %v2496 = vpop.f32.mrb[0].mxu0
      %v2497 = vadd.f32 0.0, %v2496
      %v2498 = vpop.f32.mrb[0].mxu0
      %2499 = vmatprep.mubr.f32.mxu0 0.0
      %2500 = vmatmul.mubr.f32.gmra.mrb[0].mxu0 %v2197
      %v2501 = vpop.f32.mrb[0].mxu0
      %v2502 = vadd.f32 0.0, %v2501
      %v2503 = vpop.f32.mrb[0].mxu0
      %2504 = vmatprep.mubr.f32.mxu0 0.0
      %2505 = vmatmul.mubr.f32.gmra.mrb[0].mxu0 %v2200
      %v2506 = vpop.f32.mrb[0].mxu0
      %v2507 = vadd.f32 0.0, %v2506
      %v2508 = vpop.f32.mrb[0].mxu0
      %2509 = vmatprep.mubr.f32.mxu0 0.0
      %2510 = vmatmul.mubr.f32.gmra.mrb[0].mxu0 %v2203
      %v2511 = vpop.f32.mrb[0].mxu0
      %v2512 = vadd.f32 0.0, %v2511
      %v2513 = vpop.f32.mrb[0].mxu0
      %2514 = vmatprep.mubr.f32.mxu0 0.0
      %2515 = vmatmul.mubr.f32.gmra.mrb[0].mxu0 %v2206
      %v2516 = vpop.f32.mrb[0].mxu0
      %v2517 = vadd.f32 0.0, %v2516
      %v2518 = vpop.f32.mrb[0].mxu0
      %2519 = vmatprep.mubr.f32.mxu0 0.0
      %2520 = vmatmul.mubr.f32.gmra.mrb[0].mxu0 %v2209
      %v2521 = vpop.f32.mrb[0].mxu0
      %v2522 = vadd.f32 0.0, %v2521
      %v2523 = vpop.f32.mrb[0].mxu0
      %2524 = vmatprep.mubr.f32.mxu0 0.0
      %2525 = vmatmul.mubr.f32.gmra.mrb[0].mxu0 %v2212
      %v2526 = vpop.f32.mrb[0].mxu0
      %v2527 = vadd.f32 0.0, %v2526
      %v2528 = vpop.f32.mrb[0].mxu0
      %2529 = vmatprep.mubr.f32.mxu0 0.0
      %2530 = vmatmul.mubr.f32.gmra.mrb[0].mxu0 %v2215
      %v2531 = vpop.f32.mrb[0].mxu0
      %v2532 = vadd.f32 0.0, %v2531
      %v2533 = vpop.f32.mrb[0].mxu0
      %2534 = vmatprep.mubr.f32.mxu0 0.0
      %2535 = vmatmul.mubr.f32.gmra.mrb[0].mxu0 %v2218
      %v2536 = vpop.f32.mrb[0].mxu0
      %v2537 = vadd.f32 0.0, %v2536
      %v2538 = vpop.f32.mrb[0].mxu0
      %2539 = vmatprep.mubr.f32.mxu0 0.0
      %2540 = vmatmul.mubr.f32.gmra.mrb[0].mxu0 %v2221
      %v2541 = vpop.f32.mrb[0].mxu0
      %v2542 = vadd.f32 0.0, %v2541
      %v2543 = vpop.f32.mrb[0].mxu0
      %2544 = vmatprep.mubr.f32.mxu0 0.0
      %2545 = vmatmul.mubr.f32.gmra.mrb[0].mxu0 %v2224
      %v2546 = vpop.f32.mrb[0].mxu0
      %v2547 = vadd.f32 0.0, %v2546
      %v2548 = vpop.f32.mrb[0].mxu0
      %2549 = vmatprep.mubr.f32.mxu0 0.0
      %2550 = vmatmul.mubr.f32.gmra.mrb[0].mxu0 %v2227
      %v2551 = vpop.f32.mrb[0].mxu0
      %v2552 = vadd.f32 0.0, %v2551
      %v2553 = vpop.f32.mrb[0].mxu0
      %2554 = vmatprep.mubr.f32.mxu0 0.0
      %2555 = vmatmul.mubr.f32.gmra.mrb[0].mxu0 %v2230
      %v2556 = vpop.f32.mrb[0].mxu0
      %v2557 = vadd.f32 0.0, %v2556
      %v2558 = vpop.f32.mrb[0].mxu0
      %2559 = vmatprep.mubr.f32.mxu0 0.0
      %2560 = vmatmul.mubr.f32.gmra.mrb[0].mxu0 %v2233
      %v2561 = vpop.f32.mrb[0].mxu0
      %v2562 = vadd.f32 0.0, %v2561
      %v2563 = vpop.f32.mrb[0].mxu0
      %2564 = vmatprep.mubr.f32.mxu0 0.0
      %2565 = vmatmul.mubr.f32.gmra.mrb[0].mxu0 %v2236
      %v2566 = vpop.f32.mrb[0].mxu0
      %v2567 = vadd.f32 0.0, %v2566
      %v2568 = vpop.f32.mrb[0].mxu0
      %2569 = vmatprep.mubr.f32.mxu0 0.0
      %2570 = vmatmul.mubr.f32.gmra.mrb[0].mxu0 %v2239
      %v2571 = vpop.f32.mrb[0].mxu0
      %v2572 = vadd.f32 0.0, %v2571
      %v2573 = vpop.f32.mrb[0].mxu0
      %2574 = vmatprep.mubr.f32.mxu0 0.0
      %2575 = vmatmul.mubr.f32.gmra.mrb[0].mxu0 %v2242
      %v2576 = vpop.f32.mrb[0].mxu0
      %v2577 = vadd.f32 0.0, %v2576
      %v2578 = vpop.f32.mrb[0].mxu0
      %2579 = vmatprep.mubr.f32.mxu0 0.0
      %2580 = vmatmul.mubr.f32.gmra.mrb[0].mxu0 %v2245
      %v2581 = vpop.f32.mrb[0].mxu0
      %v2582 = vadd.f32 0.0, %v2581
      %v2583 = vpop.f32.mrb[0].mxu0
      %2584 = vdwg.mxu0
      %v2585 = vadd.f32 %v1975, %v2317
      %v2586 = vadd.f32 %v1976, %v2322
      %v2587 = vadd.f32 %v1977, %v2327
      %v2588 = vadd.f32 %v1978, %v2332
      %v2589 = vadd.f32 %v1979, %v2337
      %v2590 = vadd.f32 %v1980, %v2342
      %v2591 = vadd.f32 %v1981, %v2347
      %v2592 = vadd.f32 %v1982, %v2352
      %v2593 = vadd.f32 %v1983, %v2357
      %v2594 = vadd.f32 %v1984, %v2362
      %v2595 = vadd.f32 %v1985, %v2367
      %v2596 = vadd.f32 %v1986, %v2372
      %v2597 = vadd.f32 %v1987, %v2377
      %v2598 = vadd.f32 %v1988, %v2382
      %v2599 = vadd.f32 %v1989, %v2387
      %v2600 = vadd.f32 %v1990, %v2392
      %v2601 = vadd.f32 %v1991, %v2397
      %v2602 = vadd.f32 %v1992, %v2402
      %v2603 = vadd.f32 %v1993, %v2407
      %v2604 = vadd.f32 %v1994, %v2412
      %v2605 = vadd.f32 %v1995, %v2417
      %v2606 = vadd.f32 %v1996, %v2422
      %v2607 = vadd.f32 %v1997, %v2427
      %v2608 = vadd.f32 %v1998, %v2432
      %v2609 = vadd.f32 %v1999, %v2437
      %v2610 = vadd.f32 %v2000, %v2442
      %v2611 = vadd.f32 %v2001, %v2447
      %v2612 = vadd.f32 %v2002, %v2452
      %v2613 = vadd.f32 %v2003, %v2457
      %v2614 = vadd.f32 %v2004, %v2462
      %v2615 = vadd.f32 %v2005, %v2467
      %v2616 = vadd.f32 %v2006, %v2472
      %v2617 = vadd.f32 %v2007, %v2477
      %v2618 = vadd.f32 %v2008, %v2482
      %v2619 = vadd.f32 %v2009, %v2487
      %v2620 = vadd.f32 %v2010, %v2492
      %v2621 = vadd.f32 %v2011, %v2497
      %v2622 = vadd.f32 %v2012, %v2502
      %v2623 = vadd.f32 %v2013, %v2507
      %v2624 = vadd.f32 %v2014, %v2512
      %v2625 = vadd.f32 %v2015, %v2517
      %v2626 = vadd.f32 %v2016, %v2522
      %v2627 = vadd.f32 %v2017, %v2527
      %v2628 = vadd.f32 %v2018, %v2532
      %v2629 = vadd.f32 %v2019, %v2537
      %v2630 = vadd.f32 %v2020, %v2542
      %v2631 = vadd.f32 %v2021, %v2547
      %v2632 = vadd.f32 %v2022, %v2552
      %v2633 = vadd.f32 %v2023, %v2557
      %v2634 = vadd.f32 %v2024, %v2562
      %v2635 = vadd.f32 %v2025, %v2567
      %v2636 = vadd.f32 %v2026, %v2572
      %v2637 = vadd.f32 %v2027, %v2577
      %v2638 = vadd.f32 %v2028, %v2582
      %v2639 = vld [vmem:[%s300 + $0x19] sm:$0xff]
      %v2640 = vld [vmem:[%s300 + $0x21] sm:$0xff]
      %v2641 = vld [vmem:[%s300 + $0x29] sm:$0xff]
      %v2642 = vld [vmem:[%s300 + $0x31] sm:$0xff]
      %v2643 = vld [vmem:[%s300 + $0x39] sm:$0xff]
      %v2644 = vld [vmem:[%s300 + $0x41] sm:$0xff]
      %v2645 = vld [vmem:[%s300 + $0x49] sm:$0xff]
      %v2646 = vld [vmem:[%s300 + $0x51] sm:$0xff]
      %v2647 = vld [vmem:[%s300 + $0x59] sm:$0xff]
      %v2648 = vld [vmem:[%s300 + $0x61] sm:$0xff]
      %v2649 = vld [vmem:[%s300 + $0x69] sm:$0xff]
      %v2650 = vld [vmem:[%s300 + $0x71] sm:$0xff]
      %v2651 = vld [vmem:[%s300 + $0x79] sm:$0xff]
      %v2652 = vld [vmem:[%s300 + $0x81] sm:$0xff]
      %v2653 = vld [vmem:[%s300 + $0x89] sm:$0xff]
      %v2654 = vld [vmem:[%s300 + $0x91] sm:$0xff]
      %v2655 = vld [vmem:[%s300 + $0x99] sm:$0xff]
      %v2656 = vld [vmem:[%s300 + $0xa1] sm:$0xff]
      %v2657 = vld [vmem:[%s300 + $0xa9] sm:$0xff]
      %v2658 = vld [vmem:[%s300 + $0xb1] sm:$0xff]
      %v2659 = vld [vmem:[%s300 + $0xb9] sm:$0xff]
      %v2660 = vld [vmem:[%s300 + $0xc1] sm:$0xff]
      %v2661 = vld [vmem:[%s300 + $0xc9] sm:$0xff]
      %v2662 = vld [vmem:[%s300 + $0xd1] sm:$0xff]
      %v2663 = vld [vmem:[%s300 + $0xd9] sm:$0xff]
      %v2664 = vld [vmem:[%s300 + $0xe1] sm:$0xff]
      %v2665 = vld [vmem:[%s300 + $0xe9] sm:$0xff]
      %v2666 = vld [vmem:[%s300 + $0xf1] sm:$0xff]
      %v2667 = vld [vmem:[%s300 + $0xf9] sm:$0xff]
      %v2668 = vld [vmem:[%s300 + $0x101] sm:$0xff]
      %v2669 = vld [vmem:[%s300 + $0x109] sm:$0xff]
      %v2670 = vld [vmem:[%s300 + $0x111] sm:$0xff]
      %v2671 = vld [vmem:[%s300 + $0x119] sm:$0xff]
      %v2672 = vld [vmem:[%s300 + $0x121] sm:$0xff]
      %v2673 = vld [vmem:[%s300 + $0x129] sm:$0xff]
      %v2674 = vld [vmem:[%s300 + $0x131] sm:$0xff]
      %v2675 = vld [vmem:[%s300 + $0x139] sm:$0xff]
      %v2676 = vld [vmem:[%s300 + $0x141] sm:$0xff]
      %v2677 = vld [vmem:[%s300 + $0x149] sm:$0xff]
      %v2678 = vld [vmem:[%s300 + $0x151] sm:$0xff]
      %v2679 = vld [vmem:[%s300 + $0x159] sm:$0xff]
      %v2680 = vld [vmem:[%s300 + $0x161] sm:$0xff]
      %v2681 = vld [vmem:[%s300 + $0x169] sm:$0xff]
      %v2682 = vld [vmem:[%s300 + $0x171] sm:$0xff]
      %v2683 = vld [vmem:[%s300 + $0x179] sm:$0xff]
      %v2684 = vld [vmem:[%s300 + $0x181] sm:$0xff]
      %v2685 = vld [vmem:[%s300 + $0x189] sm:$0xff]
      %v2686 = vld [vmem:[%s300 + $0x191] sm:$0xff]
      %v2687 = vld [vmem:[%s300 + $0x199] sm:$0xff]
      %v2688 = vld [vmem:[%s300 + $0x1a1] sm:$0xff]
      %v2689 = vld [vmem:[%s300 + $0x1a9] sm:$0xff]
      %v2690 = vld [vmem:[%s300 + $0x1b1] sm:$0xff]
      %v2691 = vld [vmem:[%s300 + $0x1b9] sm:$0xff]
      %v2692 = vld [vmem:[%s300 + $0x1c1] sm:$0xff]
      %s2693 = scalar_lea.vmem %s2, 16
      %v2694 = vld [vmem:[%s2693] sm:$0xf]
      %v2696 = vsel %vm417, %v2639, 0
      %v2699 = vsel %vm417, %v2640, 0
      %v2702 = vsel %vm417, %v2641, 0
      %v2705 = vsel %vm417, %v2642, 0
      %v2708 = vsel %vm417, %v2643, 0
      %v2711 = vsel %vm417, %v2644, 0
      %v2714 = vsel %vm417, %v2645, 0
      %v2717 = vsel %vm417, %v2646, 0
      %v2720 = vsel %vm417, %v2647, 0
      %v2723 = vsel %vm417, %v2648, 0
      %v2726 = vsel %vm417, %v2649, 0
      %v2729 = vsel %vm417, %v2650, 0
      %v2732 = vsel %vm417, %v2651, 0
      %v2735 = vsel %vm417, %v2652, 0
      %v2738 = vsel %vm417, %v2653, 0
      %v2741 = vsel %vm417, %v2654, 0
      %v2744 = vsel %vm417, %v2655, 0
      %v2747 = vsel %vm417, %v2656, 0
      %v2750 = vsel %vm417, %v2657, 0
      %v2753 = vsel %vm417, %v2658, 0
      %v2756 = vsel %vm417, %v2659, 0
      %v2759 = vsel %vm417, %v2660, 0
      %v2762 = vsel %vm417, %v2661, 0
      %v2765 = vsel %vm417, %v2662, 0
      %v2768 = vsel %vm417, %v2663, 0
      %v2771 = vsel %vm417, %v2664, 0
      %v2774 = vsel %vm417, %v2665, 0
      %v2777 = vsel %vm417, %v2666, 0
      %v2780 = vsel %vm417, %v2667, 0
      %v2783 = vsel %vm417, %v2668, 0
      %v2786 = vsel %vm417, %v2669, 0
      %v2789 = vsel %vm417, %v2670, 0
      %v2792 = vsel %vm417, %v2671, 0
      %v2795 = vsel %vm417, %v2672, 0
      %v2798 = vsel %vm417, %v2673, 0
      %v2801 = vsel %vm417, %v2674, 0
      %v2804 = vsel %vm417, %v2675, 0
      %v2807 = vsel %vm417, %v2676, 0
      %v2810 = vsel %vm417, %v2677, 0
      %v2813 = vsel %vm417, %v2678, 0
      %v2816 = vsel %vm417, %v2679, 0
      %v2819 = vsel %vm417, %v2680, 0
      %v2822 = vsel %vm417, %v2681, 0
      %v2825 = vsel %vm417, %v2682, 0
      %v2828 = vsel %vm417, %v2683, 0
      %v2831 = vsel %vm417, %v2684, 0
      %v2834 = vsel %vm417, %v2685, 0
      %v2837 = vsel %vm417, %v2686, 0
      %v2840 = vsel %vm417, %v2687, 0
      %v2843 = vsel %vm417, %v2688, 0
      %v2846 = vsel %vm417, %v2689, 0
      %v2849 = vsel %vm417, %v2690, 0
      %v2852 = vsel %vm417, %v2691, 0
      %v2855 = vsel %vm417, %v2692, 0
      %v2858 = vsel %vm580, %v2694, 0
      %2860 = vmatprep.subr.mxu0 0.0
      %2861 = vmatpush1.msra.mxu0 %v2858
      %2862 = vmatprep.subr.mxu0 0.0
      %2863 = vmatpush1.msra.mxu0 0.0
      %2864 = vmatprep.subr.mxu0 0.0
      %2865 = vmatpush1.msra.mxu0 0.0
      %2866 = vmatprep.subr.mxu0 0.0
      %2867 = vmatpush1.msra.mxu0 0.0
      %2868 = vmatprep.subr.mxu0 0.0
      %2869 = vmatpush1.msra.mxu0 0.0
      %2870 = vmatprep.subr.mxu0 0.0
      %2871 = vmatpush1.msra.mxu0 0.0
      %2872 = vmatprep.subr.mxu0 0.0
      %2873 = vmatpush1.msra.mxu0 0.0
      %2874 = vmatprep.subr.mxu0 0.0
      %2875 = vmatpush1.msra.mxu0 0.0
      %2876 = vmatprep.subr.mxu0 0.0
      %2877 = vmatpush1.msra.mxu0 0.0
      %2878 = vmatprep.subr.mxu0 0.0
      %2879 = vmatpush1.msra.mxu0 0.0
      %2880 = vmatprep.subr.mxu0 0.0
      %2881 = vmatpush1.msra.mxu0 0.0
      %2882 = vmatprep.subr.mxu0 0.0
      %2883 = vmatpush1.msra.mxu0 0.0
      %2884 = vmatprep.subr.mxu0 0.0
      %2885 = vmatpush1.msra.mxu0 0.0
      %2886 = vmatprep.subr.mxu0 0.0
      %2887 = vmatpush1.msra.mxu0 0.0
      %2888 = vmatprep.subr.mxu0 0.0
      %2889 = vmatpush1.msra.mxu0 0.0
      %2890 = vmatprep.subr.mxu0 0.0
      %2891 = vmatpush1.msra.mxu0 0.0
      %2892 = vmatprep.subr.mxu0 0.0
      %2893 = vmatpush1.msra.mxu0 0.0
      %2894 = vmatprep.subr.mxu0 0.0
      %2895 = vmatpush1.msra.mxu0 0.0
      %2896 = vmatprep.subr.mxu0 0.0
      %2897 = vmatpush1.msra.mxu0 0.0
      %2898 = vmatprep.subr.mxu0 0.0
      %2899 = vmatpush1.msra.mxu0 0.0
      %2900 = vmatprep.subr.mxu0 0.0
      %2901 = vmatpush1.msra.mxu0 0.0
      %2902 = vmatprep.subr.mxu0 0.0
      %2903 = vmatpush1.msra.mxu0 0.0
      %2904 = vmatprep.subr.mxu0 0.0
      %2905 = vmatpush1.msra.mxu0 0.0
      %2906 = vmatprep.subr.mxu0 0.0
      %2907 = vmatpush1.msra.mxu0 0.0
      %2908 = vmatprep.subr.mxu0 0.0
      %2909 = vmatpush1.msra.mxu0 0.0
      %2910 = vmatprep.subr.mxu0 0.0
      %2911 = vmatpush1.msra.mxu0 0.0
      %2912 = vmatprep.subr.mxu0 0.0
      %2913 = vmatpush1.msra.mxu0 0.0
      %2914 = vmatprep.subr.mxu0 0.0
      %2915 = vmatpush1.msra.mxu0 0.0
      %2916 = vmatprep.subr.mxu0 0.0
      %2917 = vmatpush1.msra.mxu0 0.0
      %2918 = vmatprep.subr.mxu0 0.0
      %2919 = vmatpush1.msra.mxu0 0.0
      %2920 = vmatprep.subr.mxu0 0.0
      %2921 = vmatpush1.msra.mxu0 0.0
      %2922 = vmatprep.subr.mxu0 0.0
      %2923 = vmatpush1.msra.mxu0 0.0
      %2924 = vmatprep.mubr.f32.mxu0 0.0
      %2925 = vmatmul.mubr.f32.gmra.mrb[0].mxu0 %v2696
      %v2926 = vpop.f32.mrb[0].mxu0
      %v2927 = vadd.f32 0.0, %v2926
      %v2928 = vpop.f32.mrb[0].mxu0
      %2929 = vmatprep.mubr.f32.mxu0 0.0
      %2930 = vmatmul.mubr.f32.gmra.mrb[0].mxu0 %v2699
      %v2931 = vpop.f32.mrb[0].mxu0
      %v2932 = vadd.f32 0.0, %v2931
      %v2933 = vpop.f32.mrb[0].mxu0
      %2934 = vmatprep.mubr.f32.mxu0 0.0
      %2935 = vmatmul.mubr.f32.gmra.mrb[0].mxu0 %v2702
      %v2936 = vpop.f32.mrb[0].mxu0
      %v2937 = vadd.f32 0.0, %v2936
      %v2938 = vpop.f32.mrb[0].mxu0
      %2939 = vmatprep.mubr.f32.mxu0 0.0
      %2940 = vmatmul.mubr.f32.gmra.mrb[0].mxu0 %v2705
      %v2941 = vpop.f32.mrb[0].mxu0
      %v2942 = vadd.f32 0.0, %v2941
      %v2943 = vpop.f32.mrb[0].mxu0
      %2944 = vmatprep.mubr.f32.mxu0 0.0
      %2945 = vmatmul.mubr.f32.gmra.mrb[0].mxu0 %v2708
      %v2946 = vpop.f32.mrb[0].mxu0
      %v2947 = vadd.f32 0.0, %v2946
      %v2948 = vpop.f32.mrb[0].mxu0
      %2949 = vmatprep.mubr.f32.mxu0 0.0
      %2950 = vmatmul.mubr.f32.gmra.mrb[0].mxu0 %v2711
      %v2951 = vpop.f32.mrb[0].mxu0
      %v2952 = vadd.f32 0.0, %v2951
      %v2953 = vpop.f32.mrb[0].mxu0
      %2954 = vmatprep.mubr.f32.mxu0 0.0
      %2955 = vmatmul.mubr.f32.gmra.mrb[0].mxu0 %v2714
      %v2956 = vpop.f32.mrb[0].mxu0
      %v2957 = vadd.f32 0.0, %v2956
      %v2958 = vpop.f32.mrb[0].mxu0
      %2959 = vmatprep.mubr.f32.mxu0 0.0
      %2960 = vmatmul.mubr.f32.gmra.mrb[0].mxu0 %v2717
      %v2961 = vpop.f32.mrb[0].mxu0
      %v2962 = vadd.f32 0.0, %v2961
      %v2963 = vpop.f32.mrb[0].mxu0
      %2964 = vmatprep.mubr.f32.mxu0 0.0
      %2965 = vmatmul.mubr.f32.gmra.mrb[0].mxu0 %v2720
      %v2966 = vpop.f32.mrb[0].mxu0
      %v2967 = vadd.f32 0.0, %v2966
      %v2968 = vpop.f32.mrb[0].mxu0
      %2969 = vmatprep.mubr.f32.mxu0 0.0
      %2970 = vmatmul.mubr.f32.gmra.mrb[0].mxu0 %v2723
      %v2971 = vpop.f32.mrb[0].mxu0
      %v2972 = vadd.f32 0.0, %v2971
      %v2973 = vpop.f32.mrb[0].mxu0
      %2974 = vmatprep.mubr.f32.mxu0 0.0
      %2975 = vmatmul.mubr.f32.gmra.mrb[0].mxu0 %v2726
      %v2976 = vpop.f32.mrb[0].mxu0
      %v2977 = vadd.f32 0.0, %v2976
      %v2978 = vpop.f32.mrb[0].mxu0
      %2979 = vmatprep.mubr.f32.mxu0 0.0
      %2980 = vmatmul.mubr.f32.gmra.mrb[0].mxu0 %v2729
      %v2981 = vpop.f32.mrb[0].mxu0
      %v2982 = vadd.f32 0.0, %v2981
      %v2983 = vpop.f32.mrb[0].mxu0
      %2984 = vmatprep.mubr.f32.mxu0 0.0
      %2985 = vmatmul.mubr.f32.gmra.mrb[0].mxu0 %v2732
      %v2986 = vpop.f32.mrb[0].mxu0
      %v2987 = vadd.f32 0.0, %v2986
      %v2988 = vpop.f32.mrb[0].mxu0
      %2989 = vmatprep.mubr.f32.mxu0 0.0
      %2990 = vmatmul.mubr.f32.gmra.mrb[0].mxu0 %v2735
      %v2991 = vpop.f32.mrb[0].mxu0
      %v2992 = vadd.f32 0.0, %v2991
      %v2993 = vpop.f32.mrb[0].mxu0
      %2994 = vmatprep.mubr.f32.mxu0 0.0
      %2995 = vmatmul.mubr.f32.gmra.mrb[0].mxu0 %v2738
      %v2996 = vpop.f32.mrb[0].mxu0
      %v2997 = vadd.f32 0.0, %v2996
      %v2998 = vpop.f32.mrb[0].mxu0
      %2999 = vmatprep.mubr.f32.mxu0 0.0
      %3000 = vmatmul.mubr.f32.gmra.mrb[0].mxu0 %v2741
      %v3001 = vpop.f32.mrb[0].mxu0
      %v3002 = vadd.f32 0.0, %v3001
      %v3003 = vpop.f32.mrb[0].mxu0
      %3004 = vmatprep.mubr.f32.mxu0 0.0
      %3005 = vmatmul.mubr.f32.gmra.mrb[0].mxu0 %v2744
      %v3006 = vpop.f32.mrb[0].mxu0
      %v3007 = vadd.f32 0.0, %v3006
      %v3008 = vpop.f32.mrb[0].mxu0
      %3009 = vmatprep.mubr.f32.mxu0 0.0
      %3010 = vmatmul.mubr.f32.gmra.mrb[0].mxu0 %v2747
      %v3011 = vpop.f32.mrb[0].mxu0
      %v3012 = vadd.f32 0.0, %v3011
      %v3013 = vpop.f32.mrb[0].mxu0
      %3014 = vmatprep.mubr.f32.mxu0 0.0
      %3015 = vmatmul.mubr.f32.gmra.mrb[0].mxu0 %v2750
      %v3016 = vpop.f32.mrb[0].mxu0
      %v3017 = vadd.f32 0.0, %v3016
      %v3018 = vpop.f32.mrb[0].mxu0
      %3019 = vmatprep.mubr.f32.mxu0 0.0
      %3020 = vmatmul.mubr.f32.gmra.mrb[0].mxu0 %v2753
      %v3021 = vpop.f32.mrb[0].mxu0
      %v3022 = vadd.f32 0.0, %v3021
      %v3023 = vpop.f32.mrb[0].mxu0
      %3024 = vmatprep.mubr.f32.mxu0 0.0
      %3025 = vmatmul.mubr.f32.gmra.mrb[0].mxu0 %v2756
      %v3026 = vpop.f32.mrb[0].mxu0
      %v3027 = vadd.f32 0.0, %v3026
      %v3028 = vpop.f32.mrb[0].mxu0
      %3029 = vmatprep.mubr.f32.mxu0 0.0
      %3030 = vmatmul.mubr.f32.gmra.mrb[0].mxu0 %v2759
      %v3031 = vpop.f32.mrb[0].mxu0
      %v3032 = vadd.f32 0.0, %v3031
      %v3033 = vpop.f32.mrb[0].mxu0
      %3034 = vmatprep.mubr.f32.mxu0 0.0
      %3035 = vmatmul.mubr.f32.gmra.mrb[0].mxu0 %v2762
      %v3036 = vpop.f32.mrb[0].mxu0
      %v3037 = vadd.f32 0.0, %v3036
      %v3038 = vpop.f32.mrb[0].mxu0
      %3039 = vmatprep.mubr.f32.mxu0 0.0
      %3040 = vmatmul.mubr.f32.gmra.mrb[0].mxu0 %v2765
      %v3041 = vpop.f32.mrb[0].mxu0
      %v3042 = vadd.f32 0.0, %v3041
      %v3043 = vpop.f32.mrb[0].mxu0
      %3044 = vmatprep.mubr.f32.mxu0 0.0
      %3045 = vmatmul.mubr.f32.gmra.mrb[0].mxu0 %v2768
      %v3046 = vpop.f32.mrb[0].mxu0
      %v3047 = vadd.f32 0.0, %v3046
      %v3048 = vpop.f32.mrb[0].mxu0
      %3049 = vmatprep.mubr.f32.mxu0 0.0
      %3050 = vmatmul.mubr.f32.gmra.mrb[0].mxu0 %v2771
      %v3051 = vpop.f32.mrb[0].mxu0
      %v3052 = vadd.f32 0.0, %v3051
      %v3053 = vpop.f32.mrb[0].mxu0
      %3054 = vmatprep.mubr.f32.mxu0 0.0
      %3055 = vmatmul.mubr.f32.gmra.mrb[0].mxu0 %v2774
      %v3056 = vpop.f32.mrb[0].mxu0
      %v3057 = vadd.f32 0.0, %v3056
      %v3058 = vpop.f32.mrb[0].mxu0
      %3059 = vmatprep.mubr.f32.mxu0 0.0
      %3060 = vmatmul.mubr.f32.gmra.mrb[0].mxu0 %v2777
      %v3061 = vpop.f32.mrb[0].mxu0
      %v3062 = vadd.f32 0.0, %v3061
      %v3063 = vpop.f32.mrb[0].mxu0
      %3064 = vmatprep.mubr.f32.mxu0 0.0
      %3065 = vmatmul.mubr.f32.gmra.mrb[0].mxu0 %v2780
      %v3066 = vpop.f32.mrb[0].mxu0
      %v3067 = vadd.f32 0.0, %v3066
      %v3068 = vpop.f32.mrb[0].mxu0
      %3069 = vmatprep.mubr.f32.mxu0 0.0
      %3070 = vmatmul.mubr.f32.gmra.mrb[0].mxu0 %v2783
      %v3071 = vpop.f32.mrb[0].mxu0
      %v3072 = vadd.f32 0.0, %v3071
      %v3073 = vpop.f32.mrb[0].mxu0
      %3074 = vmatprep.mubr.f32.mxu0 0.0
      %3075 = vmatmul.mubr.f32.gmra.mrb[0].mxu0 %v2786
      %v3076 = vpop.f32.mrb[0].mxu0
      %v3077 = vadd.f32 0.0, %v3076
      %v3078 = vpop.f32.mrb[0].mxu0
      %3079 = vmatprep.mubr.f32.mxu0 0.0
      %3080 = vmatmul.mubr.f32.gmra.mrb[0].mxu0 %v2789
      %v3081 = vpop.f32.mrb[0].mxu0
      %v3082 = vadd.f32 0.0, %v3081
      %v3083 = vpop.f32.mrb[0].mxu0
      %3084 = vmatprep.mubr.f32.mxu0 0.0
      %3085 = vmatmul.mubr.f32.gmra.mrb[0].mxu0 %v2792
      %v3086 = vpop.f32.mrb[0].mxu0
      %v3087 = vadd.f32 0.0, %v3086
      %v3088 = vpop.f32.mrb[0].mxu0
      %3089 = vmatprep.mubr.f32.mxu0 0.0
      %3090 = vmatmul.mubr.f32.gmra.mrb[0].mxu0 %v2795
      %v3091 = vpop.f32.mrb[0].mxu0
      %v3092 = vadd.f32 0.0, %v3091
      %v3093 = vpop.f32.mrb[0].mxu0
      %3094 = vmatprep.mubr.f32.mxu0 0.0
      %3095 = vmatmul.mubr.f32.gmra.mrb[0].mxu0 %v2798
      %v3096 = vpop.f32.mrb[0].mxu0
      %v3097 = vadd.f32 0.0, %v3096
      %v3098 = vpop.f32.mrb[0].mxu0
      %3099 = vmatprep.mubr.f32.mxu0 0.0
      %3100 = vmatmul.mubr.f32.gmra.mrb[0].mxu0 %v2801
      %v3101 = vpop.f32.mrb[0].mxu0
      %v3102 = vadd.f32 0.0, %v3101
      %v3103 = vpop.f32.mrb[0].mxu0
      %3104 = vmatprep.mubr.f32.mxu0 0.0
      %3105 = vmatmul.mubr.f32.gmra.mrb[0].mxu0 %v2804
      %v3106 = vpop.f32.mrb[0].mxu0
      %v3107 = vadd.f32 0.0, %v3106
      %v3108 = vpop.f32.mrb[0].mxu0
      %3109 = vmatprep.mubr.f32.mxu0 0.0
      %3110 = vmatmul.mubr.f32.gmra.mrb[0].mxu0 %v2807
      %v3111 = vpop.f32.mrb[0].mxu0
      %v3112 = vadd.f32 0.0, %v3111
      %v3113 = vpop.f32.mrb[0].mxu0
      %3114 = vmatprep.mubr.f32.mxu0 0.0
      %3115 = vmatmul.mubr.f32.gmra.mrb[0].mxu0 %v2810
      %v3116 = vpop.f32.mrb[0].mxu0
      %v3117 = vadd.f32 0.0, %v3116
      %v3118 = vpop.f32.mrb[0].mxu0
      %3119 = vmatprep.mubr.f32.mxu0 0.0
      %3120 = vmatmul.mubr.f32.gmra.mrb[0].mxu0 %v2813
      %v3121 = vpop.f32.mrb[0].mxu0
      %v3122 = vadd.f32 0.0, %v3121
      %v3123 = vpop.f32.mrb[0].mxu0
      %3124 = vmatprep.mubr.f32.mxu0 0.0
      %3125 = vmatmul.mubr.f32.gmra.mrb[0].mxu0 %v2816
      %v3126 = vpop.f32.mrb[0].mxu0
      %v3127 = vadd.f32 0.0, %v3126
      %v3128 = vpop.f32.mrb[0].mxu0
      %3129 = vmatprep.mubr.f32.mxu0 0.0
      %3130 = vmatmul.mubr.f32.gmra.mrb[0].mxu0 %v2819
      %v3131 = vpop.f32.mrb[0].mxu0
      %v3132 = vadd.f32 0.0, %v3131
      %v3133 = vpop.f32.mrb[0].mxu0
      %3134 = vmatprep.mubr.f32.mxu0 0.0
      %3135 = vmatmul.mubr.f32.gmra.mrb[0].mxu0 %v2822
      %v3136 = vpop.f32.mrb[0].mxu0
      %v3137 = vadd.f32 0.0, %v3136
      %v3138 = vpop.f32.mrb[0].mxu0
      %3139 = vmatprep.mubr.f32.mxu0 0.0
      %3140 = vmatmul.mubr.f32.gmra.mrb[0].mxu0 %v2825
      %v3141 = vpop.f32.mrb[0].mxu0
      %v3142 = vadd.f32 0.0, %v3141
      %v3143 = vpop.f32.mrb[0].mxu0
      %3144 = vmatprep.mubr.f32.mxu0 0.0
      %3145 = vmatmul.mubr.f32.gmra.mrb[0].mxu0 %v2828
      %v3146 = vpop.f32.mrb[0].mxu0
      %v3147 = vadd.f32 0.0, %v3146
      %v3148 = vpop.f32.mrb[0].mxu0
      %3149 = vmatprep.mubr.f32.mxu0 0.0
      %3150 = vmatmul.mubr.f32.gmra.mrb[0].mxu0 %v2831
      %v3151 = vpop.f32.mrb[0].mxu0
      %v3152 = vadd.f32 0.0, %v3151
      %v3153 = vpop.f32.mrb[0].mxu0
      %3154 = vmatprep.mubr.f32.mxu0 0.0
      %3155 = vmatmul.mubr.f32.gmra.mrb[0].mxu0 %v2834
      %v3156 = vpop.f32.mrb[0].mxu0
      %v3157 = vadd.f32 0.0, %v3156
      %v3158 = vpop.f32.mrb[0].mxu0
      %3159 = vmatprep.mubr.f32.mxu0 0.0
      %3160 = vmatmul.mubr.f32.gmra.mrb[0].mxu0 %v2837
      %v3161 = vpop.f32.mrb[0].mxu0
      %v3162 = vadd.f32 0.0, %v3161
      %v3163 = vpop.f32.mrb[0].mxu0
      %3164 = vmatprep.mubr.f32.mxu0 0.0
      %3165 = vmatmul.mubr.f32.gmra.mrb[0].mxu0 %v2840
      %v3166 = vpop.f32.mrb[0].mxu0
      %v3167 = vadd.f32 0.0, %v3166
      %v3168 = vpop.f32.mrb[0].mxu0
      %3169 = vmatprep.mubr.f32.mxu0 0.0
      %3170 = vmatmul.mubr.f32.gmra.mrb[0].mxu0 %v2843
      %v3171 = vpop.f32.mrb[0].mxu0
      %v3172 = vadd.f32 0.0, %v3171
      %v3173 = vpop.f32.mrb[0].mxu0
      %3174 = vmatprep.mubr.f32.mxu0 0.0
      %3175 = vmatmul.mubr.f32.gmra.mrb[0].mxu0 %v2846
      %v3176 = vpop.f32.mrb[0].mxu0
      %v3177 = vadd.f32 0.0, %v3176
      %v3178 = vpop.f32.mrb[0].mxu0
      %3179 = vmatprep.mubr.f32.mxu0 0.0
      %3180 = vmatmul.mubr.f32.gmra.mrb[0].mxu0 %v2849
      %v3181 = vpop.f32.mrb[0].mxu0
      %v3182 = vadd.f32 0.0, %v3181
      %v3183 = vpop.f32.mrb[0].mxu0
      %3184 = vmatprep.mubr.f32.mxu0 0.0
      %3185 = vmatmul.mubr.f32.gmra.mrb[0].mxu0 %v2852
      %v3186 = vpop.f32.mrb[0].mxu0
      %v3187 = vadd.f32 0.0, %v3186
      %v3188 = vpop.f32.mrb[0].mxu0
      %3189 = vmatprep.mubr.f32.mxu0 0.0
      %3190 = vmatmul.mubr.f32.gmra.mrb[0].mxu0 %v2855
      %v3191 = vpop.f32.mrb[0].mxu0
      %v3192 = vadd.f32 0.0, %v3191
      %v3193 = vpop.f32.mrb[0].mxu0
      %3194 = vdwg.mxu0
      %v3195 = vadd.f32 %v2585, %v2927
      %v3196 = vadd.f32 %v2586, %v2932
      %v3197 = vadd.f32 %v2587, %v2937
      %v3198 = vadd.f32 %v2588, %v2942
      %v3199 = vadd.f32 %v2589, %v2947
      %v3200 = vadd.f32 %v2590, %v2952
      %v3201 = vadd.f32 %v2591, %v2957
      %v3202 = vadd.f32 %v2592, %v2962
      %v3203 = vadd.f32 %v2593, %v2967
      %v3204 = vadd.f32 %v2594, %v2972
      %v3205 = vadd.f32 %v2595, %v2977
      %v3206 = vadd.f32 %v2596, %v2982
      %v3207 = vadd.f32 %v2597, %v2987
      %v3208 = vadd.f32 %v2598, %v2992
      %v3209 = vadd.f32 %v2599, %v2997
      %v3210 = vadd.f32 %v2600, %v3002
      %v3211 = vadd.f32 %v2601, %v3007
      %v3212 = vadd.f32 %v2602, %v3012
      %v3213 = vadd.f32 %v2603, %v3017
      %v3214 = vadd.f32 %v2604, %v3022
      %v3215 = vadd.f32 %v2605, %v3027
      %v3216 = vadd.f32 %v2606, %v3032
      %v3217 = vadd.f32 %v2607, %v3037
      %v3218 = vadd.f32 %v2608, %v3042
      %v3219 = vadd.f32 %v2609, %v3047
      %v3220 = vadd.f32 %v2610, %v3052
      %v3221 = vadd.f32 %v2611, %v3057
      %v3222 = vadd.f32 %v2612, %v3062
      %v3223 = vadd.f32 %v2613, %v3067
      %v3224 = vadd.f32 %v2614, %v3072
      %v3225 = vadd.f32 %v2615, %v3077
      %v3226 = vadd.f32 %v2616, %v3082
      %v3227 = vadd.f32 %v2617, %v3087
      %v3228 = vadd.f32 %v2618, %v3092
      %v3229 = vadd.f32 %v2619, %v3097
      %v3230 = vadd.f32 %v2620, %v3102
      %v3231 = vadd.f32 %v2621, %v3107
      %v3232 = vadd.f32 %v2622, %v3112
      %v3233 = vadd.f32 %v2623, %v3117
      %v3234 = vadd.f32 %v2624, %v3122
      %v3235 = vadd.f32 %v2625, %v3127
      %v3236 = vadd.f32 %v2626, %v3132
      %v3237 = vadd.f32 %v2627, %v3137
      %v3238 = vadd.f32 %v2628, %v3142
      %v3239 = vadd.f32 %v2629, %v3147
      %v3240 = vadd.f32 %v2630, %v3152
      %v3241 = vadd.f32 %v2631, %v3157
      %v3242 = vadd.f32 %v2632, %v3162
      %v3243 = vadd.f32 %v2633, %v3167
      %v3244 = vadd.f32 %v2634, %v3172
      %v3245 = vadd.f32 %v2635, %v3177
      %v3246 = vadd.f32 %v2636, %v3182
      %v3247 = vadd.f32 %v2637, %v3187
      %v3248 = vadd.f32 %v2638, %v3192
      %v3249 = vld [vmem:[%s300 + $0x1a] sm:$0xff]
      %v3250 = vld [vmem:[%s300 + $0x22] sm:$0xff]
      %v3251 = vld [vmem:[%s300 + $0x2a] sm:$0xff]
      %v3252 = vld [vmem:[%s300 + $0x32] sm:$0xff]
      %v3253 = vld [vmem:[%s300 + $0x3a] sm:$0xff]
      %v3254 = vld [vmem:[%s300 + $0x42] sm:$0xff]
      %v3255 = vld [vmem:[%s300 + $0x4a] sm:$0xff]
      %v3256 = vld [vmem:[%s300 + $0x52] sm:$0xff]
      %v3257 = vld [vmem:[%s300 + $0x5a] sm:$0xff]
      %v3258 = vld [vmem:[%s300 + $0x62] sm:$0xff]
      %v3259 = vld [vmem:[%s300 + $0x6a] sm:$0xff]
      %v3260 = vld [vmem:[%s300 + $0x72] sm:$0xff]
      %v3261 = vld [vmem:[%s300 + $0x7a] sm:$0xff]
      %v3262 = vld [vmem:[%s300 + $0x82] sm:$0xff]
      %v3263 = vld [vmem:[%s300 + $0x8a] sm:$0xff]
      %v3264 = vld [vmem:[%s300 + $0x92] sm:$0xff]
      %v3265 = vld [vmem:[%s300 + $0x9a] sm:$0xff]
      %v3266 = vld [vmem:[%s300 + $0xa2] sm:$0xff]
      %v3267 = vld [vmem:[%s300 + $0xaa] sm:$0xff]
      %v3268 = vld [vmem:[%s300 + $0xb2] sm:$0xff]
      %v3269 = vld [vmem:[%s300 + $0xba] sm:$0xff]
      %v3270 = vld [vmem:[%s300 + $0xc2] sm:$0xff]
      %v3271 = vld [vmem:[%s300 + $0xca] sm:$0xff]
      %v3272 = vld [vmem:[%s300 + $0xd2] sm:$0xff]
      %v3273 = vld [vmem:[%s300 + $0xda] sm:$0xff]
      %v3274 = vld [vmem:[%s300 + $0xe2] sm:$0xff]
      %v3275 = vld [vmem:[%s300 + $0xea] sm:$0xff]
      %v3276 = vld [vmem:[%s300 + $0xf2] sm:$0xff]
      %v3277 = vld [vmem:[%s300 + $0xfa] sm:$0xff]
      %v3278 = vld [vmem:[%s300 + $0x102] sm:$0xff]
      %v3279 = vld [vmem:[%s300 + $0x10a] sm:$0xff]
      %v3280 = vld [vmem:[%s300 + $0x112] sm:$0xff]
      %v3281 = vld [vmem:[%s300 + $0x11a] sm:$0xff]
      %v3282 = vld [vmem:[%s300 + $0x122] sm:$0xff]
      %v3283 = vld [vmem:[%s300 + $0x12a] sm:$0xff]
      %v3284 = vld [vmem:[%s300 + $0x132] sm:$0xff]
      %v3285 = vld [vmem:[%s300 + $0x13a] sm:$0xff]
      %v3286 = vld [vmem:[%s300 + $0x142] sm:$0xff]
      %v3287 = vld [vmem:[%s300 + $0x14a] sm:$0xff]
      %v3288 = vld [vmem:[%s300 + $0x152] sm:$0xff]
      %v3289 = vld [vmem:[%s300 + $0x15a] sm:$0xff]
      %v3290 = vld [vmem:[%s300 + $0x162] sm:$0xff]
      %v3291 = vld [vmem:[%s300 + $0x16a] sm:$0xff]
      %v3292 = vld [vmem:[%s300 + $0x172] sm:$0xff]
      %v3293 = vld [vmem:[%s300 + $0x17a] sm:$0xff]
      %v3294 = vld [vmem:[%s300 + $0x182] sm:$0xff]
      %v3295 = vld [vmem:[%s300 + $0x18a] sm:$0xff]
      %v3296 = vld [vmem:[%s300 + $0x192] sm:$0xff]
      %v3297 = vld [vmem:[%s300 + $0x19a] sm:$0xff]
      %v3298 = vld [vmem:[%s300 + $0x1a2] sm:$0xff]
      %v3299 = vld [vmem:[%s300 + $0x1aa] sm:$0xff]
      %v3300 = vld [vmem:[%s300 + $0x1b2] sm:$0xff]
      %v3301 = vld [vmem:[%s300 + $0x1ba] sm:$0xff]
      %v3302 = vld [vmem:[%s300 + $0x1c2] sm:$0xff]
      %s3303 = scalar_lea.vmem %s2, 20
      %v3304 = vld [vmem:[%s3303] sm:$0xf]
      %v3306 = vsel %vm417, %v3249, 0
      %v3309 = vsel %vm417, %v3250, 0
      %v3312 = vsel %vm417, %v3251, 0
      %v3315 = vsel %vm417, %v3252, 0
      %v3318 = vsel %vm417, %v3253, 0
      %v3321 = vsel %vm417, %v3254, 0
      %v3324 = vsel %vm417, %v3255, 0
      %v3327 = vsel %vm417, %v3256, 0
      %v3330 = vsel %vm417, %v3257, 0
      %v3333 = vsel %vm417, %v3258, 0
      %v3336 = vsel %vm417, %v3259, 0
      %v3339 = vsel %vm417, %v3260, 0
      %v3342 = vsel %vm417, %v3261, 0
      %v3345 = vsel %vm417, %v3262, 0
      %v3348 = vsel %vm417, %v3263, 0
      %v3351 = vsel %vm417, %v3264, 0
      %v3354 = vsel %vm417, %v3265, 0
      %v3357 = vsel %vm417, %v3266, 0
      %v3360 = vsel %vm417, %v3267, 0
      %v3363 = vsel %vm417, %v3268, 0
      %v3366 = vsel %vm417, %v3269, 0
      %v3369 = vsel %vm417, %v3270, 0
      %v3372 = vsel %vm417, %v3271, 0
      %v3375 = vsel %vm417, %v3272, 0
      %v3378 = vsel %vm417, %v3273, 0
      %v3381 = vsel %vm417, %v3274, 0
      %v3384 = vsel %vm417, %v3275, 0
      %v3387 = vsel %vm417, %v3276, 0
      %v3390 = vsel %vm417, %v3277, 0
      %v3393 = vsel %vm417, %v3278, 0
      %v3396 = vsel %vm417, %v3279, 0
      %v3399 = vsel %vm417, %v3280, 0
      %v3402 = vsel %vm417, %v3281, 0
      %v3405 = vsel %vm417, %v3282, 0
      %v3408 = vsel %vm417, %v3283, 0
      %v3411 = vsel %vm417, %v3284, 0
      %v3414 = vsel %vm417, %v3285, 0
      %v3417 = vsel %vm417, %v3286, 0
      %v3420 = vsel %vm417, %v3287, 0
      %v3423 = vsel %vm417, %v3288, 0
      %v3426 = vsel %vm417, %v3289, 0
      %v3429 = vsel %vm417, %v3290, 0
      %v3432 = vsel %vm417, %v3291, 0
      %v3435 = vsel %vm417, %v3292, 0
      %v3438 = vsel %vm417, %v3293, 0
      %v3441 = vsel %vm417, %v3294, 0
      %v3444 = vsel %vm417, %v3295, 0
      %v3447 = vsel %vm417, %v3296, 0
      %v3450 = vsel %vm417, %v3297, 0
      %v3453 = vsel %vm417, %v3298, 0
      %v3456 = vsel %vm417, %v3299, 0
      %v3459 = vsel %vm417, %v3300, 0
      %v3462 = vsel %vm417, %v3301, 0
      %v3465 = vsel %vm417, %v3302, 0
      %v3468 = vsel %vm580, %v3304, 0
      %3470 = vmatprep.subr.mxu0 0.0
      %3471 = vmatpush1.msra.mxu0 %v3468
      %3472 = vmatprep.subr.mxu0 0.0
      %3473 = vmatpush1.msra.mxu0 0.0
      %3474 = vmatprep.subr.mxu0 0.0
      %3475 = vmatpush1.msra.mxu0 0.0
      %3476 = vmatprep.subr.mxu0 0.0
      %3477 = vmatpush1.msra.mxu0 0.0
      %3478 = vmatprep.subr.mxu0 0.0
      %3479 = vmatpush1.msra.mxu0 0.0
      %3480 = vmatprep.subr.mxu0 0.0
      %3481 = vmatpush1.msra.mxu0 0.0
      %3482 = vmatprep.subr.mxu0 0.0
      %3483 = vmatpush1.msra.mxu0 0.0
      %3484 = vmatprep.subr.mxu0 0.0
      %3485 = vmatpush1.msra.mxu0 0.0
      %3486 = vmatprep.subr.mxu0 0.0
      %3487 = vmatpush1.msra.mxu0 0.0
      %3488 = vmatprep.subr.mxu0 0.0
      %3489 = vmatpush1.msra.mxu0 0.0
      %3490 = vmatprep.subr.mxu0 0.0
      %3491 = vmatpush1.msra.mxu0 0.0
      %3492 = vmatprep.subr.mxu0 0.0
      %3493 = vmatpush1.msra.mxu0 0.0
      %3494 = vmatprep.subr.mxu0 0.0
      %3495 = vmatpush1.msra.mxu0 0.0
      %3496 = vmatprep.subr.mxu0 0.0
      %3497 = vmatpush1.msra.mxu0 0.0
      %3498 = vmatprep.subr.mxu0 0.0
      %3499 = vmatpush1.msra.mxu0 0.0
      %3500 = vmatprep.subr.mxu0 0.0
      %3501 = vmatpush1.msra.mxu0 0.0
      %3502 = vmatprep.subr.mxu0 0.0
      %3503 = vmatpush1.msra.mxu0 0.0
      %3504 = vmatprep.subr.mxu0 0.0
      %3505 = vmatpush1.msra.mxu0 0.0
      %3506 = vmatprep.subr.mxu0 0.0
      %3507 = vmatpush1.msra.mxu0 0.0
      %3508 = vmatprep.subr.mxu0 0.0
      %3509 = vmatpush1.msra.mxu0 0.0
      %3510 = vmatprep.subr.mxu0 0.0
      %3511 = vmatpush1.msra.mxu0 0.0
      %3512 = vmatprep.subr.mxu0 0.0
      %3513 = vmatpush1.msra.mxu0 0.0
      %3514 = vmatprep.subr.mxu0 0.0
      %3515 = vmatpush1.msra.mxu0 0.0
      %3516 = vmatprep.subr.mxu0 0.0
      %3517 = vmatpush1.msra.mxu0 0.0
      %3518 = vmatprep.subr.mxu0 0.0
      %3519 = vmatpush1.msra.mxu0 0.0
      %3520 = vmatprep.subr.mxu0 0.0
      %3521 = vmatpush1.msra.mxu0 0.0
      %3522 = vmatprep.subr.mxu0 0.0
      %3523 = vmatpush1.msra.mxu0 0.0
      %3524 = vmatprep.subr.mxu0 0.0
      %3525 = vmatpush1.msra.mxu0 0.0
      %3526 = vmatprep.subr.mxu0 0.0
      %3527 = vmatpush1.msra.mxu0 0.0
      %3528 = vmatprep.subr.mxu0 0.0
      %3529 = vmatpush1.msra.mxu0 0.0
      %3530 = vmatprep.subr.mxu0 0.0
      %3531 = vmatpush1.msra.mxu0 0.0
      %3532 = vmatprep.subr.mxu0 0.0
      %3533 = vmatpush1.msra.mxu0 0.0
      %3534 = vmatprep.mubr.f32.mxu0 0.0
      %3535 = vmatmul.mubr.f32.gmra.mrb[0].mxu0 %v3306
      %v3536 = vpop.f32.mrb[0].mxu0
      %v3537 = vadd.f32 0.0, %v3536
      %v3538 = vpop.f32.mrb[0].mxu0
      %3539 = vmatprep.mubr.f32.mxu0 0.0
      %3540 = vmatmul.mubr.f32.gmra.mrb[0].mxu0 %v3309
      %v3541 = vpop.f32.mrb[0].mxu0
      %v3542 = vadd.f32 0.0, %v3541
      %v3543 = vpop.f32.mrb[0].mxu0
      %3544 = vmatprep.mubr.f32.mxu0 0.0
      %3545 = vmatmul.mubr.f32.gmra.mrb[0].mxu0 %v3312
      %v3546 = vpop.f32.mrb[0].mxu0
      %v3547 = vadd.f32 0.0, %v3546
      %v3548 = vpop.f32.mrb[0].mxu0
      %3549 = vmatprep.mubr.f32.mxu0 0.0
      %3550 = vmatmul.mubr.f32.gmra.mrb[0].mxu0 %v3315
      %v3551 = vpop.f32.mrb[0].mxu0
      %v3552 = vadd.f32 0.0, %v3551
      %v3553 = vpop.f32.mrb[0].mxu0
      %3554 = vmatprep.mubr.f32.mxu0 0.0
      %3555 = vmatmul.mubr.f32.gmra.mrb[0].mxu0 %v3318
      %v3556 = vpop.f32.mrb[0].mxu0
      %v3557 = vadd.f32 0.0, %v3556
      %v3558 = vpop.f32.mrb[0].mxu0
      %3559 = vmatprep.mubr.f32.mxu0 0.0
      %3560 = vmatmul.mubr.f32.gmra.mrb[0].mxu0 %v3321
      %v3561 = vpop.f32.mrb[0].mxu0
      %v3562 = vadd.f32 0.0, %v3561
      %v3563 = vpop.f32.mrb[0].mxu0
      %3564 = vmatprep.mubr.f32.mxu0 0.0
      %3565 = vmatmul.mubr.f32.gmra.mrb[0].mxu0 %v3324
      %v3566 = vpop.f32.mrb[0].mxu0
      %v3567 = vadd.f32 0.0, %v3566
      %v3568 = vpop.f32.mrb[0].mxu0
      %3569 = vmatprep.mubr.f32.mxu0 0.0
      %3570 = vmatmul.mubr.f32.gmra.mrb[0].mxu0 %v3327
      %v3571 = vpop.f32.mrb[0].mxu0
      %v3572 = vadd.f32 0.0, %v3571
      %v3573 = vpop.f32.mrb[0].mxu0
      %3574 = vmatprep.mubr.f32.mxu0 0.0
      %3575 = vmatmul.mubr.f32.gmra.mrb[0].mxu0 %v3330
      %v3576 = vpop.f32.mrb[0].mxu0
      %v3577 = vadd.f32 0.0, %v3576
      %v3578 = vpop.f32.mrb[0].mxu0
      %3579 = vmatprep.mubr.f32.mxu0 0.0
      %3580 = vmatmul.mubr.f32.gmra.mrb[0].mxu0 %v3333
      %v3581 = vpop.f32.mrb[0].mxu0
      %v3582 = vadd.f32 0.0, %v3581
      %v3583 = vpop.f32.mrb[0].mxu0
      %3584 = vmatprep.mubr.f32.mxu0 0.0
      %3585 = vmatmul.mubr.f32.gmra.mrb[0].mxu0 %v3336
      %v3586 = vpop.f32.mrb[0].mxu0
      %v3587 = vadd.f32 0.0, %v3586
      %v3588 = vpop.f32.mrb[0].mxu0
      %3589 = vmatprep.mubr.f32.mxu0 0.0
      %3590 = vmatmul.mubr.f32.gmra.mrb[0].mxu0 %v3339
      %v3591 = vpop.f32.mrb[0].mxu0
      %v3592 = vadd.f32 0.0, %v3591
      %v3593 = vpop.f32.mrb[0].mxu0
      %3594 = vmatprep.mubr.f32.mxu0 0.0
      %3595 = vmatmul.mubr.f32.gmra.mrb[0].mxu0 %v3342
      %v3596 = vpop.f32.mrb[0].mxu0
      %v3597 = vadd.f32 0.0, %v3596
      %v3598 = vpop.f32.mrb[0].mxu0
      %3599 = vmatprep.mubr.f32.mxu0 0.0
      %3600 = vmatmul.mubr.f32.gmra.mrb[0].mxu0 %v3345
      %v3601 = vpop.f32.mrb[0].mxu0
      %v3602 = vadd.f32 0.0, %v3601
      %v3603 = vpop.f32.mrb[0].mxu0
      %3604 = vmatprep.mubr.f32.mxu0 0.0
      %3605 = vmatmul.mubr.f32.gmra.mrb[0].mxu0 %v3348
      %v3606 = vpop.f32.mrb[0].mxu0
      %v3607 = vadd.f32 0.0, %v3606
      %v3608 = vpop.f32.mrb[0].mxu0
      %3609 = vmatprep.mubr.f32.mxu0 0.0
      %3610 = vmatmul.mubr.f32.gmra.mrb[0].mxu0 %v3351
      %v3611 = vpop.f32.mrb[0].mxu0
      %v3612 = vadd.f32 0.0, %v3611
      %v3613 = vpop.f32.mrb[0].mxu0
      %3614 = vmatprep.mubr.f32.mxu0 0.0
      %3615 = vmatmul.mubr.f32.gmra.mrb[0].mxu0 %v3354
      %v3616 = vpop.f32.mrb[0].mxu0
      %v3617 = vadd.f32 0.0, %v3616
      %v3618 = vpop.f32.mrb[0].mxu0
      %3619 = vmatprep.mubr.f32.mxu0 0.0
      %3620 = vmatmul.mubr.f32.gmra.mrb[0].mxu0 %v3357
      %v3621 = vpop.f32.mrb[0].mxu0
      %v3622 = vadd.f32 0.0, %v3621
      %v3623 = vpop.f32.mrb[0].mxu0
      %3624 = vmatprep.mubr.f32.mxu0 0.0
      %3625 = vmatmul.mubr.f32.gmra.mrb[0].mxu0 %v3360
      %v3626 = vpop.f32.mrb[0].mxu0
      %v3627 = vadd.f32 0.0, %v3626
      %v3628 = vpop.f32.mrb[0].mxu0
      %3629 = vmatprep.mubr.f32.mxu0 0.0
      %3630 = vmatmul.mubr.f32.gmra.mrb[0].mxu0 %v3363
      %v3631 = vpop.f32.mrb[0].mxu0
      %v3632 = vadd.f32 0.0, %v3631
      %v3633 = vpop.f32.mrb[0].mxu0
      %3634 = vmatprep.mubr.f32.mxu0 0.0
      %3635 = vmatmul.mubr.f32.gmra.mrb[0].mxu0 %v3366
      %v3636 = vpop.f32.mrb[0].mxu0
      %v3637 = vadd.f32 0.0, %v3636
      %v3638 = vpop.f32.mrb[0].mxu0
      %3639 = vmatprep.mubr.f32.mxu0 0.0
      %3640 = vmatmul.mubr.f32.gmra.mrb[0].mxu0 %v3369
      %v3641 = vpop.f32.mrb[0].mxu0
      %v3642 = vadd.f32 0.0, %v3641
      %v3643 = vpop.f32.mrb[0].mxu0
      %3644 = vmatprep.mubr.f32.mxu0 0.0
      %3645 = vmatmul.mubr.f32.gmra.mrb[0].mxu0 %v3372
      %v3646 = vpop.f32.mrb[0].mxu0
      %v3647 = vadd.f32 0.0, %v3646
      %v3648 = vpop.f32.mrb[0].mxu0
      %3649 = vmatprep.mubr.f32.mxu0 0.0
      %3650 = vmatmul.mubr.f32.gmra.mrb[0].mxu0 %v3375
      %v3651 = vpop.f32.mrb[0].mxu0
      %v3652 = vadd.f32 0.0, %v3651
      %v3653 = vpop.f32.mrb[0].mxu0
      %3654 = vmatprep.mubr.f32.mxu0 0.0
      %3655 = vmatmul.mubr.f32.gmra.mrb[0].mxu0 %v3378
      %v3656 = vpop.f32.mrb[0].mxu0
      %v3657 = vadd.f32 0.0, %v3656
      %v3658 = vpop.f32.mrb[0].mxu0
      %3659 = vmatprep.mubr.f32.mxu0 0.0
      %3660 = vmatmul.mubr.f32.gmra.mrb[0].mxu0 %v3381
      %v3661 = vpop.f32.mrb[0].mxu0
      %v3662 = vadd.f32 0.0, %v3661
      %v3663 = vpop.f32.mrb[0].mxu0
      %3664 = vmatprep.mubr.f32.mxu0 0.0
      %3665 = vmatmul.mubr.f32.gmra.mrb[0].mxu0 %v3384
      %v3666 = vpop.f32.mrb[0].mxu0
      %v3667 = vadd.f32 0.0, %v3666
      %v3668 = vpop.f32.mrb[0].mxu0
      %3669 = vmatprep.mubr.f32.mxu0 0.0
      %3670 = vmatmul.mubr.f32.gmra.mrb[0].mxu0 %v3387
      %v3671 = vpop.f32.mrb[0].mxu0
      %v3672 = vadd.f32 0.0, %v3671
      %v3673 = vpop.f32.mrb[0].mxu0
      %3674 = vmatprep.mubr.f32.mxu0 0.0
      %3675 = vmatmul.mubr.f32.gmra.mrb[0].mxu0 %v3390
      %v3676 = vpop.f32.mrb[0].mxu0
      %v3677 = vadd.f32 0.0, %v3676
      %v3678 = vpop.f32.mrb[0].mxu0
      %3679 = vmatprep.mubr.f32.mxu0 0.0
      %3680 = vmatmul.mubr.f32.gmra.mrb[0].mxu0 %v3393
      %v3681 = vpop.f32.mrb[0].mxu0
      %v3682 = vadd.f32 0.0, %v3681
      %v3683 = vpop.f32.mrb[0].mxu0
      %3684 = vmatprep.mubr.f32.mxu0 0.0
      %3685 = vmatmul.mubr.f32.gmra.mrb[0].mxu0 %v3396
      %v3686 = vpop.f32.mrb[0].mxu0
      %v3687 = vadd.f32 0.0, %v3686
      %v3688 = vpop.f32.mrb[0].mxu0
      %3689 = vmatprep.mubr.f32.mxu0 0.0
      %3690 = vmatmul.mubr.f32.gmra.mrb[0].mxu0 %v3399
      %v3691 = vpop.f32.mrb[0].mxu0
      %v3692 = vadd.f32 0.0, %v3691
      %v3693 = vpop.f32.mrb[0].mxu0
      %3694 = vmatprep.mubr.f32.mxu0 0.0
      %3695 = vmatmul.mubr.f32.gmra.mrb[0].mxu0 %v3402
      %v3696 = vpop.f32.mrb[0].mxu0
      %v3697 = vadd.f32 0.0, %v3696
      %v3698 = vpop.f32.mrb[0].mxu0
      %3699 = vmatprep.mubr.f32.mxu0 0.0
      %3700 = vmatmul.mubr.f32.gmra.mrb[0].mxu0 %v3405
      %v3701 = vpop.f32.mrb[0].mxu0
      %v3702 = vadd.f32 0.0, %v3701
      %v3703 = vpop.f32.mrb[0].mxu0
      %3704 = vmatprep.mubr.f32.mxu0 0.0
      %3705 = vmatmul.mubr.f32.gmra.mrb[0].mxu0 %v3408
      %v3706 = vpop.f32.mrb[0].mxu0
      %v3707 = vadd.f32 0.0, %v3706
      %v3708 = vpop.f32.mrb[0].mxu0
      %3709 = vmatprep.mubr.f32.mxu0 0.0
      %3710 = vmatmul.mubr.f32.gmra.mrb[0].mxu0 %v3411
      %v3711 = vpop.f32.mrb[0].mxu0
      %v3712 = vadd.f32 0.0, %v3711
      %v3713 = vpop.f32.mrb[0].mxu0
      %3714 = vmatprep.mubr.f32.mxu0 0.0
      %3715 = vmatmul.mubr.f32.gmra.mrb[0].mxu0 %v3414
      %v3716 = vpop.f32.mrb[0].mxu0
      %v3717 = vadd.f32 0.0, %v3716
      %v3718 = vpop.f32.mrb[0].mxu0
      %3719 = vmatprep.mubr.f32.mxu0 0.0
      %3720 = vmatmul.mubr.f32.gmra.mrb[0].mxu0 %v3417
      %v3721 = vpop.f32.mrb[0].mxu0
      %v3722 = vadd.f32 0.0, %v3721
      %v3723 = vpop.f32.mrb[0].mxu0
      %3724 = vmatprep.mubr.f32.mxu0 0.0
      %3725 = vmatmul.mubr.f32.gmra.mrb[0].mxu0 %v3420
      %v3726 = vpop.f32.mrb[0].mxu0
      %v3727 = vadd.f32 0.0, %v3726
      %v3728 = vpop.f32.mrb[0].mxu0
      %3729 = vmatprep.mubr.f32.mxu0 0.0
      %3730 = vmatmul.mubr.f32.gmra.mrb[0].mxu0 %v3423
      %v3731 = vpop.f32.mrb[0].mxu0
      %v3732 = vadd.f32 0.0, %v3731
      %v3733 = vpop.f32.mrb[0].mxu0
      %3734 = vmatprep.mubr.f32.mxu0 0.0
      %3735 = vmatmul.mubr.f32.gmra.mrb[0].mxu0 %v3426
      %v3736 = vpop.f32.mrb[0].mxu0
      %v3737 = vadd.f32 0.0, %v3736
      %v3738 = vpop.f32.mrb[0].mxu0
      %3739 = vmatprep.mubr.f32.mxu0 0.0
      %3740 = vmatmul.mubr.f32.gmra.mrb[0].mxu0 %v3429
      %v3741 = vpop.f32.mrb[0].mxu0
      %v3742 = vadd.f32 0.0, %v3741
      %v3743 = vpop.f32.mrb[0].mxu0
      %3744 = vmatprep.mubr.f32.mxu0 0.0
      %3745 = vmatmul.mubr.f32.gmra.mrb[0].mxu0 %v3432
      %v3746 = vpop.f32.mrb[0].mxu0
      %v3747 = vadd.f32 0.0, %v3746
      %v3748 = vpop.f32.mrb[0].mxu0
      %3749 = vmatprep.mubr.f32.mxu0 0.0
      %3750 = vmatmul.mubr.f32.gmra.mrb[0].mxu0 %v3435
      %v3751 = vpop.f32.mrb[0].mxu0
      %v3752 = vadd.f32 0.0, %v3751
      %v3753 = vpop.f32.mrb[0].mxu0
      %3754 = vmatprep.mubr.f32.mxu0 0.0
      %3755 = vmatmul.mubr.f32.gmra.mrb[0].mxu0 %v3438
      %v3756 = vpop.f32.mrb[0].mxu0
      %v3757 = vadd.f32 0.0, %v3756
      %v3758 = vpop.f32.mrb[0].mxu0
      %3759 = vmatprep.mubr.f32.mxu0 0.0
      %3760 = vmatmul.mubr.f32.gmra.mrb[0].mxu0 %v3441
      %v3761 = vpop.f32.mrb[0].mxu0
      %v3762 = vadd.f32 0.0, %v3761
      %v3763 = vpop.f32.mrb[0].mxu0
      %3764 = vmatprep.mubr.f32.mxu0 0.0
      %3765 = vmatmul.mubr.f32.gmra.mrb[0].mxu0 %v3444
      %v3766 = vpop.f32.mrb[0].mxu0
      %v3767 = vadd.f32 0.0, %v3766
      %v3768 = vpop.f32.mrb[0].mxu0
      %3769 = vmatprep.mubr.f32.mxu0 0.0
      %3770 = vmatmul.mubr.f32.gmra.mrb[0].mxu0 %v3447
      %v3771 = vpop.f32.mrb[0].mxu0
      %v3772 = vadd.f32 0.0, %v3771
      %v3773 = vpop.f32.mrb[0].mxu0
      %3774 = vmatprep.mubr.f32.mxu0 0.0
      %3775 = vmatmul.mubr.f32.gmra.mrb[0].mxu0 %v3450
      %v3776 = vpop.f32.mrb[0].mxu0
      %v3777 = vadd.f32 0.0, %v3776
      %v3778 = vpop.f32.mrb[0].mxu0
      %3779 = vmatprep.mubr.f32.mxu0 0.0
      %3780 = vmatmul.mubr.f32.gmra.mrb[0].mxu0 %v3453
      %v3781 = vpop.f32.mrb[0].mxu0
      %v3782 = vadd.f32 0.0, %v3781
      %v3783 = vpop.f32.mrb[0].mxu0
      %3784 = vmatprep.mubr.f32.mxu0 0.0
      %3785 = vmatmul.mubr.f32.gmra.mrb[0].mxu0 %v3456
      %v3786 = vpop.f32.mrb[0].mxu0
      %v3787 = vadd.f32 0.0, %v3786
      %v3788 = vpop.f32.mrb[0].mxu0
      %3789 = vmatprep.mubr.f32.mxu0 0.0
      %3790 = vmatmul.mubr.f32.gmra.mrb[0].mxu0 %v3459
      %v3791 = vpop.f32.mrb[0].mxu0
      %v3792 = vadd.f32 0.0, %v3791
      %v3793 = vpop.f32.mrb[0].mxu0
      %3794 = vmatprep.mubr.f32.mxu0 0.0
      %3795 = vmatmul.mubr.f32.gmra.mrb[0].mxu0 %v3462
      %v3796 = vpop.f32.mrb[0].mxu0
      %v3797 = vadd.f32 0.0, %v3796
      %v3798 = vpop.f32.mrb[0].mxu0
      %3799 = vmatprep.mubr.f32.mxu0 0.0
      %3800 = vmatmul.mubr.f32.gmra.mrb[0].mxu0 %v3465
      %v3801 = vpop.f32.mrb[0].mxu0
      %v3802 = vadd.f32 0.0, %v3801
      %v3803 = vpop.f32.mrb[0].mxu0
      %3804 = vdwg.mxu0
      %v3805 = vadd.f32 %v3195, %v3537
      %v3806 = vadd.f32 %v3196, %v3542
      %v3807 = vadd.f32 %v3197, %v3547
      %v3808 = vadd.f32 %v3198, %v3552
      %v3809 = vadd.f32 %v3199, %v3557
      %v3810 = vadd.f32 %v3200, %v3562
      %v3811 = vadd.f32 %v3201, %v3567
      %v3812 = vadd.f32 %v3202, %v3572
      %v3813 = vadd.f32 %v3203, %v3577
      %v3814 = vadd.f32 %v3204, %v3582
      %v3815 = vadd.f32 %v3205, %v3587
      %v3816 = vadd.f32 %v3206, %v3592
      %v3817 = vadd.f32 %v3207, %v3597
      %v3818 = vadd.f32 %v3208, %v3602
      %v3819 = vadd.f32 %v3209, %v3607
      %v3820 = vadd.f32 %v3210, %v3612
      %v3821 = vadd.f32 %v3211, %v3617
      %v3822 = vadd.f32 %v3212, %v3622
      %v3823 = vadd.f32 %v3213, %v3627
      %v3824 = vadd.f32 %v3214, %v3632
      %v3825 = vadd.f32 %v3215, %v3637
      %v3826 = vadd.f32 %v3216, %v3642
      %v3827 = vadd.f32 %v3217, %v3647
      %v3828 = vadd.f32 %v3218, %v3652
      %v3829 = vadd.f32 %v3219, %v3657
      %v3830 = vadd.f32 %v3220, %v3662
      %v3831 = vadd.f32 %v3221, %v3667
      %v3832 = vadd.f32 %v3222, %v3672
      %v3833 = vadd.f32 %v3223, %v3677
      %v3834 = vadd.f32 %v3224, %v3682
      %v3835 = vadd.f32 %v3225, %v3687
      %v3836 = vadd.f32 %v3226, %v3692
      %v3837 = vadd.f32 %v3227, %v3697
      %v3838 = vadd.f32 %v3228, %v3702
      %v3839 = vadd.f32 %v3229, %v3707
      %v3840 = vadd.f32 %v3230, %v3712
      %v3841 = vadd.f32 %v3231, %v3717
      %v3842 = vadd.f32 %v3232, %v3722
      %v3843 = vadd.f32 %v3233, %v3727
      %v3844 = vadd.f32 %v3234, %v3732
      %v3845 = vadd.f32 %v3235, %v3737
      %v3846 = vadd.f32 %v3236, %v3742
      %v3847 = vadd.f32 %v3237, %v3747
      %v3848 = vadd.f32 %v3238, %v3752
      %v3849 = vadd.f32 %v3239, %v3757
      %v3850 = vadd.f32 %v3240, %v3762
      %v3851 = vadd.f32 %v3241, %v3767
      %v3852 = vadd.f32 %v3242, %v3772
      %v3853 = vadd.f32 %v3243, %v3777
      %v3854 = vadd.f32 %v3244, %v3782
      %v3855 = vadd.f32 %v3245, %v3787
      %v3856 = vadd.f32 %v3246, %v3792
      %v3857 = vadd.f32 %v3247, %v3797
      %v3858 = vadd.f32 %v3248, %v3802
      %v3859 = vld [vmem:[%s300 + $0x30] sm:$0xff]
      %v3860 = vld [vmem:[%s300 + $0x38] sm:$0xff]
      %v3861 = vld [vmem:[%s300 + $0x40] sm:$0xff]
      %v3862 = vld [vmem:[%s300 + $0x48] sm:$0xff]
      %v3863 = vld [vmem:[%s300 + $0x50] sm:$0xff]
      %v3864 = vld [vmem:[%s300 + $0x58] sm:$0xff]
      %v3865 = vld [vmem:[%s300 + $0x60] sm:$0xff]
      %v3866 = vld [vmem:[%s300 + $0x68] sm:$0xff]
      %v3867 = vld [vmem:[%s300 + $0x70] sm:$0xff]
      %v3868 = vld [vmem:[%s300 + $0x78] sm:$0xff]
      %v3869 = vld [vmem:[%s300 + $0x80] sm:$0xff]
      %v3870 = vld [vmem:[%s300 + $0x88] sm:$0xff]
      %v3871 = vld [vmem:[%s300 + $0x90] sm:$0xff]
      %v3872 = vld [vmem:[%s300 + $0x98] sm:$0xff]
      %v3873 = vld [vmem:[%s300 + $0xa0] sm:$0xff]
      %v3874 = vld [vmem:[%s300 + $0xa8] sm:$0xff]
      %v3875 = vld [vmem:[%s300 + $0xb0] sm:$0xff]
      %v3876 = vld [vmem:[%s300 + $0xb8] sm:$0xff]
      %v3877 = vld [vmem:[%s300 + $0xc0] sm:$0xff]
      %v3878 = vld [vmem:[%s300 + $0xc8] sm:$0xff]
      %v3879 = vld [vmem:[%s300 + $0xd0] sm:$0xff]
      %v3880 = vld [vmem:[%s300 + $0xd8] sm:$0xff]
      %v3881 = vld [vmem:[%s300 + $0xe0] sm:$0xff]
      %v3882 = vld [vmem:[%s300 + $0xe8] sm:$0xff]
      %v3883 = vld [vmem:[%s300 + $0xf0] sm:$0xff]
      %v3884 = vld [vmem:[%s300 + $0xf8] sm:$0xff]
      %v3885 = vld [vmem:[%s300 + $0x100] sm:$0xff]
      %v3886 = vld [vmem:[%s300 + $0x108] sm:$0xff]
      %v3887 = vld [vmem:[%s300 + $0x110] sm:$0xff]
      %v3888 = vld [vmem:[%s300 + $0x118] sm:$0xff]
      %v3889 = vld [vmem:[%s300 + $0x120] sm:$0xff]
      %v3890 = vld [vmem:[%s300 + $0x128] sm:$0xff]
      %v3891 = vld [vmem:[%s300 + $0x130] sm:$0xff]
      %v3892 = vld [vmem:[%s300 + $0x138] sm:$0xff]
      %v3893 = vld [vmem:[%s300 + $0x140] sm:$0xff]
      %v3894 = vld [vmem:[%s300 + $0x148] sm:$0xff]
      %v3895 = vld [vmem:[%s300 + $0x150] sm:$0xff]
      %v3896 = vld [vmem:[%s300 + $0x158] sm:$0xff]
      %v3897 = vld [vmem:[%s300 + $0x160] sm:$0xff]
      %v3898 = vld [vmem:[%s300 + $0x168] sm:$0xff]
      %v3899 = vld [vmem:[%s300 + $0x170] sm:$0xff]
      %v3900 = vld [vmem:[%s300 + $0x178] sm:$0xff]
      %v3901 = vld [vmem:[%s300 + $0x180] sm:$0xff]
      %v3902 = vld [vmem:[%s300 + $0x188] sm:$0xff]
      %v3903 = vld [vmem:[%s300 + $0x190] sm:$0xff]
      %v3904 = vld [vmem:[%s300 + $0x198] sm:$0xff]
      %v3905 = vld [vmem:[%s300 + $0x1a0] sm:$0xff]
      %v3906 = vld [vmem:[%s300 + $0x1a8] sm:$0xff]
      %v3907 = vld [vmem:[%s300 + $0x1b0] sm:$0xff]
      %v3908 = vld [vmem:[%s300 + $0x1b8] sm:$0xff]
      %v3909 = vld [vmem:[%s300 + $0x1c0] sm:$0xff]
      %v3910 = vld [vmem:[%s300 + $0x1c8] sm:$0xff]
      %v3911 = vld [vmem:[%s300 + $0x1d0] sm:$0xff]
      %v3912 = vld [vmem:[%s300 + $0x1d8] sm:$0xff]
      %s3913 = scalar_lea.vmem %s2, 24
      %v3914 = vld [vmem:[%s3913] sm:$0xf]
      %v3916 = vsel %vm417, %v3859, 0
      %v3919 = vsel %vm417, %v3860, 0
      %v3922 = vsel %vm417, %v3861, 0
      %v3925 = vsel %vm417, %v3862, 0
      %v3928 = vsel %vm417, %v3863, 0
      %v3931 = vsel %vm417, %v3864, 0
      %v3934 = vsel %vm417, %v3865, 0
      %v3937 = vsel %vm417, %v3866, 0
      %v3940 = vsel %vm417, %v3867, 0
      %v3943 = vsel %vm417, %v3868, 0
      %v3946 = vsel %vm417, %v3869, 0
      %v3949 = vsel %vm417, %v3870, 0
      %v3952 = vsel %vm417, %v3871, 0
      %v3955 = vsel %vm417, %v3872, 0
      %v3958 = vsel %vm417, %v3873, 0
      %v3961 = vsel %vm417, %v3874, 0
      %v3964 = vsel %vm417, %v3875, 0
      %v3967 = vsel %vm417, %v3876, 0
      %v3970 = vsel %vm417, %v3877, 0
      %v3973 = vsel %vm417, %v3878, 0
      %v3976 = vsel %vm417, %v3879, 0
      %v3979 = vsel %vm417, %v3880, 0
      %v3982 = vsel %vm417, %v3881, 0
      %v3985 = vsel %vm417, %v3882, 0
      %v3988 = vsel %vm417, %v3883, 0
      %v3991 = vsel %vm417, %v3884, 0
      %v3994 = vsel %vm417, %v3885, 0
      %v3997 = vsel %vm417, %v3886, 0
      %v4000 = vsel %vm417, %v3887, 0
      %v4003 = vsel %vm417, %v3888, 0
      %v4006 = vsel %vm417, %v3889, 0
      %v4009 = vsel %vm417, %v3890, 0
      %v4012 = vsel %vm417, %v3891, 0
      %v4015 = vsel %vm417, %v3892, 0
      %v4018 = vsel %vm417, %v3893, 0
      %v4021 = vsel %vm417, %v3894, 0
      %v4024 = vsel %vm417, %v3895, 0
      %v4027 = vsel %vm417, %v3896, 0
      %v4030 = vsel %vm417, %v3897, 0
      %v4033 = vsel %vm417, %v3898, 0
      %v4036 = vsel %vm417, %v3899, 0
      %v4039 = vsel %vm417, %v3900, 0
      %v4042 = vsel %vm417, %v3901, 0
      %v4045 = vsel %vm417, %v3902, 0
      %v4048 = vsel %vm417, %v3903, 0
      %v4051 = vsel %vm417, %v3904, 0
      %v4054 = vsel %vm417, %v3905, 0
      %v4057 = vsel %vm417, %v3906, 0
      %v4060 = vsel %vm417, %v3907, 0
      %v4063 = vsel %vm417, %v3908, 0
      %v4066 = vsel %vm417, %v3909, 0
      %v4069 = vsel %vm417, %v3910, 0
      %v4072 = vsel %vm417, %v3911, 0
      %v4075 = vsel %vm417, %v3912, 0
      %v4078 = vsel %vm580, %v3914, 0
      %4080 = vmatprep.subr.mxu0 0.0
      %4081 = vmatpush1.msra.mxu0 %v4078
      %4082 = vmatprep.subr.mxu0 0.0
      %4083 = vmatpush1.msra.mxu0 0.0
      %4084 = vmatprep.subr.mxu0 0.0
      %4085 = vmatpush1.msra.mxu0 0.0
      %4086 = vmatprep.subr.mxu0 0.0
      %4087 = vmatpush1.msra.mxu0 0.0
      %4088 = vmatprep.subr.mxu0 0.0
      %4089 = vmatpush1.msra.mxu0 0.0
      %4090 = vmatprep.subr.mxu0 0.0
      %4091 = vmatpush1.msra.mxu0 0.0
      %4092 = vmatprep.subr.mxu0 0.0
      %4093 = vmatpush1.msra.mxu0 0.0
      %4094 = vmatprep.subr.mxu0 0.0
      %4095 = vmatpush1.msra.mxu0 0.0
      %4096 = vmatprep.subr.mxu0 0.0
      %4097 = vmatpush1.msra.mxu0 0.0
      %4098 = vmatprep.subr.mxu0 0.0
      %4099 = vmatpush1.msra.mxu0 0.0
      %4100 = vmatprep.subr.mxu0 0.0
      %4101 = vmatpush1.msra.mxu0 0.0
      %4102 = vmatprep.subr.mxu0 0.0
      %4103 = vmatpush1.msra.mxu0 0.0
      %4104 = vmatprep.subr.mxu0 0.0
      %4105 = vmatpush1.msra.mxu0 0.0
      %4106 = vmatprep.subr.mxu0 0.0
      %4107 = vmatpush1.msra.mxu0 0.0
      %4108 = vmatprep.subr.mxu0 0.0
      %4109 = vmatpush1.msra.mxu0 0.0
      %4110 = vmatprep.subr.mxu0 0.0
      %4111 = vmatpush1.msra.mxu0 0.0
      %4112 = vmatprep.subr.mxu0 0.0
      %4113 = vmatpush1.msra.mxu0 0.0
      %4114 = vmatprep.subr.mxu0 0.0
      %4115 = vmatpush1.msra.mxu0 0.0
      %4116 = vmatprep.subr.mxu0 0.0
      %4117 = vmatpush1.msra.mxu0 0.0
      %4118 = vmatprep.subr.mxu0 0.0
      %4119 = vmatpush1.msra.mxu0 0.0
      %4120 = vmatprep.subr.mxu0 0.0
      %4121 = vmatpush1.msra.mxu0 0.0
      %4122 = vmatprep.subr.mxu0 0.0
      %4123 = vmatpush1.msra.mxu0 0.0
      %4124 = vmatprep.subr.mxu0 0.0
      %4125 = vmatpush1.msra.mxu0 0.0
      %4126 = vmatprep.subr.mxu0 0.0
      %4127 = vmatpush1.msra.mxu0 0.0
      %4128 = vmatprep.subr.mxu0 0.0
      %4129 = vmatpush1.msra.mxu0 0.0
      %4130 = vmatprep.subr.mxu0 0.0
      %4131 = vmatpush1.msra.mxu0 0.0
      %4132 = vmatprep.subr.mxu0 0.0
      %4133 = vmatpush1.msra.mxu0 0.0
      %4134 = vmatprep.subr.mxu0 0.0
      %4135 = vmatpush1.msra.mxu0 0.0
      %4136 = vmatprep.subr.mxu0 0.0
      %4137 = vmatpush1.msra.mxu0 0.0
      %4138 = vmatprep.subr.mxu0 0.0
      %4139 = vmatpush1.msra.mxu0 0.0
      %4140 = vmatprep.subr.mxu0 0.0
      %4141 = vmatpush1.msra.mxu0 0.0
      %4142 = vmatprep.subr.mxu0 0.0
      %4143 = vmatpush1.msra.mxu0 0.0
      %4144 = vmatprep.mubr.f32.mxu0 0.0
      %4145 = vmatmul.mubr.f32.gmra.mrb[0].mxu0 %v3916
      %v4146 = vpop.f32.mrb[0].mxu0
      %v4147 = vadd.f32 0.0, %v4146
      %v4148 = vpop.f32.mrb[0].mxu0
      %4149 = vmatprep.mubr.f32.mxu0 0.0
      %4150 = vmatmul.mubr.f32.gmra.mrb[0].mxu0 %v3919
      %v4151 = vpop.f32.mrb[0].mxu0
      %v4152 = vadd.f32 0.0, %v4151
      %v4153 = vpop.f32.mrb[0].mxu0
      %4154 = vmatprep.mubr.f32.mxu0 0.0
      %4155 = vmatmul.mubr.f32.gmra.mrb[0].mxu0 %v3922
      %v4156 = vpop.f32.mrb[0].mxu0
      %v4157 = vadd.f32 0.0, %v4156
      %v4158 = vpop.f32.mrb[0].mxu0
      %4159 = vmatprep.mubr.f32.mxu0 0.0
      %4160 = vmatmul.mubr.f32.gmra.mrb[0].mxu0 %v3925
      %v4161 = vpop.f32.mrb[0].mxu0
      %v4162 = vadd.f32 0.0, %v4161
      %v4163 = vpop.f32.mrb[0].mxu0
      %4164 = vmatprep.mubr.f32.mxu0 0.0
      %4165 = vmatmul.mubr.f32.gmra.mrb[0].mxu0 %v3928
      %v4166 = vpop.f32.mrb[0].mxu0
      %v4167 = vadd.f32 0.0, %v4166
      %v4168 = vpop.f32.mrb[0].mxu0
      %4169 = vmatprep.mubr.f32.mxu0 0.0
      %4170 = vmatmul.mubr.f32.gmra.mrb[0].mxu0 %v3931
      %v4171 = vpop.f32.mrb[0].mxu0
      %v4172 = vadd.f32 0.0, %v4171
      %v4173 = vpop.f32.mrb[0].mxu0
      %4174 = vmatprep.mubr.f32.mxu0 0.0
      %4175 = vmatmul.mubr.f32.gmra.mrb[0].mxu0 %v3934
      %v4176 = vpop.f32.mrb[0].mxu0
      %v4177 = vadd.f32 0.0, %v4176
      %v4178 = vpop.f32.mrb[0].mxu0
      %4179 = vmatprep.mubr.f32.mxu0 0.0
      %4180 = vmatmul.mubr.f32.gmra.mrb[0].mxu0 %v3937
      %v4181 = vpop.f32.mrb[0].mxu0
      %v4182 = vadd.f32 0.0, %v4181
      %v4183 = vpop.f32.mrb[0].mxu0
      %4184 = vmatprep.mubr.f32.mxu0 0.0
      %4185 = vmatmul.mubr.f32.gmra.mrb[0].mxu0 %v3940
      %v4186 = vpop.f32.mrb[0].mxu0
      %v4187 = vadd.f32 0.0, %v4186
      %v4188 = vpop.f32.mrb[0].mxu0
      %4189 = vmatprep.mubr.f32.mxu0 0.0
      %4190 = vmatmul.mubr.f32.gmra.mrb[0].mxu0 %v3943
      %v4191 = vpop.f32.mrb[0].mxu0
      %v4192 = vadd.f32 0.0, %v4191
      %v4193 = vpop.f32.mrb[0].mxu0
      %4194 = vmatprep.mubr.f32.mxu0 0.0
      %4195 = vmatmul.mubr.f32.gmra.mrb[0].mxu0 %v3946
      %v4196 = vpop.f32.mrb[0].mxu0
      %v4197 = vadd.f32 0.0, %v4196
      %v4198 = vpop.f32.mrb[0].mxu0
      %4199 = vmatprep.mubr.f32.mxu0 0.0
      %4200 = vmatmul.mubr.f32.gmra.mrb[0].mxu0 %v3949
      %v4201 = vpop.f32.mrb[0].mxu0
      %v4202 = vadd.f32 0.0, %v4201
      %v4203 = vpop.f32.mrb[0].mxu0
      %4204 = vmatprep.mubr.f32.mxu0 0.0
      %4205 = vmatmul.mubr.f32.gmra.mrb[0].mxu0 %v3952
      %v4206 = vpop.f32.mrb[0].mxu0
      %v4207 = vadd.f32 0.0, %v4206
      %v4208 = vpop.f32.mrb[0].mxu0
      %4209 = vmatprep.mubr.f32.mxu0 0.0
      %4210 = vmatmul.mubr.f32.gmra.mrb[0].mxu0 %v3955
      %v4211 = vpop.f32.mrb[0].mxu0
      %v4212 = vadd.f32 0.0, %v4211
      %v4213 = vpop.f32.mrb[0].mxu0
      %4214 = vmatprep.mubr.f32.mxu0 0.0
      %4215 = vmatmul.mubr.f32.gmra.mrb[0].mxu0 %v3958
      %v4216 = vpop.f32.mrb[0].mxu0
      %v4217 = vadd.f32 0.0, %v4216
      %v4218 = vpop.f32.mrb[0].mxu0
      %4219 = vmatprep.mubr.f32.mxu0 0.0
      %4220 = vmatmul.mubr.f32.gmra.mrb[0].mxu0 %v3961
      %v4221 = vpop.f32.mrb[0].mxu0
      %v4222 = vadd.f32 0.0, %v4221
      %v4223 = vpop.f32.mrb[0].mxu0
      %4224 = vmatprep.mubr.f32.mxu0 0.0
      %4225 = vmatmul.mubr.f32.gmra.mrb[0].mxu0 %v3964
      %v4226 = vpop.f32.mrb[0].mxu0
      %v4227 = vadd.f32 0.0, %v4226
      %v4228 = vpop.f32.mrb[0].mxu0
      %4229 = vmatprep.mubr.f32.mxu0 0.0
      %4230 = vmatmul.mubr.f32.gmra.mrb[0].mxu0 %v3967
      %v4231 = vpop.f32.mrb[0].mxu0
      %v4232 = vadd.f32 0.0, %v4231
      %v4233 = vpop.f32.mrb[0].mxu0
      %4234 = vmatprep.mubr.f32.mxu0 0.0
      %4235 = vmatmul.mubr.f32.gmra.mrb[0].mxu0 %v3970
      %v4236 = vpop.f32.mrb[0].mxu0
      %v4237 = vadd.f32 0.0, %v4236
      %v4238 = vpop.f32.mrb[0].mxu0
      %4239 = vmatprep.mubr.f32.mxu0 0.0
      %4240 = vmatmul.mubr.f32.gmra.mrb[0].mxu0 %v3973
      %v4241 = vpop.f32.mrb[0].mxu0
      %v4242 = vadd.f32 0.0, %v4241
      %v4243 = vpop.f32.mrb[0].mxu0
      %4244 = vmatprep.mubr.f32.mxu0 0.0
      %4245 = vmatmul.mubr.f32.gmra.mrb[0].mxu0 %v3976
      %v4246 = vpop.f32.mrb[0].mxu0
      %v4247 = vadd.f32 0.0, %v4246
      %v4248 = vpop.f32.mrb[0].mxu0
      %4249 = vmatprep.mubr.f32.mxu0 0.0
      %4250 = vmatmul.mubr.f32.gmra.mrb[0].mxu0 %v3979
      %v4251 = vpop.f32.mrb[0].mxu0
      %v4252 = vadd.f32 0.0, %v4251
      %v4253 = vpop.f32.mrb[0].mxu0
      %4254 = vmatprep.mubr.f32.mxu0 0.0
      %4255 = vmatmul.mubr.f32.gmra.mrb[0].mxu0 %v3982
      %v4256 = vpop.f32.mrb[0].mxu0
      %v4257 = vadd.f32 0.0, %v4256
      %v4258 = vpop.f32.mrb[0].mxu0
      %4259 = vmatprep.mubr.f32.mxu0 0.0
      %4260 = vmatmul.mubr.f32.gmra.mrb[0].mxu0 %v3985
      %v4261 = vpop.f32.mrb[0].mxu0
      %v4262 = vadd.f32 0.0, %v4261
      %v4263 = vpop.f32.mrb[0].mxu0
      %4264 = vmatprep.mubr.f32.mxu0 0.0
      %4265 = vmatmul.mubr.f32.gmra.mrb[0].mxu0 %v3988
      %v4266 = vpop.f32.mrb[0].mxu0
      %v4267 = vadd.f32 0.0, %v4266
      %v4268 = vpop.f32.mrb[0].mxu0
      %4269 = vmatprep.mubr.f32.mxu0 0.0
      %4270 = vmatmul.mubr.f32.gmra.mrb[0].mxu0 %v3991
      %v4271 = vpop.f32.mrb[0].mxu0
      %v4272 = vadd.f32 0.0, %v4271
      %v4273 = vpop.f32.mrb[0].mxu0
      %4274 = vmatprep.mubr.f32.mxu0 0.0
      %4275 = vmatmul.mubr.f32.gmra.mrb[0].mxu0 %v3994
      %v4276 = vpop.f32.mrb[0].mxu0
      %v4277 = vadd.f32 0.0, %v4276
      %v4278 = vpop.f32.mrb[0].mxu0
      %4279 = vmatprep.mubr.f32.mxu0 0.0
      %4280 = vmatmul.mubr.f32.gmra.mrb[0].mxu0 %v3997
      %v4281 = vpop.f32.mrb[0].mxu0
      %v4282 = vadd.f32 0.0, %v4281
      %v4283 = vpop.f32.mrb[0].mxu0
      %4284 = vmatprep.mubr.f32.mxu0 0.0
      %4285 = vmatmul.mubr.f32.gmra.mrb[0].mxu0 %v4000
      %v4286 = vpop.f32.mrb[0].mxu0
      %v4287 = vadd.f32 0.0, %v4286
      %v4288 = vpop.f32.mrb[0].mxu0
      %4289 = vmatprep.mubr.f32.mxu0 0.0
      %4290 = vmatmul.mubr.f32.gmra.mrb[0].mxu0 %v4003
      %v4291 = vpop.f32.mrb[0].mxu0
      %v4292 = vadd.f32 0.0, %v4291
      %v4293 = vpop.f32.mrb[0].mxu0
      %4294 = vmatprep.mubr.f32.mxu0 0.0
      %4295 = vmatmul.mubr.f32.gmra.mrb[0].mxu0 %v4006
      %v4296 = vpop.f32.mrb[0].mxu0
      %v4297 = vadd.f32 0.0, %v4296
      %v4298 = vpop.f32.mrb[0].mxu0
      %4299 = vmatprep.mubr.f32.mxu0 0.0
      %4300 = vmatmul.mubr.f32.gmra.mrb[0].mxu0 %v4009
      %v4301 = vpop.f32.mrb[0].mxu0
      %v4302 = vadd.f32 0.0, %v4301
      %v4303 = vpop.f32.mrb[0].mxu0
      %4304 = vmatprep.mubr.f32.mxu0 0.0
      %4305 = vmatmul.mubr.f32.gmra.mrb[0].mxu0 %v4012
      %v4306 = vpop.f32.mrb[0].mxu0
      %v4307 = vadd.f32 0.0, %v4306
      %v4308 = vpop.f32.mrb[0].mxu0
      %4309 = vmatprep.mubr.f32.mxu0 0.0
      %4310 = vmatmul.mubr.f32.gmra.mrb[0].mxu0 %v4015
      %v4311 = vpop.f32.mrb[0].mxu0
      %v4312 = vadd.f32 0.0, %v4311
      %v4313 = vpop.f32.mrb[0].mxu0
      %4314 = vmatprep.mubr.f32.mxu0 0.0
      %4315 = vmatmul.mubr.f32.gmra.mrb[0].mxu0 %v4018
      %v4316 = vpop.f32.mrb[0].mxu0
      %v4317 = vadd.f32 0.0, %v4316
      %v4318 = vpop.f32.mrb[0].mxu0
      %4319 = vmatprep.mubr.f32.mxu0 0.0
      %4320 = vmatmul.mubr.f32.gmra.mrb[0].mxu0 %v4021
      %v4321 = vpop.f32.mrb[0].mxu0
      %v4322 = vadd.f32 0.0, %v4321
      %v4323 = vpop.f32.mrb[0].mxu0
      %4324 = vmatprep.mubr.f32.mxu0 0.0
      %4325 = vmatmul.mubr.f32.gmra.mrb[0].mxu0 %v4024
      %v4326 = vpop.f32.mrb[0].mxu0
      %v4327 = vadd.f32 0.0, %v4326
      %v4328 = vpop.f32.mrb[0].mxu0
      %4329 = vmatprep.mubr.f32.mxu0 0.0
      %4330 = vmatmul.mubr.f32.gmra.mrb[0].mxu0 %v4027
      %v4331 = vpop.f32.mrb[0].mxu0
      %v4332 = vadd.f32 0.0, %v4331
      %v4333 = vpop.f32.mrb[0].mxu0
      %4334 = vmatprep.mubr.f32.mxu0 0.0
      %4335 = vmatmul.mubr.f32.gmra.mrb[0].mxu0 %v4030
      %v4336 = vpop.f32.mrb[0].mxu0
      %v4337 = vadd.f32 0.0, %v4336
      %v4338 = vpop.f32.mrb[0].mxu0
      %4339 = vmatprep.mubr.f32.mxu0 0.0
      %4340 = vmatmul.mubr.f32.gmra.mrb[0].mxu0 %v4033
      %v4341 = vpop.f32.mrb[0].mxu0
      %v4342 = vadd.f32 0.0, %v4341
      %v4343 = vpop.f32.mrb[0].mxu0
      %4344 = vmatprep.mubr.f32.mxu0 0.0
      %4345 = vmatmul.mubr.f32.gmra.mrb[0].mxu0 %v4036
      %v4346 = vpop.f32.mrb[0].mxu0
      %v4347 = vadd.f32 0.0, %v4346
      %v4348 = vpop.f32.mrb[0].mxu0
      %4349 = vmatprep.mubr.f32.mxu0 0.0
      %4350 = vmatmul.mubr.f32.gmra.mrb[0].mxu0 %v4039
      %v4351 = vpop.f32.mrb[0].mxu0
      %v4352 = vadd.f32 0.0, %v4351
      %v4353 = vpop.f32.mrb[0].mxu0
      %4354 = vmatprep.mubr.f32.mxu0 0.0
      %4355 = vmatmul.mubr.f32.gmra.mrb[0].mxu0 %v4042
      %v4356 = vpop.f32.mrb[0].mxu0
      %v4357 = vadd.f32 0.0, %v4356
      %v4358 = vpop.f32.mrb[0].mxu0
      %4359 = vmatprep.mubr.f32.mxu0 0.0
      %4360 = vmatmul.mubr.f32.gmra.mrb[0].mxu0 %v4045
      %v4361 = vpop.f32.mrb[0].mxu0
      %v4362 = vadd.f32 0.0, %v4361
      %v4363 = vpop.f32.mrb[0].mxu0
      %4364 = vmatprep.mubr.f32.mxu0 0.0
      %4365 = vmatmul.mubr.f32.gmra.mrb[0].mxu0 %v4048
      %v4366 = vpop.f32.mrb[0].mxu0
      %v4367 = vadd.f32 0.0, %v4366
      %v4368 = vpop.f32.mrb[0].mxu0
      %4369 = vmatprep.mubr.f32.mxu0 0.0
      %4370 = vmatmul.mubr.f32.gmra.mrb[0].mxu0 %v4051
      %v4371 = vpop.f32.mrb[0].mxu0
      %v4372 = vadd.f32 0.0, %v4371
      %v4373 = vpop.f32.mrb[0].mxu0
      %4374 = vmatprep.mubr.f32.mxu0 0.0
      %4375 = vmatmul.mubr.f32.gmra.mrb[0].mxu0 %v4054
      %v4376 = vpop.f32.mrb[0].mxu0
      %v4377 = vadd.f32 0.0, %v4376
      %v4378 = vpop.f32.mrb[0].mxu0
      %4379 = vmatprep.mubr.f32.mxu0 0.0
      %4380 = vmatmul.mubr.f32.gmra.mrb[0].mxu0 %v4057
      %v4381 = vpop.f32.mrb[0].mxu0
      %v4382 = vadd.f32 0.0, %v4381
      %v4383 = vpop.f32.mrb[0].mxu0
      %4384 = vmatprep.mubr.f32.mxu0 0.0
      %4385 = vmatmul.mubr.f32.gmra.mrb[0].mxu0 %v4060
      %v4386 = vpop.f32.mrb[0].mxu0
      %v4387 = vadd.f32 0.0, %v4386
      %v4388 = vpop.f32.mrb[0].mxu0
      %4389 = vmatprep.mubr.f32.mxu0 0.0
      %4390 = vmatmul.mubr.f32.gmra.mrb[0].mxu0 %v4063
      %v4391 = vpop.f32.mrb[0].mxu0
      %v4392 = vadd.f32 0.0, %v4391
      %v4393 = vpop.f32.mrb[0].mxu0
      %4394 = vmatprep.mubr.f32.mxu0 0.0
      %4395 = vmatmul.mubr.f32.gmra.mrb[0].mxu0 %v4066
      %v4396 = vpop.f32.mrb[0].mxu0
      %v4397 = vadd.f32 0.0, %v4396
      %v4398 = vpop.f32.mrb[0].mxu0
      %4399 = vmatprep.mubr.f32.mxu0 0.0
      %4400 = vmatmul.mubr.f32.gmra.mrb[0].mxu0 %v4069
      %v4401 = vpop.f32.mrb[0].mxu0
      %v4402 = vadd.f32 0.0, %v4401
      %v4403 = vpop.f32.mrb[0].mxu0
      %4404 = vmatprep.mubr.f32.mxu0 0.0
      %4405 = vmatmul.mubr.f32.gmra.mrb[0].mxu0 %v4072
      %v4406 = vpop.f32.mrb[0].mxu0
      %v4407 = vadd.f32 0.0, %v4406
      %v4408 = vpop.f32.mrb[0].mxu0
      %4409 = vmatprep.mubr.f32.mxu0 0.0
      %4410 = vmatmul.mubr.f32.gmra.mrb[0].mxu0 %v4075
      %v4411 = vpop.f32.mrb[0].mxu0
      %v4412 = vadd.f32 0.0, %v4411
      %v4413 = vpop.f32.mrb[0].mxu0
      %4414 = vdwg.mxu0
      %v4415 = vadd.f32 %v3805, %v4147
      %v4416 = vadd.f32 %v3806, %v4152
      %v4417 = vadd.f32 %v3807, %v4157
      %v4418 = vadd.f32 %v3808, %v4162
      %v4419 = vadd.f32 %v3809, %v4167
      %v4420 = vadd.f32 %v3810, %v4172
      %v4421 = vadd.f32 %v3811, %v4177
      %v4422 = vadd.f32 %v3812, %v4182
      %v4423 = vadd.f32 %v3813, %v4187
      %v4424 = vadd.f32 %v3814, %v4192
      %v4425 = vadd.f32 %v3815, %v4197
      %v4426 = vadd.f32 %v3816, %v4202
      %v4427 = vadd.f32 %v3817, %v4207
      %v4428 = vadd.f32 %v3818, %v4212
      %v4429 = vadd.f32 %v3819, %v4217
      %v4430 = vadd.f32 %v3820, %v4222
      %v4431 = vadd.f32 %v3821, %v4227
      %v4432 = vadd.f32 %v3822, %v4232
      %v4433 = vadd.f32 %v3823, %v4237
      %v4434 = vadd.f32 %v3824, %v4242
      %v4435 = vadd.f32 %v3825, %v4247
      %v4436 = vadd.f32 %v3826, %v4252
      %v4437 = vadd.f32 %v3827, %v4257
      %v4438 = vadd.f32 %v3828, %v4262
      %v4439 = vadd.f32 %v3829, %v4267
      %v4440 = vadd.f32 %v3830, %v4272
      %v4441 = vadd.f32 %v3831, %v4277
      %v4442 = vadd.f32 %v3832, %v4282
      %v4443 = vadd.f32 %v3833, %v4287
      %v4444 = vadd.f32 %v3834, %v4292
      %v4445 = vadd.f32 %v3835, %v4297
      %v4446 = vadd.f32 %v3836, %v4302
      %v4447 = vadd.f32 %v3837, %v4307
      %v4448 = vadd.f32 %v3838, %v4312
      %v4449 = vadd.f32 %v3839, %v4317
      %v4450 = vadd.f32 %v3840, %v4322
      %v4451 = vadd.f32 %v3841, %v4327
      %v4452 = vadd.f32 %v3842, %v4332
      %v4453 = vadd.f32 %v3843, %v4337
      %v4454 = vadd.f32 %v3844, %v4342
      %v4455 = vadd.f32 %v3845, %v4347
      %v4456 = vadd.f32 %v3846, %v4352
      %v4457 = vadd.f32 %v3847, %v4357
      %v4458 = vadd.f32 %v3848, %v4362
      %v4459 = vadd.f32 %v3849, %v4367
      %v4460 = vadd.f32 %v3850, %v4372
      %v4461 = vadd.f32 %v3851, %v4377
      %v4462 = vadd.f32 %v3852, %v4382
      %v4463 = vadd.f32 %v3853, %v4387
      %v4464 = vadd.f32 %v3854, %v4392
      %v4465 = vadd.f32 %v3855, %v4397
      %v4466 = vadd.f32 %v3856, %v4402
      %v4467 = vadd.f32 %v3857, %v4407
      %v4468 = vadd.f32 %v3858, %v4412
      %v4469 = vld [vmem:[%s300 + $0x31] sm:$0xff]
      %v4470 = vld [vmem:[%s300 + $0x39] sm:$0xff]
      %v4471 = vld [vmem:[%s300 + $0x41] sm:$0xff]
      %v4472 = vld [vmem:[%s300 + $0x49] sm:$0xff]
      %v4473 = vld [vmem:[%s300 + $0x51] sm:$0xff]
      %v4474 = vld [vmem:[%s300 + $0x59] sm:$0xff]
      %v4475 = vld [vmem:[%s300 + $0x61] sm:$0xff]
      %v4476 = vld [vmem:[%s300 + $0x69] sm:$0xff]
      %v4477 = vld [vmem:[%s300 + $0x71] sm:$0xff]
      %v4478 = vld [vmem:[%s300 + $0x79] sm:$0xff]
      %v4479 = vld [vmem:[%s300 + $0x81] sm:$0xff]
      %v4480 = vld [vmem:[%s300 + $0x89] sm:$0xff]
      %v4481 = vld [vmem:[%s300 + $0x91] sm:$0xff]
      %v4482 = vld [vmem:[%s300 + $0x99] sm:$0xff]
      %v4483 = vld [vmem:[%s300 + $0xa1] sm:$0xff]
      %v4484 = vld [vmem:[%s300 + $0xa9] sm:$0xff]
      %v4485 = vld [vmem:[%s300 + $0xb1] sm:$0xff]
      %v4486 = vld [vmem:[%s300 + $0xb9] sm:$0xff]
      %v4487 = vld [vmem:[%s300 + $0xc1] sm:$0xff]
      %v4488 = vld [vmem:[%s300 + $0xc9] sm:$0xff]
      %v4489 = vld [vmem:[%s300 + $0xd1] sm:$0xff]
      %v4490 = vld [vmem:[%s300 + $0xd9] sm:$0xff]
      %v4491 = vld [vmem:[%s300 + $0xe1] sm:$0xff]
      %v4492 = vld [vmem:[%s300 + $0xe9] sm:$0xff]
      %v4493 = vld [vmem:[%s300 + $0xf1] sm:$0xff]
      %v4494 = vld [vmem:[%s300 + $0xf9] sm:$0xff]
      %v4495 = vld [vmem:[%s300 + $0x101] sm:$0xff]
      %v4496 = vld [vmem:[%s300 + $0x109] sm:$0xff]
      %v4497 = vld [vmem:[%s300 + $0x111] sm:$0xff]
      %v4498 = vld [vmem:[%s300 + $0x119] sm:$0xff]
      %v4499 = vld [vmem:[%s300 + $0x121] sm:$0xff]
      %v4500 = vld [vmem:[%s300 + $0x129] sm:$0xff]
      %v4501 = vld [vmem:[%s300 + $0x131] sm:$0xff]
      %v4502 = vld [vmem:[%s300 + $0x139] sm:$0xff]
      %v4503 = vld [vmem:[%s300 + $0x141] sm:$0xff]
      %v4504 = vld [vmem:[%s300 + $0x149] sm:$0xff]
      %v4505 = vld [vmem:[%s300 + $0x151] sm:$0xff]
      %v4506 = vld [vmem:[%s300 + $0x159] sm:$0xff]
      %v4507 = vld [vmem:[%s300 + $0x161] sm:$0xff]
      %v4508 = vld [vmem:[%s300 + $0x169] sm:$0xff]
      %v4509 = vld [vmem:[%s300 + $0x171] sm:$0xff]
      %v4510 = vld [vmem:[%s300 + $0x179] sm:$0xff]
      %v4511 = vld [vmem:[%s300 + $0x181] sm:$0xff]
      %v4512 = vld [vmem:[%s300 + $0x189] sm:$0xff]
      %v4513 = vld [vmem:[%s300 + $0x191] sm:$0xff]
      %v4514 = vld [vmem:[%s300 + $0x199] sm:$0xff]
      %v4515 = vld [vmem:[%s300 + $0x1a1] sm:$0xff]
      %v4516 = vld [vmem:[%s300 + $0x1a9] sm:$0xff]
      %v4517 = vld [vmem:[%s300 + $0x1b1] sm:$0xff]
      %v4518 = vld [vmem:[%s300 + $0x1b9] sm:$0xff]
      %v4519 = vld [vmem:[%s300 + $0x1c1] sm:$0xff]
      %v4520 = vld [vmem:[%s300 + $0x1c9] sm:$0xff]
      %v4521 = vld [vmem:[%s300 + $0x1d1] sm:$0xff]
      %v4522 = vld [vmem:[%s300 + $0x1d9] sm:$0xff]
      %s4523 = scalar_lea.vmem %s2, 28
      %v4524 = vld [vmem:[%s4523] sm:$0xf]
      %v4526 = vsel %vm417, %v4469, 0
      %v4529 = vsel %vm417, %v4470, 0
      %v4532 = vsel %vm417, %v4471, 0
      %v4535 = vsel %vm417, %v4472, 0
      %v4538 = vsel %vm417, %v4473, 0
      %v4541 = vsel %vm417, %v4474, 0
      %v4544 = vsel %vm417, %v4475, 0
      %v4547 = vsel %vm417, %v4476, 0
      %v4550 = vsel %vm417, %v4477, 0
      %v4553 = vsel %vm417, %v4478, 0
      %v4556 = vsel %vm417, %v4479, 0
      %v4559 = vsel %vm417, %v4480, 0
      %v4562 = vsel %vm417, %v4481, 0
      %v4565 = vsel %vm417, %v4482, 0
      %v4568 = vsel %vm417, %v4483, 0
      %v4571 = vsel %vm417, %v4484, 0
      %v4574 = vsel %vm417, %v4485, 0
      %v4577 = vsel %vm417, %v4486, 0
      %v4580 = vsel %vm417, %v4487, 0
      %v4583 = vsel %vm417, %v4488, 0
      %v4586 = vsel %vm417, %v4489, 0
      %v4589 = vsel %vm417, %v4490, 0
      %v4592 = vsel %vm417, %v4491, 0
      %v4595 = vsel %vm417, %v4492, 0
      %v4598 = vsel %vm417, %v4493, 0
      %v4601 = vsel %vm417, %v4494, 0
      %v4604 = vsel %vm417, %v4495, 0
      %v4607 = vsel %vm417, %v4496, 0
      %v4610 = vsel %vm417, %v4497, 0
      %v4613 = vsel %vm417, %v4498, 0
      %v4616 = vsel %vm417, %v4499, 0
      %v4619 = vsel %vm417, %v4500, 0
      %v4622 = vsel %vm417, %v4501, 0
      %v4625 = vsel %vm417, %v4502, 0
      %v4628 = vsel %vm417, %v4503, 0
      %v4631 = vsel %vm417, %v4504, 0
      %v4634 = vsel %vm417, %v4505, 0
      %v4637 = vsel %vm417, %v4506, 0
      %v4640 = vsel %vm417, %v4507, 0
      %v4643 = vsel %vm417, %v4508, 0
      %v4646 = vsel %vm417, %v4509, 0
      %v4649 = vsel %vm417, %v4510, 0
      %v4652 = vsel %vm417, %v4511, 0
      %v4655 = vsel %vm417, %v4512, 0
      %v4658 = vsel %vm417, %v4513, 0
      %v4661 = vsel %vm417, %v4514, 0
      %v4664 = vsel %vm417, %v4515, 0
      %v4667 = vsel %vm417, %v4516, 0
      %v4670 = vsel %vm417, %v4517, 0
      %v4673 = vsel %vm417, %v4518, 0
      %v4676 = vsel %vm417, %v4519, 0
      %v4679 = vsel %vm417, %v4520, 0
      %v4682 = vsel %vm417, %v4521, 0
      %v4685 = vsel %vm417, %v4522, 0
      %v4688 = vsel %vm580, %v4524, 0
      %4690 = vmatprep.subr.mxu0 0.0
      %4691 = vmatpush1.msra.mxu0 %v4688
      %4692 = vmatprep.subr.mxu0 0.0
      %4693 = vmatpush1.msra.mxu0 0.0
      %4694 = vmatprep.subr.mxu0 0.0
      %4695 = vmatpush1.msra.mxu0 0.0
      %4696 = vmatprep.subr.mxu0 0.0
      %4697 = vmatpush1.msra.mxu0 0.0
      %4698 = vmatprep.subr.mxu0 0.0
      %4699 = vmatpush1.msra.mxu0 0.0
      %4700 = vmatprep.subr.mxu0 0.0
      %4701 = vmatpush1.msra.mxu0 0.0
      %4702 = vmatprep.subr.mxu0 0.0
      %4703 = vmatpush1.msra.mxu0 0.0
      %4704 = vmatprep.subr.mxu0 0.0
      %4705 = vmatpush1.msra.mxu0 0.0
      %4706 = vmatprep.subr.mxu0 0.0
      %4707 = vmatpush1.msra.mxu0 0.0
      %4708 = vmatprep.subr.mxu0 0.0
      %4709 = vmatpush1.msra.mxu0 0.0
      %4710 = vmatprep.subr.mxu0 0.0
      %4711 = vmatpush1.msra.mxu0 0.0
      %4712 = vmatprep.subr.mxu0 0.0
      %4713 = vmatpush1.msra.mxu0 0.0
      %4714 = vmatprep.subr.mxu0 0.0
      %4715 = vmatpush1.msra.mxu0 0.0
      %4716 = vmatprep.subr.mxu0 0.0
      %4717 = vmatpush1.msra.mxu0 0.0
      %4718 = vmatprep.subr.mxu0 0.0
      %4719 = vmatpush1.msra.mxu0 0.0
      %4720 = vmatprep.subr.mxu0 0.0
      %4721 = vmatpush1.msra.mxu0 0.0
      %4722 = vmatprep.subr.mxu0 0.0
      %4723 = vmatpush1.msra.mxu0 0.0
      %4724 = vmatprep.subr.mxu0 0.0
      %4725 = vmatpush1.msra.mxu0 0.0
      %4726 = vmatprep.subr.mxu0 0.0
      %4727 = vmatpush1.msra.mxu0 0.0
      %4728 = vmatprep.subr.mxu0 0.0
      %4729 = vmatpush1.msra.mxu0 0.0
      %4730 = vmatprep.subr.mxu0 0.0
      %4731 = vmatpush1.msra.mxu0 0.0
      %4732 = vmatprep.subr.mxu0 0.0
      %4733 = vmatpush1.msra.mxu0 0.0
      %4734 = vmatprep.subr.mxu0 0.0
      %4735 = vmatpush1.msra.mxu0 0.0
      %4736 = vmatprep.subr.mxu0 0.0
      %4737 = vmatpush1.msra.mxu0 0.0
      %4738 = vmatprep.subr.mxu0 0.0
      %4739 = vmatpush1.msra.mxu0 0.0
      %4740 = vmatprep.subr.mxu0 0.0
      %4741 = vmatpush1.msra.mxu0 0.0
      %4742 = vmatprep.subr.mxu0 0.0
      %4743 = vmatpush1.msra.mxu0 0.0
      %4744 = vmatprep.subr.mxu0 0.0
      %4745 = vmatpush1.msra.mxu0 0.0
      %4746 = vmatprep.subr.mxu0 0.0
      %4747 = vmatpush1.msra.mxu0 0.0
      %4748 = vmatprep.subr.mxu0 0.0
      %4749 = vmatpush1.msra.mxu0 0.0
      %4750 = vmatprep.subr.mxu0 0.0
      %4751 = vmatpush1.msra.mxu0 0.0
      %4752 = vmatprep.subr.mxu0 0.0
      %4753 = vmatpush1.msra.mxu0 0.0
      %4754 = vmatprep.mubr.f32.mxu0 0.0
      %4755 = vmatmul.mubr.f32.gmra.mrb[0].mxu0 %v4526
      %v4756 = vpop.f32.mrb[0].mxu0
      %v4757 = vadd.f32 0.0, %v4756
      %v4758 = vpop.f32.mrb[0].mxu0
      %4759 = vmatprep.mubr.f32.mxu0 0.0
      %4760 = vmatmul.mubr.f32.gmra.mrb[0].mxu0 %v4529
      %v4761 = vpop.f32.mrb[0].mxu0
      %v4762 = vadd.f32 0.0, %v4761
      %v4763 = vpop.f32.mrb[0].mxu0
      %4764 = vmatprep.mubr.f32.mxu0 0.0
      %4765 = vmatmul.mubr.f32.gmra.mrb[0].mxu0 %v4532
      %v4766 = vpop.f32.mrb[0].mxu0
      %v4767 = vadd.f32 0.0, %v4766
      %v4768 = vpop.f32.mrb[0].mxu0
      %4769 = vmatprep.mubr.f32.mxu0 0.0
      %4770 = vmatmul.mubr.f32.gmra.mrb[0].mxu0 %v4535
      %v4771 = vpop.f32.mrb[0].mxu0
      %v4772 = vadd.f32 0.0, %v4771
      %v4773 = vpop.f32.mrb[0].mxu0
      %4774 = vmatprep.mubr.f32.mxu0 0.0
      %4775 = vmatmul.mubr.f32.gmra.mrb[0].mxu0 %v4538
      %v4776 = vpop.f32.mrb[0].mxu0
      %v4777 = vadd.f32 0.0, %v4776
      %v4778 = vpop.f32.mrb[0].mxu0
      %4779 = vmatprep.mubr.f32.mxu0 0.0
      %4780 = vmatmul.mubr.f32.gmra.mrb[0].mxu0 %v4541
      %v4781 = vpop.f32.mrb[0].mxu0
      %v4782 = vadd.f32 0.0, %v4781
      %v4783 = vpop.f32.mrb[0].mxu0
      %4784 = vmatprep.mubr.f32.mxu0 0.0
      %4785 = vmatmul.mubr.f32.gmra.mrb[0].mxu0 %v4544
      %v4786 = vpop.f32.mrb[0].mxu0
      %v4787 = vadd.f32 0.0, %v4786
      %v4788 = vpop.f32.mrb[0].mxu0
      %4789 = vmatprep.mubr.f32.mxu0 0.0
      %4790 = vmatmul.mubr.f32.gmra.mrb[0].mxu0 %v4547
      %v4791 = vpop.f32.mrb[0].mxu0
      %v4792 = vadd.f32 0.0, %v4791
      %v4793 = vpop.f32.mrb[0].mxu0
      %4794 = vmatprep.mubr.f32.mxu0 0.0
      %4795 = vmatmul.mubr.f32.gmra.mrb[0].mxu0 %v4550
      %v4796 = vpop.f32.mrb[0].mxu0
      %v4797 = vadd.f32 0.0, %v4796
      %v4798 = vpop.f32.mrb[0].mxu0
      %4799 = vmatprep.mubr.f32.mxu0 0.0
      %4800 = vmatmul.mubr.f32.gmra.mrb[0].mxu0 %v4553
      %v4801 = vpop.f32.mrb[0].mxu0
      %v4802 = vadd.f32 0.0, %v4801
      %v4803 = vpop.f32.mrb[0].mxu0
      %4804 = vmatprep.mubr.f32.mxu0 0.0
      %4805 = vmatmul.mubr.f32.gmra.mrb[0].mxu0 %v4556
      %v4806 = vpop.f32.mrb[0].mxu0
      %v4807 = vadd.f32 0.0, %v4806
      %v4808 = vpop.f32.mrb[0].mxu0
      %4809 = vmatprep.mubr.f32.mxu0 0.0
      %4810 = vmatmul.mubr.f32.gmra.mrb[0].mxu0 %v4559
      %v4811 = vpop.f32.mrb[0].mxu0
      %v4812 = vadd.f32 0.0, %v4811
      %v4813 = vpop.f32.mrb[0].mxu0
      %4814 = vmatprep.mubr.f32.mxu0 0.0
      %4815 = vmatmul.mubr.f32.gmra.mrb[0].mxu0 %v4562
      %v4816 = vpop.f32.mrb[0].mxu0
      %v4817 = vadd.f32 0.0, %v4816
      %v4818 = vpop.f32.mrb[0].mxu0
      %4819 = vmatprep.mubr.f32.mxu0 0.0
      %4820 = vmatmul.mubr.f32.gmra.mrb[0].mxu0 %v4565
      %v4821 = vpop.f32.mrb[0].mxu0
      %v4822 = vadd.f32 0.0, %v4821
      %v4823 = vpop.f32.mrb[0].mxu0
      %4824 = vmatprep.mubr.f32.mxu0 0.0
      %4825 = vmatmul.mubr.f32.gmra.mrb[0].mxu0 %v4568
      %v4826 = vpop.f32.mrb[0].mxu0
      %v4827 = vadd.f32 0.0, %v4826
      %v4828 = vpop.f32.mrb[0].mxu0
      %4829 = vmatprep.mubr.f32.mxu0 0.0
      %4830 = vmatmul.mubr.f32.gmra.mrb[0].mxu0 %v4571
      %v4831 = vpop.f32.mrb[0].mxu0
      %v4832 = vadd.f32 0.0, %v4831
      %v4833 = vpop.f32.mrb[0].mxu0
      %4834 = vmatprep.mubr.f32.mxu0 0.0
      %4835 = vmatmul.mubr.f32.gmra.mrb[0].mxu0 %v4574
      %v4836 = vpop.f32.mrb[0].mxu0
      %v4837 = vadd.f32 0.0, %v4836
      %v4838 = vpop.f32.mrb[0].mxu0
      %4839 = vmatprep.mubr.f32.mxu0 0.0
      %4840 = vmatmul.mubr.f32.gmra.mrb[0].mxu0 %v4577
      %v4841 = vpop.f32.mrb[0].mxu0
      %v4842 = vadd.f32 0.0, %v4841
      %v4843 = vpop.f32.mrb[0].mxu0
      %4844 = vmatprep.mubr.f32.mxu0 0.0
      %4845 = vmatmul.mubr.f32.gmra.mrb[0].mxu0 %v4580
      %v4846 = vpop.f32.mrb[0].mxu0
      %v4847 = vadd.f32 0.0, %v4846
      %v4848 = vpop.f32.mrb[0].mxu0
      %4849 = vmatprep.mubr.f32.mxu0 0.0
      %4850 = vmatmul.mubr.f32.gmra.mrb[0].mxu0 %v4583
      %v4851 = vpop.f32.mrb[0].mxu0
      %v4852 = vadd.f32 0.0, %v4851
      %v4853 = vpop.f32.mrb[0].mxu0
      %4854 = vmatprep.mubr.f32.mxu0 0.0
      %4855 = vmatmul.mubr.f32.gmra.mrb[0].mxu0 %v4586
      %v4856 = vpop.f32.mrb[0].mxu0
      %v4857 = vadd.f32 0.0, %v4856
      %v4858 = vpop.f32.mrb[0].mxu0
      %4859 = vmatprep.mubr.f32.mxu0 0.0
      %4860 = vmatmul.mubr.f32.gmra.mrb[0].mxu0 %v4589
      %v4861 = vpop.f32.mrb[0].mxu0
      %v4862 = vadd.f32 0.0, %v4861
      %v4863 = vpop.f32.mrb[0].mxu0
      %4864 = vmatprep.mubr.f32.mxu0 0.0
      %4865 = vmatmul.mubr.f32.gmra.mrb[0].mxu0 %v4592
      %v4866 = vpop.f32.mrb[0].mxu0
      %v4867 = vadd.f32 0.0, %v4866
      %v4868 = vpop.f32.mrb[0].mxu0
      %4869 = vmatprep.mubr.f32.mxu0 0.0
      %4870 = vmatmul.mubr.f32.gmra.mrb[0].mxu0 %v4595
      %v4871 = vpop.f32.mrb[0].mxu0
      %v4872 = vadd.f32 0.0, %v4871
      %v4873 = vpop.f32.mrb[0].mxu0
      %4874 = vmatprep.mubr.f32.mxu0 0.0
      %4875 = vmatmul.mubr.f32.gmra.mrb[0].mxu0 %v4598
      %v4876 = vpop.f32.mrb[0].mxu0
      %v4877 = vadd.f32 0.0, %v4876
      %v4878 = vpop.f32.mrb[0].mxu0
      %4879 = vmatprep.mubr.f32.mxu0 0.0
      %4880 = vmatmul.mubr.f32.gmra.mrb[0].mxu0 %v4601
      %v4881 = vpop.f32.mrb[0].mxu0
      %v4882 = vadd.f32 0.0, %v4881
      %v4883 = vpop.f32.mrb[0].mxu0
      %4884 = vmatprep.mubr.f32.mxu0 0.0
      %4885 = vmatmul.mubr.f32.gmra.mrb[0].mxu0 %v4604
      %v4886 = vpop.f32.mrb[0].mxu0
      %v4887 = vadd.f32 0.0, %v4886
      %v4888 = vpop.f32.mrb[0].mxu0
      %4889 = vmatprep.mubr.f32.mxu0 0.0
      %4890 = vmatmul.mubr.f32.gmra.mrb[0].mxu0 %v4607
      %v4891 = vpop.f32.mrb[0].mxu0
      %v4892 = vadd.f32 0.0, %v4891
      %v4893 = vpop.f32.mrb[0].mxu0
      %4894 = vmatprep.mubr.f32.mxu0 0.0
      %4895 = vmatmul.mubr.f32.gmra.mrb[0].mxu0 %v4610
      %v4896 = vpop.f32.mrb[0].mxu0
      %v4897 = vadd.f32 0.0, %v4896
      %v4898 = vpop.f32.mrb[0].mxu0
      %4899 = vmatprep.mubr.f32.mxu0 0.0
      %4900 = vmatmul.mubr.f32.gmra.mrb[0].mxu0 %v4613
      %v4901 = vpop.f32.mrb[0].mxu0
      %v4902 = vadd.f32 0.0, %v4901
      %v4903 = vpop.f32.mrb[0].mxu0
      %4904 = vmatprep.mubr.f32.mxu0 0.0
      %4905 = vmatmul.mubr.f32.gmra.mrb[0].mxu0 %v4616
      %v4906 = vpop.f32.mrb[0].mxu0
      %v4907 = vadd.f32 0.0, %v4906
      %v4908 = vpop.f32.mrb[0].mxu0
      %4909 = vmatprep.mubr.f32.mxu0 0.0
      %4910 = vmatmul.mubr.f32.gmra.mrb[0].mxu0 %v4619
      %v4911 = vpop.f32.mrb[0].mxu0
      %v4912 = vadd.f32 0.0, %v4911
      %v4913 = vpop.f32.mrb[0].mxu0
      %4914 = vmatprep.mubr.f32.mxu0 0.0
      %4915 = vmatmul.mubr.f32.gmra.mrb[0].mxu0 %v4622
      %v4916 = vpop.f32.mrb[0].mxu0
      %v4917 = vadd.f32 0.0, %v4916
      %v4918 = vpop.f32.mrb[0].mxu0
      %4919 = vmatprep.mubr.f32.mxu0 0.0
      %4920 = vmatmul.mubr.f32.gmra.mrb[0].mxu0 %v4625
      %v4921 = vpop.f32.mrb[0].mxu0
      %v4922 = vadd.f32 0.0, %v4921
      %v4923 = vpop.f32.mrb[0].mxu0
      %4924 = vmatprep.mubr.f32.mxu0 0.0
      %4925 = vmatmul.mubr.f32.gmra.mrb[0].mxu0 %v4628
      %v4926 = vpop.f32.mrb[0].mxu0
      %v4927 = vadd.f32 0.0, %v4926
      %v4928 = vpop.f32.mrb[0].mxu0
      %4929 = vmatprep.mubr.f32.mxu0 0.0
      %4930 = vmatmul.mubr.f32.gmra.mrb[0].mxu0 %v4631
      %v4931 = vpop.f32.mrb[0].mxu0
      %v4932 = vadd.f32 0.0, %v4931
      %v4933 = vpop.f32.mrb[0].mxu0
      %4934 = vmatprep.mubr.f32.mxu0 0.0
      %4935 = vmatmul.mubr.f32.gmra.mrb[0].mxu0 %v4634
      %v4936 = vpop.f32.mrb[0].mxu0
      %v4937 = vadd.f32 0.0, %v4936
      %v4938 = vpop.f32.mrb[0].mxu0
      %4939 = vmatprep.mubr.f32.mxu0 0.0
      %4940 = vmatmul.mubr.f32.gmra.mrb[0].mxu0 %v4637
      %v4941 = vpop.f32.mrb[0].mxu0
      %v4942 = vadd.f32 0.0, %v4941
      %v4943 = vpop.f32.mrb[0].mxu0
      %4944 = vmatprep.mubr.f32.mxu0 0.0
      %4945 = vmatmul.mubr.f32.gmra.mrb[0].mxu0 %v4640
      %v4946 = vpop.f32.mrb[0].mxu0
      %v4947 = vadd.f32 0.0, %v4946
      %v4948 = vpop.f32.mrb[0].mxu0
      %4949 = vmatprep.mubr.f32.mxu0 0.0
      %4950 = vmatmul.mubr.f32.gmra.mrb[0].mxu0 %v4643
      %v4951 = vpop.f32.mrb[0].mxu0
      %v4952 = vadd.f32 0.0, %v4951
      %v4953 = vpop.f32.mrb[0].mxu0
      %4954 = vmatprep.mubr.f32.mxu0 0.0
      %4955 = vmatmul.mubr.f32.gmra.mrb[0].mxu0 %v4646
      %v4956 = vpop.f32.mrb[0].mxu0
      %v4957 = vadd.f32 0.0, %v4956
      %v4958 = vpop.f32.mrb[0].mxu0
      %4959 = vmatprep.mubr.f32.mxu0 0.0
      %4960 = vmatmul.mubr.f32.gmra.mrb[0].mxu0 %v4649
      %v4961 = vpop.f32.mrb[0].mxu0
      %v4962 = vadd.f32 0.0, %v4961
      %v4963 = vpop.f32.mrb[0].mxu0
      %4964 = vmatprep.mubr.f32.mxu0 0.0
      %4965 = vmatmul.mubr.f32.gmra.mrb[0].mxu0 %v4652
      %v4966 = vpop.f32.mrb[0].mxu0
      %v4967 = vadd.f32 0.0, %v4966
      %v4968 = vpop.f32.mrb[0].mxu0
      %4969 = vmatprep.mubr.f32.mxu0 0.0
      %4970 = vmatmul.mubr.f32.gmra.mrb[0].mxu0 %v4655
      %v4971 = vpop.f32.mrb[0].mxu0
      %v4972 = vadd.f32 0.0, %v4971
      %v4973 = vpop.f32.mrb[0].mxu0
      %4974 = vmatprep.mubr.f32.mxu0 0.0
      %4975 = vmatmul.mubr.f32.gmra.mrb[0].mxu0 %v4658
      %v4976 = vpop.f32.mrb[0].mxu0
      %v4977 = vadd.f32 0.0, %v4976
      %v4978 = vpop.f32.mrb[0].mxu0
      %4979 = vmatprep.mubr.f32.mxu0 0.0
      %4980 = vmatmul.mubr.f32.gmra.mrb[0].mxu0 %v4661
      %v4981 = vpop.f32.mrb[0].mxu0
      %v4982 = vadd.f32 0.0, %v4981
      %v4983 = vpop.f32.mrb[0].mxu0
      %4984 = vmatprep.mubr.f32.mxu0 0.0
      %4985 = vmatmul.mubr.f32.gmra.mrb[0].mxu0 %v4664
      %v4986 = vpop.f32.mrb[0].mxu0
      %v4987 = vadd.f32 0.0, %v4986
      %v4988 = vpop.f32.mrb[0].mxu0
      %4989 = vmatprep.mubr.f32.mxu0 0.0
      %4990 = vmatmul.mubr.f32.gmra.mrb[0].mxu0 %v4667
      %v4991 = vpop.f32.mrb[0].mxu0
      %v4992 = vadd.f32 0.0, %v4991
      %v4993 = vpop.f32.mrb[0].mxu0
      %4994 = vmatprep.mubr.f32.mxu0 0.0
      %4995 = vmatmul.mubr.f32.gmra.mrb[0].mxu0 %v4670
      %v4996 = vpop.f32.mrb[0].mxu0
      %v4997 = vadd.f32 0.0, %v4996
      %v4998 = vpop.f32.mrb[0].mxu0
      %4999 = vmatprep.mubr.f32.mxu0 0.0
      %5000 = vmatmul.mubr.f32.gmra.mrb[0].mxu0 %v4673
      %v5001 = vpop.f32.mrb[0].mxu0
      %v5002 = vadd.f32 0.0, %v5001
      %v5003 = vpop.f32.mrb[0].mxu0
      %5004 = vmatprep.mubr.f32.mxu0 0.0
      %5005 = vmatmul.mubr.f32.gmra.mrb[0].mxu0 %v4676
      %v5006 = vpop.f32.mrb[0].mxu0
      %v5007 = vadd.f32 0.0, %v5006
      %v5008 = vpop.f32.mrb[0].mxu0
      %5009 = vmatprep.mubr.f32.mxu0 0.0
      %5010 = vmatmul.mubr.f32.gmra.mrb[0].mxu0 %v4679
      %v5011 = vpop.f32.mrb[0].mxu0
      %v5012 = vadd.f32 0.0, %v5011
      %v5013 = vpop.f32.mrb[0].mxu0
      %5014 = vmatprep.mubr.f32.mxu0 0.0
      %5015 = vmatmul.mubr.f32.gmra.mrb[0].mxu0 %v4682
      %v5016 = vpop.f32.mrb[0].mxu0
      %v5017 = vadd.f32 0.0, %v5016
      %v5018 = vpop.f32.mrb[0].mxu0
      %5019 = vmatprep.mubr.f32.mxu0 0.0
      %5020 = vmatmul.mubr.f32.gmra.mrb[0].mxu0 %v4685
      %v5021 = vpop.f32.mrb[0].mxu0
      %v5022 = vadd.f32 0.0, %v5021
      %v5023 = vpop.f32.mrb[0].mxu0
      %5024 = vdwg.mxu0
      %v5025 = vadd.f32 %v4415, %v4757
      %v5026 = vadd.f32 %v4416, %v4762
      %v5027 = vadd.f32 %v4417, %v4767
      %v5028 = vadd.f32 %v4418, %v4772
      %v5029 = vadd.f32 %v4419, %v4777
      %v5030 = vadd.f32 %v4420, %v4782
      %v5031 = vadd.f32 %v4421, %v4787
      %v5032 = vadd.f32 %v4422, %v4792
      %v5033 = vadd.f32 %v4423, %v4797
      %v5034 = vadd.f32 %v4424, %v4802
      %v5035 = vadd.f32 %v4425, %v4807
      %v5036 = vadd.f32 %v4426, %v4812
      %v5037 = vadd.f32 %v4427, %v4817
      %v5038 = vadd.f32 %v4428, %v4822
      %v5039 = vadd.f32 %v4429, %v4827
      %v5040 = vadd.f32 %v4430, %v4832
      %v5041 = vadd.f32 %v4431, %v4837
      %v5042 = vadd.f32 %v4432, %v4842
      %v5043 = vadd.f32 %v4433, %v4847
      %v5044 = vadd.f32 %v4434, %v4852
      %v5045 = vadd.f32 %v4435, %v4857
      %v5046 = vadd.f32 %v4436, %v4862
      %v5047 = vadd.f32 %v4437, %v4867
      %v5048 = vadd.f32 %v4438, %v4872
      %v5049 = vadd.f32 %v4439, %v4877
      %v5050 = vadd.f32 %v4440, %v4882
      %v5051 = vadd.f32 %v4441, %v4887
      %v5052 = vadd.f32 %v4442, %v4892
      %v5053 = vadd.f32 %v4443, %v4897
      %v5054 = vadd.f32 %v4444, %v4902
      %v5055 = vadd.f32 %v4445, %v4907
      %v5056 = vadd.f32 %v4446, %v4912
      %v5057 = vadd.f32 %v4447, %v4917
      %v5058 = vadd.f32 %v4448, %v4922
      %v5059 = vadd.f32 %v4449, %v4927
      %v5060 = vadd.f32 %v4450, %v4932
      %v5061 = vadd.f32 %v4451, %v4937
      %v5062 = vadd.f32 %v4452, %v4942
      %v5063 = vadd.f32 %v4453, %v4947
      %v5064 = vadd.f32 %v4454, %v4952
      %v5065 = vadd.f32 %v4455, %v4957
      %v5066 = vadd.f32 %v4456, %v4962
      %v5067 = vadd.f32 %v4457, %v4967
      %v5068 = vadd.f32 %v4458, %v4972
      %v5069 = vadd.f32 %v4459, %v4977
      %v5070 = vadd.f32 %v4460, %v4982
      %v5071 = vadd.f32 %v4461, %v4987
      %v5072 = vadd.f32 %v4462, %v4992
      %v5073 = vadd.f32 %v4463, %v4997
      %v5074 = vadd.f32 %v4464, %v5002
      %v5075 = vadd.f32 %v4465, %v5007
      %v5076 = vadd.f32 %v4466, %v5012
      %v5077 = vadd.f32 %v4467, %v5017
      %v5078 = vadd.f32 %v4468, %v5022
      %v5079 = vld [vmem:[%s300 + $0x32] sm:$0xff]
      %v5080 = vld [vmem:[%s300 + $0x3a] sm:$0xff]
      %v5081 = vld [vmem:[%s300 + $0x42] sm:$0xff]
      %v5082 = vld [vmem:[%s300 + $0x4a] sm:$0xff]
      %v5083 = vld [vmem:[%s300 + $0x52] sm:$0xff]
      %v5084 = vld [vmem:[%s300 + $0x5a] sm:$0xff]
      %v5085 = vld [vmem:[%s300 + $0x62] sm:$0xff]
      %v5086 = vld [vmem:[%s300 + $0x6a] sm:$0xff]
      %v5087 = vld [vmem:[%s300 + $0x72] sm:$0xff]
      %v5088 = vld [vmem:[%s300 + $0x7a] sm:$0xff]
      %v5089 = vld [vmem:[%s300 + $0x82] sm:$0xff]
      %v5090 = vld [vmem:[%s300 + $0x8a] sm:$0xff]
      %v5091 = vld [vmem:[%s300 + $0x92] sm:$0xff]
      %v5092 = vld [vmem:[%s300 + $0x9a] sm:$0xff]
      %v5093 = vld [vmem:[%s300 + $0xa2] sm:$0xff]
      %v5094 = vld [vmem:[%s300 + $0xaa] sm:$0xff]
      %v5095 = vld [vmem:[%s300 + $0xb2] sm:$0xff]
      %v5096 = vld [vmem:[%s300 + $0xba] sm:$0xff]
      %v5097 = vld [vmem:[%s300 + $0xc2] sm:$0xff]
      %v5098 = vld [vmem:[%s300 + $0xca] sm:$0xff]
      %v5099 = vld [vmem:[%s300 + $0xd2] sm:$0xff]
      %v5100 = vld [vmem:[%s300 + $0xda] sm:$0xff]
      %v5101 = vld [vmem:[%s300 + $0xe2] sm:$0xff]
      %v5102 = vld [vmem:[%s300 + $0xea] sm:$0xff]
      %v5103 = vld [vmem:[%s300 + $0xf2] sm:$0xff]
      %v5104 = vld [vmem:[%s300 + $0xfa] sm:$0xff]
      %v5105 = vld [vmem:[%s300 + $0x102] sm:$0xff]
      %v5106 = vld [vmem:[%s300 + $0x10a] sm:$0xff]
      %v5107 = vld [vmem:[%s300 + $0x112] sm:$0xff]
      %v5108 = vld [vmem:[%s300 + $0x11a] sm:$0xff]
      %v5109 = vld [vmem:[%s300 + $0x122] sm:$0xff]
      %v5110 = vld [vmem:[%s300 + $0x12a] sm:$0xff]
      %v5111 = vld [vmem:[%s300 + $0x132] sm:$0xff]
      %v5112 = vld [vmem:[%s300 + $0x13a] sm:$0xff]
      %v5113 = vld [vmem:[%s300 + $0x142] sm:$0xff]
      %v5114 = vld [vmem:[%s300 + $0x14a] sm:$0xff]
      %v5115 = vld [vmem:[%s300 + $0x152] sm:$0xff]
      %v5116 = vld [vmem:[%s300 + $0x15a] sm:$0xff]
      %v5117 = vld [vmem:[%s300 + $0x162] sm:$0xff]
      %v5118 = vld [vmem:[%s300 + $0x16a] sm:$0xff]
      %v5119 = vld [vmem:[%s300 + $0x172] sm:$0xff]
      %v5120 = vld [vmem:[%s300 + $0x17a] sm:$0xff]
      %v5121 = vld [vmem:[%s300 + $0x182] sm:$0xff]
      %v5122 = vld [vmem:[%s300 + $0x18a] sm:$0xff]
      %v5123 = vld [vmem:[%s300 + $0x192] sm:$0xff]
      %v5124 = vld [vmem:[%s300 + $0x19a] sm:$0xff]
      %v5125 = vld [vmem:[%s300 + $0x1a2] sm:$0xff]
      %v5126 = vld [vmem:[%s300 + $0x1aa] sm:$0xff]
      %v5127 = vld [vmem:[%s300 + $0x1b2] sm:$0xff]
      %v5128 = vld [vmem:[%s300 + $0x1ba] sm:$0xff]
      %v5129 = vld [vmem:[%s300 + $0x1c2] sm:$0xff]
      %v5130 = vld [vmem:[%s300 + $0x1ca] sm:$0xff]
      %v5131 = vld [vmem:[%s300 + $0x1d2] sm:$0xff]
      %v5132 = vld [vmem:[%s300 + $0x1da] sm:$0xff]
      %s5133 = scalar_lea.vmem %s2, 32
      %v5134 = vld [vmem:[%s5133] sm:$0xf]
      %v5136 = vsel %vm417, %v5079, 0
      %v5139 = vsel %vm417, %v5080, 0
      %v5142 = vsel %vm417, %v5081, 0
      %v5145 = vsel %vm417, %v5082, 0
      %v5148 = vsel %vm417, %v5083, 0
      %v5151 = vsel %vm417, %v5084, 0
      %v5154 = vsel %vm417, %v5085, 0
      %v5157 = vsel %vm417, %v5086, 0
      %v5160 = vsel %vm417, %v5087, 0
      %v5163 = vsel %vm417, %v5088, 0
      %v5166 = vsel %vm417, %v5089, 0
      %v5169 = vsel %vm417, %v5090, 0
      %v5172 = vsel %vm417, %v5091, 0
      %v5175 = vsel %vm417, %v5092, 0
      %v5178 = vsel %vm417, %v5093, 0
      %v5181 = vsel %vm417, %v5094, 0
      %v5184 = vsel %vm417, %v5095, 0
      %v5187 = vsel %vm417, %v5096, 0
      %v5190 = vsel %vm417, %v5097, 0
      %v5193 = vsel %vm417, %v5098, 0
      %v5196 = vsel %vm417, %v5099, 0
      %v5199 = vsel %vm417, %v5100, 0
      %v5202 = vsel %vm417, %v5101, 0
      %v5205 = vsel %vm417, %v5102, 0
      %v5208 = vsel %vm417, %v5103, 0
      %v5211 = vsel %vm417, %v5104, 0
      %v5214 = vsel %vm417, %v5105, 0
      %v5217 = vsel %vm417, %v5106, 0
      %v5220 = vsel %vm417, %v5107, 0
      %v5223 = vsel %vm417, %v5108, 0
      %v5226 = vsel %vm417, %v5109, 0
      %v5229 = vsel %vm417, %v5110, 0
      %v5232 = vsel %vm417, %v5111, 0
      %v5235 = vsel %vm417, %v5112, 0
      %v5238 = vsel %vm417, %v5113, 0
      %v5241 = vsel %vm417, %v5114, 0
      %v5244 = vsel %vm417, %v5115, 0
      %v5247 = vsel %vm417, %v5116, 0
      %v5250 = vsel %vm417, %v5117, 0
      %v5253 = vsel %vm417, %v5118, 0
      %v5256 = vsel %vm417, %v5119, 0
      %v5259 = vsel %vm417, %v5120, 0
      %v5262 = vsel %vm417, %v5121, 0
      %v5265 = vsel %vm417, %v5122, 0
      %v5268 = vsel %vm417, %v5123, 0
      %v5271 = vsel %vm417, %v5124, 0
      %v5274 = vsel %vm417, %v5125, 0
      %v5277 = vsel %vm417, %v5126, 0
      %v5280 = vsel %vm417, %v5127, 0
      %v5283 = vsel %vm417, %v5128, 0
      %v5286 = vsel %vm417, %v5129, 0
      %v5289 = vsel %vm417, %v5130, 0
      %v5292 = vsel %vm417, %v5131, 0
      %v5295 = vsel %vm417, %v5132, 0
      %v5298 = vsel %vm580, %v5134, 0
      %5300 = vmatprep.subr.mxu0 0.0
      %5301 = vmatpush1.msra.mxu0 %v5298
      %5302 = vmatprep.subr.mxu0 0.0
      %5303 = vmatpush1.msra.mxu0 0.0
      %5304 = vmatprep.subr.mxu0 0.0
      %5305 = vmatpush1.msra.mxu0 0.0
      %5306 = vmatprep.subr.mxu0 0.0
      %5307 = vmatpush1.msra.mxu0 0.0
      %5308 = vmatprep.subr.mxu0 0.0
      %5309 = vmatpush1.msra.mxu0 0.0
      %5310 = vmatprep.subr.mxu0 0.0
      %5311 = vmatpush1.msra.mxu0 0.0
      %5312 = vmatprep.subr.mxu0 0.0
      %5313 = vmatpush1.msra.mxu0 0.0
      %5314 = vmatprep.subr.mxu0 0.0
      %5315 = vmatpush1.msra.mxu0 0.0
      %5316 = vmatprep.subr.mxu0 0.0
      %5317 = vmatpush1.msra.mxu0 0.0
      %5318 = vmatprep.subr.mxu0 0.0
      %5319 = vmatpush1.msra.mxu0 0.0
      %5320 = vmatprep.subr.mxu0 0.0
      %5321 = vmatpush1.msra.mxu0 0.0
      %5322 = vmatprep.subr.mxu0 0.0
      %5323 = vmatpush1.msra.mxu0 0.0
      %5324 = vmatprep.subr.mxu0 0.0
      %5325 = vmatpush1.msra.mxu0 0.0
      %5326 = vmatprep.subr.mxu0 0.0
      %5327 = vmatpush1.msra.mxu0 0.0
      %5328 = vmatprep.subr.mxu0 0.0
      %5329 = vmatpush1.msra.mxu0 0.0
      %5330 = vmatprep.subr.mxu0 0.0
      %5331 = vmatpush1.msra.mxu0 0.0
      %5332 = vmatprep.subr.mxu0 0.0
      %5333 = vmatpush1.msra.mxu0 0.0
      %5334 = vmatprep.subr.mxu0 0.0
      %5335 = vmatpush1.msra.mxu0 0.0
      %5336 = vmatprep.subr.mxu0 0.0
      %5337 = vmatpush1.msra.mxu0 0.0
      %5338 = vmatprep.subr.mxu0 0.0
      %5339 = vmatpush1.msra.mxu0 0.0
      %5340 = vmatprep.subr.mxu0 0.0
      %5341 = vmatpush1.msra.mxu0 0.0
      %5342 = vmatprep.subr.mxu0 0.0
      %5343 = vmatpush1.msra.mxu0 0.0
      %5344 = vmatprep.subr.mxu0 0.0
      %5345 = vmatpush1.msra.mxu0 0.0
      %5346 = vmatprep.subr.mxu0 0.0
      %5347 = vmatpush1.msra.mxu0 0.0
      %5348 = vmatprep.subr.mxu0 0.0
      %5349 = vmatpush1.msra.mxu0 0.0
      %5350 = vmatprep.subr.mxu0 0.0
      %5351 = vmatpush1.msra.mxu0 0.0
      %5352 = vmatprep.subr.mxu0 0.0
      %5353 = vmatpush1.msra.mxu0 0.0
      %5354 = vmatprep.subr.mxu0 0.0
      %5355 = vmatpush1.msra.mxu0 0.0
      %5356 = vmatprep.subr.mxu0 0.0
      %5357 = vmatpush1.msra.mxu0 0.0
      %5358 = vmatprep.subr.mxu0 0.0
      %5359 = vmatpush1.msra.mxu0 0.0
      %5360 = vmatprep.subr.mxu0 0.0
      %5361 = vmatpush1.msra.mxu0 0.0
      %5362 = vmatprep.subr.mxu0 0.0
      %5363 = vmatpush1.msra.mxu0 0.0
      %5364 = vmatprep.mubr.f32.mxu0 0.0
      %5365 = vmatmul.mubr.f32.gmra.mrb[0].mxu0 %v5136
      %v5366 = vpop.f32.mrb[0].mxu0
      %v5367 = vadd.f32 0.0, %v5366
      %v5368 = vpop.f32.mrb[0].mxu0
      %5369 = vmatprep.mubr.f32.mxu0 0.0
      %5370 = vmatmul.mubr.f32.gmra.mrb[0].mxu0 %v5139
      %v5371 = vpop.f32.mrb[0].mxu0
      %v5372 = vadd.f32 0.0, %v5371
      %v5373 = vpop.f32.mrb[0].mxu0
      %5374 = vmatprep.mubr.f32.mxu0 0.0
      %5375 = vmatmul.mubr.f32.gmra.mrb[0].mxu0 %v5142
      %v5376 = vpop.f32.mrb[0].mxu0
      %v5377 = vadd.f32 0.0, %v5376
      %v5378 = vpop.f32.mrb[0].mxu0
      %5379 = vmatprep.mubr.f32.mxu0 0.0
      %5380 = vmatmul.mubr.f32.gmra.mrb[0].mxu0 %v5145
      %v5381 = vpop.f32.mrb[0].mxu0
      %v5382 = vadd.f32 0.0, %v5381
      %v5383 = vpop.f32.mrb[0].mxu0
      %5384 = vmatprep.mubr.f32.mxu0 0.0
      %5385 = vmatmul.mubr.f32.gmra.mrb[0].mxu0 %v5148
      %v5386 = vpop.f32.mrb[0].mxu0
      %v5387 = vadd.f32 0.0, %v5386
      %v5388 = vpop.f32.mrb[0].mxu0
      %5389 = vmatprep.mubr.f32.mxu0 0.0
      %5390 = vmatmul.mubr.f32.gmra.mrb[0].mxu0 %v5151
      %v5391 = vpop.f32.mrb[0].mxu0
      %v5392 = vadd.f32 0.0, %v5391
      %v5393 = vpop.f32.mrb[0].mxu0
      %5394 = vmatprep.mubr.f32.mxu0 0.0
      %5395 = vmatmul.mubr.f32.gmra.mrb[0].mxu0 %v5154
      %v5396 = vpop.f32.mrb[0].mxu0
      %v5397 = vadd.f32 0.0, %v5396
      %v5398 = vpop.f32.mrb[0].mxu0
      %5399 = vmatprep.mubr.f32.mxu0 0.0
      %5400 = vmatmul.mubr.f32.gmra.mrb[0].mxu0 %v5157
      %v5401 = vpop.f32.mrb[0].mxu0
      %v5402 = vadd.f32 0.0, %v5401
      %v5403 = vpop.f32.mrb[0].mxu0
      %5404 = vmatprep.mubr.f32.mxu0 0.0
      %5405 = vmatmul.mubr.f32.gmra.mrb[0].mxu0 %v5160
      %v5406 = vpop.f32.mrb[0].mxu0
      %v5407 = vadd.f32 0.0, %v5406
      %v5408 = vpop.f32.mrb[0].mxu0
      %5409 = vmatprep.mubr.f32.mxu0 0.0
      %5410 = vmatmul.mubr.f32.gmra.mrb[0].mxu0 %v5163
      %v5411 = vpop.f32.mrb[0].mxu0
      %v5412 = vadd.f32 0.0, %v5411
      %v5413 = vpop.f32.mrb[0].mxu0
      %5414 = vmatprep.mubr.f32.mxu0 0.0
      %5415 = vmatmul.mubr.f32.gmra.mrb[0].mxu0 %v5166
      %v5416 = vpop.f32.mrb[0].mxu0
      %v5417 = vadd.f32 0.0, %v5416
      %v5418 = vpop.f32.mrb[0].mxu0
      %5419 = vmatprep.mubr.f32.mxu0 0.0
      %5420 = vmatmul.mubr.f32.gmra.mrb[0].mxu0 %v5169
      %v5421 = vpop.f32.mrb[0].mxu0
      %v5422 = vadd.f32 0.0, %v5421
      %v5423 = vpop.f32.mrb[0].mxu0
      %5424 = vmatprep.mubr.f32.mxu0 0.0
      %5425 = vmatmul.mubr.f32.gmra.mrb[0].mxu0 %v5172
      %v5426 = vpop.f32.mrb[0].mxu0
      %v5427 = vadd.f32 0.0, %v5426
      %v5428 = vpop.f32.mrb[0].mxu0
      %5429 = vmatprep.mubr.f32.mxu0 0.0
      %5430 = vmatmul.mubr.f32.gmra.mrb[0].mxu0 %v5175
      %v5431 = vpop.f32.mrb[0].mxu0
      %v5432 = vadd.f32 0.0, %v5431
      %v5433 = vpop.f32.mrb[0].mxu0
      %5434 = vmatprep.mubr.f32.mxu0 0.0
      %5435 = vmatmul.mubr.f32.gmra.mrb[0].mxu0 %v5178
      %v5436 = vpop.f32.mrb[0].mxu0
      %v5437 = vadd.f32 0.0, %v5436
      %v5438 = vpop.f32.mrb[0].mxu0
      %5439 = vmatprep.mubr.f32.mxu0 0.0
      %5440 = vmatmul.mubr.f32.gmra.mrb[0].mxu0 %v5181
      %v5441 = vpop.f32.mrb[0].mxu0
      %v5442 = vadd.f32 0.0, %v5441
      %v5443 = vpop.f32.mrb[0].mxu0
      %5444 = vmatprep.mubr.f32.mxu0 0.0
      %5445 = vmatmul.mubr.f32.gmra.mrb[0].mxu0 %v5184
      %v5446 = vpop.f32.mrb[0].mxu0
      %v5447 = vadd.f32 0.0, %v5446
      %v5448 = vpop.f32.mrb[0].mxu0
      %5449 = vmatprep.mubr.f32.mxu0 0.0
      %5450 = vmatmul.mubr.f32.gmra.mrb[0].mxu0 %v5187
      %v5451 = vpop.f32.mrb[0].mxu0
      %v5452 = vadd.f32 0.0, %v5451
      %v5453 = vpop.f32.mrb[0].mxu0
      %5454 = vmatprep.mubr.f32.mxu0 0.0
      %5455 = vmatmul.mubr.f32.gmra.mrb[0].mxu0 %v5190
      %v5456 = vpop.f32.mrb[0].mxu0
      %v5457 = vadd.f32 0.0, %v5456
      %v5458 = vpop.f32.mrb[0].mxu0
      %5459 = vmatprep.mubr.f32.mxu0 0.0
      %5460 = vmatmul.mubr.f32.gmra.mrb[0].mxu0 %v5193
      %v5461 = vpop.f32.mrb[0].mxu0
      %v5462 = vadd.f32 0.0, %v5461
      %v5463 = vpop.f32.mrb[0].mxu0
      %5464 = vmatprep.mubr.f32.mxu0 0.0
      %5465 = vmatmul.mubr.f32.gmra.mrb[0].mxu0 %v5196
      %v5466 = vpop.f32.mrb[0].mxu0
      %v5467 = vadd.f32 0.0, %v5466
      %v5468 = vpop.f32.mrb[0].mxu0
      %5469 = vmatprep.mubr.f32.mxu0 0.0
      %5470 = vmatmul.mubr.f32.gmra.mrb[0].mxu0 %v5199
      %v5471 = vpop.f32.mrb[0].mxu0
      %v5472 = vadd.f32 0.0, %v5471
      %v5473 = vpop.f32.mrb[0].mxu0
      %5474 = vmatprep.mubr.f32.mxu0 0.0
      %5475 = vmatmul.mubr.f32.gmra.mrb[0].mxu0 %v5202
      %v5476 = vpop.f32.mrb[0].mxu0
      %v5477 = vadd.f32 0.0, %v5476
      %v5478 = vpop.f32.mrb[0].mxu0
      %5479 = vmatprep.mubr.f32.mxu0 0.0
      %5480 = vmatmul.mubr.f32.gmra.mrb[0].mxu0 %v5205
      %v5481 = vpop.f32.mrb[0].mxu0
      %v5482 = vadd.f32 0.0, %v5481
      %v5483 = vpop.f32.mrb[0].mxu0
      %5484 = vmatprep.mubr.f32.mxu0 0.0
      %5485 = vmatmul.mubr.f32.gmra.mrb[0].mxu0 %v5208
      %v5486 = vpop.f32.mrb[0].mxu0
      %v5487 = vadd.f32 0.0, %v5486
      %v5488 = vpop.f32.mrb[0].mxu0
      %5489 = vmatprep.mubr.f32.mxu0 0.0
      %5490 = vmatmul.mubr.f32.gmra.mrb[0].mxu0 %v5211
      %v5491 = vpop.f32.mrb[0].mxu0
      %v5492 = vadd.f32 0.0, %v5491
      %v5493 = vpop.f32.mrb[0].mxu0
      %5494 = vmatprep.mubr.f32.mxu0 0.0
      %5495 = vmatmul.mubr.f32.gmra.mrb[0].mxu0 %v5214
      %v5496 = vpop.f32.mrb[0].mxu0
      %v5497 = vadd.f32 0.0, %v5496
      %v5498 = vpop.f32.mrb[0].mxu0
      %5499 = vmatprep.mubr.f32.mxu0 0.0
      %5500 = vmatmul.mubr.f32.gmra.mrb[0].mxu0 %v5217
      %v5501 = vpop.f32.mrb[0].mxu0
      %v5502 = vadd.f32 0.0, %v5501
      %v5503 = vpop.f32.mrb[0].mxu0
      %5504 = vmatprep.mubr.f32.mxu0 0.0
      %5505 = vmatmul.mubr.f32.gmra.mrb[0].mxu0 %v5220
      %v5506 = vpop.f32.mrb[0].mxu0
      %v5507 = vadd.f32 0.0, %v5506
      %v5508 = vpop.f32.mrb[0].mxu0
      %5509 = vmatprep.mubr.f32.mxu0 0.0
      %5510 = vmatmul.mubr.f32.gmra.mrb[0].mxu0 %v5223
      %v5511 = vpop.f32.mrb[0].mxu0
      %v5512 = vadd.f32 0.0, %v5511
      %v5513 = vpop.f32.mrb[0].mxu0
      %5514 = vmatprep.mubr.f32.mxu0 0.0
      %5515 = vmatmul.mubr.f32.gmra.mrb[0].mxu0 %v5226
      %v5516 = vpop.f32.mrb[0].mxu0
      %v5517 = vadd.f32 0.0, %v5516
      %v5518 = vpop.f32.mrb[0].mxu0
      %5519 = vmatprep.mubr.f32.mxu0 0.0
      %5520 = vmatmul.mubr.f32.gmra.mrb[0].mxu0 %v5229
      %v5521 = vpop.f32.mrb[0].mxu0
      %v5522 = vadd.f32 0.0, %v5521
      %v5523 = vpop.f32.mrb[0].mxu0
      %5524 = vmatprep.mubr.f32.mxu0 0.0
      %5525 = vmatmul.mubr.f32.gmra.mrb[0].mxu0 %v5232
      %v5526 = vpop.f32.mrb[0].mxu0
      %v5527 = vadd.f32 0.0, %v5526
      %v5528 = vpop.f32.mrb[0].mxu0
      %5529 = vmatprep.mubr.f32.mxu0 0.0
      %5530 = vmatmul.mubr.f32.gmra.mrb[0].mxu0 %v5235
      %v5531 = vpop.f32.mrb[0].mxu0
      %v5532 = vadd.f32 0.0, %v5531
      %v5533 = vpop.f32.mrb[0].mxu0
      %5534 = vmatprep.mubr.f32.mxu0 0.0
      %5535 = vmatmul.mubr.f32.gmra.mrb[0].mxu0 %v5238
      %v5536 = vpop.f32.mrb[0].mxu0
      %v5537 = vadd.f32 0.0, %v5536
      %v5538 = vpop.f32.mrb[0].mxu0
      %5539 = vmatprep.mubr.f32.mxu0 0.0
      %5540 = vmatmul.mubr.f32.gmra.mrb[0].mxu0 %v5241
      %v5541 = vpop.f32.mrb[0].mxu0
      %v5542 = vadd.f32 0.0, %v5541
      %v5543 = vpop.f32.mrb[0].mxu0
      %5544 = vmatprep.mubr.f32.mxu0 0.0
      %5545 = vmatmul.mubr.f32.gmra.mrb[0].mxu0 %v5244
      %v5546 = vpop.f32.mrb[0].mxu0
      %v5547 = vadd.f32 0.0, %v5546
      %v5548 = vpop.f32.mrb[0].mxu0
      %5549 = vmatprep.mubr.f32.mxu0 0.0
      %5550 = vmatmul.mubr.f32.gmra.mrb[0].mxu0 %v5247
      %v5551 = vpop.f32.mrb[0].mxu0
      %v5552 = vadd.f32 0.0, %v5551
      %v5553 = vpop.f32.mrb[0].mxu0
      %5554 = vmatprep.mubr.f32.mxu0 0.0
      %5555 = vmatmul.mubr.f32.gmra.mrb[0].mxu0 %v5250
      %v5556 = vpop.f32.mrb[0].mxu0
      %v5557 = vadd.f32 0.0, %v5556
      %v5558 = vpop.f32.mrb[0].mxu0
      %5559 = vmatprep.mubr.f32.mxu0 0.0
      %5560 = vmatmul.mubr.f32.gmra.mrb[0].mxu0 %v5253
      %v5561 = vpop.f32.mrb[0].mxu0
      %v5562 = vadd.f32 0.0, %v5561
      %v5563 = vpop.f32.mrb[0].mxu0
      %5564 = vmatprep.mubr.f32.mxu0 0.0
      %5565 = vmatmul.mubr.f32.gmra.mrb[0].mxu0 %v5256
      %v5566 = vpop.f32.mrb[0].mxu0
      %v5567 = vadd.f32 0.0, %v5566
      %v5568 = vpop.f32.mrb[0].mxu0
      %5569 = vmatprep.mubr.f32.mxu0 0.0
      %5570 = vmatmul.mubr.f32.gmra.mrb[0].mxu0 %v5259
      %v5571 = vpop.f32.mrb[0].mxu0
      %v5572 = vadd.f32 0.0, %v5571
      %v5573 = vpop.f32.mrb[0].mxu0
      %5574 = vmatprep.mubr.f32.mxu0 0.0
      %5575 = vmatmul.mubr.f32.gmra.mrb[0].mxu0 %v5262
      %v5576 = vpop.f32.mrb[0].mxu0
      %v5577 = vadd.f32 0.0, %v5576
      %v5578 = vpop.f32.mrb[0].mxu0
      %5579 = vmatprep.mubr.f32.mxu0 0.0
      %5580 = vmatmul.mubr.f32.gmra.mrb[0].mxu0 %v5265
      %v5581 = vpop.f32.mrb[0].mxu0
      %v5582 = vadd.f32 0.0, %v5581
      %v5583 = vpop.f32.mrb[0].mxu0
      %5584 = vmatprep.mubr.f32.mxu0 0.0
      %5585 = vmatmul.mubr.f32.gmra.mrb[0].mxu0 %v5268
      %v5586 = vpop.f32.mrb[0].mxu0
      %v5587 = vadd.f32 0.0, %v5586
      %v5588 = vpop.f32.mrb[0].mxu0
      %5589 = vmatprep.mubr.f32.mxu0 0.0
      %5590 = vmatmul.mubr.f32.gmra.mrb[0].mxu0 %v5271
      %v5591 = vpop.f32.mrb[0].mxu0
      %v5592 = vadd.f32 0.0, %v5591
      %v5593 = vpop.f32.mrb[0].mxu0
      %5594 = vmatprep.mubr.f32.mxu0 0.0
      %5595 = vmatmul.mubr.f32.gmra.mrb[0].mxu0 %v5274
      %v5596 = vpop.f32.mrb[0].mxu0
      %v5597 = vadd.f32 0.0, %v5596
      %v5598 = vpop.f32.mrb[0].mxu0
      %5599 = vmatprep.mubr.f32.mxu0 0.0
      %5600 = vmatmul.mubr.f32.gmra.mrb[0].mxu0 %v5277
      %v5601 = vpop.f32.mrb[0].mxu0
      %v5602 = vadd.f32 0.0, %v5601
      %v5603 = vpop.f32.mrb[0].mxu0
      %5604 = vmatprep.mubr.f32.mxu0 0.0
      %5605 = vmatmul.mubr.f32.gmra.mrb[0].mxu0 %v5280
      %v5606 = vpop.f32.mrb[0].mxu0
      %v5607 = vadd.f32 0.0, %v5606
      %v5608 = vpop.f32.mrb[0].mxu0
      %5609 = vmatprep.mubr.f32.mxu0 0.0
      %5610 = vmatmul.mubr.f32.gmra.mrb[0].mxu0 %v5283
      %v5611 = vpop.f32.mrb[0].mxu0
      %v5612 = vadd.f32 0.0, %v5611
      %v5613 = vpop.f32.mrb[0].mxu0
      %5614 = vmatprep.mubr.f32.mxu0 0.0
      %5615 = vmatmul.mubr.f32.gmra.mrb[0].mxu0 %v5286
      %v5616 = vpop.f32.mrb[0].mxu0
      %v5617 = vadd.f32 0.0, %v5616
      %v5618 = vpop.f32.mrb[0].mxu0
      %5619 = vmatprep.mubr.f32.mxu0 0.0
      %5620 = vmatmul.mubr.f32.gmra.mrb[0].mxu0 %v5289
      %v5621 = vpop.f32.mrb[0].mxu0
      %v5622 = vadd.f32 0.0, %v5621
      %v5623 = vpop.f32.mrb[0].mxu0
      %5624 = vmatprep.mubr.f32.mxu0 0.0
      %5625 = vmatmul.mubr.f32.gmra.mrb[0].mxu0 %v5292
      %v5626 = vpop.f32.mrb[0].mxu0
      %v5627 = vadd.f32 0.0, %v5626
      %v5628 = vpop.f32.mrb[0].mxu0
      %5629 = vmatprep.mubr.f32.mxu0 0.0
      %5630 = vmatmul.mubr.f32.gmra.mrb[0].mxu0 %v5295
      %v5631 = vpop.f32.mrb[0].mxu0
      %v5632 = vadd.f32 0.0, %v5631
      %v5633 = vpop.f32.mrb[0].mxu0
      %5634 = vdwg.mxu0
      %v5635 = vadd.f32 %v5025, %v5367
      %v5636 = vadd.f32 %v5026, %v5372
      %v5637 = vadd.f32 %v5027, %v5377
      %v5638 = vadd.f32 %v5028, %v5382
      %v5639 = vadd.f32 %v5029, %v5387
      %v5640 = vadd.f32 %v5030, %v5392
      %v5641 = vadd.f32 %v5031, %v5397
      %v5642 = vadd.f32 %v5032, %v5402
      %v5643 = vadd.f32 %v5033, %v5407
      %v5644 = vadd.f32 %v5034, %v5412
      %v5645 = vadd.f32 %v5035, %v5417
      %v5646 = vadd.f32 %v5036, %v5422
      %v5647 = vadd.f32 %v5037, %v5427
      %v5648 = vadd.f32 %v5038, %v5432
      %v5649 = vadd.f32 %v5039, %v5437
      %v5650 = vadd.f32 %v5040, %v5442
      %v5651 = vadd.f32 %v5041, %v5447
      %v5652 = vadd.f32 %v5042, %v5452
      %v5653 = vadd.f32 %v5043, %v5457
      %v5654 = vadd.f32 %v5044, %v5462
      %v5655 = vadd.f32 %v5045, %v5467
      %v5656 = vadd.f32 %v5046, %v5472
      %v5657 = vadd.f32 %v5047, %v5477
      %v5658 = vadd.f32 %v5048, %v5482
      %v5659 = vadd.f32 %v5049, %v5487
      %v5660 = vadd.f32 %v5050, %v5492
      %v5661 = vadd.f32 %v5051, %v5497
      %v5662 = vadd.f32 %v5052, %v5502
      %v5663 = vadd.f32 %v5053, %v5507
      %v5664 = vadd.f32 %v5054, %v5512
      %v5665 = vadd.f32 %v5055, %v5517
      %v5666 = vadd.f32 %v5056, %v5522
      %v5667 = vadd.f32 %v5057, %v5527
      %v5668 = vadd.f32 %v5058, %v5532
      %v5669 = vadd.f32 %v5059, %v5537
      %v5670 = vadd.f32 %v5060, %v5542
      %v5671 = vadd.f32 %v5061, %v5547
      %v5672 = vadd.f32 %v5062, %v5552
      %v5673 = vadd.f32 %v5063, %v5557
      %v5674 = vadd.f32 %v5064, %v5562
      %v5675 = vadd.f32 %v5065, %v5567
      %v5676 = vadd.f32 %v5066, %v5572
      %v5677 = vadd.f32 %v5067, %v5577
      %v5678 = vadd.f32 %v5068, %v5582
      %v5679 = vadd.f32 %v5069, %v5587
      %v5680 = vadd.f32 %v5070, %v5592
      %v5681 = vadd.f32 %v5071, %v5597
      %v5682 = vadd.f32 %v5072, %v5602
      %v5683 = vadd.f32 %v5073, %v5607
      %v5684 = vadd.f32 %v5074, %v5612
      %v5685 = vadd.f32 %v5075, %v5617
      %v5686 = vadd.f32 %v5076, %v5622
      %v5687 = vadd.f32 %v5077, %v5627
      %v5688 = vadd.f32 %v5078, %v5632
      %v5689 = vld [vmem:[%s3] sm:$0x1]
      %v5691 = vlaneseq
      %v5692 = vshrl.u32 %v5691, 7
      %v5693 = vsub.s32 0, %v5692
      %v5694 = vrot.slane %v5689, %v5693
      %v5696 = vmul.f32 %v5635, %v5694
      %v5697 = vmul.f32 %v5636, %v5694
      %v5698 = vmul.f32 %v5637, %v5694
      %v5699 = vmul.f32 %v5638, %v5694
      %v5700 = vmul.f32 %v5639, %v5694
      %v5701 = vmul.f32 %v5640, %v5694
      %v5702 = vmul.f32 %v5641, %v5694
      %v5703 = vmul.f32 %v5642, %v5694
      %v5704 = vmul.f32 %v5643, %v5694
      %v5705 = vmul.f32 %v5644, %v5694
      %v5706 = vmul.f32 %v5645, %v5694
      %v5707 = vmul.f32 %v5646, %v5694
      %v5708 = vmul.f32 %v5647, %v5694
      %v5709 = vmul.f32 %v5648, %v5694
      %v5710 = vmul.f32 %v5649, %v5694
      %v5711 = vmul.f32 %v5650, %v5694
      %v5712 = vmul.f32 %v5651, %v5694
      %v5713 = vmul.f32 %v5652, %v5694
      %v5714 = vmul.f32 %v5653, %v5694
      %v5715 = vmul.f32 %v5654, %v5694
      %v5716 = vmul.f32 %v5655, %v5694
      %v5717 = vmul.f32 %v5656, %v5694
      %v5718 = vmul.f32 %v5657, %v5694
      %v5719 = vmul.f32 %v5658, %v5694
      %v5720 = vmul.f32 %v5659, %v5694
      %v5721 = vmul.f32 %v5660, %v5694
      %v5722 = vmul.f32 %v5661, %v5694
      %v5723 = vmul.f32 %v5662, %v5694
      %v5724 = vmul.f32 %v5663, %v5694
      %v5725 = vmul.f32 %v5664, %v5694
      %v5726 = vmul.f32 %v5665, %v5694
      %v5727 = vmul.f32 %v5666, %v5694
      %v5728 = vmul.f32 %v5667, %v5694
      %v5729 = vmul.f32 %v5668, %v5694
      %v5730 = vmul.f32 %v5669, %v5694
      %v5731 = vmul.f32 %v5670, %v5694
      %v5732 = vmul.f32 %v5671, %v5694
      %v5733 = vmul.f32 %v5672, %v5694
      %v5734 = vmul.f32 %v5673, %v5694
      %v5735 = vmul.f32 %v5674, %v5694
      %v5736 = vmul.f32 %v5675, %v5694
      %v5737 = vmul.f32 %v5676, %v5694
      %v5738 = vmul.f32 %v5677, %v5694
      %v5739 = vmul.f32 %v5678, %v5694
      %v5740 = vmul.f32 %v5679, %v5694
      %v5741 = vmul.f32 %v5680, %v5694
      %v5742 = vmul.f32 %v5681, %v5694
      %v5743 = vmul.f32 %v5682, %v5694
      %v5744 = vmul.f32 %v5683, %v5694
      %v5745 = vmul.f32 %v5684, %v5694
      %v5746 = vmul.f32 %v5685, %v5694
      %v5747 = vmul.f32 %v5686, %v5694
      %v5748 = vmul.f32 %v5687, %v5694
      %v5749 = vmul.f32 %v5688, %v5694
      %v5750 = vld [vmem:[%s4] sm:$0x1]
      %v5752 = vlaneseq
      %v5753 = vshrl.u32 %v5752, 7
      %v5754 = vsub.s32 0, %v5753
      %v5755 = vrot.slane %v5750, %v5754
      %v5757 = vadd.f32 %v5696, %v5755
      %v5758 = vadd.f32 %v5697, %v5755
      %v5759 = vadd.f32 %v5698, %v5755
      %v5760 = vadd.f32 %v5699, %v5755
      %v5761 = vadd.f32 %v5700, %v5755
      %v5762 = vadd.f32 %v5701, %v5755
      %v5763 = vadd.f32 %v5702, %v5755
      %v5764 = vadd.f32 %v5703, %v5755
      %v5765 = vadd.f32 %v5704, %v5755
      %v5766 = vadd.f32 %v5705, %v5755
      %v5767 = vadd.f32 %v5706, %v5755
      %v5768 = vadd.f32 %v5707, %v5755
      %v5769 = vadd.f32 %v5708, %v5755
      %v5770 = vadd.f32 %v5709, %v5755
      %v5771 = vadd.f32 %v5710, %v5755
      %v5772 = vadd.f32 %v5711, %v5755
      %v5773 = vadd.f32 %v5712, %v5755
      %v5774 = vadd.f32 %v5713, %v5755
      %v5775 = vadd.f32 %v5714, %v5755
      %v5776 = vadd.f32 %v5715, %v5755
      %v5777 = vadd.f32 %v5716, %v5755
      %v5778 = vadd.f32 %v5717, %v5755
      %v5779 = vadd.f32 %v5718, %v5755
      %v5780 = vadd.f32 %v5719, %v5755
      %v5781 = vadd.f32 %v5720, %v5755
      %v5782 = vadd.f32 %v5721, %v5755
      %v5783 = vadd.f32 %v5722, %v5755
      %v5784 = vadd.f32 %v5723, %v5755
      %v5785 = vadd.f32 %v5724, %v5755
      %v5786 = vadd.f32 %v5725, %v5755
      %v5787 = vadd.f32 %v5726, %v5755
      %v5788 = vadd.f32 %v5727, %v5755
      %v5789 = vadd.f32 %v5728, %v5755
      %v5790 = vadd.f32 %v5729, %v5755
      %v5791 = vadd.f32 %v5730, %v5755
      %v5792 = vadd.f32 %v5731, %v5755
      %v5793 = vadd.f32 %v5732, %v5755
      %v5794 = vadd.f32 %v5733, %v5755
      %v5795 = vadd.f32 %v5734, %v5755
      %v5796 = vadd.f32 %v5735, %v5755
      %v5797 = vadd.f32 %v5736, %v5755
      %v5798 = vadd.f32 %v5737, %v5755
      %v5799 = vadd.f32 %v5738, %v5755
      %v5800 = vadd.f32 %v5739, %v5755
      %v5801 = vadd.f32 %v5740, %v5755
      %v5802 = vadd.f32 %v5741, %v5755
      %v5803 = vadd.f32 %v5742, %v5755
      %v5804 = vadd.f32 %v5743, %v5755
      %v5805 = vadd.f32 %v5744, %v5755
      %v5806 = vadd.f32 %v5745, %v5755
      %v5807 = vadd.f32 %v5746, %v5755
      %v5808 = vadd.f32 %v5747, %v5755
      %v5809 = vadd.f32 %v5748, %v5755
      %v5810 = vadd.f32 %v5749, %v5755
      %vm5811 = vcmp.ge.f32.partialorder %v5757, 0.0
      %vm5812 = vcmp.ge.f32.partialorder %v5758, 0.0
      %vm5813 = vcmp.ge.f32.partialorder %v5759, 0.0
      %vm5814 = vcmp.ge.f32.partialorder %v5760, 0.0
      %vm5815 = vcmp.ge.f32.partialorder %v5761, 0.0
      %vm5816 = vcmp.ge.f32.partialorder %v5762, 0.0
      %vm5817 = vcmp.ge.f32.partialorder %v5763, 0.0
      %vm5818 = vcmp.ge.f32.partialorder %v5764, 0.0
      %vm5819 = vcmp.ge.f32.partialorder %v5765, 0.0
      %vm5820 = vcmp.ge.f32.partialorder %v5766, 0.0
      %vm5821 = vcmp.ge.f32.partialorder %v5767, 0.0
      %vm5822 = vcmp.ge.f32.partialorder %v5768, 0.0
      %vm5823 = vcmp.ge.f32.partialorder %v5769, 0.0
      %vm5824 = vcmp.ge.f32.partialorder %v5770, 0.0
      %vm5825 = vcmp.ge.f32.partialorder %v5771, 0.0
      %vm5826 = vcmp.ge.f32.partialorder %v5772, 0.0
      %vm5827 = vcmp.ge.f32.partialorder %v5773, 0.0
      %vm5828 = vcmp.ge.f32.partialorder %v5774, 0.0
      %vm5829 = vcmp.ge.f32.partialorder %v5775, 0.0
      %vm5830 = vcmp.ge.f32.partialorder %v5776, 0.0
      %vm5831 = vcmp.ge.f32.partialorder %v5777, 0.0
      %vm5832 = vcmp.ge.f32.partialorder %v5778, 0.0
      %vm5833 = vcmp.ge.f32.partialorder %v5779, 0.0
      %vm5834 = vcmp.ge.f32.partialorder %v5780, 0.0
      %vm5835 = vcmp.ge.f32.partialorder %v5781, 0.0
      %vm5836 = vcmp.ge.f32.partialorder %v5782, 0.0
      %vm5837 = vcmp.ge.f32.partialorder %v5783, 0.0
      %vm5838 = vcmp.ge.f32.partialorder %v5784, 0.0
      %vm5839 = vcmp.ge.f32.partialorder %v5785, 0.0
      %vm5840 = vcmp.ge.f32.partialorder %v5786, 0.0
      %vm5841 = vcmp.ge.f32.partialorder %v5787, 0.0
      %vm5842 = vcmp.ge.f32.partialorder %v5788, 0.0
      %vm5843 = vcmp.ge.f32.partialorder %v5789, 0.0
      %vm5844 = vcmp.ge.f32.partialorder %v5790, 0.0
      %vm5845 = vcmp.ge.f32.partialorder %v5791, 0.0
      %vm5846 = vcmp.ge.f32.partialorder %v5792, 0.0
      %vm5847 = vcmp.ge.f32.partialorder %v5793, 0.0
      %vm5848 = vcmp.ge.f32.partialorder %v5794, 0.0
      %vm5849 = vcmp.ge.f32.partialorder %v5795, 0.0
      %vm5850 = vcmp.ge.f32.partialorder %v5796, 0.0
      %vm5851 = vcmp.ge.f32.partialorder %v5797, 0.0
      %vm5852 = vcmp.ge.f32.partialorder %v5798, 0.0
      %vm5853 = vcmp.ge.f32.partialorder %v5799, 0.0
      %vm5854 = vcmp.ge.f32.partialorder %v5800, 0.0
      %vm5855 = vcmp.ge.f32.partialorder %v5801, 0.0
      %vm5856 = vcmp.ge.f32.partialorder %v5802, 0.0
      %vm5857 = vcmp.ge.f32.partialorder %v5803, 0.0
      %vm5858 = vcmp.ge.f32.partialorder %v5804, 0.0
      %vm5859 = vcmp.ge.f32.partialorder %v5805, 0.0
      %vm5860 = vcmp.ge.f32.partialorder %v5806, 0.0
      %vm5861 = vcmp.ge.f32.partialorder %v5807, 0.0
      %vm5862 = vcmp.ge.f32.partialorder %v5808, 0.0
      %vm5863 = vcmp.ge.f32.partialorder %v5809, 0.0
      %vm5864 = vcmp.ge.f32.partialorder %v5810, 0.0
      %v5865 = vmul.f32 %v5757, 0.01
      %v5866 = vmul.f32 %v5758, 0.01
      %v5867 = vmul.f32 %v5759, 0.01
      %v5868 = vmul.f32 %v5760, 0.01
      %v5869 = vmul.f32 %v5761, 0.01
      %v5870 = vmul.f32 %v5762, 0.01
      %v5871 = vmul.f32 %v5763, 0.01
      %v5872 = vmul.f32 %v5764, 0.01
      %v5873 = vmul.f32 %v5765, 0.01
      %v5874 = vmul.f32 %v5766, 0.01
      %v5875 = vmul.f32 %v5767, 0.01
      %v5876 = vmul.f32 %v5768, 0.01
      %v5877 = vmul.f32 %v5769, 0.01
      %v5878 = vmul.f32 %v5770, 0.01
      %v5879 = vmul.f32 %v5771, 0.01
      %v5880 = vmul.f32 %v5772, 0.01
      %v5881 = vmul.f32 %v5773, 0.01
      %v5882 = vmul.f32 %v5774, 0.01
      %v5883 = vmul.f32 %v5775, 0.01
      %v5884 = vmul.f32 %v5776, 0.01
      %v5885 = vmul.f32 %v5777, 0.01
      %v5886 = vmul.f32 %v5778, 0.01
      %v5887 = vmul.f32 %v5779, 0.01
      %v5888 = vmul.f32 %v5780, 0.01
      %v5889 = vmul.f32 %v5781, 0.01
      %v5890 = vmul.f32 %v5782, 0.01
      %v5891 = vmul.f32 %v5783, 0.01
      %v5892 = vmul.f32 %v5784, 0.01
      %v5893 = vmul.f32 %v5785, 0.01
      %v5894 = vmul.f32 %v5786, 0.01
      %v5895 = vmul.f32 %v5787, 0.01
      %v5896 = vmul.f32 %v5788, 0.01
      %v5897 = vmul.f32 %v5789, 0.01
      %v5898 = vmul.f32 %v5790, 0.01
      %v5899 = vmul.f32 %v5791, 0.01
      %v5900 = vmul.f32 %v5792, 0.01
      %v5901 = vmul.f32 %v5793, 0.01
      %v5902 = vmul.f32 %v5794, 0.01
      %v5903 = vmul.f32 %v5795, 0.01
      %v5904 = vmul.f32 %v5796, 0.01
      %v5905 = vmul.f32 %v5797, 0.01
      %v5906 = vmul.f32 %v5798, 0.01
      %v5907 = vmul.f32 %v5799, 0.01
      %v5908 = vmul.f32 %v5800, 0.01
      %v5909 = vmul.f32 %v5801, 0.01
      %v5910 = vmul.f32 %v5802, 0.01
      %v5911 = vmul.f32 %v5803, 0.01
      %v5912 = vmul.f32 %v5804, 0.01
      %v5913 = vmul.f32 %v5805, 0.01
      %v5914 = vmul.f32 %v5806, 0.01
      %v5915 = vmul.f32 %v5807, 0.01
      %v5916 = vmul.f32 %v5808, 0.01
      %v5917 = vmul.f32 %v5809, 0.01
      %v5918 = vmul.f32 %v5810, 0.01
      %v5919 = vsel %vm5811, %v5757, %v5865
      %v5920 = vsel %vm5812, %v5758, %v5866
      %v5921 = vsel %vm5813, %v5759, %v5867
      %v5922 = vsel %vm5814, %v5760, %v5868
      %v5923 = vsel %vm5815, %v5761, %v5869
      %v5924 = vsel %vm5816, %v5762, %v5870
      %v5925 = vsel %vm5817, %v5763, %v5871
      %v5926 = vsel %vm5818, %v5764, %v5872
      %v5927 = vsel %vm5819, %v5765, %v5873
      %v5928 = vsel %vm5820, %v5766, %v5874
      %v5929 = vsel %vm5821, %v5767, %v5875
      %v5930 = vsel %vm5822, %v5768, %v5876
      %v5931 = vsel %vm5823, %v5769, %v5877
      %v5932 = vsel %vm5824, %v5770, %v5878
      %v5933 = vsel %vm5825, %v5771, %v5879
      %v5934 = vsel %vm5826, %v5772, %v5880
      %v5935 = vsel %vm5827, %v5773, %v5881
      %v5936 = vsel %vm5828, %v5774, %v5882
      %v5937 = vsel %vm5829, %v5775, %v5883
      %v5938 = vsel %vm5830, %v5776, %v5884
      %v5939 = vsel %vm5831, %v5777, %v5885
      %v5940 = vsel %vm5832, %v5778, %v5886
      %v5941 = vsel %vm5833, %v5779, %v5887
      %v5942 = vsel %vm5834, %v5780, %v5888
      %v5943 = vsel %vm5835, %v5781, %v5889
      %v5944 = vsel %vm5836, %v5782, %v5890
      %v5945 = vsel %vm5837, %v5783, %v5891
      %v5946 = vsel %vm5838, %v5784, %v5892
      %v5947 = vsel %vm5839, %v5785, %v5893
      %v5948 = vsel %vm5840, %v5786, %v5894
      %v5949 = vsel %vm5841, %v5787, %v5895
      %v5950 = vsel %vm5842, %v5788, %v5896
      %v5951 = vsel %vm5843, %v5789, %v5897
      %v5952 = vsel %vm5844, %v5790, %v5898
      %v5953 = vsel %vm5845, %v5791, %v5899
      %v5954 = vsel %vm5846, %v5792, %v5900
      %v5955 = vsel %vm5847, %v5793, %v5901
      %v5956 = vsel %vm5848, %v5794, %v5902
      %v5957 = vsel %vm5849, %v5795, %v5903
      %v5958 = vsel %vm5850, %v5796, %v5904
      %v5959 = vsel %vm5851, %v5797, %v5905
      %v5960 = vsel %vm5852, %v5798, %v5906
      %v5961 = vsel %vm5853, %v5799, %v5907
      %v5962 = vsel %vm5854, %v5800, %v5908
      %v5963 = vsel %vm5855, %v5801, %v5909
      %v5964 = vsel %vm5856, %v5802, %v5910
      %v5965 = vsel %vm5857, %v5803, %v5911
      %v5966 = vsel %vm5858, %v5804, %v5912
      %v5967 = vsel %vm5859, %v5805, %v5913
      %v5968 = vsel %vm5860, %v5806, %v5914
      %v5969 = vsel %vm5861, %v5807, %v5915
      %v5970 = vsel %vm5862, %v5808, %v5916
      %v5971 = vsel %vm5863, %v5809, %v5917
      %v5972 = vsel %vm5864, %v5810, %v5918
      %v5973 = vld [vmem:[%s1] sm:$0xff]
      %v5974 = vld [vmem:[%s1 + $0x8] sm:$0xff]
      %v5975 = vld [vmem:[%s1 + $0x10] sm:$0xff]
      %v5976 = vld [vmem:[%s1 + $0x18] sm:$0xff]
      %v5977 = vld [vmem:[%s1 + $0x20] sm:$0xff]
      %v5978 = vld [vmem:[%s1 + $0x28] sm:$0xff]
      %v5979 = vld [vmem:[%s1 + $0x30] sm:$0xff]
      %v5980 = vld [vmem:[%s1 + $0x38] sm:$0xff]
      %v5981 = vld [vmem:[%s1 + $0x40] sm:$0xff]
      %v5982 = vld [vmem:[%s1 + $0x48] sm:$0xff]
      %v5983 = vld [vmem:[%s1 + $0x50] sm:$0xff]
      %v5984 = vld [vmem:[%s1 + $0x58] sm:$0xff]
      %v5985 = vld [vmem:[%s1 + $0x60] sm:$0xff]
      %v5986 = vld [vmem:[%s1 + $0x68] sm:$0xff]
      %v5987 = vld [vmem:[%s1 + $0x70] sm:$0xff]
      %v5988 = vld [vmem:[%s1 + $0x78] sm:$0xff]
      %v5989 = vld [vmem:[%s1 + $0x80] sm:$0xff]
      %v5990 = vld [vmem:[%s1 + $0x88] sm:$0xff]
      %v5991 = vld [vmem:[%s1 + $0x90] sm:$0xff]
      %v5992 = vld [vmem:[%s1 + $0x98] sm:$0xff]
      %v5993 = vld [vmem:[%s1 + $0xa0] sm:$0xff]
      %v5994 = vld [vmem:[%s1 + $0xa8] sm:$0xff]
      %v5995 = vld [vmem:[%s1 + $0xb0] sm:$0xff]
      %v5996 = vld [vmem:[%s1 + $0xb8] sm:$0xff]
      %v5997 = vld [vmem:[%s1 + $0xc0] sm:$0xff]
      %v5998 = vld [vmem:[%s1 + $0xc8] sm:$0xff]
      %v5999 = vld [vmem:[%s1 + $0xd0] sm:$0xff]
      %v6000 = vld [vmem:[%s1 + $0xd8] sm:$0xff]
      %v6001 = vld [vmem:[%s1 + $0xe0] sm:$0xff]
      %v6002 = vld [vmem:[%s1 + $0xe8] sm:$0xff]
      %v6003 = vld [vmem:[%s1 + $0xf0] sm:$0xff]
      %v6004 = vld [vmem:[%s1 + $0xf8] sm:$0xff]
      %v6005 = vld [vmem:[%s1 + $0x100] sm:$0xff]
      %v6006 = vld [vmem:[%s1 + $0x108] sm:$0xff]
      %v6007 = vld [vmem:[%s1 + $0x110] sm:$0xff]
      %v6008 = vld [vmem:[%s1 + $0x118] sm:$0xff]
      %v6009 = vld [vmem:[%s1 + $0x120] sm:$0xff]
      %v6010 = vld [vmem:[%s1 + $0x128] sm:$0xff]
      %v6011 = vld [vmem:[%s1 + $0x130] sm:$0xff]
      %v6012 = vld [vmem:[%s1 + $0x138] sm:$0xff]
      %v6013 = vld [vmem:[%s1 + $0x140] sm:$0xff]
      %v6014 = vld [vmem:[%s1 + $0x148] sm:$0xff]
      %v6015 = vld [vmem:[%s1 + $0x150] sm:$0xff]
      %v6016 = vld [vmem:[%s1 + $0x158] sm:$0xff]
      %v6017 = vld [vmem:[%s1 + $0x160] sm:$0xff]
      %v6018 = vld [vmem:[%s1 + $0x168] sm:$0xff]
      %v6019 = vld [vmem:[%s1 + $0x170] sm:$0xff]
      %v6020 = vld [vmem:[%s1 + $0x178] sm:$0xff]
      %v6021 = vld [vmem:[%s1 + $0x180] sm:$0xff]
      %v6022 = vld [vmem:[%s1 + $0x188] sm:$0xff]
      %v6023 = vld [vmem:[%s1 + $0x190] sm:$0xff]
      %v6024 = vld [vmem:[%s1 + $0x198] sm:$0xff]
      %v6025 = vld [vmem:[%s1 + $0x1a0] sm:$0xff]
      %v6026 = vld [vmem:[%s1 + $0x1a8] sm:$0xff]
      %6028 = vset.pattern.permute.xlu0 0
      %6029 = vperm.xlu0 %6028, %v5973
      %v6030 = vpop.permute.xlu0 %6029
      %6033 = vset.pattern.permute.xlu0 0
      %6034 = vperm.xlu0 %6033, %v5974
      %v6035 = vpop.permute.xlu0 %6034
      %6038 = vset.pattern.permute.xlu0 0
      %6039 = vperm.xlu0 %6038, %v5975
      %v6040 = vpop.permute.xlu0 %6039
      %6043 = vset.pattern.permute.xlu0 0
      %6044 = vperm.xlu0 %6043, %v5976
      %v6045 = vpop.permute.xlu0 %6044
      %6048 = vset.pattern.permute.xlu0 0
      %6049 = vperm.xlu0 %6048, %v5977
      %v6050 = vpop.permute.xlu0 %6049
      %6053 = vset.pattern.permute.xlu0 0
      %6054 = vperm.xlu0 %6053, %v5978
      %v6055 = vpop.permute.xlu0 %6054
      %6058 = vset.pattern.permute.xlu0 0
      %6059 = vperm.xlu0 %6058, %v5979
      %v6060 = vpop.permute.xlu0 %6059
      %6063 = vset.pattern.permute.xlu0 0
      %6064 = vperm.xlu0 %6063, %v5980
      %v6065 = vpop.permute.xlu0 %6064
      %6068 = vset.pattern.permute.xlu0 0
      %6069 = vperm.xlu0 %6068, %v5981
      %v6070 = vpop.permute.xlu0 %6069
      %6073 = vset.pattern.permute.xlu0 0
      %6074 = vperm.xlu0 %6073, %v5982
      %v6075 = vpop.permute.xlu0 %6074
      %6078 = vset.pattern.permute.xlu0 0
      %6079 = vperm.xlu0 %6078, %v5983
      %v6080 = vpop.permute.xlu0 %6079
      %6083 = vset.pattern.permute.xlu0 0
      %6084 = vperm.xlu0 %6083, %v5984
      %v6085 = vpop.permute.xlu0 %6084
      %6088 = vset.pattern.permute.xlu0 0
      %6089 = vperm.xlu0 %6088, %v5985
      %v6090 = vpop.permute.xlu0 %6089
      %6093 = vset.pattern.permute.xlu0 0
      %6094 = vperm.xlu0 %6093, %v5986
      %v6095 = vpop.permute.xlu0 %6094
      %6098 = vset.pattern.permute.xlu0 0
      %6099 = vperm.xlu0 %6098, %v5987
      %v6100 = vpop.permute.xlu0 %6099
      %6103 = vset.pattern.permute.xlu0 0
      %6104 = vperm.xlu0 %6103, %v5988
      %v6105 = vpop.permute.xlu0 %6104
      %6108 = vset.pattern.permute.xlu0 0
      %6109 = vperm.xlu0 %6108, %v5989
      %v6110 = vpop.permute.xlu0 %6109
      %6113 = vset.pattern.permute.xlu0 0
      %6114 = vperm.xlu0 %6113, %v5990
      %v6115 = vpop.permute.xlu0 %6114
      %6118 = vset.pattern.permute.xlu0 0
      %6119 = vperm.xlu0 %6118, %v5991
      %v6120 = vpop.permute.xlu0 %6119
      %6123 = vset.pattern.permute.xlu0 0
      %6124 = vperm.xlu0 %6123, %v5992
      %v6125 = vpop.permute.xlu0 %6124
      %6128 = vset.pattern.permute.xlu0 0
      %6129 = vperm.xlu0 %6128, %v5993
      %v6130 = vpop.permute.xlu0 %6129
      %6133 = vset.pattern.permute.xlu0 0
      %6134 = vperm.xlu0 %6133, %v5994
      %v6135 = vpop.permute.xlu0 %6134
      %6138 = vset.pattern.permute.xlu0 0
      %6139 = vperm.xlu0 %6138, %v5995
      %v6140 = vpop.permute.xlu0 %6139
      %6143 = vset.pattern.permute.xlu0 0
      %6144 = vperm.xlu0 %6143, %v5996
      %v6145 = vpop.permute.xlu0 %6144
      %6148 = vset.pattern.permute.xlu0 0
      %6149 = vperm.xlu0 %6148, %v5997
      %v6150 = vpop.permute.xlu0 %6149
      %6153 = vset.pattern.permute.xlu0 0
      %6154 = vperm.xlu0 %6153, %v5998
      %v6155 = vpop.permute.xlu0 %6154
      %6158 = vset.pattern.permute.xlu0 0
      %6159 = vperm.xlu0 %6158, %v5999
      %v6160 = vpop.permute.xlu0 %6159
      %6163 = vset.pattern.permute.xlu0 0
      %6164 = vperm.xlu0 %6163, %v6000
      %v6165 = vpop.permute.xlu0 %6164
      %6168 = vset.pattern.permute.xlu0 0
      %6169 = vperm.xlu0 %6168, %v6001
      %v6170 = vpop.permute.xlu0 %6169
      %6173 = vset.pattern.permute.xlu0 0
      %6174 = vperm.xlu0 %6173, %v6002
      %v6175 = vpop.permute.xlu0 %6174
      %6178 = vset.pattern.permute.xlu0 0
      %6179 = vperm.xlu0 %6178, %v6003
      %v6180 = vpop.permute.xlu0 %6179
      %6183 = vset.pattern.permute.xlu0 0
      %6184 = vperm.xlu0 %6183, %v6004
      %v6185 = vpop.permute.xlu0 %6184
      %6188 = vset.pattern.permute.xlu0 0
      %6189 = vperm.xlu0 %6188, %v6005
      %v6190 = vpop.permute.xlu0 %6189
      %6193 = vset.pattern.permute.xlu0 0
      %6194 = vperm.xlu0 %6193, %v6006
      %v6195 = vpop.permute.xlu0 %6194
      %6198 = vset.pattern.permute.xlu0 0
      %6199 = vperm.xlu0 %6198, %v6007
      %v6200 = vpop.permute.xlu0 %6199
      %6203 = vset.pattern.permute.xlu0 0
      %6204 = vperm.xlu0 %6203, %v6008
      %v6205 = vpop.permute.xlu0 %6204
      %6208 = vset.pattern.permute.xlu0 0
      %6209 = vperm.xlu0 %6208, %v6009
      %v6210 = vpop.permute.xlu0 %6209
      %6213 = vset.pattern.permute.xlu0 0
      %6214 = vperm.xlu0 %6213, %v6010
      %v6215 = vpop.permute.xlu0 %6214
      %6218 = vset.pattern.permute.xlu0 0
      %6219 = vperm.xlu0 %6218, %v6011
      %v6220 = vpop.permute.xlu0 %6219
      %6223 = vset.pattern.permute.xlu0 0
      %6224 = vperm.xlu0 %6223, %v6012
      %v6225 = vpop.permute.xlu0 %6224
      %6228 = vset.pattern.permute.xlu0 0
      %6229 = vperm.xlu0 %6228, %v6013
      %v6230 = vpop.permute.xlu0 %6229
      %6233 = vset.pattern.permute.xlu0 0
      %6234 = vperm.xlu0 %6233, %v6014
      %v6235 = vpop.permute.xlu0 %6234
      %6238 = vset.pattern.permute.xlu0 0
      %6239 = vperm.xlu0 %6238, %v6015
      %v6240 = vpop.permute.xlu0 %6239
      %6243 = vset.pattern.permute.xlu0 0
      %6244 = vperm.xlu0 %6243, %v6016
      %v6245 = vpop.permute.xlu0 %6244
      %6248 = vset.pattern.permute.xlu0 0
      %6249 = vperm.xlu0 %6248, %v6017
      %v6250 = vpop.permute.xlu0 %6249
      %6253 = vset.pattern.permute.xlu0 0
      %6254 = vperm.xlu0 %6253, %v6018
      %v6255 = vpop.permute.xlu0 %6254
      %6258 = vset.pattern.permute.xlu0 0
      %6259 = vperm.xlu0 %6258, %v6019
      %v6260 = vpop.permute.xlu0 %6259
      %6263 = vset.pattern.permute.xlu0 0
      %6264 = vperm.xlu0 %6263, %v6020
      %v6265 = vpop.permute.xlu0 %6264
      %6268 = vset.pattern.permute.xlu0 0
      %6269 = vperm.xlu0 %6268, %v6021
      %v6270 = vpop.permute.xlu0 %6269
      %6273 = vset.pattern.permute.xlu0 0
      %6274 = vperm.xlu0 %6273, %v6022
      %v6275 = vpop.permute.xlu0 %6274
      %6278 = vset.pattern.permute.xlu0 0
      %6279 = vperm.xlu0 %6278, %v6023
      %v6280 = vpop.permute.xlu0 %6279
      %6283 = vset.pattern.permute.xlu0 0
      %6284 = vperm.xlu0 %6283, %v6024
      %v6285 = vpop.permute.xlu0 %6284
      %6288 = vset.pattern.permute.xlu0 0
      %6289 = vperm.xlu0 %6288, %v6025
      %v6290 = vpop.permute.xlu0 %6289
      %6293 = vset.pattern.permute.xlu0 0
      %6294 = vperm.xlu0 %6293, %v6026
      %v6295 = vpop.permute.xlu0 %6294
      %v6297 = vmul.f32 %v5919, %v6030
      %v6298 = vmul.f32 %v5920, %v6035
      %v6299 = vmul.f32 %v5921, %v6040
      %v6300 = vmul.f32 %v5922, %v6045
      %v6301 = vmul.f32 %v5923, %v6050
      %v6302 = vmul.f32 %v5924, %v6055
      %v6303 = vmul.f32 %v5925, %v6060
      %v6304 = vmul.f32 %v5926, %v6065
      %v6305 = vmul.f32 %v5927, %v6070
      %v6306 = vmul.f32 %v5928, %v6075
      %v6307 = vmul.f32 %v5929, %v6080
      %v6308 = vmul.f32 %v5930, %v6085
      %v6309 = vmul.f32 %v5931, %v6090
      %v6310 = vmul.f32 %v5932, %v6095
      %v6311 = vmul.f32 %v5933, %v6100
      %v6312 = vmul.f32 %v5934, %v6105
      %v6313 = vmul.f32 %v5935, %v6110
      %v6314 = vmul.f32 %v5936, %v6115
      %v6315 = vmul.f32 %v5937, %v6120
      %v6316 = vmul.f32 %v5938, %v6125
      %v6317 = vmul.f32 %v5939, %v6130
      %v6318 = vmul.f32 %v5940, %v6135
      %v6319 = vmul.f32 %v5941, %v6140
      %v6320 = vmul.f32 %v5942, %v6145
      %v6321 = vmul.f32 %v5943, %v6150
      %v6322 = vmul.f32 %v5944, %v6155
      %v6323 = vmul.f32 %v5945, %v6160
      %v6324 = vmul.f32 %v5946, %v6165
      %v6325 = vmul.f32 %v5947, %v6170
      %v6326 = vmul.f32 %v5948, %v6175
      %v6327 = vmul.f32 %v5949, %v6180
      %v6328 = vmul.f32 %v5950, %v6185
      %v6329 = vmul.f32 %v5951, %v6190
      %v6330 = vmul.f32 %v5952, %v6195
      %v6331 = vmul.f32 %v5953, %v6200
      %v6332 = vmul.f32 %v5954, %v6205
      %v6333 = vmul.f32 %v5955, %v6210
      %v6334 = vmul.f32 %v5956, %v6215
      %v6335 = vmul.f32 %v5957, %v6220
      %v6336 = vmul.f32 %v5958, %v6225
      %v6337 = vmul.f32 %v5959, %v6230
      %v6338 = vmul.f32 %v5960, %v6235
      %v6339 = vmul.f32 %v5961, %v6240
      %v6340 = vmul.f32 %v5962, %v6245
      %v6341 = vmul.f32 %v5963, %v6250
      %v6342 = vmul.f32 %v5964, %v6255
      %v6343 = vmul.f32 %v5965, %v6260
      %v6344 = vmul.f32 %v5966, %v6265
      %v6345 = vmul.f32 %v5967, %v6270
      %v6346 = vmul.f32 %v5968, %v6275
      %v6347 = vmul.f32 %v5969, %v6280
      %v6348 = vmul.f32 %v5970, %v6285
      %v6349 = vmul.f32 %v5971, %v6290
      %v6350 = vmul.f32 %v5972, %v6295
      %6351 = vst.msk [vmem:[#allocation2] sm:$0xff] %vm417, %v6297
      %6352 = vst.msk [vmem:[#allocation2 + $0x8] sm:$0xff] %vm417, %v6298
      %6353 = vst.msk [vmem:[#allocation2 + $0x10] sm:$0xff] %vm417, %v6299
      %6354 = vst.msk [vmem:[#allocation2 + $0x18] sm:$0xff] %vm417, %v6300
      %6355 = vst.msk [vmem:[#allocation2 + $0x20] sm:$0xff] %vm417, %v6301
      %6356 = vst.msk [vmem:[#allocation2 + $0x28] sm:$0xff] %vm417, %v6302
      %6357 = vst.msk [vmem:[#allocation2 + $0x30] sm:$0xff] %vm417, %v6303
      %6358 = vst.msk [vmem:[#allocation2 + $0x38] sm:$0xff] %vm417, %v6304
      %6359 = vst.msk [vmem:[#allocation2 + $0x40] sm:$0xff] %vm417, %v6305
      %6360 = vst.msk [vmem:[#allocation2 + $0x48] sm:$0xff] %vm417, %v6306
      %6361 = vst.msk [vmem:[#allocation2 + $0x50] sm:$0xff] %vm417, %v6307
      %6362 = vst.msk [vmem:[#allocation2 + $0x58] sm:$0xff] %vm417, %v6308
      %6363 = vst.msk [vmem:[#allocation2 + $0x60] sm:$0xff] %vm417, %v6309
      %6364 = vst.msk [vmem:[#allocation2 + $0x68] sm:$0xff] %vm417, %v6310
      %6365 = vst.msk [vmem:[#allocation2 + $0x70] sm:$0xff] %vm417, %v6311
      %6366 = vst.msk [vmem:[#allocation2 + $0x78] sm:$0xff] %vm417, %v6312
      %6367 = vst.msk [vmem:[#allocation2 + $0x80] sm:$0xff] %vm417, %v6313
      %6368 = vst.msk [vmem:[#allocation2 + $0x88] sm:$0xff] %vm417, %v6314
      %6369 = vst.msk [vmem:[#allocation2 + $0x90] sm:$0xff] %vm417, %v6315
      %6370 = vst.msk [vmem:[#allocation2 + $0x98] sm:$0xff] %vm417, %v6316
      %6371 = vst.msk [vmem:[#allocation2 + $0xa0] sm:$0xff] %vm417, %v6317
      %6372 = vst.msk [vmem:[#allocation2 + $0xa8] sm:$0xff] %vm417, %v6318
      %6373 = vst.msk [vmem:[#allocation2 + $0xb0] sm:$0xff] %vm417, %v6319
      %6374 = vst.msk [vmem:[#allocation2 + $0xb8] sm:$0xff] %vm417, %v6320
      %6375 = vst.msk [vmem:[#allocation2 + $0xc0] sm:$0xff] %vm417, %v6321
      %6376 = vst.msk [vmem:[#allocation2 + $0xc8] sm:$0xff] %vm417, %v6322
      %6377 = vst.msk [vmem:[#allocation2 + $0xd0] sm:$0xff] %vm417, %v6323
      %6378 = vst.msk [vmem:[#allocation2 + $0xd8] sm:$0xff] %vm417, %v6324
      %6379 = vst.msk [vmem:[#allocation2 + $0xe0] sm:$0xff] %vm417, %v6325
      %6380 = vst.msk [vmem:[#allocation2 + $0xe8] sm:$0xff] %vm417, %v6326
      %6381 = vst.msk [vmem:[#allocation2 + $0xf0] sm:$0xff] %vm417, %v6327
      %6382 = vst.msk [vmem:[#allocation2 + $0xf8] sm:$0xff] %vm417, %v6328
      %6383 = vst.msk [vmem:[#allocation2 + $0x100] sm:$0xff] %vm417, %v6329
      %6384 = vst.msk [vmem:[#allocation2 + $0x108] sm:$0xff] %vm417, %v6330
      %6385 = vst.msk [vmem:[#allocation2 + $0x110] sm:$0xff] %vm417, %v6331
      %6386 = vst.msk [vmem:[#allocation2 + $0x118] sm:$0xff] %vm417, %v6332
      %6387 = vst.msk [vmem:[#allocation2 + $0x120] sm:$0xff] %vm417, %v6333
      %6388 = vst.msk [vmem:[#allocation2 + $0x128] sm:$0xff] %vm417, %v6334
      %6389 = vst.msk [vmem:[#allocation2 + $0x130] sm:$0xff] %vm417, %v6335
      %6390 = vst.msk [vmem:[#allocation2 + $0x138] sm:$0xff] %vm417, %v6336
      %6391 = vst.msk [vmem:[#allocation2 + $0x140] sm:$0xff] %vm417, %v6337
      %6392 = vst.msk [vmem:[#allocation2 + $0x148] sm:$0xff] %vm417, %v6338
      %6393 = vst.msk [vmem:[#allocation2 + $0x150] sm:$0xff] %vm417, %v6339
      %6394 = vst.msk [vmem:[#allocation2 + $0x158] sm:$0xff] %vm417, %v6340
      %6395 = vst.msk [vmem:[#allocation2 + $0x160] sm:$0xff] %vm417, %v6341
      %6396 = vst.msk [vmem:[#allocation2 + $0x168] sm:$0xff] %vm417, %v6342
      %6397 = vst.msk [vmem:[#allocation2 + $0x170] sm:$0xff] %vm417, %v6343
      %6398 = vst.msk [vmem:[#allocation2 + $0x178] sm:$0xff] %vm417, %v6344
      %6399 = vst.msk [vmem:[#allocation2 + $0x180] sm:$0xff] %vm417, %v6345
      %6400 = vst.msk [vmem:[#allocation2 + $0x188] sm:$0xff] %vm417, %v6346
      %6401 = vst.msk [vmem:[#allocation2 + $0x190] sm:$0xff] %vm417, %v6347
      %6402 = vst.msk [vmem:[#allocation2 + $0x198] sm:$0xff] %vm417, %v6348
      %6403 = vst.msk [vmem:[#allocation2 + $0x1a0] sm:$0xff] %vm417, %v6349
      %6404 = vst.msk [vmem:[#allocation2 + $0x1a8] sm:$0xff] %vm417, %v6350
      %6405 = vst.msk [vmem:[#allocation2 + $0x1b0] sm:$0xff] %vm417, 0.0
      %6406 = vst.msk [vmem:[#allocation2 + $0x1b8] sm:$0xff] %vm417, 0.0
      %6407 = vst.msk [vmem:[#allocation2 + $0x1c0] sm:$0xff] %vm417, 0.0
      %v6408 = vld [vmem:[#allocation2] sm:$0xff]
      %v6409 = vld [vmem:[#allocation2 + $0x8] sm:$0xff]
      %v6410 = vld [vmem:[#allocation2 + $0x10] sm:$0xff]
      %v6411 = vld [vmem:[#allocation2 + $0x18] sm:$0xff]
      %v6412 = vld [vmem:[#allocation2 + $0x20] sm:$0xff]
      %v6413 = vld [vmem:[#allocation2 + $0x28] sm:$0xff]
      %v6414 = vld [vmem:[#allocation2 + $0x30] sm:$0xff]
      %v6415 = vld [vmem:[#allocation2 + $0x38] sm:$0xff]
      %v6416 = vld [vmem:[#allocation2 + $0x40] sm:$0xff]
      %v6417 = vld [vmem:[#allocation2 + $0x48] sm:$0xff]
      %v6418 = vld [vmem:[#allocation2 + $0x50] sm:$0xff]
      %v6419 = vld [vmem:[#allocation2 + $0x58] sm:$0xff]
      %v6420 = vld [vmem:[#allocation2 + $0x60] sm:$0xff]
      %v6421 = vld [vmem:[#allocation2 + $0x68] sm:$0xff]
      %v6422 = vld [vmem:[#allocation2 + $0x70] sm:$0xff]
      %v6423 = vld [vmem:[#allocation2 + $0x78] sm:$0xff]
      %v6424 = vld [vmem:[#allocation2 + $0x80] sm:$0xff]
      %v6425 = vld [vmem:[#allocation2 + $0x88] sm:$0xff]
      %v6426 = vld [vmem:[#allocation2 + $0x90] sm:$0xff]
      %v6427 = vld [vmem:[#allocation2 + $0x98] sm:$0xff]
      %v6428 = vld [vmem:[#allocation2 + $0xa0] sm:$0xff]
      %v6429 = vld [vmem:[#allocation2 + $0xa8] sm:$0xff]
      %v6430 = vld [vmem:[#allocation2 + $0xb0] sm:$0xff]
      %v6431 = vld [vmem:[#allocation2 + $0xb8] sm:$0xff]
      %v6432 = vld [vmem:[#allocation2 + $0xc0] sm:$0xff]
      %v6433 = vld [vmem:[#allocation2 + $0xc8] sm:$0xff]
      %v6434 = vld [vmem:[#allocation2 + $0xd0] sm:$0xff]
      %v6435 = vld [vmem:[#allocation2 + $0xd8] sm:$0xff]
      %v6436 = vld [vmem:[#allocation2 + $0xe0] sm:$0xff]
      %v6437 = vld [vmem:[#allocation2 + $0xe8] sm:$0xff]
      %v6438 = vld [vmem:[#allocation2 + $0xf0] sm:$0xff]
      %v6439 = vld [vmem:[#allocation2 + $0xf8] sm:$0xff]
      %v6440 = vld [vmem:[#allocation2 + $0x100] sm:$0xff]
      %v6441 = vld [vmem:[#allocation2 + $0x108] sm:$0xff]
      %v6442 = vld [vmem:[#allocation2 + $0x110] sm:$0xff]
      %v6443 = vld [vmem:[#allocation2 + $0x118] sm:$0xff]
      %v6444 = vld [vmem:[#allocation2 + $0x120] sm:$0xff]
      %v6445 = vld [vmem:[#allocation2 + $0x128] sm:$0xff]
      %v6446 = vld [vmem:[#allocation2 + $0x130] sm:$0xff]
      %v6447 = vld [vmem:[#allocation2 + $0x138] sm:$0xff]
      %v6448 = vld [vmem:[#allocation2 + $0x140] sm:$0xff]
      %v6449 = vld [vmem:[#allocation2 + $0x148] sm:$0xff]
      %v6450 = vld [vmem:[#allocation2 + $0x150] sm:$0xff]
      %v6451 = vld [vmem:[#allocation2 + $0x158] sm:$0xff]
      %v6452 = vld [vmem:[#allocation2 + $0x160] sm:$0xff]
      %v6453 = vld [vmem:[#allocation2 + $0x168] sm:$0xff]
      %v6454 = vld [vmem:[#allocation2 + $0x170] sm:$0xff]
      %v6455 = vld [vmem:[#allocation2 + $0x178] sm:$0xff]
      %v6456 = vld [vmem:[%s5] sm:$0xf]
      %v6457 = vld [vmem:[#allocation2 + $0x1] sm:$0xff]
      %v6458 = vld [vmem:[#allocation2 + $0x9] sm:$0xff]
      %v6459 = vld [vmem:[#allocation2 + $0x11] sm:$0xff]
      %v6460 = vld [vmem:[#allocation2 + $0x19] sm:$0xff]
      %v6461 = vld [vmem:[#allocation2 + $0x21] sm:$0xff]
      %v6462 = vld [vmem:[#allocation2 + $0x29] sm:$0xff]
      %v6463 = vld [vmem:[#allocation2 + $0x31] sm:$0xff]
      %v6464 = vld [vmem:[#allocation2 + $0x39] sm:$0xff]
      %v6465 = vld [vmem:[#allocation2 + $0x41] sm:$0xff]
      %v6466 = vld [vmem:[#allocation2 + $0x49] sm:$0xff]
      %v6467 = vld [vmem:[#allocation2 + $0x51] sm:$0xff]
      %v6468 = vld [vmem:[#allocation2 + $0x59] sm:$0xff]
      %v6469 = vld [vmem:[#allocation2 + $0x61] sm:$0xff]
      %v6470 = vld [vmem:[#allocation2 + $0x69] sm:$0xff]
      %v6471 = vld [vmem:[#allocation2 + $0x71] sm:$0xff]
      %v6472 = vld [vmem:[#allocation2 + $0x79] sm:$0xff]
      %v6473 = vld [vmem:[#allocation2 + $0x81] sm:$0xff]
      %v6474 = vld [vmem:[#allocation2 + $0x89] sm:$0xff]
      %v6475 = vld [vmem:[#allocation2 + $0x91] sm:$0xff]
      %v6476 = vld [vmem:[#allocation2 + $0x99] sm:$0xff]
      %v6477 = vld [vmem:[#allocation2 + $0xa1] sm:$0xff]
      %v6478 = vld [vmem:[#allocation2 + $0xa9] sm:$0xff]
      %v6479 = vld [vmem:[#allocation2 + $0xb1] sm:$0xff]
      %v6480 = vld [vmem:[#allocation2 + $0xb9] sm:$0xff]
      %v6481 = vld [vmem:[#allocation2 + $0xc1] sm:$0xff]
      %v6482 = vld [vmem:[#allocation2 + $0xc9] sm:$0xff]
      %v6483 = vld [vmem:[#allocation2 + $0xd1] sm:$0xff]
      %v6484 = vld [vmem:[#allocation2 + $0xd9] sm:$0xff]
      %v6485 = vld [vmem:[#allocation2 + $0xe1] sm:$0xff]
      %v6486 = vld [vmem:[#allocation2 + $0xe9] sm:$0xff]
      %v6487 = vld [vmem:[#allocation2 + $0xf1] sm:$0xff]
      %v6488 = vld [vmem:[#allocation2 + $0xf9] sm:$0xff]
      %v6489 = vld [vmem:[#allocation2 + $0x101] sm:$0xff]
      %v6490 = vld [vmem:[#allocation2 + $0x109] sm:$0xff]
      %v6491 = vld [vmem:[#allocation2 + $0x111] sm:$0xff]
      %v6492 = vld [vmem:[#allocation2 + $0x119] sm:$0xff]
      %v6493 = vld [vmem:[#allocation2 + $0x121] sm:$0xff]
      %v6494 = vld [vmem:[#allocation2 + $0x129] sm:$0xff]
      %v6495 = vld [vmem:[#allocation2 + $0x131] sm:$0xff]
      %v6496 = vld [vmem:[#allocation2 + $0x139] sm:$0xff]
      %v6497 = vld [vmem:[#allocation2 + $0x141] sm:$0xff]
      %v6498 = vld [vmem:[#allocation2 + $0x149] sm:$0xff]
      %v6499 = vld [vmem:[#allocation2 + $0x151] sm:$0xff]
      %v6500 = vld [vmem:[#allocation2 + $0x159] sm:$0xff]
      %v6501 = vld [vmem:[#allocation2 + $0x161] sm:$0xff]
      %v6502 = vld [vmem:[#allocation2 + $0x169] sm:$0xff]
      %v6503 = vld [vmem:[#allocation2 + $0x171] sm:$0xff]
      %v6504 = vld [vmem:[#allocation2 + $0x179] sm:$0xff]
      %s6505 = scalar_lea.vmem %s5, 4
      %v6506 = vld [vmem:[%s6505] sm:$0xf]
      %v6508 = vsel %vm417, %v6457, 0
      %v6511 = vsel %vm417, %v6458, 0
      %v6514 = vsel %vm417, %v6459, 0
      %v6517 = vsel %vm417, %v6460, 0
      %v6520 = vsel %vm417, %v6461, 0
      %v6523 = vsel %vm417, %v6462, 0
      %v6526 = vsel %vm417, %v6463, 0
      %v6529 = vsel %vm417, %v6464, 0
      %v6532 = vsel %vm417, %v6465, 0
      %v6535 = vsel %vm417, %v6466, 0
      %v6538 = vsel %vm417, %v6467, 0
      %v6541 = vsel %vm417, %v6468, 0
      %v6544 = vsel %vm417, %v6469, 0
      %v6547 = vsel %vm417, %v6470, 0
      %v6550 = vsel %vm417, %v6471, 0
      %v6553 = vsel %vm417, %v6472, 0
      %v6556 = vsel %vm417, %v6473, 0
      %v6559 = vsel %vm417, %v6474, 0
      %v6562 = vsel %vm417, %v6475, 0
      %v6565 = vsel %vm417, %v6476, 0
      %v6568 = vsel %vm417, %v6477, 0
      %v6571 = vsel %vm417, %v6478, 0
      %v6574 = vsel %vm417, %v6479, 0
      %v6577 = vsel %vm417, %v6480, 0
      %v6580 = vsel %vm417, %v6481, 0
      %v6583 = vsel %vm417, %v6482, 0
      %v6586 = vsel %vm417, %v6483, 0
      %v6589 = vsel %vm417, %v6484, 0
      %v6592 = vsel %vm417, %v6485, 0
      %v6595 = vsel %vm417, %v6486, 0
      %v6598 = vsel %vm417, %v6487, 0
      %v6601 = vsel %vm417, %v6488, 0
      %v6604 = vsel %vm417, %v6489, 0
      %v6607 = vsel %vm417, %v6490, 0
      %v6610 = vsel %vm417, %v6491, 0
      %v6613 = vsel %vm417, %v6492, 0
      %v6616 = vsel %vm417, %v6493, 0
      %v6619 = vsel %vm417, %v6494, 0
      %v6622 = vsel %vm417, %v6495, 0
      %v6625 = vsel %vm417, %v6496, 0
      %v6628 = vsel %vm417, %v6497, 0
      %v6631 = vsel %vm417, %v6498, 0
      %v6634 = vsel %vm417, %v6499, 0
      %v6637 = vsel %vm417, %v6500, 0
      %v6640 = vsel %vm417, %v6501, 0
      %v6643 = vsel %vm417, %v6502, 0
      %v6646 = vsel %vm417, %v6503, 0
      %v6649 = vsel %vm417, %v6504, 0
      %v6652 = vsel %vm580, %v6506, 0
      %6654 = vmatprep.subr.mxu0 0.0
      %6655 = vmatpush1.msra.mxu0 %v6652
      %6656 = vmatprep.subr.mxu0 0.0
      %6657 = vmatpush1.msra.mxu0 0.0
      %6658 = vmatprep.subr.mxu0 0.0
      %6659 = vmatpush1.msra.mxu0 0.0
      %6660 = vmatprep.subr.mxu0 0.0
      %6661 = vmatpush1.msra.mxu0 0.0
      %6662 = vmatprep.subr.mxu0 0.0
      %6663 = vmatpush1.msra.mxu0 0.0
      %6664 = vmatprep.subr.mxu0 0.0
      %6665 = vmatpush1.msra.mxu0 0.0
      %6666 = vmatprep.subr.mxu0 0.0
      %6667 = vmatpush1.msra.mxu0 0.0
      %6668 = vmatprep.subr.mxu0 0.0
      %6669 = vmatpush1.msra.mxu0 0.0
      %6670 = vmatprep.subr.mxu0 0.0
      %6671 = vmatpush1.msra.mxu0 0.0
      %6672 = vmatprep.subr.mxu0 0.0
      %6673 = vmatpush1.msra.mxu0 0.0
      %6674 = vmatprep.subr.mxu0 0.0
      %6675 = vmatpush1.msra.mxu0 0.0
      %6676 = vmatprep.subr.mxu0 0.0
      %6677 = vmatpush1.msra.mxu0 0.0
      %6678 = vmatprep.subr.mxu0 0.0
      %6679 = vmatpush1.msra.mxu0 0.0
      %6680 = vmatprep.subr.mxu0 0.0
      %6681 = vmatpush1.msra.mxu0 0.0
      %6682 = vmatprep.subr.mxu0 0.0
      %6683 = vmatpush1.msra.mxu0 0.0
      %6684 = vmatprep.subr.mxu0 0.0
      %6685 = vmatpush1.msra.mxu0 0.0
      %6686 = vmatprep.subr.mxu0 0.0
      %6687 = vmatpush1.msra.mxu0 0.0
      %6688 = vmatprep.subr.mxu0 0.0
      %6689 = vmatpush1.msra.mxu0 0.0
      %6690 = vmatprep.subr.mxu0 0.0
      %6691 = vmatpush1.msra.mxu0 0.0
      %6692 = vmatprep.subr.mxu0 0.0
      %6693 = vmatpush1.msra.mxu0 0.0
      %6694 = vmatprep.subr.mxu0 0.0
      %6695 = vmatpush1.msra.mxu0 0.0
      %6696 = vmatprep.subr.mxu0 0.0
      %6697 = vmatpush1.msra.mxu0 0.0
      %6698 = vmatprep.subr.mxu0 0.0
      %6699 = vmatpush1.msra.mxu0 0.0
      %6700 = vmatprep.subr.mxu0 0.0
      %6701 = vmatpush1.msra.mxu0 0.0
      %6702 = vmatprep.subr.mxu0 0.0
      %6703 = vmatpush1.msra.mxu0 0.0
      %6704 = vmatprep.subr.mxu0 0.0
      %6705 = vmatpush1.msra.mxu0 0.0
      %6706 = vmatprep.subr.mxu0 0.0
      %6707 = vmatpush1.msra.mxu0 0.0
      %6708 = vmatprep.subr.mxu0 0.0
      %6709 = vmatpush1.msra.mxu0 0.0
      %6710 = vmatprep.subr.mxu0 0.0
      %6711 = vmatpush1.msra.mxu0 0.0
      %6712 = vmatprep.subr.mxu0 0.0
      %6713 = vmatpush1.msra.mxu0 0.0
      %6714 = vmatprep.subr.mxu0 0.0
      %6715 = vmatpush1.msra.mxu0 0.0
      %6716 = vmatprep.subr.mxu0 0.0
      %6717 = vmatpush1.msra.mxu0 0.0
      %6718 = vmatprep.mubr.f32.mxu0 0.0
      %6719 = vmatmul.mubr.f32.gmra.mrb[0].mxu0 %v6508
      %v6720 = vpop.f32.mrb[0].mxu0
      %v6721 = vadd.f32 0.0, %v6720
      %v6722 = vpop.f32.mrb[0].mxu0
      %6723 = vmatprep.mubr.f32.mxu0 0.0
      %6724 = vmatmul.mubr.f32.gmra.mrb[0].mxu0 %v6511
      %v6725 = vpop.f32.mrb[0].mxu0
      %v6726 = vadd.f32 0.0, %v6725
      %v6727 = vpop.f32.mrb[0].mxu0
      %6728 = vmatprep.mubr.f32.mxu0 0.0
      %6729 = vmatmul.mubr.f32.gmra.mrb[0].mxu0 %v6514
      %v6730 = vpop.f32.mrb[0].mxu0
      %v6731 = vpop.f32.mrb[0].mxu0
      %6732 = vmatprep.mubr.f32.mxu0 0.0
      %6733 = vmatmul.mubr.f32.gmra.mrb[0].mxu0 %v6517
      %v6734 = vpop.f32.mrb[0].mxu0
      %v6735 = vadd.f32 0.0, %v6734
      %v6736 = vpop.f32.mrb[0].mxu0
      %6737 = vmatprep.mubr.f32.mxu0 0.0
      %6738 = vmatmul.mubr.f32.gmra.mrb[0].mxu0 %v6520
      %v6739 = vpop.f32.mrb[0].mxu0
      %v6740 = vadd.f32 0.0, %v6739
      %v6741 = vpop.f32.mrb[0].mxu0
      %6742 = vmatprep.mubr.f32.mxu0 0.0
      %6743 = vmatmul.mubr.f32.gmra.mrb[0].mxu0 %v6523
      %v6744 = vpop.f32.mrb[0].mxu0
      %v6745 = vpop.f32.mrb[0].mxu0
      %6746 = vmatprep.mubr.f32.mxu0 0.0
      %6747 = vmatmul.mubr.f32.gmra.mrb[0].mxu0 %v6526
      %v6748 = vpop.f32.mrb[0].mxu0
      %v6749 = vadd.f32 0.0, %v6748
      %v6750 = vpop.f32.mrb[0].mxu0
      %6751 = vmatprep.mubr.f32.mxu0 0.0
      %6752 = vmatmul.mubr.f32.gmra.mrb[0].mxu0 %v6529
      %v6753 = vpop.f32.mrb[0].mxu0
      %v6754 = vadd.f32 0.0, %v6753
      %v6755 = vpop.f32.mrb[0].mxu0
      %6756 = vmatprep.mubr.f32.mxu0 0.0
      %6757 = vmatmul.mubr.f32.gmra.mrb[0].mxu0 %v6532
      %v6758 = vpop.f32.mrb[0].mxu0
      %v6759 = vpop.f32.mrb[0].mxu0
      %6760 = vmatprep.mubr.f32.mxu0 0.0
      %6761 = vmatmul.mubr.f32.gmra.mrb[0].mxu0 %v6535
      %v6762 = vpop.f32.mrb[0].mxu0
      %v6763 = vadd.f32 0.0, %v6762
      %v6764 = vpop.f32.mrb[0].mxu0
      %6765 = vmatprep.mubr.f32.mxu0 0.0
      %6766 = vmatmul.mubr.f32.gmra.mrb[0].mxu0 %v6538
      %v6767 = vpop.f32.mrb[0].mxu0
      %v6768 = vadd.f32 0.0, %v6767
      %v6769 = vpop.f32.mrb[0].mxu0
      %6770 = vmatprep.mubr.f32.mxu0 0.0
      %6771 = vmatmul.mubr.f32.gmra.mrb[0].mxu0 %v6541
      %v6772 = vpop.f32.mrb[0].mxu0
      %v6773 = vpop.f32.mrb[0].mxu0
      %6774 = vmatprep.mubr.f32.mxu0 0.0
      %6775 = vmatmul.mubr.f32.gmra.mrb[0].mxu0 %v6544
      %v6776 = vpop.f32.mrb[0].mxu0
      %v6777 = vadd.f32 0.0, %v6776
      %v6778 = vpop.f32.mrb[0].mxu0
      %6779 = vmatprep.mubr.f32.mxu0 0.0
      %6780 = vmatmul.mubr.f32.gmra.mrb[0].mxu0 %v6547
      %v6781 = vpop.f32.mrb[0].mxu0
      %v6782 = vadd.f32 0.0, %v6781
      %v6783 = vpop.f32.mrb[0].mxu0
      %6784 = vmatprep.mubr.f32.mxu0 0.0
      %6785 = vmatmul.mubr.f32.gmra.mrb[0].mxu0 %v6550
      %v6786 = vpop.f32.mrb[0].mxu0
      %v6787 = vpop.f32.mrb[0].mxu0
      %6788 = vmatprep.mubr.f32.mxu0 0.0
      %6789 = vmatmul.mubr.f32.gmra.mrb[0].mxu0 %v6553
      %v6790 = vpop.f32.mrb[0].mxu0
      %v6791 = vadd.f32 0.0, %v6790
      %v6792 = vpop.f32.mrb[0].mxu0
      %6793 = vmatprep.mubr.f32.mxu0 0.0
      %6794 = vmatmul.mubr.f32.gmra.mrb[0].mxu0 %v6556
      %v6795 = vpop.f32.mrb[0].mxu0
      %v6796 = vadd.f32 0.0, %v6795
      %v6797 = vpop.f32.mrb[0].mxu0
      %6798 = vmatprep.mubr.f32.mxu0 0.0
      %6799 = vmatmul.mubr.f32.gmra.mrb[0].mxu0 %v6559
      %v6800 = vpop.f32.mrb[0].mxu0
      %v6801 = vpop.f32.mrb[0].mxu0
      %6802 = vmatprep.mubr.f32.mxu0 0.0
      %6803 = vmatmul.mubr.f32.gmra.mrb[0].mxu0 %v6562
      %v6804 = vpop.f32.mrb[0].mxu0
      %v6805 = vadd.f32 0.0, %v6804
      %v6806 = vpop.f32.mrb[0].mxu0
      %6807 = vmatprep.mubr.f32.mxu0 0.0
      %6808 = vmatmul.mubr.f32.gmra.mrb[0].mxu0 %v6565
      %v6809 = vpop.f32.mrb[0].mxu0
      %v6810 = vadd.f32 0.0, %v6809
      %v6811 = vpop.f32.mrb[0].mxu0
      %6812 = vmatprep.mubr.f32.mxu0 0.0
      %6813 = vmatmul.mubr.f32.gmra.mrb[0].mxu0 %v6568
      %v6814 = vpop.f32.mrb[0].mxu0
      %v6815 = vpop.f32.mrb[0].mxu0
      %6816 = vmatprep.mubr.f32.mxu0 0.0
      %6817 = vmatmul.mubr.f32.gmra.mrb[0].mxu0 %v6571
      %v6818 = vpop.f32.mrb[0].mxu0
      %v6819 = vadd.f32 0.0, %v6818
      %v6820 = vpop.f32.mrb[0].mxu0
      %6821 = vmatprep.mubr.f32.mxu0 0.0
      %6822 = vmatmul.mubr.f32.gmra.mrb[0].mxu0 %v6574
      %v6823 = vpop.f32.mrb[0].mxu0
      %v6824 = vadd.f32 0.0, %v6823
      %v6825 = vpop.f32.mrb[0].mxu0
      %6826 = vmatprep.mubr.f32.mxu0 0.0
      %6827 = vmatmul.mubr.f32.gmra.mrb[0].mxu0 %v6577
      %v6828 = vpop.f32.mrb[0].mxu0
      %v6829 = vpop.f32.mrb[0].mxu0
      %6830 = vmatprep.mubr.f32.mxu0 0.0
      %6831 = vmatmul.mubr.f32.gmra.mrb[0].mxu0 %v6580
      %v6832 = vpop.f32.mrb[0].mxu0
      %v6833 = vadd.f32 0.0, %v6832
      %v6834 = vpop.f32.mrb[0].mxu0
      %6835 = vmatprep.mubr.f32.mxu0 0.0
      %6836 = vmatmul.mubr.f32.gmra.mrb[0].mxu0 %v6583
      %v6837 = vpop.f32.mrb[0].mxu0
      %v6838 = vadd.f32 0.0, %v6837
      %v6839 = vpop.f32.mrb[0].mxu0
      %6840 = vmatprep.mubr.f32.mxu0 0.0
      %6841 = vmatmul.mubr.f32.gmra.mrb[0].mxu0 %v6586
      %v6842 = vpop.f32.mrb[0].mxu0
      %v6843 = vpop.f32.mrb[0].mxu0
      %6844 = vmatprep.mubr.f32.mxu0 0.0
      %6845 = vmatmul.mubr.f32.gmra.mrb[0].mxu0 %v6589
      %v6846 = vpop.f32.mrb[0].mxu0
      %v6847 = vadd.f32 0.0, %v6846
      %v6848 = vpop.f32.mrb[0].mxu0
      %6849 = vmatprep.mubr.f32.mxu0 0.0
      %6850 = vmatmul.mubr.f32.gmra.mrb[0].mxu0 %v6592
      %v6851 = vpop.f32.mrb[0].mxu0
      %v6852 = vadd.f32 0.0, %v6851
      %v6853 = vpop.f32.mrb[0].mxu0
      %6854 = vmatprep.mubr.f32.mxu0 0.0
      %6855 = vmatmul.mubr.f32.gmra.mrb[0].mxu0 %v6595
      %v6856 = vpop.f32.mrb[0].mxu0
      %v6857 = vpop.f32.mrb[0].mxu0
      %6858 = vmatprep.mubr.f32.mxu0 0.0
      %6859 = vmatmul.mubr.f32.gmra.mrb[0].mxu0 %v6598
      %v6860 = vpop.f32.mrb[0].mxu0
      %v6861 = vadd.f32 0.0, %v6860
      %v6862 = vpop.f32.mrb[0].mxu0
      %6863 = vmatprep.mubr.f32.mxu0 0.0
      %6864 = vmatmul.mubr.f32.gmra.mrb[0].mxu0 %v6601
      %v6865 = vpop.f32.mrb[0].mxu0
      %v6866 = vadd.f32 0.0, %v6865
      %v6867 = vpop.f32.mrb[0].mxu0
      %6868 = vmatprep.mubr.f32.mxu0 0.0
      %6869 = vmatmul.mubr.f32.gmra.mrb[0].mxu0 %v6604
      %v6870 = vpop.f32.mrb[0].mxu0
      %v6871 = vpop.f32.mrb[0].mxu0
      %6872 = vmatprep.mubr.f32.mxu0 0.0
      %6873 = vmatmul.mubr.f32.gmra.mrb[0].mxu0 %v6607
      %v6874 = vpop.f32.mrb[0].mxu0
      %v6875 = vadd.f32 0.0, %v6874
      %v6876 = vpop.f32.mrb[0].mxu0
      %6877 = vmatprep.mubr.f32.mxu0 0.0
      %6878 = vmatmul.mubr.f32.gmra.mrb[0].mxu0 %v6610
      %v6879 = vpop.f32.mrb[0].mxu0
      %v6880 = vadd.f32 0.0, %v6879
      %v6881 = vpop.f32.mrb[0].mxu0
      %6882 = vmatprep.mubr.f32.mxu0 0.0
      %6883 = vmatmul.mubr.f32.gmra.mrb[0].mxu0 %v6613
      %v6884 = vpop.f32.mrb[0].mxu0
      %v6885 = vpop.f32.mrb[0].mxu0
      %6886 = vmatprep.mubr.f32.mxu0 0.0
      %6887 = vmatmul.mubr.f32.gmra.mrb[0].mxu0 %v6616
      %v6888 = vpop.f32.mrb[0].mxu0
      %v6889 = vadd.f32 0.0, %v6888
      %v6890 = vpop.f32.mrb[0].mxu0
      %6891 = vmatprep.mubr.f32.mxu0 0.0
      %6892 = vmatmul.mubr.f32.gmra.mrb[0].mxu0 %v6619
      %v6893 = vpop.f32.mrb[0].mxu0
      %v6894 = vadd.f32 0.0, %v6893
      %v6895 = vpop.f32.mrb[0].mxu0
      %6896 = vmatprep.mubr.f32.mxu0 0.0
      %6897 = vmatmul.mubr.f32.gmra.mrb[0].mxu0 %v6622
      %v6898 = vpop.f32.mrb[0].mxu0
      %v6899 = vpop.f32.mrb[0].mxu0
      %6900 = vmatprep.mubr.f32.mxu0 0.0
      %6901 = vmatmul.mubr.f32.gmra.mrb[0].mxu0 %v6625
      %v6902 = vpop.f32.mrb[0].mxu0
      %v6903 = vadd.f32 0.0, %v6902
      %v6904 = vpop.f32.mrb[0].mxu0
      %6905 = vmatprep.mubr.f32.mxu0 0.0
      %6906 = vmatmul.mubr.f32.gmra.mrb[0].mxu0 %v6628
      %v6907 = vpop.f32.mrb[0].mxu0
      %v6908 = vadd.f32 0.0, %v6907
      %v6909 = vpop.f32.mrb[0].mxu0
      %6910 = vmatprep.mubr.f32.mxu0 0.0
      %6911 = vmatmul.mubr.f32.gmra.mrb[0].mxu0 %v6631
      %v6912 = vpop.f32.mrb[0].mxu0
      %v6913 = vpop.f32.mrb[0].mxu0
      %6914 = vmatprep.mubr.f32.mxu0 0.0
      %6915 = vmatmul.mubr.f32.gmra.mrb[0].mxu0 %v6634
      %v6916 = vpop.f32.mrb[0].mxu0
      %v6917 = vadd.f32 0.0, %v6916
      %v6918 = vpop.f32.mrb[0].mxu0
      %6919 = vmatprep.mubr.f32.mxu0 0.0
      %6920 = vmatmul.mubr.f32.gmra.mrb[0].mxu0 %v6637
      %v6921 = vpop.f32.mrb[0].mxu0
      %v6922 = vadd.f32 0.0, %v6921
      %v6923 = vpop.f32.mrb[0].mxu0
      %6924 = vmatprep.mubr.f32.mxu0 0.0
      %6925 = vmatmul.mubr.f32.gmra.mrb[0].mxu0 %v6640
      %v6926 = vpop.f32.mrb[0].mxu0
      %v6927 = vpop.f32.mrb[0].mxu0
      %6928 = vmatprep.mubr.f32.mxu0 0.0
      %6929 = vmatmul.mubr.f32.gmra.mrb[0].mxu0 %v6643
      %v6930 = vpop.f32.mrb[0].mxu0
      %v6931 = vadd.f32 0.0, %v6930
      %v6932 = vpop.f32.mrb[0].mxu0
      %6933 = vmatprep.mubr.f32.mxu0 0.0
      %6934 = vmatmul.mubr.f32.gmra.mrb[0].mxu0 %v6646
      %v6935 = vpop.f32.mrb[0].mxu0
      %v6936 = vadd.f32 0.0, %v6935
      %v6937 = vpop.f32.mrb[0].mxu0
      %6938 = vmatprep.mubr.f32.mxu0 0.0
      %6939 = vmatmul.mubr.f32.gmra.mrb[0].mxu0 %v6649
      %v6940 = vpop.f32.mrb[0].mxu0
      %v6941 = vpop.f32.mrb[0].mxu0
      %6942 = vdwg.mxu0
      %v6944 = vsel %vm417, %v6408, 0
      %v6947 = vsel %vm417, %v6409, 0
      %v6950 = vsel %vm417, %v6410, 0
      %v6953 = vsel %vm417, %v6411, 0
      %v6956 = vsel %vm417, %v6412, 0
      %v6959 = vsel %vm417, %v6413, 0
      %v6962 = vsel %vm417, %v6414, 0
      %v6965 = vsel %vm417, %v6415, 0
      %v6968 = vsel %vm417, %v6416, 0
      %v6971 = vsel %vm417, %v6417, 0
      %v6974 = vsel %vm417, %v6418, 0
      %v6977 = vsel %vm417, %v6419, 0
      %v6980 = vsel %vm417, %v6420, 0
      %v6983 = vsel %vm417, %v6421, 0
      %v6986 = vsel %vm417, %v6422, 0
      %v6989 = vsel %vm417, %v6423, 0
      %v6992 = vsel %vm417, %v6424, 0
      %v6995 = vsel %vm417, %v6425, 0
      %v6998 = vsel %vm417, %v6426, 0
      %v7001 = vsel %vm417, %v6427, 0
      %v7004 = vsel %vm417, %v6428, 0
      %v7007 = vsel %vm417, %v6429, 0
      %v7010 = vsel %vm417, %v6430, 0
      %v7013 = vsel %vm417, %v6431, 0
      %v7016 = vsel %vm417, %v6432, 0
      %v7019 = vsel %vm417, %v6433, 0
      %v7022 = vsel %vm417, %v6434, 0
      %v7025 = vsel %vm417, %v6435, 0
      %v7028 = vsel %vm417, %v6436, 0
      %v7031 = vsel %vm417, %v6437, 0
      %v7034 = vsel %vm417, %v6438, 0
      %v7037 = vsel %vm417, %v6439, 0
      %v7040 = vsel %vm417, %v6440, 0
      %v7043 = vsel %vm417, %v6441, 0
      %v7046 = vsel %vm417, %v6442, 0
      %v7049 = vsel %vm417, %v6443, 0
      %v7052 = vsel %vm417, %v6444, 0
      %v7055 = vsel %vm417, %v6445, 0
      %v7058 = vsel %vm417, %v6446, 0
      %v7061 = vsel %vm417, %v6447, 0
      %v7064 = vsel %vm417, %v6448, 0
      %v7067 = vsel %vm417, %v6449, 0
      %v7070 = vsel %vm417, %v6450, 0
      %v7073 = vsel %vm417, %v6451, 0
      %v7076 = vsel %vm417, %v6452, 0
      %v7079 = vsel %vm417, %v6453, 0
      %v7082 = vsel %vm417, %v6454, 0
      %v7085 = vsel %vm417, %v6455, 0
      %v7088 = vsel %vm580, %v6456, 0
      %7090 = vmatprep.subr.mxu0 0.0
      %7091 = vmatpush1.msra.mxu0 %v7088
      %7092 = vmatprep.subr.mxu0 0.0
      %7093 = vmatpush1.msra.mxu0 0.0
      %7094 = vmatprep.subr.mxu0 0.0
      %7095 = vmatpush1.msra.mxu0 0.0
      %7096 = vmatprep.subr.mxu0 0.0
      %7097 = vmatpush1.msra.mxu0 0.0
      %7098 = vmatprep.subr.mxu0 0.0
      %7099 = vmatpush1.msra.mxu0 0.0
      %7100 = vmatprep.subr.mxu0 0.0
      %7101 = vmatpush1.msra.mxu0 0.0
      %7102 = vmatprep.subr.mxu0 0.0
      %7103 = vmatpush1.msra.mxu0 0.0
      %7104 = vmatprep.subr.mxu0 0.0
      %7105 = vmatpush1.msra.mxu0 0.0
      %7106 = vmatprep.subr.mxu0 0.0
      %7107 = vmatpush1.msra.mxu0 0.0
      %7108 = vmatprep.subr.mxu0 0.0
      %7109 = vmatpush1.msra.mxu0 0.0
      %7110 = vmatprep.subr.mxu0 0.0
      %7111 = vmatpush1.msra.mxu0 0.0
      %7112 = vmatprep.subr.mxu0 0.0
      %7113 = vmatpush1.msra.mxu0 0.0
      %7114 = vmatprep.subr.mxu0 0.0
      %7115 = vmatpush1.msra.mxu0 0.0
      %7116 = vmatprep.subr.mxu0 0.0
      %7117 = vmatpush1.msra.mxu0 0.0
      %7118 = vmatprep.subr.mxu0 0.0
      %7119 = vmatpush1.msra.mxu0 0.0
      %7120 = vmatprep.subr.mxu0 0.0
      %7121 = vmatpush1.msra.mxu0 0.0
      %7122 = vmatprep.subr.mxu0 0.0
      %7123 = vmatpush1.msra.mxu0 0.0
      %7124 = vmatprep.subr.mxu0 0.0
      %7125 = vmatpush1.msra.mxu0 0.0
      %7126 = vmatprep.subr.mxu0 0.0
      %7127 = vmatpush1.msra.mxu0 0.0
      %7128 = vmatprep.subr.mxu0 0.0
      %7129 = vmatpush1.msra.mxu0 0.0
      %7130 = vmatprep.subr.mxu0 0.0
      %7131 = vmatpush1.msra.mxu0 0.0
      %7132 = vmatprep.subr.mxu0 0.0
      %7133 = vmatpush1.msra.mxu0 0.0
      %7134 = vmatprep.subr.mxu0 0.0
      %7135 = vmatpush1.msra.mxu0 0.0
      %7136 = vmatprep.subr.mxu0 0.0
      %7137 = vmatpush1.msra.mxu0 0.0
      %7138 = vmatprep.subr.mxu0 0.0
      %7139 = vmatpush1.msra.mxu0 0.0
      %7140 = vmatprep.subr.mxu0 0.0
      %7141 = vmatpush1.msra.mxu0 0.0
      %7142 = vmatprep.subr.mxu0 0.0
      %7143 = vmatpush1.msra.mxu0 0.0
      %7144 = vmatprep.subr.mxu0 0.0
      %7145 = vmatpush1.msra.mxu0 0.0
      %7146 = vmatprep.subr.mxu0 0.0
      %7147 = vmatpush1.msra.mxu0 0.0
      %7148 = vmatprep.subr.mxu0 0.0
      %7149 = vmatpush1.msra.mxu0 0.0
      %7150 = vmatprep.subr.mxu0 0.0
      %7151 = vmatpush1.msra.mxu0 0.0
      %7152 = vmatprep.subr.mxu0 0.0
      %7153 = vmatpush1.msra.mxu0 0.0
      %7154 = vmatprep.mubr.f32.mxu0 0.0
      %7155 = vmatmul.mubr.f32.gmra.mrb[0].mxu0 %v6944
      %v7156 = vpop.f32.mrb[0].mxu0
      %v7157 = vadd.f32 %v6721, %v7156
      %v7158 = vpop.f32.mrb[0].mxu0
      %7159 = vmatprep.mubr.f32.mxu0 0.0
      %7160 = vmatmul.mubr.f32.gmra.mrb[0].mxu0 %v6947
      %v7161 = vpop.f32.mrb[0].mxu0
      %v7162 = vadd.f32 %v6726, %v7161
      %v7163 = vpop.f32.mrb[0].mxu0
      %7164 = vmatprep.mubr.f32.mxu0 0.0
      %7165 = vmatmul.mubr.f32.gmra.mrb[0].mxu0 %v6950
      %v7166 = vpop.f32.mrb[0].mxu0
      %v7167 = vpop.f32.mrb[0].mxu0
      %7168 = vmatprep.mubr.f32.mxu0 0.0
      %7169 = vmatmul.mubr.f32.gmra.mrb[0].mxu0 %v6953
      %v7170 = vpop.f32.mrb[0].mxu0
      %v7171 = vadd.f32 %v6735, %v7170
      %v7172 = vpop.f32.mrb[0].mxu0
      %7173 = vmatprep.mubr.f32.mxu0 0.0
      %7174 = vmatmul.mubr.f32.gmra.mrb[0].mxu0 %v6956
      %v7175 = vpop.f32.mrb[0].mxu0
      %v7176 = vadd.f32 %v6740, %v7175
      %v7177 = vpop.f32.mrb[0].mxu0
      %7178 = vmatprep.mubr.f32.mxu0 0.0
      %7179 = vmatmul.mubr.f32.gmra.mrb[0].mxu0 %v6959
      %v7180 = vpop.f32.mrb[0].mxu0
      %v7181 = vpop.f32.mrb[0].mxu0
      %7182 = vmatprep.mubr.f32.mxu0 0.0
      %7183 = vmatmul.mubr.f32.gmra.mrb[0].mxu0 %v6962
      %v7184 = vpop.f32.mrb[0].mxu0
      %v7185 = vadd.f32 %v6749, %v7184
      %v7186 = vpop.f32.mrb[0].mxu0
      %7187 = vmatprep.mubr.f32.mxu0 0.0
      %7188 = vmatmul.mubr.f32.gmra.mrb[0].mxu0 %v6965
      %v7189 = vpop.f32.mrb[0].mxu0
      %v7190 = vadd.f32 %v6754, %v7189
      %v7191 = vpop.f32.mrb[0].mxu0
      %7192 = vmatprep.mubr.f32.mxu0 0.0
      %7193 = vmatmul.mubr.f32.gmra.mrb[0].mxu0 %v6968
      %v7194 = vpop.f32.mrb[0].mxu0
      %v7195 = vpop.f32.mrb[0].mxu0
      %7196 = vmatprep.mubr.f32.mxu0 0.0
      %7197 = vmatmul.mubr.f32.gmra.mrb[0].mxu0 %v6971
      %v7198 = vpop.f32.mrb[0].mxu0
      %v7199 = vadd.f32 %v6763, %v7198
      %v7200 = vpop.f32.mrb[0].mxu0
      %7201 = vmatprep.mubr.f32.mxu0 0.0
      %7202 = vmatmul.mubr.f32.gmra.mrb[0].mxu0 %v6974
      %v7203 = vpop.f32.mrb[0].mxu0
      %v7204 = vadd.f32 %v6768, %v7203
      %v7205 = vpop.f32.mrb[0].mxu0
      %7206 = vmatprep.mubr.f32.mxu0 0.0
      %7207 = vmatmul.mubr.f32.gmra.mrb[0].mxu0 %v6977
      %v7208 = vpop.f32.mrb[0].mxu0
      %v7209 = vpop.f32.mrb[0].mxu0
      %7210 = vmatprep.mubr.f32.mxu0 0.0
      %7211 = vmatmul.mubr.f32.gmra.mrb[0].mxu0 %v6980
      %v7212 = vpop.f32.mrb[0].mxu0
      %v7213 = vadd.f32 %v6777, %v7212
      %v7214 = vpop.f32.mrb[0].mxu0
      %7215 = vmatprep.mubr.f32.mxu0 0.0
      %7216 = vmatmul.mubr.f32.gmra.mrb[0].mxu0 %v6983
      %v7217 = vpop.f32.mrb[0].mxu0
      %v7218 = vadd.f32 %v6782, %v7217
      %v7219 = vpop.f32.mrb[0].mxu0
      %7220 = vmatprep.mubr.f32.mxu0 0.0
      %7221 = vmatmul.mubr.f32.gmra.mrb[0].mxu0 %v6986
      %v7222 = vpop.f32.mrb[0].mxu0
      %v7223 = vpop.f32.mrb[0].mxu0
      %7224 = vmatprep.mubr.f32.mxu0 0.0
      %7225 = vmatmul.mubr.f32.gmra.mrb[0].mxu0 %v6989
      %v7226 = vpop.f32.mrb[0].mxu0
      %v7227 = vadd.f32 %v6791, %v7226
      %v7228 = vpop.f32.mrb[0].mxu0
      %7229 = vmatprep.mubr.f32.mxu0 0.0
      %7230 = vmatmul.mubr.f32.gmra.mrb[0].mxu0 %v6992
      %v7231 = vpop.f32.mrb[0].mxu0
      %v7232 = vadd.f32 %v6796, %v7231
      %v7233 = vpop.f32.mrb[0].mxu0
      %7234 = vmatprep.mubr.f32.mxu0 0.0
      %7235 = vmatmul.mubr.f32.gmra.mrb[0].mxu0 %v6995
      %v7236 = vpop.f32.mrb[0].mxu0
      %v7237 = vpop.f32.mrb[0].mxu0
      %7238 = vmatprep.mubr.f32.mxu0 0.0
      %7239 = vmatmul.mubr.f32.gmra.mrb[0].mxu0 %v6998
      %v7240 = vpop.f32.mrb[0].mxu0
      %v7241 = vadd.f32 %v6805, %v7240
      %v7242 = vpop.f32.mrb[0].mxu0
      %7243 = vmatprep.mubr.f32.mxu0 0.0
      %7244 = vmatmul.mubr.f32.gmra.mrb[0].mxu0 %v7001
      %v7245 = vpop.f32.mrb[0].mxu0
      %v7246 = vadd.f32 %v6810, %v7245
      %v7247 = vpop.f32.mrb[0].mxu0
      %7248 = vmatprep.mubr.f32.mxu0 0.0
      %7249 = vmatmul.mubr.f32.gmra.mrb[0].mxu0 %v7004
      %v7250 = vpop.f32.mrb[0].mxu0
      %v7251 = vpop.f32.mrb[0].mxu0
      %7252 = vmatprep.mubr.f32.mxu0 0.0
      %7253 = vmatmul.mubr.f32.gmra.mrb[0].mxu0 %v7007
      %v7254 = vpop.f32.mrb[0].mxu0
      %v7255 = vadd.f32 %v6819, %v7254
      %v7256 = vpop.f32.mrb[0].mxu0
      %7257 = vmatprep.mubr.f32.mxu0 0.0
      %7258 = vmatmul.mubr.f32.gmra.mrb[0].mxu0 %v7010
      %v7259 = vpop.f32.mrb[0].mxu0
      %v7260 = vadd.f32 %v6824, %v7259
      %v7261 = vpop.f32.mrb[0].mxu0
      %7262 = vmatprep.mubr.f32.mxu0 0.0
      %7263 = vmatmul.mubr.f32.gmra.mrb[0].mxu0 %v7013
      %v7264 = vpop.f32.mrb[0].mxu0
      %v7265 = vpop.f32.mrb[0].mxu0
      %7266 = vmatprep.mubr.f32.mxu0 0.0
      %7267 = vmatmul.mubr.f32.gmra.mrb[0].mxu0 %v7016
      %v7268 = vpop.f32.mrb[0].mxu0
      %v7269 = vadd.f32 %v6833, %v7268
      %v7270 = vpop.f32.mrb[0].mxu0
      %7271 = vmatprep.mubr.f32.mxu0 0.0
      %7272 = vmatmul.mubr.f32.gmra.mrb[0].mxu0 %v7019
      %v7273 = vpop.f32.mrb[0].mxu0
      %v7274 = vadd.f32 %v6838, %v7273
      %v7275 = vpop.f32.mrb[0].mxu0
      %7276 = vmatprep.mubr.f32.mxu0 0.0
      %7277 = vmatmul.mubr.f32.gmra.mrb[0].mxu0 %v7022
      %v7278 = vpop.f32.mrb[0].mxu0
      %v7279 = vpop.f32.mrb[0].mxu0
      %7280 = vmatprep.mubr.f32.mxu0 0.0
      %7281 = vmatmul.mubr.f32.gmra.mrb[0].mxu0 %v7025
      %v7282 = vpop.f32.mrb[0].mxu0
      %v7283 = vadd.f32 %v6847, %v7282
      %v7284 = vpop.f32.mrb[0].mxu0
      %7285 = vmatprep.mubr.f32.mxu0 0.0
      %7286 = vmatmul.mubr.f32.gmra.mrb[0].mxu0 %v7028
      %v7287 = vpop.f32.mrb[0].mxu0
      %v7288 = vadd.f32 %v6852, %v7287
      %v7289 = vpop.f32.mrb[0].mxu0
      %7290 = vmatprep.mubr.f32.mxu0 0.0
      %7291 = vmatmul.mubr.f32.gmra.mrb[0].mxu0 %v7031
      %v7292 = vpop.f32.mrb[0].mxu0
      %v7293 = vpop.f32.mrb[0].mxu0
      %7294 = vmatprep.mubr.f32.mxu0 0.0
      %7295 = vmatmul.mubr.f32.gmra.mrb[0].mxu0 %v7034
      %v7296 = vpop.f32.mrb[0].mxu0
      %v7297 = vadd.f32 %v6861, %v7296
      %v7298 = vpop.f32.mrb[0].mxu0
      %7299 = vmatprep.mubr.f32.mxu0 0.0
      %7300 = vmatmul.mubr.f32.gmra.mrb[0].mxu0 %v7037
      %v7301 = vpop.f32.mrb[0].mxu0
      %v7302 = vadd.f32 %v6866, %v7301
      %v7303 = vpop.f32.mrb[0].mxu0
      %7304 = vmatprep.mubr.f32.mxu0 0.0
      %7305 = vmatmul.mubr.f32.gmra.mrb[0].mxu0 %v7040
      %v7306 = vpop.f32.mrb[0].mxu0
      %v7307 = vpop.f32.mrb[0].mxu0
      %7308 = vmatprep.mubr.f32.mxu0 0.0
      %7309 = vmatmul.mubr.f32.gmra.mrb[0].mxu0 %v7043
      %v7310 = vpop.f32.mrb[0].mxu0
      %v7311 = vadd.f32 %v6875, %v7310
      %v7312 = vpop.f32.mrb[0].mxu0
      %7313 = vmatprep.mubr.f32.mxu0 0.0
      %7314 = vmatmul.mubr.f32.gmra.mrb[0].mxu0 %v7046
      %v7315 = vpop.f32.mrb[0].mxu0
      %v7316 = vadd.f32 %v6880, %v7315
      %v7317 = vpop.f32.mrb[0].mxu0
      %7318 = vmatprep.mubr.f32.mxu0 0.0
      %7319 = vmatmul.mubr.f32.gmra.mrb[0].mxu0 %v7049
      %v7320 = vpop.f32.mrb[0].mxu0
      %v7321 = vpop.f32.mrb[0].mxu0
      %7322 = vmatprep.mubr.f32.mxu0 0.0
      %7323 = vmatmul.mubr.f32.gmra.mrb[0].mxu0 %v7052
      %v7324 = vpop.f32.mrb[0].mxu0
      %v7325 = vadd.f32 %v6889, %v7324
      %v7326 = vpop.f32.mrb[0].mxu0
      %7327 = vmatprep.mubr.f32.mxu0 0.0
      %7328 = vmatmul.mubr.f32.gmra.mrb[0].mxu0 %v7055
      %v7329 = vpop.f32.mrb[0].mxu0
      %v7330 = vadd.f32 %v6894, %v7329
      %v7331 = vpop.f32.mrb[0].mxu0
      %7332 = vmatprep.mubr.f32.mxu0 0.0
      %7333 = vmatmul.mubr.f32.gmra.mrb[0].mxu0 %v7058
      %v7334 = vpop.f32.mrb[0].mxu0
      %v7335 = vpop.f32.mrb[0].mxu0
      %7336 = vmatprep.mubr.f32.mxu0 0.0
      %7337 = vmatmul.mubr.f32.gmra.mrb[0].mxu0 %v7061
      %v7338 = vpop.f32.mrb[0].mxu0
      %v7339 = vadd.f32 %v6903, %v7338
      %v7340 = vpop.f32.mrb[0].mxu0
      %7341 = vmatprep.mubr.f32.mxu0 0.0
      %7342 = vmatmul.mubr.f32.gmra.mrb[0].mxu0 %v7064
      %v7343 = vpop.f32.mrb[0].mxu0
      %v7344 = vadd.f32 %v6908, %v7343
      %v7345 = vpop.f32.mrb[0].mxu0
      %7346 = vmatprep.mubr.f32.mxu0 0.0
      %7347 = vmatmul.mubr.f32.gmra.mrb[0].mxu0 %v7067
      %v7348 = vpop.f32.mrb[0].mxu0
      %v7349 = vpop.f32.mrb[0].mxu0
      %7350 = vmatprep.mubr.f32.mxu0 0.0
      %7351 = vmatmul.mubr.f32.gmra.mrb[0].mxu0 %v7070
      %v7352 = vpop.f32.mrb[0].mxu0
      %v7353 = vadd.f32 %v6917, %v7352
      %v7354 = vpop.f32.mrb[0].mxu0
      %7355 = vmatprep.mubr.f32.mxu0 0.0
      %7356 = vmatmul.mubr.f32.gmra.mrb[0].mxu0 %v7073
      %v7357 = vpop.f32.mrb[0].mxu0
      %v7358 = vadd.f32 %v6922, %v7357
      %v7359 = vpop.f32.mrb[0].mxu0
      %7360 = vmatprep.mubr.f32.mxu0 0.0
      %7361 = vmatmul.mubr.f32.gmra.mrb[0].mxu0 %v7076
      %v7362 = vpop.f32.mrb[0].mxu0
      %v7363 = vpop.f32.mrb[0].mxu0
      %7364 = vmatprep.mubr.f32.mxu0 0.0
      %7365 = vmatmul.mubr.f32.gmra.mrb[0].mxu0 %v7079
      %v7366 = vpop.f32.mrb[0].mxu0
      %v7367 = vadd.f32 %v6931, %v7366
      %v7368 = vpop.f32.mrb[0].mxu0
      %7369 = vmatprep.mubr.f32.mxu0 0.0
      %7370 = vmatmul.mubr.f32.gmra.mrb[0].mxu0 %v7082
      %v7371 = vpop.f32.mrb[0].mxu0
      %v7372 = vadd.f32 %v6936, %v7371
      %v7373 = vpop.f32.mrb[0].mxu0
      %7374 = vmatprep.mubr.f32.mxu0 0.0
      %7375 = vmatmul.mubr.f32.gmra.mrb[0].mxu0 %v7085
      %v7376 = vpop.f32.mrb[0].mxu0
      %v7377 = vpop.f32.mrb[0].mxu0
      %7378 = vdwg.mxu0
      %v7379 = vld [vmem:[#allocation2 + $0x2] sm:$0xff]
      %v7380 = vld [vmem:[#allocation2 + $0xa] sm:$0xff]
      %v7381 = vld [vmem:[#allocation2 + $0x12] sm:$0xff]
      %v7382 = vld [vmem:[#allocation2 + $0x1a] sm:$0xff]
      %v7383 = vld [vmem:[#allocation2 + $0x22] sm:$0xff]
      %v7384 = vld [vmem:[#allocation2 + $0x2a] sm:$0xff]
      %v7385 = vld [vmem:[#allocation2 + $0x32] sm:$0xff]
      %v7386 = vld [vmem:[#allocation2 + $0x3a] sm:$0xff]
      %v7387 = vld [vmem:[#allocation2 + $0x42] sm:$0xff]
      %v7388 = vld [vmem:[#allocation2 + $0x4a] sm:$0xff]
      %v7389 = vld [vmem:[#allocation2 + $0x52] sm:$0xff]
      %v7390 = vld [vmem:[#allocation2 + $0x5a] sm:$0xff]
      %v7391 = vld [vmem:[#allocation2 + $0x62] sm:$0xff]
      %v7392 = vld [vmem:[#allocation2 + $0x6a] sm:$0xff]
      %v7393 = vld [vmem:[#allocation2 + $0x72] sm:$0xff]
      %v7394 = vld [vmem:[#allocation2 + $0x7a] sm:$0xff]
      %v7395 = vld [vmem:[#allocation2 + $0x82] sm:$0xff]
      %v7396 = vld [vmem:[#allocation2 + $0x8a] sm:$0xff]
      %v7397 = vld [vmem:[#allocation2 + $0x92] sm:$0xff]
      %v7398 = vld [vmem:[#allocation2 + $0x9a] sm:$0xff]
      %v7399 = vld [vmem:[#allocation2 + $0xa2] sm:$0xff]
      %v7400 = vld [vmem:[#allocation2 + $0xaa] sm:$0xff]
      %v7401 = vld [vmem:[#allocation2 + $0xb2] sm:$0xff]
      %v7402 = vld [vmem:[#allocation2 + $0xba] sm:$0xff]
      %v7403 = vld [vmem:[#allocation2 + $0xc2] sm:$0xff]
      %v7404 = vld [vmem:[#allocation2 + $0xca] sm:$0xff]
      %v7405 = vld [vmem:[#allocation2 + $0xd2] sm:$0xff]
      %v7406 = vld [vmem:[#allocation2 + $0xda] sm:$0xff]
      %v7407 = vld [vmem:[#allocation2 + $0xe2] sm:$0xff]
      %v7408 = vld [vmem:[#allocation2 + $0xea] sm:$0xff]
      %v7409 = vld [vmem:[#allocation2 + $0xf2] sm:$0xff]
      %v7410 = vld [vmem:[#allocation2 + $0xfa] sm:$0xff]
      %v7411 = vld [vmem:[#allocation2 + $0x102] sm:$0xff]
      %v7412 = vld [vmem:[#allocation2 + $0x10a] sm:$0xff]
      %v7413 = vld [vmem:[#allocation2 + $0x112] sm:$0xff]
      %v7414 = vld [vmem:[#allocation2 + $0x11a] sm:$0xff]
      %v7415 = vld [vmem:[#allocation2 + $0x122] sm:$0xff]
      %v7416 = vld [vmem:[#allocation2 + $0x12a] sm:$0xff]
      %v7417 = vld [vmem:[#allocation2 + $0x132] sm:$0xff]
      %v7418 = vld [vmem:[#allocation2 + $0x13a] sm:$0xff]
      %v7419 = vld [vmem:[#allocation2 + $0x142] sm:$0xff]
      %v7420 = vld [vmem:[#allocation2 + $0x14a] sm:$0xff]
      %v7421 = vld [vmem:[#allocation2 + $0x152] sm:$0xff]
      %v7422 = vld [vmem:[#allocation2 + $0x15a] sm:$0xff]
      %v7423 = vld [vmem:[#allocation2 + $0x162] sm:$0xff]
      %v7424 = vld [vmem:[#allocation2 + $0x16a] sm:$0xff]
      %v7425 = vld [vmem:[#allocation2 + $0x172] sm:$0xff]
      %v7426 = vld [vmem:[#allocation2 + $0x17a] sm:$0xff]
      %s7427 = scalar_lea.vmem %s5, 8
      %v7428 = vld [vmem:[%s7427] sm:$0xf]
      %v7430 = vsel %vm417, %v7379, 0
      %v7433 = vsel %vm417, %v7380, 0
      %v7436 = vsel %vm417, %v7381, 0
      %v7439 = vsel %vm417, %v7382, 0
      %v7442 = vsel %vm417, %v7383, 0
      %v7445 = vsel %vm417, %v7384, 0
      %v7448 = vsel %vm417, %v7385, 0
      %v7451 = vsel %vm417, %v7386, 0
      %v7454 = vsel %vm417, %v7387, 0
      %v7457 = vsel %vm417, %v7388, 0
      %v7460 = vsel %vm417, %v7389, 0
      %v7463 = vsel %vm417, %v7390, 0
      %v7466 = vsel %vm417, %v7391, 0
      %v7469 = vsel %vm417, %v7392, 0
      %v7472 = vsel %vm417, %v7393, 0
      %v7475 = vsel %vm417, %v7394, 0
      %v7478 = vsel %vm417, %v7395, 0
      %v7481 = vsel %vm417, %v7396, 0
      %v7484 = vsel %vm417, %v7397, 0
      %v7487 = vsel %vm417, %v7398, 0
      %v7490 = vsel %vm417, %v7399, 0
      %v7493 = vsel %vm417, %v7400, 0
      %v7496 = vsel %vm417, %v7401, 0
      %v7499 = vsel %vm417, %v7402, 0
      %v7502 = vsel %vm417, %v7403, 0
      %v7505 = vsel %vm417, %v7404, 0
      %v7508 = vsel %vm417, %v7405, 0
      %v7511 = vsel %vm417, %v7406, 0
      %v7514 = vsel %vm417, %v7407, 0
      %v7517 = vsel %vm417, %v7408, 0
      %v7520 = vsel %vm417, %v7409, 0
      %v7523 = vsel %vm417, %v7410, 0
      %v7526 = vsel %vm417, %v7411, 0
      %v7529 = vsel %vm417, %v7412, 0
      %v7532 = vsel %vm417, %v7413, 0
      %v7535 = vsel %vm417, %v7414, 0
      %v7538 = vsel %vm417, %v7415, 0
      %v7541 = vsel %vm417, %v7416, 0
      %v7544 = vsel %vm417, %v7417, 0
      %v7547 = vsel %vm417, %v7418, 0
      %v7550 = vsel %vm417, %v7419, 0
      %v7553 = vsel %vm417, %v7420, 0
      %v7556 = vsel %vm417, %v7421, 0
      %v7559 = vsel %vm417, %v7422, 0
      %v7562 = vsel %vm417, %v7423, 0
      %v7565 = vsel %vm417, %v7424, 0
      %v7568 = vsel %vm417, %v7425, 0
      %v7571 = vsel %vm417, %v7426, 0
      %v7574 = vsel %vm580, %v7428, 0
      %7576 = vmatprep.subr.mxu0 0.0
      %7577 = vmatpush1.msra.mxu0 %v7574
      %7578 = vmatprep.subr.mxu0 0.0
      %7579 = vmatpush1.msra.mxu0 0.0
      %7580 = vmatprep.subr.mxu0 0.0
      %7581 = vmatpush1.msra.mxu0 0.0
      %7582 = vmatprep.subr.mxu0 0.0
      %7583 = vmatpush1.msra.mxu0 0.0
      %7584 = vmatprep.subr.mxu0 0.0
      %7585 = vmatpush1.msra.mxu0 0.0
      %7586 = vmatprep.subr.mxu0 0.0
      %7587 = vmatpush1.msra.mxu0 0.0
      %7588 = vmatprep.subr.mxu0 0.0
      %7589 = vmatpush1.msra.mxu0 0.0
      %7590 = vmatprep.subr.mxu0 0.0
      %7591 = vmatpush1.msra.mxu0 0.0
      %7592 = vmatprep.subr.mxu0 0.0
      %7593 = vmatpush1.msra.mxu0 0.0
      %7594 = vmatprep.subr.mxu0 0.0
      %7595 = vmatpush1.msra.mxu0 0.0
      %7596 = vmatprep.subr.mxu0 0.0
      %7597 = vmatpush1.msra.mxu0 0.0
      %7598 = vmatprep.subr.mxu0 0.0
      %7599 = vmatpush1.msra.mxu0 0.0
      %7600 = vmatprep.subr.mxu0 0.0
      %7601 = vmatpush1.msra.mxu0 0.0
      %7602 = vmatprep.subr.mxu0 0.0
      %7603 = vmatpush1.msra.mxu0 0.0
      %7604 = vmatprep.subr.mxu0 0.0
      %7605 = vmatpush1.msra.mxu0 0.0
      %7606 = vmatprep.subr.mxu0 0.0
      %7607 = vmatpush1.msra.mxu0 0.0
      %7608 = vmatprep.subr.mxu0 0.0
      %7609 = vmatpush1.msra.mxu0 0.0
      %7610 = vmatprep.subr.mxu0 0.0
      %7611 = vmatpush1.msra.mxu0 0.0
      %7612 = vmatprep.subr.mxu0 0.0
      %7613 = vmatpush1.msra.mxu0 0.0
      %7614 = vmatprep.subr.mxu0 0.0
      %7615 = vmatpush1.msra.mxu0 0.0
      %7616 = vmatprep.subr.mxu0 0.0
      %7617 = vmatpush1.msra.mxu0 0.0
      %7618 = vmatprep.subr.mxu0 0.0
      %7619 = vmatpush1.msra.mxu0 0.0
      %7620 = vmatprep.subr.mxu0 0.0
      %7621 = vmatpush1.msra.mxu0 0.0
      %7622 = vmatprep.subr.mxu0 0.0
      %7623 = vmatpush1.msra.mxu0 0.0
      %7624 = vmatprep.subr.mxu0 0.0
      %7625 = vmatpush1.msra.mxu0 0.0
      %7626 = vmatprep.subr.mxu0 0.0
      %7627 = vmatpush1.msra.mxu0 0.0
      %7628 = vmatprep.subr.mxu0 0.0
      %7629 = vmatpush1.msra.mxu0 0.0
      %7630 = vmatprep.subr.mxu0 0.0
      %7631 = vmatpush1.msra.mxu0 0.0
      %7632 = vmatprep.subr.mxu0 0.0
      %7633 = vmatpush1.msra.mxu0 0.0
      %7634 = vmatprep.subr.mxu0 0.0
      %7635 = vmatpush1.msra.mxu0 0.0
      %7636 = vmatprep.subr.mxu0 0.0
      %7637 = vmatpush1.msra.mxu0 0.0
      %7638 = vmatprep.subr.mxu0 0.0
      %7639 = vmatpush1.msra.mxu0 0.0
      %7640 = vmatprep.mubr.f32.mxu0 0.0
      %7641 = vmatmul.mubr.f32.gmra.mrb[0].mxu0 %v7430
      %v7642 = vpop.f32.mrb[0].mxu0
      %v7643 = vadd.f32 0.0, %v7642
      %v7644 = vpop.f32.mrb[0].mxu0
      %7645 = vmatprep.mubr.f32.mxu0 0.0
      %7646 = vmatmul.mubr.f32.gmra.mrb[0].mxu0 %v7433
      %v7647 = vpop.f32.mrb[0].mxu0
      %v7648 = vadd.f32 0.0, %v7647
      %v7649 = vpop.f32.mrb[0].mxu0
      %7650 = vmatprep.mubr.f32.mxu0 0.0
      %7651 = vmatmul.mubr.f32.gmra.mrb[0].mxu0 %v7436
      %v7652 = vpop.f32.mrb[0].mxu0
      %v7653 = vpop.f32.mrb[0].mxu0
      %7654 = vmatprep.mubr.f32.mxu0 0.0
      %7655 = vmatmul.mubr.f32.gmra.mrb[0].mxu0 %v7439
      %v7656 = vpop.f32.mrb[0].mxu0
      %v7657 = vadd.f32 0.0, %v7656
      %v7658 = vpop.f32.mrb[0].mxu0
      %7659 = vmatprep.mubr.f32.mxu0 0.0
      %7660 = vmatmul.mubr.f32.gmra.mrb[0].mxu0 %v7442
      %v7661 = vpop.f32.mrb[0].mxu0
      %v7662 = vadd.f32 0.0, %v7661
      %v7663 = vpop.f32.mrb[0].mxu0
      %7664 = vmatprep.mubr.f32.mxu0 0.0
      %7665 = vmatmul.mubr.f32.gmra.mrb[0].mxu0 %v7445
      %v7666 = vpop.f32.mrb[0].mxu0
      %v7667 = vpop.f32.mrb[0].mxu0
      %7668 = vmatprep.mubr.f32.mxu0 0.0
      %7669 = vmatmul.mubr.f32.gmra.mrb[0].mxu0 %v7448
      %v7670 = vpop.f32.mrb[0].mxu0
      %v7671 = vadd.f32 0.0, %v7670
      %v7672 = vpop.f32.mrb[0].mxu0
      %7673 = vmatprep.mubr.f32.mxu0 0.0
      %7674 = vmatmul.mubr.f32.gmra.mrb[0].mxu0 %v7451
      %v7675 = vpop.f32.mrb[0].mxu0
      %v7676 = vadd.f32 0.0, %v7675
      %v7677 = vpop.f32.mrb[0].mxu0
      %7678 = vmatprep.mubr.f32.mxu0 0.0
      %7679 = vmatmul.mubr.f32.gmra.mrb[0].mxu0 %v7454
      %v7680 = vpop.f32.mrb[0].mxu0
      %v7681 = vpop.f32.mrb[0].mxu0
      %7682 = vmatprep.mubr.f32.mxu0 0.0
      %7683 = vmatmul.mubr.f32.gmra.mrb[0].mxu0 %v7457
      %v7684 = vpop.f32.mrb[0].mxu0
      %v7685 = vadd.f32 0.0, %v7684
      %v7686 = vpop.f32.mrb[0].mxu0
      %7687 = vmatprep.mubr.f32.mxu0 0.0
      %7688 = vmatmul.mubr.f32.gmra.mrb[0].mxu0 %v7460
      %v7689 = vpop.f32.mrb[0].mxu0
      %v7690 = vadd.f32 0.0, %v7689
      %v7691 = vpop.f32.mrb[0].mxu0
      %7692 = vmatprep.mubr.f32.mxu0 0.0
      %7693 = vmatmul.mubr.f32.gmra.mrb[0].mxu0 %v7463
      %v7694 = vpop.f32.mrb[0].mxu0
      %v7695 = vpop.f32.mrb[0].mxu0
      %7696 = vmatprep.mubr.f32.mxu0 0.0
      %7697 = vmatmul.mubr.f32.gmra.mrb[0].mxu0 %v7466
      %v7698 = vpop.f32.mrb[0].mxu0
      %v7699 = vadd.f32 0.0, %v7698
      %v7700 = vpop.f32.mrb[0].mxu0
      %7701 = vmatprep.mubr.f32.mxu0 0.0
      %7702 = vmatmul.mubr.f32.gmra.mrb[0].mxu0 %v7469
      %v7703 = vpop.f32.mrb[0].mxu0
      %v7704 = vadd.f32 0.0, %v7703
      %v7705 = vpop.f32.mrb[0].mxu0
      %7706 = vmatprep.mubr.f32.mxu0 0.0
      %7707 = vmatmul.mubr.f32.gmra.mrb[0].mxu0 %v7472
      %v7708 = vpop.f32.mrb[0].mxu0
      %v7709 = vpop.f32.mrb[0].mxu0
      %7710 = vmatprep.mubr.f32.mxu0 0.0
      %7711 = vmatmul.mubr.f32.gmra.mrb[0].mxu0 %v7475
      %v7712 = vpop.f32.mrb[0].mxu0
      %v7713 = vadd.f32 0.0, %v7712
      %v7714 = vpop.f32.mrb[0].mxu0
      %7715 = vmatprep.mubr.f32.mxu0 0.0
      %7716 = vmatmul.mubr.f32.gmra.mrb[0].mxu0 %v7478
      %v7717 = vpop.f32.mrb[0].mxu0
      %v7718 = vadd.f32 0.0, %v7717
      %v7719 = vpop.f32.mrb[0].mxu0
      %7720 = vmatprep.mubr.f32.mxu0 0.0
      %7721 = vmatmul.mubr.f32.gmra.mrb[0].mxu0 %v7481
      %v7722 = vpop.f32.mrb[0].mxu0
      %v7723 = vpop.f32.mrb[0].mxu0
      %7724 = vmatprep.mubr.f32.mxu0 0.0
      %7725 = vmatmul.mubr.f32.gmra.mrb[0].mxu0 %v7484
      %v7726 = vpop.f32.mrb[0].mxu0
      %v7727 = vadd.f32 0.0, %v7726
      %v7728 = vpop.f32.mrb[0].mxu0
      %7729 = vmatprep.mubr.f32.mxu0 0.0
      %7730 = vmatmul.mubr.f32.gmra.mrb[0].mxu0 %v7487
      %v7731 = vpop.f32.mrb[0].mxu0
      %v7732 = vadd.f32 0.0, %v7731
      %v7733 = vpop.f32.mrb[0].mxu0
      %7734 = vmatprep.mubr.f32.mxu0 0.0
      %7735 = vmatmul.mubr.f32.gmra.mrb[0].mxu0 %v7490
      %v7736 = vpop.f32.mrb[0].mxu0
      %v7737 = vpop.f32.mrb[0].mxu0
      %7738 = vmatprep.mubr.f32.mxu0 0.0
      %7739 = vmatmul.mubr.f32.gmra.mrb[0].mxu0 %v7493
      %v7740 = vpop.f32.mrb[0].mxu0
      %v7741 = vadd.f32 0.0, %v7740
      %v7742 = vpop.f32.mrb[0].mxu0
      %7743 = vmatprep.mubr.f32.mxu0 0.0
      %7744 = vmatmul.mubr.f32.gmra.mrb[0].mxu0 %v7496
      %v7745 = vpop.f32.mrb[0].mxu0
      %v7746 = vadd.f32 0.0, %v7745
      %v7747 = vpop.f32.mrb[0].mxu0
      %7748 = vmatprep.mubr.f32.mxu0 0.0
      %7749 = vmatmul.mubr.f32.gmra.mrb[0].mxu0 %v7499
      %v7750 = vpop.f32.mrb[0].mxu0
      %v7751 = vpop.f32.mrb[0].mxu0
      %7752 = vmatprep.mubr.f32.mxu0 0.0
      %7753 = vmatmul.mubr.f32.gmra.mrb[0].mxu0 %v7502
      %v7754 = vpop.f32.mrb[0].mxu0
      %v7755 = vadd.f32 0.0, %v7754
      %v7756 = vpop.f32.mrb[0].mxu0
      %7757 = vmatprep.mubr.f32.mxu0 0.0
      %7758 = vmatmul.mubr.f32.gmra.mrb[0].mxu0 %v7505
      %v7759 = vpop.f32.mrb[0].mxu0
      %v7760 = vadd.f32 0.0, %v7759
      %v7761 = vpop.f32.mrb[0].mxu0
      %7762 = vmatprep.mubr.f32.mxu0 0.0
      %7763 = vmatmul.mubr.f32.gmra.mrb[0].mxu0 %v7508
      %v7764 = vpop.f32.mrb[0].mxu0
      %v7765 = vpop.f32.mrb[0].mxu0
      %7766 = vmatprep.mubr.f32.mxu0 0.0
      %7767 = vmatmul.mubr.f32.gmra.mrb[0].mxu0 %v7511
      %v7768 = vpop.f32.mrb[0].mxu0
      %v7769 = vadd.f32 0.0, %v7768
      %v7770 = vpop.f32.mrb[0].mxu0
      %7771 = vmatprep.mubr.f32.mxu0 0.0
      %7772 = vmatmul.mubr.f32.gmra.mrb[0].mxu0 %v7514
      %v7773 = vpop.f32.mrb[0].mxu0
      %v7774 = vadd.f32 0.0, %v7773
      %v7775 = vpop.f32.mrb[0].mxu0
      %7776 = vmatprep.mubr.f32.mxu0 0.0
      %7777 = vmatmul.mubr.f32.gmra.mrb[0].mxu0 %v7517
      %v7778 = vpop.f32.mrb[0].mxu0
      %v7779 = vpop.f32.mrb[0].mxu0
      %7780 = vmatprep.mubr.f32.mxu0 0.0
      %7781 = vmatmul.mubr.f32.gmra.mrb[0].mxu0 %v7520
      %v7782 = vpop.f32.mrb[0].mxu0
      %v7783 = vadd.f32 0.0, %v7782
      %v7784 = vpop.f32.mrb[0].mxu0
      %7785 = vmatprep.mubr.f32.mxu0 0.0
      %7786 = vmatmul.mubr.f32.gmra.mrb[0].mxu0 %v7523
      %v7787 = vpop.f32.mrb[0].mxu0
      %v7788 = vadd.f32 0.0, %v7787
      %v7789 = vpop.f32.mrb[0].mxu0
      %7790 = vmatprep.mubr.f32.mxu0 0.0
      %7791 = vmatmul.mubr.f32.gmra.mrb[0].mxu0 %v7526
      %v7792 = vpop.f32.mrb[0].mxu0
      %v7793 = vpop.f32.mrb[0].mxu0
      %7794 = vmatprep.mubr.f32.mxu0 0.0
      %7795 = vmatmul.mubr.f32.gmra.mrb[0].mxu0 %v7529
      %v7796 = vpop.f32.mrb[0].mxu0
      %v7797 = vadd.f32 0.0, %v7796
      %v7798 = vpop.f32.mrb[0].mxu0
      %7799 = vmatprep.mubr.f32.mxu0 0.0
      %7800 = vmatmul.mubr.f32.gmra.mrb[0].mxu0 %v7532
      %v7801 = vpop.f32.mrb[0].mxu0
      %v7802 = vadd.f32 0.0, %v7801
      %v7803 = vpop.f32.mrb[0].mxu0
      %7804 = vmatprep.mubr.f32.mxu0 0.0
      %7805 = vmatmul.mubr.f32.gmra.mrb[0].mxu0 %v7535
      %v7806 = vpop.f32.mrb[0].mxu0
      %v7807 = vpop.f32.mrb[0].mxu0
      %7808 = vmatprep.mubr.f32.mxu0 0.0
      %7809 = vmatmul.mubr.f32.gmra.mrb[0].mxu0 %v7538
      %v7810 = vpop.f32.mrb[0].mxu0
      %v7811 = vadd.f32 0.0, %v7810
      %v7812 = vpop.f32.mrb[0].mxu0
      %7813 = vmatprep.mubr.f32.mxu0 0.0
      %7814 = vmatmul.mubr.f32.gmra.mrb[0].mxu0 %v7541
      %v7815 = vpop.f32.mrb[0].mxu0
      %v7816 = vadd.f32 0.0, %v7815
      %v7817 = vpop.f32.mrb[0].mxu0
      %7818 = vmatprep.mubr.f32.mxu0 0.0
      %7819 = vmatmul.mubr.f32.gmra.mrb[0].mxu0 %v7544
      %v7820 = vpop.f32.mrb[0].mxu0
      %v7821 = vpop.f32.mrb[0].mxu0
      %7822 = vmatprep.mubr.f32.mxu0 0.0
      %7823 = vmatmul.mubr.f32.gmra.mrb[0].mxu0 %v7547
      %v7824 = vpop.f32.mrb[0].mxu0
      %v7825 = vadd.f32 0.0, %v7824
      %v7826 = vpop.f32.mrb[0].mxu0
      %7827 = vmatprep.mubr.f32.mxu0 0.0
      %7828 = vmatmul.mubr.f32.gmra.mrb[0].mxu0 %v7550
      %v7829 = vpop.f32.mrb[0].mxu0
      %v7830 = vadd.f32 0.0, %v7829
      %v7831 = vpop.f32.mrb[0].mxu0
      %7832 = vmatprep.mubr.f32.mxu0 0.0
      %7833 = vmatmul.mubr.f32.gmra.mrb[0].mxu0 %v7553
      %v7834 = vpop.f32.mrb[0].mxu0
      %v7835 = vpop.f32.mrb[0].mxu0
      %7836 = vmatprep.mubr.f32.mxu0 0.0
      %7837 = vmatmul.mubr.f32.gmra.mrb[0].mxu0 %v7556
      %v7838 = vpop.f32.mrb[0].mxu0
      %v7839 = vadd.f32 0.0, %v7838
      %v7840 = vpop.f32.mrb[0].mxu0
      %7841 = vmatprep.mubr.f32.mxu0 0.0
      %7842 = vmatmul.mubr.f32.gmra.mrb[0].mxu0 %v7559
      %v7843 = vpop.f32.mrb[0].mxu0
      %v7844 = vadd.f32 0.0, %v7843
      %v7845 = vpop.f32.mrb[0].mxu0
      %7846 = vmatprep.mubr.f32.mxu0 0.0
      %7847 = vmatmul.mubr.f32.gmra.mrb[0].mxu0 %v7562
      %v7848 = vpop.f32.mrb[0].mxu0
      %v7849 = vpop.f32.mrb[0].mxu0
      %7850 = vmatprep.mubr.f32.mxu0 0.0
      %7851 = vmatmul.mubr.f32.gmra.mrb[0].mxu0 %v7565
      %v7852 = vpop.f32.mrb[0].mxu0
      %v7853 = vadd.f32 0.0, %v7852
      %v7854 = vpop.f32.mrb[0].mxu0
      %7855 = vmatprep.mubr.f32.mxu0 0.0
      %7856 = vmatmul.mubr.f32.gmra.mrb[0].mxu0 %v7568
      %v7857 = vpop.f32.mrb[0].mxu0
      %v7858 = vadd.f32 0.0, %v7857
      %v7859 = vpop.f32.mrb[0].mxu0
      %7860 = vmatprep.mubr.f32.mxu0 0.0
      %7861 = vmatmul.mubr.f32.gmra.mrb[0].mxu0 %v7571
      %v7862 = vpop.f32.mrb[0].mxu0
      %v7863 = vpop.f32.mrb[0].mxu0
      %7864 = vdwg.mxu0
      %v7865 = vadd.f32 %v7157, %v7643
      %v7866 = vadd.f32 %v7162, %v7648
      %v7867 = vadd.f32 %v7171, %v7657
      %v7868 = vadd.f32 %v7176, %v7662
      %v7869 = vadd.f32 %v7185, %v7671
      %v7870 = vadd.f32 %v7190, %v7676
      %v7871 = vadd.f32 %v7199, %v7685
      %v7872 = vadd.f32 %v7204, %v7690
      %v7873 = vadd.f32 %v7213, %v7699
      %v7874 = vadd.f32 %v7218, %v7704
      %v7875 = vadd.f32 %v7227, %v7713
      %v7876 = vadd.f32 %v7232, %v7718
      %v7877 = vadd.f32 %v7241, %v7727
      %v7878 = vadd.f32 %v7246, %v7732
      %v7879 = vadd.f32 %v7255, %v7741
      %v7880 = vadd.f32 %v7260, %v7746
      %v7881 = vadd.f32 %v7269, %v7755
      %v7882 = vadd.f32 %v7274, %v7760
      %v7883 = vadd.f32 %v7283, %v7769
      %v7884 = vadd.f32 %v7288, %v7774
      %v7885 = vadd.f32 %v7297, %v7783
      %v7886 = vadd.f32 %v7302, %v7788
      %v7887 = vadd.f32 %v7311, %v7797
      %v7888 = vadd.f32 %v7316, %v7802
      %v7889 = vadd.f32 %v7325, %v7811
      %v7890 = vadd.f32 %v7330, %v7816
      %v7891 = vadd.f32 %v7339, %v7825
      %v7892 = vadd.f32 %v7344, %v7830
      %v7893 = vadd.f32 %v7353, %v7839
      %v7894 = vadd.f32 %v7358, %v7844
      %v7895 = vadd.f32 %v7367, %v7853
      %v7896 = vadd.f32 %v7372, %v7858
      %v7897 = vld [vmem:[#allocation2 + $0x18] sm:$0xff]
      %v7898 = vld [vmem:[#allocation2 + $0x20] sm:$0xff]
      %v7899 = vld [vmem:[#allocation2 + $0x28] sm:$0xff]
      %v7900 = vld [vmem:[#allocation2 + $0x30] sm:$0xff]
      %v7901 = vld [vmem:[#allocation2 + $0x38] sm:$0xff]
      %v7902 = vld [vmem:[#allocation2 + $0x40] sm:$0xff]
      %v7903 = vld [vmem:[#allocation2 + $0x48] sm:$0xff]
      %v7904 = vld [vmem:[#allocation2 + $0x50] sm:$0xff]
      %v7905 = vld [vmem:[#allocation2 + $0x58] sm:$0xff]
      %v7906 = vld [vmem:[#allocation2 + $0x60] sm:$0xff]
      %v7907 = vld [vmem:[#allocation2 + $0x68] sm:$0xff]
      %v7908 = vld [vmem:[#allocation2 + $0x70] sm:$0xff]
      %v7909 = vld [vmem:[#allocation2 + $0x78] sm:$0xff]
      %v7910 = vld [vmem:[#allocation2 + $0x80] sm:$0xff]
      %v7911 = vld [vmem:[#allocation2 + $0x88] sm:$0xff]
      %v7912 = vld [vmem:[#allocation2 + $0x90] sm:$0xff]
      %v7913 = vld [vmem:[#allocation2 + $0x98] sm:$0xff]
      %v7914 = vld [vmem:[#allocation2 + $0xa0] sm:$0xff]
      %v7915 = vld [vmem:[#allocation2 + $0xa8] sm:$0xff]
      %v7916 = vld [vmem:[#allocation2 + $0xb0] sm:$0xff]
      %v7917 = vld [vmem:[#allocation2 + $0xb8] sm:$0xff]
      %v7918 = vld [vmem:[#allocation2 + $0xc0] sm:$0xff]
      %v7919 = vld [vmem:[#allocation2 + $0xc8] sm:$0xff]
      %v7920 = vld [vmem:[#allocation2 + $0xd0] sm:$0xff]
      %v7921 = vld [vmem:[#allocation2 + $0xd8] sm:$0xff]
      %v7922 = vld [vmem:[#allocation2 + $0xe0] sm:$0xff]
      %v7923 = vld [vmem:[#allocation2 + $0xe8] sm:$0xff]
      %v7924 = vld [vmem:[#allocation2 + $0xf0] sm:$0xff]
      %v7925 = vld [vmem:[#allocation2 + $0xf8] sm:$0xff]
      %v7926 = vld [vmem:[#allocation2 + $0x100] sm:$0xff]
      %v7927 = vld [vmem:[#allocation2 + $0x108] sm:$0xff]
      %v7928 = vld [vmem:[#allocation2 + $0x110] sm:$0xff]
      %v7929 = vld [vmem:[#allocation2 + $0x118] sm:$0xff]
      %v7930 = vld [vmem:[#allocation2 + $0x120] sm:$0xff]
      %v7931 = vld [vmem:[#allocation2 + $0x128] sm:$0xff]
      %v7932 = vld [vmem:[#allocation2 + $0x130] sm:$0xff]
      %v7933 = vld [vmem:[#allocation2 + $0x138] sm:$0xff]
      %v7934 = vld [vmem:[#allocation2 + $0x140] sm:$0xff]
      %v7935 = vld [vmem:[#allocation2 + $0x148] sm:$0xff]
      %v7936 = vld [vmem:[#allocation2 + $0x150] sm:$0xff]
      %v7937 = vld [vmem:[#allocation2 + $0x158] sm:$0xff]
      %v7938 = vld [vmem:[#allocation2 + $0x160] sm:$0xff]
      %v7939 = vld [vmem:[#allocation2 + $0x168] sm:$0xff]
      %v7940 = vld [vmem:[#allocation2 + $0x170] sm:$0xff]
      %v7941 = vld [vmem:[#allocation2 + $0x178] sm:$0xff]
      %v7942 = vld [vmem:[#allocation2 + $0x180] sm:$0xff]
      %v7943 = vld [vmem:[#allocation2 + $0x188] sm:$0xff]
      %v7944 = vld [vmem:[#allocation2 + $0x190] sm:$0xff]
      %s7945 = scalar_lea.vmem %s5, 12
      %v7946 = vld [vmem:[%s7945] sm:$0xf]
      %v7948 = vsel %vm417, %v7897, 0
      %v7951 = vsel %vm417, %v7898, 0
      %v7954 = vsel %vm417, %v7899, 0
      %v7957 = vsel %vm417, %v7900, 0
      %v7960 = vsel %vm417, %v7901, 0
      %v7963 = vsel %vm417, %v7902, 0
      %v7966 = vsel %vm417, %v7903, 0
      %v7969 = vsel %vm417, %v7904, 0
      %v7972 = vsel %vm417, %v7905, 0
      %v7975 = vsel %vm417, %v7906, 0
      %v7978 = vsel %vm417, %v7907, 0
      %v7981 = vsel %vm417, %v7908, 0
      %v7984 = vsel %vm417, %v7909, 0
      %v7987 = vsel %vm417, %v7910, 0
      %v7990 = vsel %vm417, %v7911, 0
      %v7993 = vsel %vm417, %v7912, 0
      %v7996 = vsel %vm417, %v7913, 0
      %v7999 = vsel %vm417, %v7914, 0
      %v8002 = vsel %vm417, %v7915, 0
      %v8005 = vsel %vm417, %v7916, 0
      %v8008 = vsel %vm417, %v7917, 0
      %v8011 = vsel %vm417, %v7918, 0
      %v8014 = vsel %vm417, %v7919, 0
      %v8017 = vsel %vm417, %v7920, 0
      %v8020 = vsel %vm417, %v7921, 0
      %v8023 = vsel %vm417, %v7922, 0
      %v8026 = vsel %vm417, %v7923, 0
      %v8029 = vsel %vm417, %v7924, 0
      %v8032 = vsel %vm417, %v7925, 0
      %v8035 = vsel %vm417, %v7926, 0
      %v8038 = vsel %vm417, %v7927, 0
      %v8041 = vsel %vm417, %v7928, 0
      %v8044 = vsel %vm417, %v7929, 0
      %v8047 = vsel %vm417, %v7930, 0
      %v8050 = vsel %vm417, %v7931, 0
      %v8053 = vsel %vm417, %v7932, 0
      %v8056 = vsel %vm417, %v7933, 0
      %v8059 = vsel %vm417, %v7934, 0
      %v8062 = vsel %vm417, %v7935, 0
      %v8065 = vsel %vm417, %v7936, 0
      %v8068 = vsel %vm417, %v7937, 0
      %v8071 = vsel %vm417, %v7938, 0
      %v8074 = vsel %vm417, %v7939, 0
      %v8077 = vsel %vm417, %v7940, 0
      %v8080 = vsel %vm417, %v7941, 0
      %v8083 = vsel %vm417, %v7942, 0
      %v8086 = vsel %vm417, %v7943, 0
      %v8089 = vsel %vm417, %v7944, 0
      %v8092 = vsel %vm580, %v7946, 0
      %8094 = vmatprep.subr.mxu0 0.0
      %8095 = vmatpush1.msra.mxu0 %v8092
      %8096 = vmatprep.subr.mxu0 0.0
      %8097 = vmatpush1.msra.mxu0 0.0
      %8098 = vmatprep.subr.mxu0 0.0
      %8099 = vmatpush1.msra.mxu0 0.0
      %8100 = vmatprep.subr.mxu0 0.0
      %8101 = vmatpush1.msra.mxu0 0.0
      %8102 = vmatprep.subr.mxu0 0.0
      %8103 = vmatpush1.msra.mxu0 0.0
      %8104 = vmatprep.subr.mxu0 0.0
      %8105 = vmatpush1.msra.mxu0 0.0
      %8106 = vmatprep.subr.mxu0 0.0
      %8107 = vmatpush1.msra.mxu0 0.0
      %8108 = vmatprep.subr.mxu0 0.0
      %8109 = vmatpush1.msra.mxu0 0.0
      %8110 = vmatprep.subr.mxu0 0.0
      %8111 = vmatpush1.msra.mxu0 0.0
      %8112 = vmatprep.subr.mxu0 0.0
      %8113 = vmatpush1.msra.mxu0 0.0
      %8114 = vmatprep.subr.mxu0 0.0
      %8115 = vmatpush1.msra.mxu0 0.0
      %8116 = vmatprep.subr.mxu0 0.0
      %8117 = vmatpush1.msra.mxu0 0.0
      %8118 = vmatprep.subr.mxu0 0.0
      %8119 = vmatpush1.msra.mxu0 0.0
      %8120 = vmatprep.subr.mxu0 0.0
      %8121 = vmatpush1.msra.mxu0 0.0
      %8122 = vmatprep.subr.mxu0 0.0
      %8123 = vmatpush1.msra.mxu0 0.0
      %8124 = vmatprep.subr.mxu0 0.0
      %8125 = vmatpush1.msra.mxu0 0.0
      %8126 = vmatprep.subr.mxu0 0.0
      %8127 = vmatpush1.msra.mxu0 0.0
      %8128 = vmatprep.subr.mxu0 0.0
      %8129 = vmatpush1.msra.mxu0 0.0
      %8130 = vmatprep.subr.mxu0 0.0
      %8131 = vmatpush1.msra.mxu0 0.0
      %8132 = vmatprep.subr.mxu0 0.0
      %8133 = vmatpush1.msra.mxu0 0.0
      %8134 = vmatprep.subr.mxu0 0.0
      %8135 = vmatpush1.msra.mxu0 0.0
      %8136 = vmatprep.subr.mxu0 0.0
      %8137 = vmatpush1.msra.mxu0 0.0
      %8138 = vmatprep.subr.mxu0 0.0
      %8139 = vmatpush1.msra.mxu0 0.0
      %8140 = vmatprep.subr.mxu0 0.0
      %8141 = vmatpush1.msra.mxu0 0.0
      %8142 = vmatprep.subr.mxu0 0.0
      %8143 = vmatpush1.msra.mxu0 0.0
      %8144 = vmatprep.subr.mxu0 0.0
      %8145 = vmatpush1.msra.mxu0 0.0
      %8146 = vmatprep.subr.mxu0 0.0
      %8147 = vmatpush1.msra.mxu0 0.0
      %8148 = vmatprep.subr.mxu0 0.0
      %8149 = vmatpush1.msra.mxu0 0.0
      %8150 = vmatprep.subr.mxu0 0.0
      %8151 = vmatpush1.msra.mxu0 0.0
      %8152 = vmatprep.subr.mxu0 0.0
      %8153 = vmatpush1.msra.mxu0 0.0
      %8154 = vmatprep.subr.mxu0 0.0
      %8155 = vmatpush1.msra.mxu0 0.0
      %8156 = vmatprep.subr.mxu0 0.0
      %8157 = vmatpush1.msra.mxu0 0.0
      %8158 = vmatprep.mubr.f32.mxu0 0.0
      %8159 = vmatmul.mubr.f32.gmra.mrb[0].mxu0 %v7948
      %v8160 = vpop.f32.mrb[0].mxu0
      %v8161 = vadd.f32 0.0, %v8160
      %v8162 = vpop.f32.mrb[0].mxu0
      %8163 = vmatprep.mubr.f32.mxu0 0.0
      %8164 = vmatmul.mubr.f32.gmra.mrb[0].mxu0 %v7951
      %v8165 = vpop.f32.mrb[0].mxu0
      %v8166 = vadd.f32 0.0, %v8165
      %v8167 = vpop.f32.mrb[0].mxu0
      %8168 = vmatprep.mubr.f32.mxu0 0.0
      %8169 = vmatmul.mubr.f32.gmra.mrb[0].mxu0 %v7954
      %v8170 = vpop.f32.mrb[0].mxu0
      %v8171 = vpop.f32.mrb[0].mxu0
      %8172 = vmatprep.mubr.f32.mxu0 0.0
      %8173 = vmatmul.mubr.f32.gmra.mrb[0].mxu0 %v7957
      %v8174 = vpop.f32.mrb[0].mxu0
      %v8175 = vadd.f32 0.0, %v8174
      %v8176 = vpop.f32.mrb[0].mxu0
      %8177 = vmatprep.mubr.f32.mxu0 0.0
      %8178 = vmatmul.mubr.f32.gmra.mrb[0].mxu0 %v7960
      %v8179 = vpop.f32.mrb[0].mxu0
      %v8180 = vadd.f32 0.0, %v8179
      %v8181 = vpop.f32.mrb[0].mxu0
      %8182 = vmatprep.mubr.f32.mxu0 0.0
      %8183 = vmatmul.mubr.f32.gmra.mrb[0].mxu0 %v7963
      %v8184 = vpop.f32.mrb[0].mxu0
      %v8185 = vpop.f32.mrb[0].mxu0
      %8186 = vmatprep.mubr.f32.mxu0 0.0
      %8187 = vmatmul.mubr.f32.gmra.mrb[0].mxu0 %v7966
      %v8188 = vpop.f32.mrb[0].mxu0
      %v8189 = vadd.f32 0.0, %v8188
      %v8190 = vpop.f32.mrb[0].mxu0
      %8191 = vmatprep.mubr.f32.mxu0 0.0
      %8192 = vmatmul.mubr.f32.gmra.mrb[0].mxu0 %v7969
      %v8193 = vpop.f32.mrb[0].mxu0
      %v8194 = vadd.f32 0.0, %v8193
      %v8195 = vpop.f32.mrb[0].mxu0
      %8196 = vmatprep.mubr.f32.mxu0 0.0
      %8197 = vmatmul.mubr.f32.gmra.mrb[0].mxu0 %v7972
      %v8198 = vpop.f32.mrb[0].mxu0
      %v8199 = vpop.f32.mrb[0].mxu0
      %8200 = vmatprep.mubr.f32.mxu0 0.0
      %8201 = vmatmul.mubr.f32.gmra.mrb[0].mxu0 %v7975
      %v8202 = vpop.f32.mrb[0].mxu0
      %v8203 = vadd.f32 0.0, %v8202
      %v8204 = vpop.f32.mrb[0].mxu0
      %8205 = vmatprep.mubr.f32.mxu0 0.0
      %8206 = vmatmul.mubr.f32.gmra.mrb[0].mxu0 %v7978
      %v8207 = vpop.f32.mrb[0].mxu0
      %v8208 = vadd.f32 0.0, %v8207
      %v8209 = vpop.f32.mrb[0].mxu0
      %8210 = vmatprep.mubr.f32.mxu0 0.0
      %8211 = vmatmul.mubr.f32.gmra.mrb[0].mxu0 %v7981
      %v8212 = vpop.f32.mrb[0].mxu0
      %v8213 = vpop.f32.mrb[0].mxu0
      %8214 = vmatprep.mubr.f32.mxu0 0.0
      %8215 = vmatmul.mubr.f32.gmra.mrb[0].mxu0 %v7984
      %v8216 = vpop.f32.mrb[0].mxu0
      %v8217 = vadd.f32 0.0, %v8216
      %v8218 = vpop.f32.mrb[0].mxu0
      %8219 = vmatprep.mubr.f32.mxu0 0.0
      %8220 = vmatmul.mubr.f32.gmra.mrb[0].mxu0 %v7987
      %v8221 = vpop.f32.mrb[0].mxu0
      %v8222 = vadd.f32 0.0, %v8221
      %v8223 = vpop.f32.mrb[0].mxu0
      %8224 = vmatprep.mubr.f32.mxu0 0.0
      %8225 = vmatmul.mubr.f32.gmra.mrb[0].mxu0 %v7990
      %v8226 = vpop.f32.mrb[0].mxu0
      %v8227 = vpop.f32.mrb[0].mxu0
      %8228 = vmatprep.mubr.f32.mxu0 0.0
      %8229 = vmatmul.mubr.f32.gmra.mrb[0].mxu0 %v7993
      %v8230 = vpop.f32.mrb[0].mxu0
      %v8231 = vadd.f32 0.0, %v8230
      %v8232 = vpop.f32.mrb[0].mxu0
      %8233 = vmatprep.mubr.f32.mxu0 0.0
      %8234 = vmatmul.mubr.f32.gmra.mrb[0].mxu0 %v7996
      %v8235 = vpop.f32.mrb[0].mxu0
      %v8236 = vadd.f32 0.0, %v8235
      %v8237 = vpop.f32.mrb[0].mxu0
      %8238 = vmatprep.mubr.f32.mxu0 0.0
      %8239 = vmatmul.mubr.f32.gmra.mrb[0].mxu0 %v7999
      %v8240 = vpop.f32.mrb[0].mxu0
      %v8241 = vpop.f32.mrb[0].mxu0
      %8242 = vmatprep.mubr.f32.mxu0 0.0
      %8243 = vmatmul.mubr.f32.gmra.mrb[0].mxu0 %v8002
      %v8244 = vpop.f32.mrb[0].mxu0
      %v8245 = vadd.f32 0.0, %v8244
      %v8246 = vpop.f32.mrb[0].mxu0
      %8247 = vmatprep.mubr.f32.mxu0 0.0
      %8248 = vmatmul.mubr.f32.gmra.mrb[0].mxu0 %v8005
      %v8249 = vpop.f32.mrb[0].mxu0
      %v8250 = vadd.f32 0.0, %v8249
      %v8251 = vpop.f32.mrb[0].mxu0
      %8252 = vmatprep.mubr.f32.mxu0 0.0
      %8253 = vmatmul.mubr.f32.gmra.mrb[0].mxu0 %v8008
      %v8254 = vpop.f32.mrb[0].mxu0
      %v8255 = vpop.f32.mrb[0].mxu0
      %8256 = vmatprep.mubr.f32.mxu0 0.0
      %8257 = vmatmul.mubr.f32.gmra.mrb[0].mxu0 %v8011
      %v8258 = vpop.f32.mrb[0].mxu0
      %v8259 = vadd.f32 0.0, %v8258
      %v8260 = vpop.f32.mrb[0].mxu0
      %8261 = vmatprep.mubr.f32.mxu0 0.0
      %8262 = vmatmul.mubr.f32.gmra.mrb[0].mxu0 %v8014
      %v8263 = vpop.f32.mrb[0].mxu0
      %v8264 = vadd.f32 0.0, %v8263
      %v8265 = vpop.f32.mrb[0].mxu0
      %8266 = vmatprep.mubr.f32.mxu0 0.0
      %8267 = vmatmul.mubr.f32.gmra.mrb[0].mxu0 %v8017
      %v8268 = vpop.f32.mrb[0].mxu0
      %v8269 = vpop.f32.mrb[0].mxu0
      %8270 = vmatprep.mubr.f32.mxu0 0.0
      %8271 = vmatmul.mubr.f32.gmra.mrb[0].mxu0 %v8020
      %v8272 = vpop.f32.mrb[0].mxu0
      %v8273 = vadd.f32 0.0, %v8272
      %v8274 = vpop.f32.mrb[0].mxu0
      %8275 = vmatprep.mubr.f32.mxu0 0.0
      %8276 = vmatmul.mubr.f32.gmra.mrb[0].mxu0 %v8023
      %v8277 = vpop.f32.mrb[0].mxu0
      %v8278 = vadd.f32 0.0, %v8277
      %v8279 = vpop.f32.mrb[0].mxu0
      %8280 = vmatprep.mubr.f32.mxu0 0.0
      %8281 = vmatmul.mubr.f32.gmra.mrb[0].mxu0 %v8026
      %v8282 = vpop.f32.mrb[0].mxu0
      %v8283 = vpop.f32.mrb[0].mxu0
      %8284 = vmatprep.mubr.f32.mxu0 0.0
      %8285 = vmatmul.mubr.f32.gmra.mrb[0].mxu0 %v8029
      %v8286 = vpop.f32.mrb[0].mxu0
      %v8287 = vadd.f32 0.0, %v8286
      %v8288 = vpop.f32.mrb[0].mxu0
      %8289 = vmatprep.mubr.f32.mxu0 0.0
      %8290 = vmatmul.mubr.f32.gmra.mrb[0].mxu0 %v8032
      %v8291 = vpop.f32.mrb[0].mxu0
      %v8292 = vadd.f32 0.0, %v8291
      %v8293 = vpop.f32.mrb[0].mxu0
      %8294 = vmatprep.mubr.f32.mxu0 0.0
      %8295 = vmatmul.mubr.f32.gmra.mrb[0].mxu0 %v8035
      %v8296 = vpop.f32.mrb[0].mxu0
      %v8297 = vpop.f32.mrb[0].mxu0
      %8298 = vmatprep.mubr.f32.mxu0 0.0
      %8299 = vmatmul.mubr.f32.gmra.mrb[0].mxu0 %v8038
      %v8300 = vpop.f32.mrb[0].mxu0
      %v8301 = vadd.f32 0.0, %v8300
      %v8302 = vpop.f32.mrb[0].mxu0
      %8303 = vmatprep.mubr.f32.mxu0 0.0
      %8304 = vmatmul.mubr.f32.gmra.mrb[0].mxu0 %v8041
      %v8305 = vpop.f32.mrb[0].mxu0
      %v8306 = vadd.f32 0.0, %v8305
      %v8307 = vpop.f32.mrb[0].mxu0
      %8308 = vmatprep.mubr.f32.mxu0 0.0
      %8309 = vmatmul.mubr.f32.gmra.mrb[0].mxu0 %v8044
      %v8310 = vpop.f32.mrb[0].mxu0
      %v8311 = vpop.f32.mrb[0].mxu0
      %8312 = vmatprep.mubr.f32.mxu0 0.0
      %8313 = vmatmul.mubr.f32.gmra.mrb[0].mxu0 %v8047
      %v8314 = vpop.f32.mrb[0].mxu0
      %v8315 = vadd.f32 0.0, %v8314
      %v8316 = vpop.f32.mrb[0].mxu0
      %8317 = vmatprep.mubr.f32.mxu0 0.0
      %8318 = vmatmul.mubr.f32.gmra.mrb[0].mxu0 %v8050
      %v8319 = vpop.f32.mrb[0].mxu0
      %v8320 = vadd.f32 0.0, %v8319
      %v8321 = vpop.f32.mrb[0].mxu0
      %8322 = vmatprep.mubr.f32.mxu0 0.0
      %8323 = vmatmul.mubr.f32.gmra.mrb[0].mxu0 %v8053
      %v8324 = vpop.f32.mrb[0].mxu0
      %v8325 = vpop.f32.mrb[0].mxu0
      %8326 = vmatprep.mubr.f32.mxu0 0.0
      %8327 = vmatmul.mubr.f32.gmra.mrb[0].mxu0 %v8056
      %v8328 = vpop.f32.mrb[0].mxu0
      %v8329 = vadd.f32 0.0, %v8328
      %v8330 = vpop.f32.mrb[0].mxu0
      %8331 = vmatprep.mubr.f32.mxu0 0.0
      %8332 = vmatmul.mubr.f32.gmra.mrb[0].mxu0 %v8059
      %v8333 = vpop.f32.mrb[0].mxu0
      %v8334 = vadd.f32 0.0, %v8333
      %v8335 = vpop.f32.mrb[0].mxu0
      %8336 = vmatprep.mubr.f32.mxu0 0.0
      %8337 = vmatmul.mubr.f32.gmra.mrb[0].mxu0 %v8062
      %v8338 = vpop.f32.mrb[0].mxu0
      %v8339 = vpop.f32.mrb[0].mxu0
      %8340 = vmatprep.mubr.f32.mxu0 0.0
      %8341 = vmatmul.mubr.f32.gmra.mrb[0].mxu0 %v8065
      %v8342 = vpop.f32.mrb[0].mxu0
      %v8343 = vadd.f32 0.0, %v8342
      %v8344 = vpop.f32.mrb[0].mxu0
      %8345 = vmatprep.mubr.f32.mxu0 0.0
      %8346 = vmatmul.mubr.f32.gmra.mrb[0].mxu0 %v8068
      %v8347 = vpop.f32.mrb[0].mxu0
      %v8348 = vadd.f32 0.0, %v8347
      %v8349 = vpop.f32.mrb[0].mxu0
      %8350 = vmatprep.mubr.f32.mxu0 0.0
      %8351 = vmatmul.mubr.f32.gmra.mrb[0].mxu0 %v8071
      %v8352 = vpop.f32.mrb[0].mxu0
      %v8353 = vpop.f32.mrb[0].mxu0
      %8354 = vmatprep.mubr.f32.mxu0 0.0
      %8355 = vmatmul.mubr.f32.gmra.mrb[0].mxu0 %v8074
      %v8356 = vpop.f32.mrb[0].mxu0
      %v8357 = vadd.f32 0.0, %v8356
      %v8358 = vpop.f32.mrb[0].mxu0
      %8359 = vmatprep.mubr.f32.mxu0 0.0
      %8360 = vmatmul.mubr.f32.gmra.mrb[0].mxu0 %v8077
      %v8361 = vpop.f32.mrb[0].mxu0
      %v8362 = vadd.f32 0.0, %v8361
      %v8363 = vpop.f32.mrb[0].mxu0
      %8364 = vmatprep.mubr.f32.mxu0 0.0
      %8365 = vmatmul.mubr.f32.gmra.mrb[0].mxu0 %v8080
      %v8366 = vpop.f32.mrb[0].mxu0
      %v8367 = vpop.f32.mrb[0].mxu0
      %8368 = vmatprep.mubr.f32.mxu0 0.0
      %8369 = vmatmul.mubr.f32.gmra.mrb[0].mxu0 %v8083
      %v8370 = vpop.f32.mrb[0].mxu0
      %v8371 = vadd.f32 0.0, %v8370
      %v8372 = vpop.f32.mrb[0].mxu0
      %8373 = vmatprep.mubr.f32.mxu0 0.0
      %8374 = vmatmul.mubr.f32.gmra.mrb[0].mxu0 %v8086
      %v8375 = vpop.f32.mrb[0].mxu0
      %v8376 = vadd.f32 0.0, %v8375
      %v8377 = vpop.f32.mrb[0].mxu0
      %8378 = vmatprep.mubr.f32.mxu0 0.0
      %8379 = vmatmul.mubr.f32.gmra.mrb[0].mxu0 %v8089
      %v8380 = vpop.f32.mrb[0].mxu0
      %v8381 = vpop.f32.mrb[0].mxu0
      %8382 = vdwg.mxu0
      %v8383 = vadd.f32 %v7865, %v8161
      %v8384 = vadd.f32 %v7866, %v8166
      %v8385 = vadd.f32 %v7867, %v8175
      %v8386 = vadd.f32 %v7868, %v8180
      %v8387 = vadd.f32 %v7869, %v8189
      %v8388 = vadd.f32 %v7870, %v8194
      %v8389 = vadd.f32 %v7871, %v8203
      %v8390 = vadd.f32 %v7872, %v8208
      %v8391 = vadd.f32 %v7873, %v8217
      %v8392 = vadd.f32 %v7874, %v8222
      %v8393 = vadd.f32 %v7875, %v8231
      %v8394 = vadd.f32 %v7876, %v8236
      %v8395 = vadd.f32 %v7877, %v8245
      %v8396 = vadd.f32 %v7878, %v8250
      %v8397 = vadd.f32 %v7879, %v8259
      %v8398 = vadd.f32 %v7880, %v8264
      %v8399 = vadd.f32 %v7881, %v8273
      %v8400 = vadd.f32 %v7882, %v8278
      %v8401 = vadd.f32 %v7883, %v8287
      %v8402 = vadd.f32 %v7884, %v8292
      %v8403 = vadd.f32 %v7885, %v8301
      %v8404 = vadd.f32 %v7886, %v8306
      %v8405 = vadd.f32 %v7887, %v8315
      %v8406 = vadd.f32 %v7888, %v8320
      %v8407 = vadd.f32 %v7889, %v8329
      %v8408 = vadd.f32 %v7890, %v8334
      %v8409 = vadd.f32 %v7891, %v8343
      %v8410 = vadd.f32 %v7892, %v8348
      %v8411 = vadd.f32 %v7893, %v8357
      %v8412 = vadd.f32 %v7894, %v8362
      %v8413 = vadd.f32 %v7895, %v8371
      %v8414 = vadd.f32 %v7896, %v8376
      %v8415 = vld [vmem:[#allocation2 + $0x19] sm:$0xff]
      %v8416 = vld [vmem:[#allocation2 + $0x21] sm:$0xff]
      %v8417 = vld [vmem:[#allocation2 + $0x29] sm:$0xff]
      %v8418 = vld [vmem:[#allocation2 + $0x31] sm:$0xff]
      %v8419 = vld [vmem:[#allocation2 + $0x39] sm:$0xff]
      %v8420 = vld [vmem:[#allocation2 + $0x41] sm:$0xff]
      %v8421 = vld [vmem:[#allocation2 + $0x49] sm:$0xff]
      %v8422 = vld [vmem:[#allocation2 + $0x51] sm:$0xff]
      %v8423 = vld [vmem:[#allocation2 + $0x59] sm:$0xff]
      %v8424 = vld [vmem:[#allocation2 + $0x61] sm:$0xff]
      %v8425 = vld [vmem:[#allocation2 + $0x69] sm:$0xff]
      %v8426 = vld [vmem:[#allocation2 + $0x71] sm:$0xff]
      %v8427 = vld [vmem:[#allocation2 + $0x79] sm:$0xff]
      %v8428 = vld [vmem:[#allocation2 + $0x81] sm:$0xff]
      %v8429 = vld [vmem:[#allocation2 + $0x89] sm:$0xff]
      %v8430 = vld [vmem:[#allocation2 + $0x91] sm:$0xff]
      %v8431 = vld [vmem:[#allocation2 + $0x99] sm:$0xff]
      %v8432 = vld [vmem:[#allocation2 + $0xa1] sm:$0xff]
      %v8433 = vld [vmem:[#allocation2 + $0xa9] sm:$0xff]
      %v8434 = vld [vmem:[#allocation2 + $0xb1] sm:$0xff]
      %v8435 = vld [vmem:[#allocation2 + $0xb9] sm:$0xff]
      %v8436 = vld [vmem:[#allocation2 + $0xc1] sm:$0xff]
      %v8437 = vld [vmem:[#allocation2 + $0xc9] sm:$0xff]
      %v8438 = vld [vmem:[#allocation2 + $0xd1] sm:$0xff]
      %v8439 = vld [vmem:[#allocation2 + $0xd9] sm:$0xff]
      %v8440 = vld [vmem:[#allocation2 + $0xe1] sm:$0xff]
      %v8441 = vld [vmem:[#allocation2 + $0xe9] sm:$0xff]
      %v8442 = vld [vmem:[#allocation2 + $0xf1] sm:$0xff]
      %v8443 = vld [vmem:[#allocation2 + $0xf9] sm:$0xff]
      %v8444 = vld [vmem:[#allocation2 + $0x101] sm:$0xff]
      %v8445 = vld [vmem:[#allocation2 + $0x109] sm:$0xff]
      %v8446 = vld [vmem:[#allocation2 + $0x111] sm:$0xff]
      %v8447 = vld [vmem:[#allocation2 + $0x119] sm:$0xff]
      %v8448 = vld [vmem:[#allocation2 + $0x121] sm:$0xff]
      %v8449 = vld [vmem:[#allocation2 + $0x129] sm:$0xff]
      %v8450 = vld [vmem:[#allocation2 + $0x131] sm:$0xff]
      %v8451 = vld [vmem:[#allocation2 + $0x139] sm:$0xff]
      %v8452 = vld [vmem:[#allocation2 + $0x141] sm:$0xff]
      %v8453 = vld [vmem:[#allocation2 + $0x149] sm:$0xff]
      %v8454 = vld [vmem:[#allocation2 + $0x151] sm:$0xff]
      %v8455 = vld [vmem:[#allocation2 + $0x159] sm:$0xff]
      %v8456 = vld [vmem:[#allocation2 + $0x161] sm:$0xff]
      %v8457 = vld [vmem:[#allocation2 + $0x169] sm:$0xff]
      %v8458 = vld [vmem:[#allocation2 + $0x171] sm:$0xff]
      %v8459 = vld [vmem:[#allocation2 + $0x179] sm:$0xff]
      %v8460 = vld [vmem:[#allocation2 + $0x181] sm:$0xff]
      %v8461 = vld [vmem:[#allocation2 + $0x189] sm:$0xff]
      %v8462 = vld [vmem:[#allocation2 + $0x191] sm:$0xff]
      %s8463 = scalar_lea.vmem %s5, 16
      %v8464 = vld [vmem:[%s8463] sm:$0xf]
      %v8466 = vsel %vm417, %v8415, 0
      %v8469 = vsel %vm417, %v8416, 0
      %v8472 = vsel %vm417, %v8417, 0
      %v8475 = vsel %vm417, %v8418, 0
      %v8478 = vsel %vm417, %v8419, 0
      %v8481 = vsel %vm417, %v8420, 0
      %v8484 = vsel %vm417, %v8421, 0
      %v8487 = vsel %vm417, %v8422, 0
      %v8490 = vsel %vm417, %v8423, 0
      %v8493 = vsel %vm417, %v8424, 0
      %v8496 = vsel %vm417, %v8425, 0
      %v8499 = vsel %vm417, %v8426, 0
      %v8502 = vsel %vm417, %v8427, 0
      %v8505 = vsel %vm417, %v8428, 0
      %v8508 = vsel %vm417, %v8429, 0
      %v8511 = vsel %vm417, %v8430, 0
      %v8514 = vsel %vm417, %v8431, 0
      %v8517 = vsel %vm417, %v8432, 0
      %v8520 = vsel %vm417, %v8433, 0
      %v8523 = vsel %vm417, %v8434, 0
      %v8526 = vsel %vm417, %v8435, 0
      %v8529 = vsel %vm417, %v8436, 0
      %v8532 = vsel %vm417, %v8437, 0
      %v8535 = vsel %vm417, %v8438, 0
      %v8538 = vsel %vm417, %v8439, 0
      %v8541 = vsel %vm417, %v8440, 0
      %v8544 = vsel %vm417, %v8441, 0
      %v8547 = vsel %vm417, %v8442, 0
      %v8550 = vsel %vm417, %v8443, 0
      %v8553 = vsel %vm417, %v8444, 0
      %v8556 = vsel %vm417, %v8445, 0
      %v8559 = vsel %vm417, %v8446, 0
      %v8562 = vsel %vm417, %v8447, 0
      %v8565 = vsel %vm417, %v8448, 0
      %v8568 = vsel %vm417, %v8449, 0
      %v8571 = vsel %vm417, %v8450, 0
      %v8574 = vsel %vm417, %v8451, 0
      %v8577 = vsel %vm417, %v8452, 0
      %v8580 = vsel %vm417, %v8453, 0
      %v8583 = vsel %vm417, %v8454, 0
      %v8586 = vsel %vm417, %v8455, 0
      %v8589 = vsel %vm417, %v8456, 0
      %v8592 = vsel %vm417, %v8457, 0
      %v8595 = vsel %vm417, %v8458, 0
      %v8598 = vsel %vm417, %v8459, 0
      %v8601 = vsel %vm417, %v8460, 0
      %v8604 = vsel %vm417, %v8461, 0
      %v8607 = vsel %vm417, %v8462, 0
      %v8610 = vsel %vm580, %v8464, 0
      %8612 = vmatprep.subr.mxu0 0.0
      %8613 = vmatpush1.msra.mxu0 %v8610
      %8614 = vmatprep.subr.mxu0 0.0
      %8615 = vmatpush1.msra.mxu0 0.0
      %8616 = vmatprep.subr.mxu0 0.0
      %8617 = vmatpush1.msra.mxu0 0.0
      %8618 = vmatprep.subr.mxu0 0.0
      %8619 = vmatpush1.msra.mxu0 0.0
      %8620 = vmatprep.subr.mxu0 0.0
      %8621 = vmatpush1.msra.mxu0 0.0
      %8622 = vmatprep.subr.mxu0 0.0
      %8623 = vmatpush1.msra.mxu0 0.0
      %8624 = vmatprep.subr.mxu0 0.0
      %8625 = vmatpush1.msra.mxu0 0.0
      %8626 = vmatprep.subr.mxu0 0.0
      %8627 = vmatpush1.msra.mxu0 0.0
      %8628 = vmatprep.subr.mxu0 0.0
      %8629 = vmatpush1.msra.mxu0 0.0
      %8630 = vmatprep.subr.mxu0 0.0
      %8631 = vmatpush1.msra.mxu0 0.0
      %8632 = vmatprep.subr.mxu0 0.0
      %8633 = vmatpush1.msra.mxu0 0.0
      %8634 = vmatprep.subr.mxu0 0.0
      %8635 = vmatpush1.msra.mxu0 0.0
      %8636 = vmatprep.subr.mxu0 0.0
      %8637 = vmatpush1.msra.mxu0 0.0
      %8638 = vmatprep.subr.mxu0 0.0
      %8639 = vmatpush1.msra.mxu0 0.0
      %8640 = vmatprep.subr.mxu0 0.0
      %8641 = vmatpush1.msra.mxu0 0.0
      %8642 = vmatprep.subr.mxu0 0.0
      %8643 = vmatpush1.msra.mxu0 0.0
      %8644 = vmatprep.subr.mxu0 0.0
      %8645 = vmatpush1.msra.mxu0 0.0
      %8646 = vmatprep.subr.mxu0 0.0
      %8647 = vmatpush1.msra.mxu0 0.0
      %8648 = vmatprep.subr.mxu0 0.0
      %8649 = vmatpush1.msra.mxu0 0.0
      %8650 = vmatprep.subr.mxu0 0.0
      %8651 = vmatpush1.msra.mxu0 0.0
      %8652 = vmatprep.subr.mxu0 0.0
      %8653 = vmatpush1.msra.mxu0 0.0
      %8654 = vmatprep.subr.mxu0 0.0
      %8655 = vmatpush1.msra.mxu0 0.0
      %8656 = vmatprep.subr.mxu0 0.0
      %8657 = vmatpush1.msra.mxu0 0.0
      %8658 = vmatprep.subr.mxu0 0.0
      %8659 = vmatpush1.msra.mxu0 0.0
      %8660 = vmatprep.subr.mxu0 0.0
      %8661 = vmatpush1.msra.mxu0 0.0
      %8662 = vmatprep.subr.mxu0 0.0
      %8663 = vmatpush1.msra.mxu0 0.0
      %8664 = vmatprep.subr.mxu0 0.0
      %8665 = vmatpush1.msra.mxu0 0.0
      %8666 = vmatprep.subr.mxu0 0.0
      %8667 = vmatpush1.msra.mxu0 0.0
      %8668 = vmatprep.subr.mxu0 0.0
      %8669 = vmatpush1.msra.mxu0 0.0
      %8670 = vmatprep.subr.mxu0 0.0
      %8671 = vmatpush1.msra.mxu0 0.0
      %8672 = vmatprep.subr.mxu0 0.0
      %8673 = vmatpush1.msra.mxu0 0.0
      %8674 = vmatprep.subr.mxu0 0.0
      %8675 = vmatpush1.msra.mxu0 0.0
      %8676 = vmatprep.mubr.f32.mxu0 0.0
      %8677 = vmatmul.mubr.f32.gmra.mrb[0].mxu0 %v8466
      %v8678 = vpop.f32.mrb[0].mxu0
      %v8679 = vadd.f32 0.0, %v8678
      %v8680 = vpop.f32.mrb[0].mxu0
      %8681 = vmatprep.mubr.f32.mxu0 0.0
      %8682 = vmatmul.mubr.f32.gmra.mrb[0].mxu0 %v8469
      %v8683 = vpop.f32.mrb[0].mxu0
      %v8684 = vadd.f32 0.0, %v8683
      %v8685 = vpop.f32.mrb[0].mxu0
      %8686 = vmatprep.mubr.f32.mxu0 0.0
      %8687 = vmatmul.mubr.f32.gmra.mrb[0].mxu0 %v8472
      %v8688 = vpop.f32.mrb[0].mxu0
      %v8689 = vpop.f32.mrb[0].mxu0
      %8690 = vmatprep.mubr.f32.mxu0 0.0
      %8691 = vmatmul.mubr.f32.gmra.mrb[0].mxu0 %v8475
      %v8692 = vpop.f32.mrb[0].mxu0
      %v8693 = vadd.f32 0.0, %v8692
      %v8694 = vpop.f32.mrb[0].mxu0
      %8695 = vmatprep.mubr.f32.mxu0 0.0
      %8696 = vmatmul.mubr.f32.gmra.mrb[0].mxu0 %v8478
      %v8697 = vpop.f32.mrb[0].mxu0
      %v8698 = vadd.f32 0.0, %v8697
      %v8699 = vpop.f32.mrb[0].mxu0
      %8700 = vmatprep.mubr.f32.mxu0 0.0
      %8701 = vmatmul.mubr.f32.gmra.mrb[0].mxu0 %v8481
      %v8702 = vpop.f32.mrb[0].mxu0
      %v8703 = vpop.f32.mrb[0].mxu0
      %8704 = vmatprep.mubr.f32.mxu0 0.0
      %8705 = vmatmul.mubr.f32.gmra.mrb[0].mxu0 %v8484
      %v8706 = vpop.f32.mrb[0].mxu0
      %v8707 = vadd.f32 0.0, %v8706
      %v8708 = vpop.f32.mrb[0].mxu0
      %8709 = vmatprep.mubr.f32.mxu0 0.0
      %8710 = vmatmul.mubr.f32.gmra.mrb[0].mxu0 %v8487
      %v8711 = vpop.f32.mrb[0].mxu0
      %v8712 = vadd.f32 0.0, %v8711
      %v8713 = vpop.f32.mrb[0].mxu0
      %8714 = vmatprep.mubr.f32.mxu0 0.0
      %8715 = vmatmul.mubr.f32.gmra.mrb[0].mxu0 %v8490
      %v8716 = vpop.f32.mrb[0].mxu0
      %v8717 = vpop.f32.mrb[0].mxu0
      %8718 = vmatprep.mubr.f32.mxu0 0.0
      %8719 = vmatmul.mubr.f32.gmra.mrb[0].mxu0 %v8493
      %v8720 = vpop.f32.mrb[0].mxu0
      %v8721 = vadd.f32 0.0, %v8720
      %v8722 = vpop.f32.mrb[0].mxu0
      %8723 = vmatprep.mubr.f32.mxu0 0.0
      %8724 = vmatmul.mubr.f32.gmra.mrb[0].mxu0 %v8496
      %v8725 = vpop.f32.mrb[0].mxu0
      %v8726 = vadd.f32 0.0, %v8725
      %v8727 = vpop.f32.mrb[0].mxu0
      %8728 = vmatprep.mubr.f32.mxu0 0.0
      %8729 = vmatmul.mubr.f32.gmra.mrb[0].mxu0 %v8499
      %v8730 = vpop.f32.mrb[0].mxu0
      %v8731 = vpop.f32.mrb[0].mxu0
      %8732 = vmatprep.mubr.f32.mxu0 0.0
      %8733 = vmatmul.mubr.f32.gmra.mrb[0].mxu0 %v8502
      %v8734 = vpop.f32.mrb[0].mxu0
      %v8735 = vadd.f32 0.0, %v8734
      %v8736 = vpop.f32.mrb[0].mxu0
      %8737 = vmatprep.mubr.f32.mxu0 0.0
      %8738 = vmatmul.mubr.f32.gmra.mrb[0].mxu0 %v8505
      %v8739 = vpop.f32.mrb[0].mxu0
      %v8740 = vadd.f32 0.0, %v8739
      %v8741 = vpop.f32.mrb[0].mxu0
      %8742 = vmatprep.mubr.f32.mxu0 0.0
      %8743 = vmatmul.mubr.f32.gmra.mrb[0].mxu0 %v8508
      %v8744 = vpop.f32.mrb[0].mxu0
      %v8745 = vpop.f32.mrb[0].mxu0
      %8746 = vmatprep.mubr.f32.mxu0 0.0
      %8747 = vmatmul.mubr.f32.gmra.mrb[0].mxu0 %v8511
      %v8748 = vpop.f32.mrb[0].mxu0
      %v8749 = vadd.f32 0.0, %v8748
      %v8750 = vpop.f32.mrb[0].mxu0
      %8751 = vmatprep.mubr.f32.mxu0 0.0
      %8752 = vmatmul.mubr.f32.gmra.mrb[0].mxu0 %v8514
      %v8753 = vpop.f32.mrb[0].mxu0
      %v8754 = vadd.f32 0.0, %v8753
      %v8755 = vpop.f32.mrb[0].mxu0
      %8756 = vmatprep.mubr.f32.mxu0 0.0
      %8757 = vmatmul.mubr.f32.gmra.mrb[0].mxu0 %v8517
      %v8758 = vpop.f32.mrb[0].mxu0
      %v8759 = vpop.f32.mrb[0].mxu0
      %8760 = vmatprep.mubr.f32.mxu0 0.0
      %8761 = vmatmul.mubr.f32.gmra.mrb[0].mxu0 %v8520
      %v8762 = vpop.f32.mrb[0].mxu0
      %v8763 = vadd.f32 0.0, %v8762
      %v8764 = vpop.f32.mrb[0].mxu0
      %8765 = vmatprep.mubr.f32.mxu0 0.0
      %8766 = vmatmul.mubr.f32.gmra.mrb[0].mxu0 %v8523
      %v8767 = vpop.f32.mrb[0].mxu0
      %v8768 = vadd.f32 0.0, %v8767
      %v8769 = vpop.f32.mrb[0].mxu0
      %8770 = vmatprep.mubr.f32.mxu0 0.0
      %8771 = vmatmul.mubr.f32.gmra.mrb[0].mxu0 %v8526
      %v8772 = vpop.f32.mrb[0].mxu0
      %v8773 = vpop.f32.mrb[0].mxu0
      %8774 = vmatprep.mubr.f32.mxu0 0.0
      %8775 = vmatmul.mubr.f32.gmra.mrb[0].mxu0 %v8529
      %v8776 = vpop.f32.mrb[0].mxu0
      %v8777 = vadd.f32 0.0, %v8776
      %v8778 = vpop.f32.mrb[0].mxu0
      %8779 = vmatprep.mubr.f32.mxu0 0.0
      %8780 = vmatmul.mubr.f32.gmra.mrb[0].mxu0 %v8532
      %v8781 = vpop.f32.mrb[0].mxu0
      %v8782 = vadd.f32 0.0, %v8781
      %v8783 = vpop.f32.mrb[0].mxu0
      %8784 = vmatprep.mubr.f32.mxu0 0.0
      %8785 = vmatmul.mubr.f32.gmra.mrb[0].mxu0 %v8535
      %v8786 = vpop.f32.mrb[0].mxu0
      %v8787 = vpop.f32.mrb[0].mxu0
      %8788 = vmatprep.mubr.f32.mxu0 0.0
      %8789 = vmatmul.mubr.f32.gmra.mrb[0].mxu0 %v8538
      %v8790 = vpop.f32.mrb[0].mxu0
      %v8791 = vadd.f32 0.0, %v8790
      %v8792 = vpop.f32.mrb[0].mxu0
      %8793 = vmatprep.mubr.f32.mxu0 0.0
      %8794 = vmatmul.mubr.f32.gmra.mrb[0].mxu0 %v8541
      %v8795 = vpop.f32.mrb[0].mxu0
      %v8796 = vadd.f32 0.0, %v8795
      %v8797 = vpop.f32.mrb[0].mxu0
      %8798 = vmatprep.mubr.f32.mxu0 0.0
      %8799 = vmatmul.mubr.f32.gmra.mrb[0].mxu0 %v8544
      %v8800 = vpop.f32.mrb[0].mxu0
      %v8801 = vpop.f32.mrb[0].mxu0
      %8802 = vmatprep.mubr.f32.mxu0 0.0
      %8803 = vmatmul.mubr.f32.gmra.mrb[0].mxu0 %v8547
      %v8804 = vpop.f32.mrb[0].mxu0
      %v8805 = vadd.f32 0.0, %v8804
      %v8806 = vpop.f32.mrb[0].mxu0
      %8807 = vmatprep.mubr.f32.mxu0 0.0
      %8808 = vmatmul.mubr.f32.gmra.mrb[0].mxu0 %v8550
      %v8809 = vpop.f32.mrb[0].mxu0
      %v8810 = vadd.f32 0.0, %v8809
      %v8811 = vpop.f32.mrb[0].mxu0
      %8812 = vmatprep.mubr.f32.mxu0 0.0
      %8813 = vmatmul.mubr.f32.gmra.mrb[0].mxu0 %v8553
      %v8814 = vpop.f32.mrb[0].mxu0
      %v8815 = vpop.f32.mrb[0].mxu0
      %8816 = vmatprep.mubr.f32.mxu0 0.0
      %8817 = vmatmul.mubr.f32.gmra.mrb[0].mxu0 %v8556
      %v8818 = vpop.f32.mrb[0].mxu0
      %v8819 = vadd.f32 0.0, %v8818
      %v8820 = vpop.f32.mrb[0].mxu0
      %8821 = vmatprep.mubr.f32.mxu0 0.0
      %8822 = vmatmul.mubr.f32.gmra.mrb[0].mxu0 %v8559
      %v8823 = vpop.f32.mrb[0].mxu0
      %v8824 = vadd.f32 0.0, %v8823
      %v8825 = vpop.f32.mrb[0].mxu0
      %8826 = vmatprep.mubr.f32.mxu0 0.0
      %8827 = vmatmul.mubr.f32.gmra.mrb[0].mxu0 %v8562
      %v8828 = vpop.f32.mrb[0].mxu0
      %v8829 = vpop.f32.mrb[0].mxu0
      %8830 = vmatprep.mubr.f32.mxu0 0.0
      %8831 = vmatmul.mubr.f32.gmra.mrb[0].mxu0 %v8565
      %v8832 = vpop.f32.mrb[0].mxu0
      %v8833 = vadd.f32 0.0, %v8832
      %v8834 = vpop.f32.mrb[0].mxu0
      %8835 = vmatprep.mubr.f32.mxu0 0.0
      %8836 = vmatmul.mubr.f32.gmra.mrb[0].mxu0 %v8568
      %v8837 = vpop.f32.mrb[0].mxu0
      %v8838 = vadd.f32 0.0, %v8837
      %v8839 = vpop.f32.mrb[0].mxu0
      %8840 = vmatprep.mubr.f32.mxu0 0.0
      %8841 = vmatmul.mubr.f32.gmra.mrb[0].mxu0 %v8571
      %v8842 = vpop.f32.mrb[0].mxu0
      %v8843 = vpop.f32.mrb[0].mxu0
      %8844 = vmatprep.mubr.f32.mxu0 0.0
      %8845 = vmatmul.mubr.f32.gmra.mrb[0].mxu0 %v8574
      %v8846 = vpop.f32.mrb[0].mxu0
      %v8847 = vadd.f32 0.0, %v8846
      %v8848 = vpop.f32.mrb[0].mxu0
      %8849 = vmatprep.mubr.f32.mxu0 0.0
      %8850 = vmatmul.mubr.f32.gmra.mrb[0].mxu0 %v8577
      %v8851 = vpop.f32.mrb[0].mxu0
      %v8852 = vadd.f32 0.0, %v8851
      %v8853 = vpop.f32.mrb[0].mxu0
      %8854 = vmatprep.mubr.f32.mxu0 0.0
      %8855 = vmatmul.mubr.f32.gmra.mrb[0].mxu0 %v8580
      %v8856 = vpop.f32.mrb[0].mxu0
      %v8857 = vpop.f32.mrb[0].mxu0
      %8858 = vmatprep.mubr.f32.mxu0 0.0
      %8859 = vmatmul.mubr.f32.gmra.mrb[0].mxu0 %v8583
      %v8860 = vpop.f32.mrb[0].mxu0
      %v8861 = vadd.f32 0.0, %v8860
      %v8862 = vpop.f32.mrb[0].mxu0
      %8863 = vmatprep.mubr.f32.mxu0 0.0
      %8864 = vmatmul.mubr.f32.gmra.mrb[0].mxu0 %v8586
      %v8865 = vpop.f32.mrb[0].mxu0
      %v8866 = vadd.f32 0.0, %v8865
      %v8867 = vpop.f32.mrb[0].mxu0
      %8868 = vmatprep.mubr.f32.mxu0 0.0
      %8869 = vmatmul.mubr.f32.gmra.mrb[0].mxu0 %v8589
      %v8870 = vpop.f32.mrb[0].mxu0
      %v8871 = vpop.f32.mrb[0].mxu0
      %8872 = vmatprep.mubr.f32.mxu0 0.0
      %8873 = vmatmul.mubr.f32.gmra.mrb[0].mxu0 %v8592
      %v8874 = vpop.f32.mrb[0].mxu0
      %v8875 = vadd.f32 0.0, %v8874
      %v8876 = vpop.f32.mrb[0].mxu0
      %8877 = vmatprep.mubr.f32.mxu0 0.0
      %8878 = vmatmul.mubr.f32.gmra.mrb[0].mxu0 %v8595
      %v8879 = vpop.f32.mrb[0].mxu0
      %v8880 = vadd.f32 0.0, %v8879
      %v8881 = vpop.f32.mrb[0].mxu0
      %8882 = vmatprep.mubr.f32.mxu0 0.0
      %8883 = vmatmul.mubr.f32.gmra.mrb[0].mxu0 %v8598
      %v8884 = vpop.f32.mrb[0].mxu0
      %v8885 = vpop.f32.mrb[0].mxu0
      %8886 = vmatprep.mubr.f32.mxu0 0.0
      %8887 = vmatmul.mubr.f32.gmra.mrb[0].mxu0 %v8601
      %v8888 = vpop.f32.mrb[0].mxu0
      %v8889 = vadd.f32 0.0, %v8888
      %v8890 = vpop.f32.mrb[0].mxu0
      %8891 = vmatprep.mubr.f32.mxu0 0.0
      %8892 = vmatmul.mubr.f32.gmra.mrb[0].mxu0 %v8604
      %v8893 = vpop.f32.mrb[0].mxu0
      %v8894 = vadd.f32 0.0, %v8893
      %v8895 = vpop.f32.mrb[0].mxu0
      %8896 = vmatprep.mubr.f32.mxu0 0.0
      %8897 = vmatmul.mubr.f32.gmra.mrb[0].mxu0 %v8607
      %v8898 = vpop.f32.mrb[0].mxu0
      %v8899 = vpop.f32.mrb[0].mxu0
      %8900 = vdwg.mxu0
      %v8901 = vadd.f32 %v8383, %v8679
      %v8902 = vadd.f32 %v8384, %v8684
      %v8903 = vadd.f32 %v8385, %v8693
      %v8904 = vadd.f32 %v8386, %v8698
      %v8905 = vadd.f32 %v8387, %v8707
      %v8906 = vadd.f32 %v8388, %v8712
      %v8907 = vadd.f32 %v8389, %v8721
      %v8908 = vadd.f32 %v8390, %v8726
      %v8909 = vadd.f32 %v8391, %v8735
      %v8910 = vadd.f32 %v8392, %v8740
      %v8911 = vadd.f32 %v8393, %v8749
      %v8912 = vadd.f32 %v8394, %v8754
      %v8913 = vadd.f32 %v8395, %v8763
      %v8914 = vadd.f32 %v8396, %v8768
      %v8915 = vadd.f32 %v8397, %v8777
      %v8916 = vadd.f32 %v8398, %v8782
      %v8917 = vadd.f32 %v8399, %v8791
      %v8918 = vadd.f32 %v8400, %v8796
      %v8919 = vadd.f32 %v8401, %v8805
      %v8920 = vadd.f32 %v8402, %v8810
      %v8921 = vadd.f32 %v8403, %v8819
      %v8922 = vadd.f32 %v8404, %v8824
      %v8923 = vadd.f32 %v8405, %v8833
      %v8924 = vadd.f32 %v8406, %v8838
      %v8925 = vadd.f32 %v8407, %v8847
      %v8926 = vadd.f32 %v8408, %v8852
      %v8927 = vadd.f32 %v8409, %v8861
      %v8928 = vadd.f32 %v8410, %v8866
      %v8929 = vadd.f32 %v8411, %v8875
      %v8930 = vadd.f32 %v8412, %v8880
      %v8931 = vadd.f32 %v8413, %v8889
      %v8932 = vadd.f32 %v8414, %v8894
      %v8933 = vld [vmem:[#allocation2 + $0x1a] sm:$0xff]
      %v8934 = vld [vmem:[#allocation2 + $0x22] sm:$0xff]
      %v8935 = vld [vmem:[#allocation2 + $0x2a] sm:$0xff]
      %v8936 = vld [vmem:[#allocation2 + $0x32] sm:$0xff]
      %v8937 = vld [vmem:[#allocation2 + $0x3a] sm:$0xff]
      %v8938 = vld [vmem:[#allocation2 + $0x42] sm:$0xff]
      %v8939 = vld [vmem:[#allocation2 + $0x4a] sm:$0xff]
      %v8940 = vld [vmem:[#allocation2 + $0x52] sm:$0xff]
      %v8941 = vld [vmem:[#allocation2 + $0x5a] sm:$0xff]
      %v8942 = vld [vmem:[#allocation2 + $0x62] sm:$0xff]
      %v8943 = vld [vmem:[#allocation2 + $0x6a] sm:$0xff]
      %v8944 = vld [vmem:[#allocation2 + $0x72] sm:$0xff]
      %v8945 = vld [vmem:[#allocation2 + $0x7a] sm:$0xff]
      %v8946 = vld [vmem:[#allocation2 + $0x82] sm:$0xff]
      %v8947 = vld [vmem:[#allocation2 + $0x8a] sm:$0xff]
      %v8948 = vld [vmem:[#allocation2 + $0x92] sm:$0xff]
      %v8949 = vld [vmem:[#allocation2 + $0x9a] sm:$0xff]
      %v8950 = vld [vmem:[#allocation2 + $0xa2] sm:$0xff]
      %v8951 = vld [vmem:[#allocation2 + $0xaa] sm:$0xff]
      %v8952 = vld [vmem:[#allocation2 + $0xb2] sm:$0xff]
      %v8953 = vld [vmem:[#allocation2 + $0xba] sm:$0xff]
      %v8954 = vld [vmem:[#allocation2 + $0xc2] sm:$0xff]
      %v8955 = vld [vmem:[#allocation2 + $0xca] sm:$0xff]
      %v8956 = vld [vmem:[#allocation2 + $0xd2] sm:$0xff]
      %v8957 = vld [vmem:[#allocation2 + $0xda] sm:$0xff]
      %v8958 = vld [vmem:[#allocation2 + $0xe2] sm:$0xff]
      %v8959 = vld [vmem:[#allocation2 + $0xea] sm:$0xff]
      %v8960 = vld [vmem:[#allocation2 + $0xf2] sm:$0xff]
      %v8961 = vld [vmem:[#allocation2 + $0xfa] sm:$0xff]
      %v8962 = vld [vmem:[#allocation2 + $0x102] sm:$0xff]
      %v8963 = vld [vmem:[#allocation2 + $0x10a] sm:$0xff]
      %v8964 = vld [vmem:[#allocation2 + $0x112] sm:$0xff]
      %v8965 = vld [vmem:[#allocation2 + $0x11a] sm:$0xff]
      %v8966 = vld [vmem:[#allocation2 + $0x122] sm:$0xff]
      %v8967 = vld [vmem:[#allocation2 + $0x12a] sm:$0xff]
      %v8968 = vld [vmem:[#allocation2 + $0x132] sm:$0xff]
      %v8969 = vld [vmem:[#allocation2 + $0x13a] sm:$0xff]
      %v8970 = vld [vmem:[#allocation2 + $0x142] sm:$0xff]
      %v8971 = vld [vmem:[#allocation2 + $0x14a] sm:$0xff]
      %v8972 = vld [vmem:[#allocation2 + $0x152] sm:$0xff]
      %v8973 = vld [vmem:[#allocation2 + $0x15a] sm:$0xff]
      %v8974 = vld [vmem:[#allocation2 + $0x162] sm:$0xff]
      %v8975 = vld [vmem:[#allocation2 + $0x16a] sm:$0xff]
      %v8976 = vld [vmem:[#allocation2 + $0x172] sm:$0xff]
      %v8977 = vld [vmem:[#allocation2 + $0x17a] sm:$0xff]
      %v8978 = vld [vmem:[#allocation2 + $0x182] sm:$0xff]
      %v8979 = vld [vmem:[#allocation2 + $0x18a] sm:$0xff]
      %v8980 = vld [vmem:[#allocation2 + $0x192] sm:$0xff]
      %s8981 = scalar_lea.vmem %s5, 20
      %v8982 = vld [vmem:[%s8981] sm:$0xf]
      %v8984 = vsel %vm417, %v8933, 0
      %v8987 = vsel %vm417, %v8934, 0
      %v8990 = vsel %vm417, %v8935, 0
      %v8993 = vsel %vm417, %v8936, 0
      %v8996 = vsel %vm417, %v8937, 0
      %v8999 = vsel %vm417, %v8938, 0
      %v9002 = vsel %vm417, %v8939, 0
      %v9005 = vsel %vm417, %v8940, 0
      %v9008 = vsel %vm417, %v8941, 0
      %v9011 = vsel %vm417, %v8942, 0
      %v9014 = vsel %vm417, %v8943, 0
      %v9017 = vsel %vm417, %v8944, 0
      %v9020 = vsel %vm417, %v8945, 0
      %v9023 = vsel %vm417, %v8946, 0
      %v9026 = vsel %vm417, %v8947, 0
      %v9029 = vsel %vm417, %v8948, 0
      %v9032 = vsel %vm417, %v8949, 0
      %v9035 = vsel %vm417, %v8950, 0
      %v9038 = vsel %vm417, %v8951, 0
      %v9041 = vsel %vm417, %v8952, 0
      %v9044 = vsel %vm417, %v8953, 0
      %v9047 = vsel %vm417, %v8954, 0
      %v9050 = vsel %vm417, %v8955, 0
      %v9053 = vsel %vm417, %v8956, 0
      %v9056 = vsel %vm417, %v8957, 0
      %v9059 = vsel %vm417, %v8958, 0
      %v9062 = vsel %vm417, %v8959, 0
      %v9065 = vsel %vm417, %v8960, 0
      %v9068 = vsel %vm417, %v8961, 0
      %v9071 = vsel %vm417, %v8962, 0
      %v9074 = vsel %vm417, %v8963, 0
      %v9077 = vsel %vm417, %v8964, 0
      %v9080 = vsel %vm417, %v8965, 0
      %v9083 = vsel %vm417, %v8966, 0
      %v9086 = vsel %vm417, %v8967, 0
      %v9089 = vsel %vm417, %v8968, 0
      %v9092 = vsel %vm417, %v8969, 0
      %v9095 = vsel %vm417, %v8970, 0
      %v9098 = vsel %vm417, %v8971, 0
      %v9101 = vsel %vm417, %v8972, 0
      %v9104 = vsel %vm417, %v8973, 0
      %v9107 = vsel %vm417, %v8974, 0
      %v9110 = vsel %vm417, %v8975, 0
      %v9113 = vsel %vm417, %v8976, 0
      %v9116 = vsel %vm417, %v8977, 0
      %v9119 = vsel %vm417, %v8978, 0
      %v9122 = vsel %vm417, %v8979, 0
      %v9125 = vsel %vm417, %v8980, 0
      %v9128 = vsel %vm580, %v8982, 0
      %9130 = vmatprep.subr.mxu0 0.0
      %9131 = vmatpush1.msra.mxu0 %v9128
      %9132 = vmatprep.subr.mxu0 0.0
      %9133 = vmatpush1.msra.mxu0 0.0
      %9134 = vmatprep.subr.mxu0 0.0
      %9135 = vmatpush1.msra.mxu0 0.0
      %9136 = vmatprep.subr.mxu0 0.0
      %9137 = vmatpush1.msra.mxu0 0.0
      %9138 = vmatprep.subr.mxu0 0.0
      %9139 = vmatpush1.msra.mxu0 0.0
      %9140 = vmatprep.subr.mxu0 0.0
      %9141 = vmatpush1.msra.mxu0 0.0
      %9142 = vmatprep.subr.mxu0 0.0
      %9143 = vmatpush1.msra.mxu0 0.0
      %9144 = vmatprep.subr.mxu0 0.0
      %9145 = vmatpush1.msra.mxu0 0.0
      %9146 = vmatprep.subr.mxu0 0.0
      %9147 = vmatpush1.msra.mxu0 0.0
      %9148 = vmatprep.subr.mxu0 0.0
      %9149 = vmatpush1.msra.mxu0 0.0
      %9150 = vmatprep.subr.mxu0 0.0
      %9151 = vmatpush1.msra.mxu0 0.0
      %9152 = vmatprep.subr.mxu0 0.0
      %9153 = vmatpush1.msra.mxu0 0.0
      %9154 = vmatprep.subr.mxu0 0.0
      %9155 = vmatpush1.msra.mxu0 0.0
      %9156 = vmatprep.subr.mxu0 0.0
      %9157 = vmatpush1.msra.mxu0 0.0
      %9158 = vmatprep.subr.mxu0 0.0
      %9159 = vmatpush1.msra.mxu0 0.0
      %9160 = vmatprep.subr.mxu0 0.0
      %9161 = vmatpush1.msra.mxu0 0.0
      %9162 = vmatprep.subr.mxu0 0.0
      %9163 = vmatpush1.msra.mxu0 0.0
      %9164 = vmatprep.subr.mxu0 0.0
      %9165 = vmatpush1.msra.mxu0 0.0
      %9166 = vmatprep.subr.mxu0 0.0
      %9167 = vmatpush1.msra.mxu0 0.0
      %9168 = vmatprep.subr.mxu0 0.0
      %9169 = vmatpush1.msra.mxu0 0.0
      %9170 = vmatprep.subr.mxu0 0.0
      %9171 = vmatpush1.msra.mxu0 0.0
      %9172 = vmatprep.subr.mxu0 0.0
      %9173 = vmatpush1.msra.mxu0 0.0
      %9174 = vmatprep.subr.mxu0 0.0
      %9175 = vmatpush1.msra.mxu0 0.0
      %9176 = vmatprep.subr.mxu0 0.0
      %9177 = vmatpush1.msra.mxu0 0.0
      %9178 = vmatprep.subr.mxu0 0.0
      %9179 = vmatpush1.msra.mxu0 0.0
      %9180 = vmatprep.subr.mxu0 0.0
      %9181 = vmatpush1.msra.mxu0 0.0
      %9182 = vmatprep.subr.mxu0 0.0
      %9183 = vmatpush1.msra.mxu0 0.0
      %9184 = vmatprep.subr.mxu0 0.0
      %9185 = vmatpush1.msra.mxu0 0.0
      %9186 = vmatprep.subr.mxu0 0.0
      %9187 = vmatpush1.msra.mxu0 0.0
      %9188 = vmatprep.subr.mxu0 0.0
      %9189 = vmatpush1.msra.mxu0 0.0
      %9190 = vmatprep.subr.mxu0 0.0
      %9191 = vmatpush1.msra.mxu0 0.0
      %9192 = vmatprep.subr.mxu0 0.0
      %9193 = vmatpush1.msra.mxu0 0.0
      %9194 = vmatprep.mubr.f32.mxu0 0.0
      %9195 = vmatmul.mubr.f32.gmra.mrb[0].mxu0 %v8984
      %v9196 = vpop.f32.mrb[0].mxu0
      %v9197 = vadd.f32 0.0, %v9196
      %v9198 = vpop.f32.mrb[0].mxu0
      %9199 = vmatprep.mubr.f32.mxu0 0.0
      %9200 = vmatmul.mubr.f32.gmra.mrb[0].mxu0 %v8987
      %v9201 = vpop.f32.mrb[0].mxu0
      %v9202 = vadd.f32 0.0, %v9201
      %v9203 = vpop.f32.mrb[0].mxu0
      %9204 = vmatprep.mubr.f32.mxu0 0.0
      %9205 = vmatmul.mubr.f32.gmra.mrb[0].mxu0 %v8990
      %v9206 = vpop.f32.mrb[0].mxu0
      %v9207 = vpop.f32.mrb[0].mxu0
      %9208 = vmatprep.mubr.f32.mxu0 0.0
      %9209 = vmatmul.mubr.f32.gmra.mrb[0].mxu0 %v8993
      %v9210 = vpop.f32.mrb[0].mxu0
      %v9211 = vadd.f32 0.0, %v9210
      %v9212 = vpop.f32.mrb[0].mxu0
      %9213 = vmatprep.mubr.f32.mxu0 0.0
      %9214 = vmatmul.mubr.f32.gmra.mrb[0].mxu0 %v8996
      %v9215 = vpop.f32.mrb[0].mxu0
      %v9216 = vadd.f32 0.0, %v9215
      %v9217 = vpop.f32.mrb[0].mxu0
      %9218 = vmatprep.mubr.f32.mxu0 0.0
      %9219 = vmatmul.mubr.f32.gmra.mrb[0].mxu0 %v8999
      %v9220 = vpop.f32.mrb[0].mxu0
      %v9221 = vpop.f32.mrb[0].mxu0
      %9222 = vmatprep.mubr.f32.mxu0 0.0
      %9223 = vmatmul.mubr.f32.gmra.mrb[0].mxu0 %v9002
      %v9224 = vpop.f32.mrb[0].mxu0
      %v9225 = vadd.f32 0.0, %v9224
      %v9226 = vpop.f32.mrb[0].mxu0
      %9227 = vmatprep.mubr.f32.mxu0 0.0
      %9228 = vmatmul.mubr.f32.gmra.mrb[0].mxu0 %v9005
      %v9229 = vpop.f32.mrb[0].mxu0
      %v9230 = vadd.f32 0.0, %v9229
      %v9231 = vpop.f32.mrb[0].mxu0
      %9232 = vmatprep.mubr.f32.mxu0 0.0
      %9233 = vmatmul.mubr.f32.gmra.mrb[0].mxu0 %v9008
      %v9234 = vpop.f32.mrb[0].mxu0
      %v9235 = vpop.f32.mrb[0].mxu0
      %9236 = vmatprep.mubr.f32.mxu0 0.0
      %9237 = vmatmul.mubr.f32.gmra.mrb[0].mxu0 %v9011
      %v9238 = vpop.f32.mrb[0].mxu0
      %v9239 = vadd.f32 0.0, %v9238
      %v9240 = vpop.f32.mrb[0].mxu0
      %9241 = vmatprep.mubr.f32.mxu0 0.0
      %9242 = vmatmul.mubr.f32.gmra.mrb[0].mxu0 %v9014
      %v9243 = vpop.f32.mrb[0].mxu0
      %v9244 = vadd.f32 0.0, %v9243
      %v9245 = vpop.f32.mrb[0].mxu0
      %9246 = vmatprep.mubr.f32.mxu0 0.0
      %9247 = vmatmul.mubr.f32.gmra.mrb[0].mxu0 %v9017
      %v9248 = vpop.f32.mrb[0].mxu0
      %v9249 = vpop.f32.mrb[0].mxu0
      %9250 = vmatprep.mubr.f32.mxu0 0.0
      %9251 = vmatmul.mubr.f32.gmra.mrb[0].mxu0 %v9020
      %v9252 = vpop.f32.mrb[0].mxu0
      %v9253 = vadd.f32 0.0, %v9252
      %v9254 = vpop.f32.mrb[0].mxu0
      %9255 = vmatprep.mubr.f32.mxu0 0.0
      %9256 = vmatmul.mubr.f32.gmra.mrb[0].mxu0 %v9023
      %v9257 = vpop.f32.mrb[0].mxu0
      %v9258 = vadd.f32 0.0, %v9257
      %v9259 = vpop.f32.mrb[0].mxu0
      %9260 = vmatprep.mubr.f32.mxu0 0.0
      %9261 = vmatmul.mubr.f32.gmra.mrb[0].mxu0 %v9026
      %v9262 = vpop.f32.mrb[0].mxu0
      %v9263 = vpop.f32.mrb[0].mxu0
      %9264 = vmatprep.mubr.f32.mxu0 0.0
      %9265 = vmatmul.mubr.f32.gmra.mrb[0].mxu0 %v9029
      %v9266 = vpop.f32.mrb[0].mxu0
      %v9267 = vadd.f32 0.0, %v9266
      %v9268 = vpop.f32.mrb[0].mxu0
      %9269 = vmatprep.mubr.f32.mxu0 0.0
      %9270 = vmatmul.mubr.f32.gmra.mrb[0].mxu0 %v9032
      %v9271 = vpop.f32.mrb[0].mxu0
      %v9272 = vadd.f32 0.0, %v9271
      %v9273 = vpop.f32.mrb[0].mxu0
      %9274 = vmatprep.mubr.f32.mxu0 0.0
      %9275 = vmatmul.mubr.f32.gmra.mrb[0].mxu0 %v9035
      %v9276 = vpop.f32.mrb[0].mxu0
      %v9277 = vpop.f32.mrb[0].mxu0
      %9278 = vmatprep.mubr.f32.mxu0 0.0
      %9279 = vmatmul.mubr.f32.gmra.mrb[0].mxu0 %v9038
      %v9280 = vpop.f32.mrb[0].mxu0
      %v9281 = vadd.f32 0.0, %v9280
      %v9282 = vpop.f32.mrb[0].mxu0
      %9283 = vmatprep.mubr.f32.mxu0 0.0
      %9284 = vmatmul.mubr.f32.gmra.mrb[0].mxu0 %v9041
      %v9285 = vpop.f32.mrb[0].mxu0
      %v9286 = vadd.f32 0.0, %v9285
      %v9287 = vpop.f32.mrb[0].mxu0
      %9288 = vmatprep.mubr.f32.mxu0 0.0
      %9289 = vmatmul.mubr.f32.gmra.mrb[0].mxu0 %v9044
      %v9290 = vpop.f32.mrb[0].mxu0
      %v9291 = vpop.f32.mrb[0].mxu0
      %9292 = vmatprep.mubr.f32.mxu0 0.0
      %9293 = vmatmul.mubr.f32.gmra.mrb[0].mxu0 %v9047
      %v9294 = vpop.f32.mrb[0].mxu0
      %v9295 = vadd.f32 0.0, %v9294
      %v9296 = vpop.f32.mrb[0].mxu0
      %9297 = vmatprep.mubr.f32.mxu0 0.0
      %9298 = vmatmul.mubr.f32.gmra.mrb[0].mxu0 %v9050
      %v9299 = vpop.f32.mrb[0].mxu0
      %v9300 = vadd.f32 0.0, %v9299
      %v9301 = vpop.f32.mrb[0].mxu0
      %9302 = vmatprep.mubr.f32.mxu0 0.0
      %9303 = vmatmul.mubr.f32.gmra.mrb[0].mxu0 %v9053
      %v9304 = vpop.f32.mrb[0].mxu0
      %v9305 = vpop.f32.mrb[0].mxu0
      %9306 = vmatprep.mubr.f32.mxu0 0.0
      %9307 = vmatmul.mubr.f32.gmra.mrb[0].mxu0 %v9056
      %v9308 = vpop.f32.mrb[0].mxu0
      %v9309 = vadd.f32 0.0, %v9308
      %v9310 = vpop.f32.mrb[0].mxu0
      %9311 = vmatprep.mubr.f32.mxu0 0.0
      %9312 = vmatmul.mubr.f32.gmra.mrb[0].mxu0 %v9059
      %v9313 = vpop.f32.mrb[0].mxu0
      %v9314 = vadd.f32 0.0, %v9313
      %v9315 = vpop.f32.mrb[0].mxu0
      %9316 = vmatprep.mubr.f32.mxu0 0.0
      %9317 = vmatmul.mubr.f32.gmra.mrb[0].mxu0 %v9062
      %v9318 = vpop.f32.mrb[0].mxu0
      %v9319 = vpop.f32.mrb[0].mxu0
      %9320 = vmatprep.mubr.f32.mxu0 0.0
      %9321 = vmatmul.mubr.f32.gmra.mrb[0].mxu0 %v9065
      %v9322 = vpop.f32.mrb[0].mxu0
      %v9323 = vadd.f32 0.0, %v9322
      %v9324 = vpop.f32.mrb[0].mxu0
      %9325 = vmatprep.mubr.f32.mxu0 0.0
      %9326 = vmatmul.mubr.f32.gmra.mrb[0].mxu0 %v9068
      %v9327 = vpop.f32.mrb[0].mxu0
      %v9328 = vadd.f32 0.0, %v9327
      %v9329 = vpop.f32.mrb[0].mxu0
      %9330 = vmatprep.mubr.f32.mxu0 0.0
      %9331 = vmatmul.mubr.f32.gmra.mrb[0].mxu0 %v9071
      %v9332 = vpop.f32.mrb[0].mxu0
      %v9333 = vpop.f32.mrb[0].mxu0
      %9334 = vmatprep.mubr.f32.mxu0 0.0
      %9335 = vmatmul.mubr.f32.gmra.mrb[0].mxu0 %v9074
      %v9336 = vpop.f32.mrb[0].mxu0
      %v9337 = vadd.f32 0.0, %v9336
      %v9338 = vpop.f32.mrb[0].mxu0
      %9339 = vmatprep.mubr.f32.mxu0 0.0
      %9340 = vmatmul.mubr.f32.gmra.mrb[0].mxu0 %v9077
      %v9341 = vpop.f32.mrb[0].mxu0
      %v9342 = vadd.f32 0.0, %v9341
      %v9343 = vpop.f32.mrb[0].mxu0
      %9344 = vmatprep.mubr.f32.mxu0 0.0
      %9345 = vmatmul.mubr.f32.gmra.mrb[0].mxu0 %v9080
      %v9346 = vpop.f32.mrb[0].mxu0
      %v9347 = vpop.f32.mrb[0].mxu0
      %9348 = vmatprep.mubr.f32.mxu0 0.0
      %9349 = vmatmul.mubr.f32.gmra.mrb[0].mxu0 %v9083
      %v9350 = vpop.f32.mrb[0].mxu0
      %v9351 = vadd.f32 0.0, %v9350
      %v9352 = vpop.f32.mrb[0].mxu0
      %9353 = vmatprep.mubr.f32.mxu0 0.0
      %9354 = vmatmul.mubr.f32.gmra.mrb[0].mxu0 %v9086
      %v9355 = vpop.f32.mrb[0].mxu0
      %v9356 = vadd.f32 0.0, %v9355
      %v9357 = vpop.f32.mrb[0].mxu0
      %9358 = vmatprep.mubr.f32.mxu0 0.0
      %9359 = vmatmul.mubr.f32.gmra.mrb[0].mxu0 %v9089
      %v9360 = vpop.f32.mrb[0].mxu0
      %v9361 = vpop.f32.mrb[0].mxu0
      %9362 = vmatprep.mubr.f32.mxu0 0.0
      %9363 = vmatmul.mubr.f32.gmra.mrb[0].mxu0 %v9092
      %v9364 = vpop.f32.mrb[0].mxu0
      %v9365 = vadd.f32 0.0, %v9364
      %v9366 = vpop.f32.mrb[0].mxu0
      %9367 = vmatprep.mubr.f32.mxu0 0.0
      %9368 = vmatmul.mubr.f32.gmra.mrb[0].mxu0 %v9095
      %v9369 = vpop.f32.mrb[0].mxu0
      %v9370 = vadd.f32 0.0, %v9369
      %v9371 = vpop.f32.mrb[0].mxu0
      %9372 = vmatprep.mubr.f32.mxu0 0.0
      %9373 = vmatmul.mubr.f32.gmra.mrb[0].mxu0 %v9098
      %v9374 = vpop.f32.mrb[0].mxu0
      %v9375 = vpop.f32.mrb[0].mxu0
      %9376 = vmatprep.mubr.f32.mxu0 0.0
      %9377 = vmatmul.mubr.f32.gmra.mrb[0].mxu0 %v9101
      %v9378 = vpop.f32.mrb[0].mxu0
      %v9379 = vadd.f32 0.0, %v9378
      %v9380 = vpop.f32.mrb[0].mxu0
      %9381 = vmatprep.mubr.f32.mxu0 0.0
      %9382 = vmatmul.mubr.f32.gmra.mrb[0].mxu0 %v9104
      %v9383 = vpop.f32.mrb[0].mxu0
      %v9384 = vadd.f32 0.0, %v9383
      %v9385 = vpop.f32.mrb[0].mxu0
      %9386 = vmatprep.mubr.f32.mxu0 0.0
      %9387 = vmatmul.mubr.f32.gmra.mrb[0].mxu0 %v9107
      %v9388 = vpop.f32.mrb[0].mxu0
      %v9389 = vpop.f32.mrb[0].mxu0
      %9390 = vmatprep.mubr.f32.mxu0 0.0
      %9391 = vmatmul.mubr.f32.gmra.mrb[0].mxu0 %v9110
      %v9392 = vpop.f32.mrb[0].mxu0
      %v9393 = vadd.f32 0.0, %v9392
      %v9394 = vpop.f32.mrb[0].mxu0
      %9395 = vmatprep.mubr.f32.mxu0 0.0
      %9396 = vmatmul.mubr.f32.gmra.mrb[0].mxu0 %v9113
      %v9397 = vpop.f32.mrb[0].mxu0
      %v9398 = vadd.f32 0.0, %v9397
      %v9399 = vpop.f32.mrb[0].mxu0
      %9400 = vmatprep.mubr.f32.mxu0 0.0
      %9401 = vmatmul.mubr.f32.gmra.mrb[0].mxu0 %v9116
      %v9402 = vpop.f32.mrb[0].mxu0
      %v9403 = vpop.f32.mrb[0].mxu0
      %9404 = vmatprep.mubr.f32.mxu0 0.0
      %9405 = vmatmul.mubr.f32.gmra.mrb[0].mxu0 %v9119
      %v9406 = vpop.f32.mrb[0].mxu0
      %v9407 = vadd.f32 0.0, %v9406
      %v9408 = vpop.f32.mrb[0].mxu0
      %9409 = vmatprep.mubr.f32.mxu0 0.0
      %9410 = vmatmul.mubr.f32.gmra.mrb[0].mxu0 %v9122
      %v9411 = vpop.f32.mrb[0].mxu0
      %v9412 = vadd.f32 0.0, %v9411
      %v9413 = vpop.f32.mrb[0].mxu0
      %9414 = vmatprep.mubr.f32.mxu0 0.0
      %9415 = vmatmul.mubr.f32.gmra.mrb[0].mxu0 %v9125
      %v9416 = vpop.f32.mrb[0].mxu0
      %v9417 = vpop.f32.mrb[0].mxu0
      %9418 = vdwg.mxu0
      %v9419 = vadd.f32 %v8901, %v9197
      %v9420 = vadd.f32 %v8902, %v9202
      %v9421 = vadd.f32 %v8903, %v9211
      %v9422 = vadd.f32 %v8904, %v9216
      %v9423 = vadd.f32 %v8905, %v9225
      %v9424 = vadd.f32 %v8906, %v9230
      %v9425 = vadd.f32 %v8907, %v9239
      %v9426 = vadd.f32 %v8908, %v9244
      %v9427 = vadd.f32 %v8909, %v9253
      %v9428 = vadd.f32 %v8910, %v9258
      %v9429 = vadd.f32 %v8911, %v9267
      %v9430 = vadd.f32 %v8912, %v9272
      %v9431 = vadd.f32 %v8913, %v9281
      %v9432 = vadd.f32 %v8914, %v9286
      %v9433 = vadd.f32 %v8915, %v9295
      %v9434 = vadd.f32 %v8916, %v9300
      %v9435 = vadd.f32 %v8917, %v9309
      %v9436 = vadd.f32 %v8918, %v9314
      %v9437 = vadd.f32 %v8919, %v9323
      %v9438 = vadd.f32 %v8920, %v9328
      %v9439 = vadd.f32 %v8921, %v9337
      %v9440 = vadd.f32 %v8922, %v9342
      %v9441 = vadd.f32 %v8923, %v9351
      %v9442 = vadd.f32 %v8924, %v9356
      %v9443 = vadd.f32 %v8925, %v9365
      %v9444 = vadd.f32 %v8926, %v9370
      %v9445 = vadd.f32 %v8927, %v9379
      %v9446 = vadd.f32 %v8928, %v9384
      %v9447 = vadd.f32 %v8929, %v9393
      %v9448 = vadd.f32 %v8930, %v9398
      %v9449 = vadd.f32 %v8931, %v9407
      %v9450 = vadd.f32 %v8932, %v9412
      %v9451 = vld [vmem:[#allocation2 + $0x30] sm:$0xff]
      %v9452 = vld [vmem:[#allocation2 + $0x38] sm:$0xff]
      %v9453 = vld [vmem:[#allocation2 + $0x40] sm:$0xff]
      %v9454 = vld [vmem:[#allocation2 + $0x48] sm:$0xff]
      %v9455 = vld [vmem:[#allocation2 + $0x50] sm:$0xff]
      %v9456 = vld [vmem:[#allocation2 + $0x58] sm:$0xff]
      %v9457 = vld [vmem:[#allocation2 + $0x60] sm:$0xff]
      %v9458 = vld [vmem:[#allocation2 + $0x68] sm:$0xff]
      %v9459 = vld [vmem:[#allocation2 + $0x70] sm:$0xff]
      %v9460 = vld [vmem:[#allocation2 + $0x78] sm:$0xff]
      %v9461 = vld [vmem:[#allocation2 + $0x80] sm:$0xff]
      %v9462 = vld [vmem:[#allocation2 + $0x88] sm:$0xff]
      %v9463 = vld [vmem:[#allocation2 + $0x90] sm:$0xff]
      %v9464 = vld [vmem:[#allocation2 + $0x98] sm:$0xff]
      %v9465 = vld [vmem:[#allocation2 + $0xa0] sm:$0xff]
      %v9466 = vld [vmem:[#allocation2 + $0xa8] sm:$0xff]
      %v9467 = vld [vmem:[#allocation2 + $0xb0] sm:$0xff]
      %v9468 = vld [vmem:[#allocation2 + $0xb8] sm:$0xff]
      %v9469 = vld [vmem:[#allocation2 + $0xc0] sm:$0xff]
      %v9470 = vld [vmem:[#allocation2 + $0xc8] sm:$0xff]
      %v9471 = vld [vmem:[#allocation2 + $0xd0] sm:$0xff]
      %v9472 = vld [vmem:[#allocation2 + $0xd8] sm:$0xff]
      %v9473 = vld [vmem:[#allocation2 + $0xe0] sm:$0xff]
      %v9474 = vld [vmem:[#allocation2 + $0xe8] sm:$0xff]
      %v9475 = vld [vmem:[#allocation2 + $0xf0] sm:$0xff]
      %v9476 = vld [vmem:[#allocation2 + $0xf8] sm:$0xff]
      %v9477 = vld [vmem:[#allocation2 + $0x100] sm:$0xff]
      %v9478 = vld [vmem:[#allocation2 + $0x108] sm:$0xff]
      %v9479 = vld [vmem:[#allocation2 + $0x110] sm:$0xff]
      %v9480 = vld [vmem:[#allocation2 + $0x118] sm:$0xff]
      %v9481 = vld [vmem:[#allocation2 + $0x120] sm:$0xff]
      %v9482 = vld [vmem:[#allocation2 + $0x128] sm:$0xff]
      %v9483 = vld [vmem:[#allocation2 + $0x130] sm:$0xff]
      %v9484 = vld [vmem:[#allocation2 + $0x138] sm:$0xff]
      %v9485 = vld [vmem:[#allocation2 + $0x140] sm:$0xff]
      %v9486 = vld [vmem:[#allocation2 + $0x148] sm:$0xff]
      %v9487 = vld [vmem:[#allocation2 + $0x150] sm:$0xff]
      %v9488 = vld [vmem:[#allocation2 + $0x158] sm:$0xff]
      %v9489 = vld [vmem:[#allocation2 + $0x160] sm:$0xff]
      %v9490 = vld [vmem:[#allocation2 + $0x168] sm:$0xff]
      %v9491 = vld [vmem:[#allocation2 + $0x170] sm:$0xff]
      %v9492 = vld [vmem:[#allocation2 + $0x178] sm:$0xff]
      %v9493 = vld [vmem:[#allocation2 + $0x180] sm:$0xff]
      %v9494 = vld [vmem:[#allocation2 + $0x188] sm:$0xff]
      %v9495 = vld [vmem:[#allocation2 + $0x190] sm:$0xff]
      %v9496 = vld [vmem:[#allocation2 + $0x198] sm:$0xff]
      %v9497 = vld [vmem:[#allocation2 + $0x1a0] sm:$0xff]
      %v9498 = vld [vmem:[#allocation2 + $0x1a8] sm:$0xff]
      %s9499 = scalar_lea.vmem %s5, 24
      %v9500 = vld [vmem:[%s9499] sm:$0xf]
      %v9502 = vsel %vm417, %v9451, 0
      %v9505 = vsel %vm417, %v9452, 0
      %v9508 = vsel %vm417, %v9453, 0
      %v9511 = vsel %vm417, %v9454, 0
      %v9514 = vsel %vm417, %v9455, 0
      %v9517 = vsel %vm417, %v9456, 0
      %v9520 = vsel %vm417, %v9457, 0
      %v9523 = vsel %vm417, %v9458, 0
      %v9526 = vsel %vm417, %v9459, 0
      %v9529 = vsel %vm417, %v9460, 0
      %v9532 = vsel %vm417, %v9461, 0
      %v9535 = vsel %vm417, %v9462, 0
      %v9538 = vsel %vm417, %v9463, 0
      %v9541 = vsel %vm417, %v9464, 0
      %v9544 = vsel %vm417, %v9465, 0
      %v9547 = vsel %vm417, %v9466, 0
      %v9550 = vsel %vm417, %v9467, 0
      %v9553 = vsel %vm417, %v9468, 0
      %v9556 = vsel %vm417, %v9469, 0
      %v9559 = vsel %vm417, %v9470, 0
      %v9562 = vsel %vm417, %v9471, 0
      %v9565 = vsel %vm417, %v9472, 0
      %v9568 = vsel %vm417, %v9473, 0
      %v9571 = vsel %vm417, %v9474, 0
      %v9574 = vsel %vm417, %v9475, 0
      %v9577 = vsel %vm417, %v9476, 0
      %v9580 = vsel %vm417, %v9477, 0
      %v9583 = vsel %vm417, %v9478, 0
      %v9586 = vsel %vm417, %v9479, 0
      %v9589 = vsel %vm417, %v9480, 0
      %v9592 = vsel %vm417, %v9481, 0
      %v9595 = vsel %vm417, %v9482, 0
      %v9598 = vsel %vm417, %v9483, 0
      %v9601 = vsel %vm417, %v9484, 0
      %v9604 = vsel %vm417, %v9485, 0
      %v9607 = vsel %vm417, %v9486, 0
      %v9610 = vsel %vm417, %v9487, 0
      %v9613 = vsel %vm417, %v9488, 0
      %v9616 = vsel %vm417, %v9489, 0
      %v9619 = vsel %vm417, %v9490, 0
      %v9622 = vsel %vm417, %v9491, 0
      %v9625 = vsel %vm417, %v9492, 0
      %v9628 = vsel %vm417, %v9493, 0
      %v9631 = vsel %vm417, %v9494, 0
      %v9634 = vsel %vm417, %v9495, 0
      %v9637 = vsel %vm417, %v9496, 0
      %v9640 = vsel %vm417, %v9497, 0
      %v9643 = vsel %vm417, %v9498, 0
      %v9646 = vsel %vm580, %v9500, 0
      %9648 = vmatprep.subr.mxu0 0.0
      %9649 = vmatpush1.msra.mxu0 %v9646
      %9650 = vmatprep.subr.mxu0 0.0
      %9651 = vmatpush1.msra.mxu0 0.0
      %9652 = vmatprep.subr.mxu0 0.0
      %9653 = vmatpush1.msra.mxu0 0.0
      %9654 = vmatprep.subr.mxu0 0.0
      %9655 = vmatpush1.msra.mxu0 0.0
      %9656 = vmatprep.subr.mxu0 0.0
      %9657 = vmatpush1.msra.mxu0 0.0
      %9658 = vmatprep.subr.mxu0 0.0
      %9659 = vmatpush1.msra.mxu0 0.0
      %9660 = vmatprep.subr.mxu0 0.0
      %9661 = vmatpush1.msra.mxu0 0.0
      %9662 = vmatprep.subr.mxu0 0.0
      %9663 = vmatpush1.msra.mxu0 0.0
      %9664 = vmatprep.subr.mxu0 0.0
      %9665 = vmatpush1.msra.mxu0 0.0
      %9666 = vmatprep.subr.mxu0 0.0
      %9667 = vmatpush1.msra.mxu0 0.0
      %9668 = vmatprep.subr.mxu0 0.0
      %9669 = vmatpush1.msra.mxu0 0.0
      %9670 = vmatprep.subr.mxu0 0.0
      %9671 = vmatpush1.msra.mxu0 0.0
      %9672 = vmatprep.subr.mxu0 0.0
      %9673 = vmatpush1.msra.mxu0 0.0
      %9674 = vmatprep.subr.mxu0 0.0
      %9675 = vmatpush1.msra.mxu0 0.0
      %9676 = vmatprep.subr.mxu0 0.0
      %9677 = vmatpush1.msra.mxu0 0.0
      %9678 = vmatprep.subr.mxu0 0.0
      %9679 = vmatpush1.msra.mxu0 0.0
      %9680 = vmatprep.subr.mxu0 0.0
      %9681 = vmatpush1.msra.mxu0 0.0
      %9682 = vmatprep.subr.mxu0 0.0
      %9683 = vmatpush1.msra.mxu0 0.0
      %9684 = vmatprep.subr.mxu0 0.0
      %9685 = vmatpush1.msra.mxu0 0.0
      %9686 = vmatprep.subr.mxu0 0.0
      %9687 = vmatpush1.msra.mxu0 0.0
      %9688 = vmatprep.subr.mxu0 0.0
      %9689 = vmatpush1.msra.mxu0 0.0
      %9690 = vmatprep.subr.mxu0 0.0
      %9691 = vmatpush1.msra.mxu0 0.0
      %9692 = vmatprep.subr.mxu0 0.0
      %9693 = vmatpush1.msra.mxu0 0.0
      %9694 = vmatprep.subr.mxu0 0.0
      %9695 = vmatpush1.msra.mxu0 0.0
      %9696 = vmatprep.subr.mxu0 0.0
      %9697 = vmatpush1.msra.mxu0 0.0
      %9698 = vmatprep.subr.mxu0 0.0
      %9699 = vmatpush1.msra.mxu0 0.0
      %9700 = vmatprep.subr.mxu0 0.0
      %9701 = vmatpush1.msra.mxu0 0.0
      %9702 = vmatprep.subr.mxu0 0.0
      %9703 = vmatpush1.msra.mxu0 0.0
      %9704 = vmatprep.subr.mxu0 0.0
      %9705 = vmatpush1.msra.mxu0 0.0
      %9706 = vmatprep.subr.mxu0 0.0
      %9707 = vmatpush1.msra.mxu0 0.0
      %9708 = vmatprep.subr.mxu0 0.0
      %9709 = vmatpush1.msra.mxu0 0.0
      %9710 = vmatprep.subr.mxu0 0.0
      %9711 = vmatpush1.msra.mxu0 0.0
      %9712 = vmatprep.mubr.f32.mxu0 0.0
      %9713 = vmatmul.mubr.f32.gmra.mrb[0].mxu0 %v9502
      %v9714 = vpop.f32.mrb[0].mxu0
      %v9715 = vadd.f32 0.0, %v9714
      %v9716 = vpop.f32.mrb[0].mxu0
      %9717 = vmatprep.mubr.f32.mxu0 0.0
      %9718 = vmatmul.mubr.f32.gmra.mrb[0].mxu0 %v9505
      %v9719 = vpop.f32.mrb[0].mxu0
      %v9720 = vadd.f32 0.0, %v9719
      %v9721 = vpop.f32.mrb[0].mxu0
      %9722 = vmatprep.mubr.f32.mxu0 0.0
      %9723 = vmatmul.mubr.f32.gmra.mrb[0].mxu0 %v9508
      %v9724 = vpop.f32.mrb[0].mxu0
      %v9725 = vpop.f32.mrb[0].mxu0
      %9726 = vmatprep.mubr.f32.mxu0 0.0
      %9727 = vmatmul.mubr.f32.gmra.mrb[0].mxu0 %v9511
      %v9728 = vpop.f32.mrb[0].mxu0
      %v9729 = vadd.f32 0.0, %v9728
      %v9730 = vpop.f32.mrb[0].mxu0
      %9731 = vmatprep.mubr.f32.mxu0 0.0
      %9732 = vmatmul.mubr.f32.gmra.mrb[0].mxu0 %v9514
      %v9733 = vpop.f32.mrb[0].mxu0
      %v9734 = vadd.f32 0.0, %v9733
      %v9735 = vpop.f32.mrb[0].mxu0
      %9736 = vmatprep.mubr.f32.mxu0 0.0
      %9737 = vmatmul.mubr.f32.gmra.mrb[0].mxu0 %v9517
      %v9738 = vpop.f32.mrb[0].mxu0
      %v9739 = vpop.f32.mrb[0].mxu0
      %9740 = vmatprep.mubr.f32.mxu0 0.0
      %9741 = vmatmul.mubr.f32.gmra.mrb[0].mxu0 %v9520
      %v9742 = vpop.f32.mrb[0].mxu0
      %v9743 = vadd.f32 0.0, %v9742
      %v9744 = vpop.f32.mrb[0].mxu0
      %9745 = vmatprep.mubr.f32.mxu0 0.0
      %9746 = vmatmul.mubr.f32.gmra.mrb[0].mxu0 %v9523
      %v9747 = vpop.f32.mrb[0].mxu0
      %v9748 = vadd.f32 0.0, %v9747
      %v9749 = vpop.f32.mrb[0].mxu0
      %9750 = vmatprep.mubr.f32.mxu0 0.0
      %9751 = vmatmul.mubr.f32.gmra.mrb[0].mxu0 %v9526
      %v9752 = vpop.f32.mrb[0].mxu0
      %v9753 = vpop.f32.mrb[0].mxu0
      %9754 = vmatprep.mubr.f32.mxu0 0.0
      %9755 = vmatmul.mubr.f32.gmra.mrb[0].mxu0 %v9529
      %v9756 = vpop.f32.mrb[0].mxu0
      %v9757 = vadd.f32 0.0, %v9756
      %v9758 = vpop.f32.mrb[0].mxu0
      %9759 = vmatprep.mubr.f32.mxu0 0.0
      %9760 = vmatmul.mubr.f32.gmra.mrb[0].mxu0 %v9532
      %v9761 = vpop.f32.mrb[0].mxu0
      %v9762 = vadd.f32 0.0, %v9761
      %v9763 = vpop.f32.mrb[0].mxu0
      %9764 = vmatprep.mubr.f32.mxu0 0.0
      %9765 = vmatmul.mubr.f32.gmra.mrb[0].mxu0 %v9535
      %v9766 = vpop.f32.mrb[0].mxu0
      %v9767 = vpop.f32.mrb[0].mxu0
      %9768 = vmatprep.mubr.f32.mxu0 0.0
      %9769 = vmatmul.mubr.f32.gmra.mrb[0].mxu0 %v9538
      %v9770 = vpop.f32.mrb[0].mxu0
      %v9771 = vadd.f32 0.0, %v9770
      %v9772 = vpop.f32.mrb[0].mxu0
      %9773 = vmatprep.mubr.f32.mxu0 0.0
      %9774 = vmatmul.mubr.f32.gmra.mrb[0].mxu0 %v9541
      %v9775 = vpop.f32.mrb[0].mxu0
      %v9776 = vadd.f32 0.0, %v9775
      %v9777 = vpop.f32.mrb[0].mxu0
      %9778 = vmatprep.mubr.f32.mxu0 0.0
      %9779 = vmatmul.mubr.f32.gmra.mrb[0].mxu0 %v9544
      %v9780 = vpop.f32.mrb[0].mxu0
      %v9781 = vpop.f32.mrb[0].mxu0
      %9782 = vmatprep.mubr.f32.mxu0 0.0
      %9783 = vmatmul.mubr.f32.gmra.mrb[0].mxu0 %v9547
      %v9784 = vpop.f32.mrb[0].mxu0
      %v9785 = vadd.f32 0.0, %v9784
      %v9786 = vpop.f32.mrb[0].mxu0
      %9787 = vmatprep.mubr.f32.mxu0 0.0
      %9788 = vmatmul.mubr.f32.gmra.mrb[0].mxu0 %v9550
      %v9789 = vpop.f32.mrb[0].mxu0
      %v9790 = vadd.f32 0.0, %v9789
      %v9791 = vpop.f32.mrb[0].mxu0
      %9792 = vmatprep.mubr.f32.mxu0 0.0
      %9793 = vmatmul.mubr.f32.gmra.mrb[0].mxu0 %v9553
      %v9794 = vpop.f32.mrb[0].mxu0
      %v9795 = vpop.f32.mrb[0].mxu0
      %9796 = vmatprep.mubr.f32.mxu0 0.0
      %9797 = vmatmul.mubr.f32.gmra.mrb[0].mxu0 %v9556
      %v9798 = vpop.f32.mrb[0].mxu0
      %v9799 = vadd.f32 0.0, %v9798
      %v9800 = vpop.f32.mrb[0].mxu0
      %9801 = vmatprep.mubr.f32.mxu0 0.0
      %9802 = vmatmul.mubr.f32.gmra.mrb[0].mxu0 %v9559
      %v9803 = vpop.f32.mrb[0].mxu0
      %v9804 = vadd.f32 0.0, %v9803
      %v9805 = vpop.f32.mrb[0].mxu0
      %9806 = vmatprep.mubr.f32.mxu0 0.0
      %9807 = vmatmul.mubr.f32.gmra.mrb[0].mxu0 %v9562
      %v9808 = vpop.f32.mrb[0].mxu0
      %v9809 = vpop.f32.mrb[0].mxu0
      %9810 = vmatprep.mubr.f32.mxu0 0.0
      %9811 = vmatmul.mubr.f32.gmra.mrb[0].mxu0 %v9565
      %v9812 = vpop.f32.mrb[0].mxu0
      %v9813 = vadd.f32 0.0, %v9812
      %v9814 = vpop.f32.mrb[0].mxu0
      %9815 = vmatprep.mubr.f32.mxu0 0.0
      %9816 = vmatmul.mubr.f32.gmra.mrb[0].mxu0 %v9568
      %v9817 = vpop.f32.mrb[0].mxu0
      %v9818 = vadd.f32 0.0, %v9817
      %v9819 = vpop.f32.mrb[0].mxu0
      %9820 = vmatprep.mubr.f32.mxu0 0.0
      %9821 = vmatmul.mubr.f32.gmra.mrb[0].mxu0 %v9571
      %v9822 = vpop.f32.mrb[0].mxu0
      %v9823 = vpop.f32.mrb[0].mxu0
      %9824 = vmatprep.mubr.f32.mxu0 0.0
      %9825 = vmatmul.mubr.f32.gmra.mrb[0].mxu0 %v9574
      %v9826 = vpop.f32.mrb[0].mxu0
      %v9827 = vadd.f32 0.0, %v9826
      %v9828 = vpop.f32.mrb[0].mxu0
      %9829 = vmatprep.mubr.f32.mxu0 0.0
      %9830 = vmatmul.mubr.f32.gmra.mrb[0].mxu0 %v9577
      %v9831 = vpop.f32.mrb[0].mxu0
      %v9832 = vadd.f32 0.0, %v9831
      %v9833 = vpop.f32.mrb[0].mxu0
      %9834 = vmatprep.mubr.f32.mxu0 0.0
      %9835 = vmatmul.mubr.f32.gmra.mrb[0].mxu0 %v9580
      %v9836 = vpop.f32.mrb[0].mxu0
      %v9837 = vpop.f32.mrb[0].mxu0
      %9838 = vmatprep.mubr.f32.mxu0 0.0
      %9839 = vmatmul.mubr.f32.gmra.mrb[0].mxu0 %v9583
      %v9840 = vpop.f32.mrb[0].mxu0
      %v9841 = vadd.f32 0.0, %v9840
      %v9842 = vpop.f32.mrb[0].mxu0
      %9843 = vmatprep.mubr.f32.mxu0 0.0
      %9844 = vmatmul.mubr.f32.gmra.mrb[0].mxu0 %v9586
      %v9845 = vpop.f32.mrb[0].mxu0
      %v9846 = vadd.f32 0.0, %v9845
      %v9847 = vpop.f32.mrb[0].mxu0
      %9848 = vmatprep.mubr.f32.mxu0 0.0
      %9849 = vmatmul.mubr.f32.gmra.mrb[0].mxu0 %v9589
      %v9850 = vpop.f32.mrb[0].mxu0
      %v9851 = vpop.f32.mrb[0].mxu0
      %9852 = vmatprep.mubr.f32.mxu0 0.0
      %9853 = vmatmul.mubr.f32.gmra.mrb[0].mxu0 %v9592
      %v9854 = vpop.f32.mrb[0].mxu0
      %v9855 = vadd.f32 0.0, %v9854
      %v9856 = vpop.f32.mrb[0].mxu0
      %9857 = vmatprep.mubr.f32.mxu0 0.0
      %9858 = vmatmul.mubr.f32.gmra.mrb[0].mxu0 %v9595
      %v9859 = vpop.f32.mrb[0].mxu0
      %v9860 = vadd.f32 0.0, %v9859
      %v9861 = vpop.f32.mrb[0].mxu0
      %9862 = vmatprep.mubr.f32.mxu0 0.0
      %9863 = vmatmul.mubr.f32.gmra.mrb[0].mxu0 %v9598
      %v9864 = vpop.f32.mrb[0].mxu0
      %v9865 = vpop.f32.mrb[0].mxu0
      %9866 = vmatprep.mubr.f32.mxu0 0.0
      %9867 = vmatmul.mubr.f32.gmra.mrb[0].mxu0 %v9601
      %v9868 = vpop.f32.mrb[0].mxu0
      %v9869 = vadd.f32 0.0, %v9868
      %v9870 = vpop.f32.mrb[0].mxu0
      %9871 = vmatprep.mubr.f32.mxu0 0.0
      %9872 = vmatmul.mubr.f32.gmra.mrb[0].mxu0 %v9604
      %v9873 = vpop.f32.mrb[0].mxu0
      %v9874 = vadd.f32 0.0, %v9873
      %v9875 = vpop.f32.mrb[0].mxu0
      %9876 = vmatprep.mubr.f32.mxu0 0.0
      %9877 = vmatmul.mubr.f32.gmra.mrb[0].mxu0 %v9607
      %v9878 = vpop.f32.mrb[0].mxu0
      %v9879 = vpop.f32.mrb[0].mxu0
      %9880 = vmatprep.mubr.f32.mxu0 0.0
      %9881 = vmatmul.mubr.f32.gmra.mrb[0].mxu0 %v9610
      %v9882 = vpop.f32.mrb[0].mxu0
      %v9883 = vadd.f32 0.0, %v9882
      %v9884 = vpop.f32.mrb[0].mxu0
      %9885 = vmatprep.mubr.f32.mxu0 0.0
      %9886 = vmatmul.mubr.f32.gmra.mrb[0].mxu0 %v9613
      %v9887 = vpop.f32.mrb[0].mxu0
      %v9888 = vadd.f32 0.0, %v9887
      %v9889 = vpop.f32.mrb[0].mxu0
      %9890 = vmatprep.mubr.f32.mxu0 0.0
      %9891 = vmatmul.mubr.f32.gmra.mrb[0].mxu0 %v9616
      %v9892 = vpop.f32.mrb[0].mxu0
      %v9893 = vpop.f32.mrb[0].mxu0
      %9894 = vmatprep.mubr.f32.mxu0 0.0
      %9895 = vmatmul.mubr.f32.gmra.mrb[0].mxu0 %v9619
      %v9896 = vpop.f32.mrb[0].mxu0
      %v9897 = vadd.f32 0.0, %v9896
      %v9898 = vpop.f32.mrb[0].mxu0
      %9899 = vmatprep.mubr.f32.mxu0 0.0
      %9900 = vmatmul.mubr.f32.gmra.mrb[0].mxu0 %v9622
      %v9901 = vpop.f32.mrb[0].mxu0
      %v9902 = vadd.f32 0.0, %v9901
      %v9903 = vpop.f32.mrb[0].mxu0
      %9904 = vmatprep.mubr.f32.mxu0 0.0
      %9905 = vmatmul.mubr.f32.gmra.mrb[0].mxu0 %v9625
      %v9906 = vpop.f32.mrb[0].mxu0
      %v9907 = vpop.f32.mrb[0].mxu0
      %9908 = vmatprep.mubr.f32.mxu0 0.0
      %9909 = vmatmul.mubr.f32.gmra.mrb[0].mxu0 %v9628
      %v9910 = vpop.f32.mrb[0].mxu0
      %v9911 = vadd.f32 0.0, %v9910
      %v9912 = vpop.f32.mrb[0].mxu0
      %9913 = vmatprep.mubr.f32.mxu0 0.0
      %9914 = vmatmul.mubr.f32.gmra.mrb[0].mxu0 %v9631
      %v9915 = vpop.f32.mrb[0].mxu0
      %v9916 = vadd.f32 0.0, %v9915
      %v9917 = vpop.f32.mrb[0].mxu0
      %9918 = vmatprep.mubr.f32.mxu0 0.0
      %9919 = vmatmul.mubr.f32.gmra.mrb[0].mxu0 %v9634
      %v9920 = vpop.f32.mrb[0].mxu0
      %v9921 = vpop.f32.mrb[0].mxu0
      %9922 = vmatprep.mubr.f32.mxu0 0.0
      %9923 = vmatmul.mubr.f32.gmra.mrb[0].mxu0 %v9637
      %v9924 = vpop.f32.mrb[0].mxu0
      %v9925 = vadd.f32 0.0, %v9924
      %v9926 = vpop.f32.mrb[0].mxu0
      %9927 = vmatprep.mubr.f32.mxu0 0.0
      %9928 = vmatmul.mubr.f32.gmra.mrb[0].mxu0 %v9640
      %v9929 = vpop.f32.mrb[0].mxu0
      %v9930 = vadd.f32 0.0, %v9929
      %v9931 = vpop.f32.mrb[0].mxu0
      %9932 = vmatprep.mubr.f32.mxu0 0.0
      %9933 = vmatmul.mubr.f32.gmra.mrb[0].mxu0 %v9643
      %v9934 = vpop.f32.mrb[0].mxu0
      %v9935 = vpop.f32.mrb[0].mxu0
      %9936 = vdwg.mxu0
      %v9937 = vadd.f32 %v9419, %v9715
      %v9938 = vadd.f32 %v9420, %v9720
      %v9939 = vadd.f32 %v9421, %v9729
      %v9940 = vadd.f32 %v9422, %v9734
      %v9941 = vadd.f32 %v9423, %v9743
      %v9942 = vadd.f32 %v9424, %v9748
      %v9943 = vadd.f32 %v9425, %v9757
      %v9944 = vadd.f32 %v9426, %v9762
      %v9945 = vadd.f32 %v9427, %v9771
      %v9946 = vadd.f32 %v9428, %v9776
      %v9947 = vadd.f32 %v9429, %v9785
      %v9948 = vadd.f32 %v9430, %v9790
      %v9949 = vadd.f32 %v9431, %v9799
      %v9950 = vadd.f32 %v9432, %v9804
      %v9951 = vadd.f32 %v9433, %v9813
      %v9952 = vadd.f32 %v9434, %v9818
      %v9953 = vadd.f32 %v9435, %v9827
      %v9954 = vadd.f32 %v9436, %v9832
      %v9955 = vadd.f32 %v9437, %v9841
      %v9956 = vadd.f32 %v9438, %v9846
      %v9957 = vadd.f32 %v9439, %v9855
      %v9958 = vadd.f32 %v9440, %v9860
      %v9959 = vadd.f32 %v9441, %v9869
      %v9960 = vadd.f32 %v9442, %v9874
      %v9961 = vadd.f32 %v9443, %v9883
      %v9962 = vadd.f32 %v9444, %v9888
      %v9963 = vadd.f32 %v9445, %v9897
      %v9964 = vadd.f32 %v9446, %v9902
      %v9965 = vadd.f32 %v9447, %v9911
      %v9966 = vadd.f32 %v9448, %v9916
      %v9967 = vadd.f32 %v9449, %v9925
      %v9968 = vadd.f32 %v9450, %v9930
      %v9969 = vld [vmem:[#allocation2 + $0x31] sm:$0xff]
      %v9970 = vld [vmem:[#allocation2 + $0x39] sm:$0xff]
      %v9971 = vld [vmem:[#allocation2 + $0x41] sm:$0xff]
      %v9972 = vld [vmem:[#allocation2 + $0x49] sm:$0xff]
      %v9973 = vld [vmem:[#allocation2 + $0x51] sm:$0xff]
      %v9974 = vld [vmem:[#allocation2 + $0x59] sm:$0xff]
      %v9975 = vld [vmem:[#allocation2 + $0x61] sm:$0xff]
      %v9976 = vld [vmem:[#allocation2 + $0x69] sm:$0xff]
      %v9977 = vld [vmem:[#allocation2 + $0x71] sm:$0xff]
      %v9978 = vld [vmem:[#allocation2 + $0x79] sm:$0xff]
      %v9979 = vld [vmem:[#allocation2 + $0x81] sm:$0xff]
      %v9980 = vld [vmem:[#allocation2 + $0x89] sm:$0xff]
      %v9981 = vld [vmem:[#allocation2 + $0x91] sm:$0xff]
      %v9982 = vld [vmem:[#allocation2 + $0x99] sm:$0xff]
      %v9983 = vld [vmem:[#allocation2 + $0xa1] sm:$0xff]
      %v9984 = vld [vmem:[#allocation2 + $0xa9] sm:$0xff]
      %v9985 = vld [vmem:[#allocation2 + $0xb1] sm:$0xff]
      %v9986 = vld [vmem:[#allocation2 + $0xb9] sm:$0xff]
      %v9987 = vld [vmem:[#allocation2 + $0xc1] sm:$0xff]
      %v9988 = vld [vmem:[#allocation2 + $0xc9] sm:$0xff]
      %v9989 = vld [vmem:[#allocation2 + $0xd1] sm:$0xff]
      %v9990 = vld [vmem:[#allocation2 + $0xd9] sm:$0xff]
      %v9991 = vld [vmem:[#allocation2 + $0xe1] sm:$0xff]
      %v9992 = vld [vmem:[#allocation2 + $0xe9] sm:$0xff]
      %v9993 = vld [vmem:[#allocation2 + $0xf1] sm:$0xff]
      %v9994 = vld [vmem:[#allocation2 + $0xf9] sm:$0xff]
      %v9995 = vld [vmem:[#allocation2 + $0x101] sm:$0xff]
      %v9996 = vld [vmem:[#allocation2 + $0x109] sm:$0xff]
      %v9997 = vld [vmem:[#allocation2 + $0x111] sm:$0xff]
      %v9998 = vld [vmem:[#allocation2 + $0x119] sm:$0xff]
      %v9999 = vld [vmem:[#allocation2 + $0x121] sm:$0xff]
      %v10000 = vld [vmem:[#allocation2 + $0x129] sm:$0xff]
      %v10001 = vld [vmem:[#allocation2 + $0x131] sm:$0xff]
      %v10002 = vld [vmem:[#allocation2 + $0x139] sm:$0xff]
      %v10003 = vld [vmem:[#allocation2 + $0x141] sm:$0xff]
      %v10004 = vld [vmem:[#allocation2 + $0x149] sm:$0xff]
      %v10005 = vld [vmem:[#allocation2 + $0x151] sm:$0xff]
      %v10006 = vld [vmem:[#allocation2 + $0x159] sm:$0xff]
      %v10007 = vld [vmem:[#allocation2 + $0x161] sm:$0xff]
      %v10008 = vld [vmem:[#allocation2 + $0x169] sm:$0xff]
      %v10009 = vld [vmem:[#allocation2 + $0x171] sm:$0xff]
      %v10010 = vld [vmem:[#allocation2 + $0x179] sm:$0xff]
      %v10011 = vld [vmem:[#allocation2 + $0x181] sm:$0xff]
      %v10012 = vld [vmem:[#allocation2 + $0x189] sm:$0xff]
      %v10013 = vld [vmem:[#allocation2 + $0x191] sm:$0xff]
      %v10014 = vld [vmem:[#allocation2 + $0x199] sm:$0xff]
      %v10015 = vld [vmem:[#allocation2 + $0x1a1] sm:$0xff]
      %v10016 = vld [vmem:[#allocation2 + $0x1a9] sm:$0xff]
      %s10017 = scalar_lea.vmem %s5, 28
      %v10018 = vld [vmem:[%s10017] sm:$0xf]
      %v10020 = vsel %vm417, %v9969, 0
      %v10023 = vsel %vm417, %v9970, 0
      %v10026 = vsel %vm417, %v9971, 0
      %v10029 = vsel %vm417, %v9972, 0
      %v10032 = vsel %vm417, %v9973, 0
      %v10035 = vsel %vm417, %v9974, 0
      %v10038 = vsel %vm417, %v9975, 0
      %v10041 = vsel %vm417, %v9976, 0
      %v10044 = vsel %vm417, %v9977, 0
      %v10047 = vsel %vm417, %v9978, 0
      %v10050 = vsel %vm417, %v9979, 0
      %v10053 = vsel %vm417, %v9980, 0
      %v10056 = vsel %vm417, %v9981, 0
      %v10059 = vsel %vm417, %v9982, 0
      %v10062 = vsel %vm417, %v9983, 0
      %v10065 = vsel %vm417, %v9984, 0
      %v10068 = vsel %vm417, %v9985, 0
      %v10071 = vsel %vm417, %v9986, 0
      %v10074 = vsel %vm417, %v9987, 0
      %v10077 = vsel %vm417, %v9988, 0
      %v10080 = vsel %vm417, %v9989, 0
      %v10083 = vsel %vm417, %v9990, 0
      %v10086 = vsel %vm417, %v9991, 0
      %v10089 = vsel %vm417, %v9992, 0
      %v10092 = vsel %vm417, %v9993, 0
      %v10095 = vsel %vm417, %v9994, 0
      %v10098 = vsel %vm417, %v9995, 0
      %v10101 = vsel %vm417, %v9996, 0
      %v10104 = vsel %vm417, %v9997, 0
      %v10107 = vsel %vm417, %v9998, 0
      %v10110 = vsel %vm417, %v9999, 0
      %v10113 = vsel %vm417, %v10000, 0
      %v10116 = vsel %vm417, %v10001, 0
      %v10119 = vsel %vm417, %v10002, 0
      %v10122 = vsel %vm417, %v10003, 0
      %v10125 = vsel %vm417, %v10004, 0
      %v10128 = vsel %vm417, %v10005, 0
      %v10131 = vsel %vm417, %v10006, 0
      %v10134 = vsel %vm417, %v10007, 0
      %v10137 = vsel %vm417, %v10008, 0
      %v10140 = vsel %vm417, %v10009, 0
      %v10143 = vsel %vm417, %v10010, 0
      %v10146 = vsel %vm417, %v10011, 0
      %v10149 = vsel %vm417, %v10012, 0
      %v10152 = vsel %vm417, %v10013, 0
      %v10155 = vsel %vm417, %v10014, 0
      %v10158 = vsel %vm417, %v10015, 0
      %v10161 = vsel %vm417, %v10016, 0
      %v10164 = vsel %vm580, %v10018, 0
      %10166 = vmatprep.subr.mxu0 0.0
      %10167 = vmatpush1.msra.mxu0 %v10164
      %10168 = vmatprep.subr.mxu0 0.0
      %10169 = vmatpush1.msra.mxu0 0.0
      %10170 = vmatprep.subr.mxu0 0.0
      %10171 = vmatpush1.msra.mxu0 0.0
      %10172 = vmatprep.subr.mxu0 0.0
      %10173 = vmatpush1.msra.mxu0 0.0
      %10174 = vmatprep.subr.mxu0 0.0
      %10175 = vmatpush1.msra.mxu0 0.0
      %10176 = vmatprep.subr.mxu0 0.0
      %10177 = vmatpush1.msra.mxu0 0.0
      %10178 = vmatprep.subr.mxu0 0.0
      %10179 = vmatpush1.msra.mxu0 0.0
      %10180 = vmatprep.subr.mxu0 0.0
      %10181 = vmatpush1.msra.mxu0 0.0
      %10182 = vmatprep.subr.mxu0 0.0
      %10183 = vmatpush1.msra.mxu0 0.0
      %10184 = vmatprep.subr.mxu0 0.0
      %10185 = vmatpush1.msra.mxu0 0.0
      %10186 = vmatprep.subr.mxu0 0.0
      %10187 = vmatpush1.msra.mxu0 0.0
      %10188 = vmatprep.subr.mxu0 0.0
      %10189 = vmatpush1.msra.mxu0 0.0
      %10190 = vmatprep.subr.mxu0 0.0
      %10191 = vmatpush1.msra.mxu0 0.0
      %10192 = vmatprep.subr.mxu0 0.0
      %10193 = vmatpush1.msra.mxu0 0.0
      %10194 = vmatprep.subr.mxu0 0.0
      %10195 = vmatpush1.msra.mxu0 0.0
      %10196 = vmatprep.subr.mxu0 0.0
      %10197 = vmatpush1.msra.mxu0 0.0
      %10198 = vmatprep.subr.mxu0 0.0
      %10199 = vmatpush1.msra.mxu0 0.0
      %10200 = vmatprep.subr.mxu0 0.0
      %10201 = vmatpush1.msra.mxu0 0.0
      %10202 = vmatprep.subr.mxu0 0.0
      %10203 = vmatpush1.msra.mxu0 0.0
      %10204 = vmatprep.subr.mxu0 0.0
      %10205 = vmatpush1.msra.mxu0 0.0
      %10206 = vmatprep.subr.mxu0 0.0
      %10207 = vmatpush1.msra.mxu0 0.0
      %10208 = vmatprep.subr.mxu0 0.0
      %10209 = vmatpush1.msra.mxu0 0.0
      %10210 = vmatprep.subr.mxu0 0.0
      %10211 = vmatpush1.msra.mxu0 0.0
      %10212 = vmatprep.subr.mxu0 0.0
      %10213 = vmatpush1.msra.mxu0 0.0
      %10214 = vmatprep.subr.mxu0 0.0
      %10215 = vmatpush1.msra.mxu0 0.0
      %10216 = vmatprep.subr.mxu0 0.0
      %10217 = vmatpush1.msra.mxu0 0.0
      %10218 = vmatprep.subr.mxu0 0.0
      %10219 = vmatpush1.msra.mxu0 0.0
      %10220 = vmatprep.subr.mxu0 0.0
      %10221 = vmatpush1.msra.mxu0 0.0
      %10222 = vmatprep.subr.mxu0 0.0
      %10223 = vmatpush1.msra.mxu0 0.0
      %10224 = vmatprep.subr.mxu0 0.0
      %10225 = vmatpush1.msra.mxu0 0.0
      %10226 = vmatprep.subr.mxu0 0.0
      %10227 = vmatpush1.msra.mxu0 0.0
      %10228 = vmatprep.subr.mxu0 0.0
      %10229 = vmatpush1.msra.mxu0 0.0
      %10230 = vmatprep.mubr.f32.mxu0 0.0
      %10231 = vmatmul.mubr.f32.gmra.mrb[0].mxu0 %v10020
      %v10232 = vpop.f32.mrb[0].mxu0
      %v10233 = vadd.f32 0.0, %v10232
      %v10234 = vpop.f32.mrb[0].mxu0
      %10235 = vmatprep.mubr.f32.mxu0 0.0
      %10236 = vmatmul.mubr.f32.gmra.mrb[0].mxu0 %v10023
      %v10237 = vpop.f32.mrb[0].mxu0
      %v10238 = vadd.f32 0.0, %v10237
      %v10239 = vpop.f32.mrb[0].mxu0
      %10240 = vmatprep.mubr.f32.mxu0 0.0
      %10241 = vmatmul.mubr.f32.gmra.mrb[0].mxu0 %v10026
      %v10242 = vpop.f32.mrb[0].mxu0
      %v10243 = vpop.f32.mrb[0].mxu0
      %10244 = vmatprep.mubr.f32.mxu0 0.0
      %10245 = vmatmul.mubr.f32.gmra.mrb[0].mxu0 %v10029
      %v10246 = vpop.f32.mrb[0].mxu0
      %v10247 = vadd.f32 0.0, %v10246
      %v10248 = vpop.f32.mrb[0].mxu0
      %10249 = vmatprep.mubr.f32.mxu0 0.0
      %10250 = vmatmul.mubr.f32.gmra.mrb[0].mxu0 %v10032
      %v10251 = vpop.f32.mrb[0].mxu0
      %v10252 = vadd.f32 0.0, %v10251
      %v10253 = vpop.f32.mrb[0].mxu0
      %10254 = vmatprep.mubr.f32.mxu0 0.0
      %10255 = vmatmul.mubr.f32.gmra.mrb[0].mxu0 %v10035
      %v10256 = vpop.f32.mrb[0].mxu0
      %v10257 = vpop.f32.mrb[0].mxu0
      %10258 = vmatprep.mubr.f32.mxu0 0.0
      %10259 = vmatmul.mubr.f32.gmra.mrb[0].mxu0 %v10038
      %v10260 = vpop.f32.mrb[0].mxu0
      %v10261 = vadd.f32 0.0, %v10260
      %v10262 = vpop.f32.mrb[0].mxu0
      %10263 = vmatprep.mubr.f32.mxu0 0.0
      %10264 = vmatmul.mubr.f32.gmra.mrb[0].mxu0 %v10041
      %v10265 = vpop.f32.mrb[0].mxu0
      %v10266 = vadd.f32 0.0, %v10265
      %v10267 = vpop.f32.mrb[0].mxu0
      %10268 = vmatprep.mubr.f32.mxu0 0.0
      %10269 = vmatmul.mubr.f32.gmra.mrb[0].mxu0 %v10044
      %v10270 = vpop.f32.mrb[0].mxu0
      %v10271 = vpop.f32.mrb[0].mxu0
      %10272 = vmatprep.mubr.f32.mxu0 0.0
      %10273 = vmatmul.mubr.f32.gmra.mrb[0].mxu0 %v10047
      %v10274 = vpop.f32.mrb[0].mxu0
      %v10275 = vadd.f32 0.0, %v10274
      %v10276 = vpop.f32.mrb[0].mxu0
      %10277 = vmatprep.mubr.f32.mxu0 0.0
      %10278 = vmatmul.mubr.f32.gmra.mrb[0].mxu0 %v10050
      %v10279 = vpop.f32.mrb[0].mxu0
      %v10280 = vadd.f32 0.0, %v10279
      %v10281 = vpop.f32.mrb[0].mxu0
      %10282 = vmatprep.mubr.f32.mxu0 0.0
      %10283 = vmatmul.mubr.f32.gmra.mrb[0].mxu0 %v10053
      %v10284 = vpop.f32.mrb[0].mxu0
      %v10285 = vpop.f32.mrb[0].mxu0
      %10286 = vmatprep.mubr.f32.mxu0 0.0
      %10287 = vmatmul.mubr.f32.gmra.mrb[0].mxu0 %v10056
      %v10288 = vpop.f32.mrb[0].mxu0
      %v10289 = vadd.f32 0.0, %v10288
      %v10290 = vpop.f32.mrb[0].mxu0
      %10291 = vmatprep.mubr.f32.mxu0 0.0
      %10292 = vmatmul.mubr.f32.gmra.mrb[0].mxu0 %v10059
      %v10293 = vpop.f32.mrb[0].mxu0
      %v10294 = vadd.f32 0.0, %v10293
      %v10295 = vpop.f32.mrb[0].mxu0
      %10296 = vmatprep.mubr.f32.mxu0 0.0
      %10297 = vmatmul.mubr.f32.gmra.mrb[0].mxu0 %v10062
      %v10298 = vpop.f32.mrb[0].mxu0
      %v10299 = vpop.f32.mrb[0].mxu0
      %10300 = vmatprep.mubr.f32.mxu0 0.0
      %10301 = vmatmul.mubr.f32.gmra.mrb[0].mxu0 %v10065
      %v10302 = vpop.f32.mrb[0].mxu0
      %v10303 = vadd.f32 0.0, %v10302
      %v10304 = vpop.f32.mrb[0].mxu0
      %10305 = vmatprep.mubr.f32.mxu0 0.0
      %10306 = vmatmul.mubr.f32.gmra.mrb[0].mxu0 %v10068
      %v10307 = vpop.f32.mrb[0].mxu0
      %v10308 = vadd.f32 0.0, %v10307
      %v10309 = vpop.f32.mrb[0].mxu0
      %10310 = vmatprep.mubr.f32.mxu0 0.0
      %10311 = vmatmul.mubr.f32.gmra.mrb[0].mxu0 %v10071
      %v10312 = vpop.f32.mrb[0].mxu0
      %v10313 = vpop.f32.mrb[0].mxu0
      %10314 = vmatprep.mubr.f32.mxu0 0.0
      %10315 = vmatmul.mubr.f32.gmra.mrb[0].mxu0 %v10074
      %v10316 = vpop.f32.mrb[0].mxu0
      %v10317 = vadd.f32 0.0, %v10316
      %v10318 = vpop.f32.mrb[0].mxu0
      %10319 = vmatprep.mubr.f32.mxu0 0.0
      %10320 = vmatmul.mubr.f32.gmra.mrb[0].mxu0 %v10077
      %v10321 = vpop.f32.mrb[0].mxu0
      %v10322 = vadd.f32 0.0, %v10321
      %v10323 = vpop.f32.mrb[0].mxu0
      %10324 = vmatprep.mubr.f32.mxu0 0.0
      %10325 = vmatmul.mubr.f32.gmra.mrb[0].mxu0 %v10080
      %v10326 = vpop.f32.mrb[0].mxu0
      %v10327 = vpop.f32.mrb[0].mxu0
      %10328 = vmatprep.mubr.f32.mxu0 0.0
      %10329 = vmatmul.mubr.f32.gmra.mrb[0].mxu0 %v10083
      %v10330 = vpop.f32.mrb[0].mxu0
      %v10331 = vadd.f32 0.0, %v10330
      %v10332 = vpop.f32.mrb[0].mxu0
      %10333 = vmatprep.mubr.f32.mxu0 0.0
      %10334 = vmatmul.mubr.f32.gmra.mrb[0].mxu0 %v10086
      %v10335 = vpop.f32.mrb[0].mxu0
      %v10336 = vadd.f32 0.0, %v10335
      %v10337 = vpop.f32.mrb[0].mxu0
      %10338 = vmatprep.mubr.f32.mxu0 0.0
      %10339 = vmatmul.mubr.f32.gmra.mrb[0].mxu0 %v10089
      %v10340 = vpop.f32.mrb[0].mxu0
      %v10341 = vpop.f32.mrb[0].mxu0
      %10342 = vmatprep.mubr.f32.mxu0 0.0
      %10343 = vmatmul.mubr.f32.gmra.mrb[0].mxu0 %v10092
      %v10344 = vpop.f32.mrb[0].mxu0
      %v10345 = vadd.f32 0.0, %v10344
      %v10346 = vpop.f32.mrb[0].mxu0
      %10347 = vmatprep.mubr.f32.mxu0 0.0
      %10348 = vmatmul.mubr.f32.gmra.mrb[0].mxu0 %v10095
      %v10349 = vpop.f32.mrb[0].mxu0
      %v10350 = vadd.f32 0.0, %v10349
      %v10351 = vpop.f32.mrb[0].mxu0
      %10352 = vmatprep.mubr.f32.mxu0 0.0
      %10353 = vmatmul.mubr.f32.gmra.mrb[0].mxu0 %v10098
      %v10354 = vpop.f32.mrb[0].mxu0
      %v10355 = vpop.f32.mrb[0].mxu0
      %10356 = vmatprep.mubr.f32.mxu0 0.0
      %10357 = vmatmul.mubr.f32.gmra.mrb[0].mxu0 %v10101
      %v10358 = vpop.f32.mrb[0].mxu0
      %v10359 = vadd.f32 0.0, %v10358
      %v10360 = vpop.f32.mrb[0].mxu0
      %10361 = vmatprep.mubr.f32.mxu0 0.0
      %10362 = vmatmul.mubr.f32.gmra.mrb[0].mxu0 %v10104
      %v10363 = vpop.f32.mrb[0].mxu0
      %v10364 = vadd.f32 0.0, %v10363
      %v10365 = vpop.f32.mrb[0].mxu0
      %10366 = vmatprep.mubr.f32.mxu0 0.0
      %10367 = vmatmul.mubr.f32.gmra.mrb[0].mxu0 %v10107
      %v10368 = vpop.f32.mrb[0].mxu0
      %v10369 = vpop.f32.mrb[0].mxu0
      %10370 = vmatprep.mubr.f32.mxu0 0.0
      %10371 = vmatmul.mubr.f32.gmra.mrb[0].mxu0 %v10110
      %v10372 = vpop.f32.mrb[0].mxu0
      %v10373 = vadd.f32 0.0, %v10372
      %v10374 = vpop.f32.mrb[0].mxu0
      %10375 = vmatprep.mubr.f32.mxu0 0.0
      %10376 = vmatmul.mubr.f32.gmra.mrb[0].mxu0 %v10113
      %v10377 = vpop.f32.mrb[0].mxu0
      %v10378 = vadd.f32 0.0, %v10377
      %v10379 = vpop.f32.mrb[0].mxu0
      %10380 = vmatprep.mubr.f32.mxu0 0.0
      %10381 = vmatmul.mubr.f32.gmra.mrb[0].mxu0 %v10116
      %v10382 = vpop.f32.mrb[0].mxu0
      %v10383 = vpop.f32.mrb[0].mxu0
      %10384 = vmatprep.mubr.f32.mxu0 0.0
      %10385 = vmatmul.mubr.f32.gmra.mrb[0].mxu0 %v10119
      %v10386 = vpop.f32.mrb[0].mxu0
      %v10387 = vadd.f32 0.0, %v10386
      %v10388 = vpop.f32.mrb[0].mxu0
      %10389 = vmatprep.mubr.f32.mxu0 0.0
      %10390 = vmatmul.mubr.f32.gmra.mrb[0].mxu0 %v10122
      %v10391 = vpop.f32.mrb[0].mxu0
      %v10392 = vadd.f32 0.0, %v10391
      %v10393 = vpop.f32.mrb[0].mxu0
      %10394 = vmatprep.mubr.f32.mxu0 0.0
      %10395 = vmatmul.mubr.f32.gmra.mrb[0].mxu0 %v10125
      %v10396 = vpop.f32.mrb[0].mxu0
      %v10397 = vpop.f32.mrb[0].mxu0
      %10398 = vmatprep.mubr.f32.mxu0 0.0
      %10399 = vmatmul.mubr.f32.gmra.mrb[0].mxu0 %v10128
      %v10400 = vpop.f32.mrb[0].mxu0
      %v10401 = vadd.f32 0.0, %v10400
      %v10402 = vpop.f32.mrb[0].mxu0
      %10403 = vmatprep.mubr.f32.mxu0 0.0
      %10404 = vmatmul.mubr.f32.gmra.mrb[0].mxu0 %v10131
      %v10405 = vpop.f32.mrb[0].mxu0
      %v10406 = vadd.f32 0.0, %v10405
      %v10407 = vpop.f32.mrb[0].mxu0
      %10408 = vmatprep.mubr.f32.mxu0 0.0
      %10409 = vmatmul.mubr.f32.gmra.mrb[0].mxu0 %v10134
      %v10410 = vpop.f32.mrb[0].mxu0
      %v10411 = vpop.f32.mrb[0].mxu0
      %10412 = vmatprep.mubr.f32.mxu0 0.0
      %10413 = vmatmul.mubr.f32.gmra.mrb[0].mxu0 %v10137
      %v10414 = vpop.f32.mrb[0].mxu0
      %v10415 = vadd.f32 0.0, %v10414
      %v10416 = vpop.f32.mrb[0].mxu0
      %10417 = vmatprep.mubr.f32.mxu0 0.0
      %10418 = vmatmul.mubr.f32.gmra.mrb[0].mxu0 %v10140
      %v10419 = vpop.f32.mrb[0].mxu0
      %v10420 = vadd.f32 0.0, %v10419
      %v10421 = vpop.f32.mrb[0].mxu0
      %10422 = vmatprep.mubr.f32.mxu0 0.0
      %10423 = vmatmul.mubr.f32.gmra.mrb[0].mxu0 %v10143
      %v10424 = vpop.f32.mrb[0].mxu0
      %v10425 = vpop.f32.mrb[0].mxu0
      %10426 = vmatprep.mubr.f32.mxu0 0.0
      %10427 = vmatmul.mubr.f32.gmra.mrb[0].mxu0 %v10146
      %v10428 = vpop.f32.mrb[0].mxu0
      %v10429 = vadd.f32 0.0, %v10428
      %v10430 = vpop.f32.mrb[0].mxu0
      %10431 = vmatprep.mubr.f32.mxu0 0.0
      %10432 = vmatmul.mubr.f32.gmra.mrb[0].mxu0 %v10149
      %v10433 = vpop.f32.mrb[0].mxu0
      %v10434 = vadd.f32 0.0, %v10433
      %v10435 = vpop.f32.mrb[0].mxu0
      %10436 = vmatprep.mubr.f32.mxu0 0.0
      %10437 = vmatmul.mubr.f32.gmra.mrb[0].mxu0 %v10152
      %v10438 = vpop.f32.mrb[0].mxu0
      %v10439 = vpop.f32.mrb[0].mxu0
      %10440 = vmatprep.mubr.f32.mxu0 0.0
      %10441 = vmatmul.mubr.f32.gmra.mrb[0].mxu0 %v10155
      %v10442 = vpop.f32.mrb[0].mxu0
      %v10443 = vadd.f32 0.0, %v10442
      %v10444 = vpop.f32.mrb[0].mxu0
      %10445 = vmatprep.mubr.f32.mxu0 0.0
      %10446 = vmatmul.mubr.f32.gmra.mrb[0].mxu0 %v10158
      %v10447 = vpop.f32.mrb[0].mxu0
      %v10448 = vadd.f32 0.0, %v10447
      %v10449 = vpop.f32.mrb[0].mxu0
      %10450 = vmatprep.mubr.f32.mxu0 0.0
      %10451 = vmatmul.mubr.f32.gmra.mrb[0].mxu0 %v10161
      %v10452 = vpop.f32.mrb[0].mxu0
      %v10453 = vpop.f32.mrb[0].mxu0
      %10454 = vdwg.mxu0
      %v10455 = vadd.f32 %v9937, %v10233
      %v10456 = vadd.f32 %v9938, %v10238
      %v10457 = vadd.f32 %v9939, %v10247
      %v10458 = vadd.f32 %v9940, %v10252
      %v10459 = vadd.f32 %v9941, %v10261
      %v10460 = vadd.f32 %v9942, %v10266
      %v10461 = vadd.f32 %v9943, %v10275
      %v10462 = vadd.f32 %v9944, %v10280
      %v10463 = vadd.f32 %v9945, %v10289
      %v10464 = vadd.f32 %v9946, %v10294
      %v10465 = vadd.f32 %v9947, %v10303
      %v10466 = vadd.f32 %v9948, %v10308
      %v10467 = vadd.f32 %v9949, %v10317
      %v10468 = vadd.f32 %v9950, %v10322
      %v10469 = vadd.f32 %v9951, %v10331
      %v10470 = vadd.f32 %v9952, %v10336
      %v10471 = vadd.f32 %v9953, %v10345
      %v10472 = vadd.f32 %v9954, %v10350
      %v10473 = vadd.f32 %v9955, %v10359
      %v10474 = vadd.f32 %v9956, %v10364
      %v10475 = vadd.f32 %v9957, %v10373
      %v10476 = vadd.f32 %v9958, %v10378
      %v10477 = vadd.f32 %v9959, %v10387
      %v10478 = vadd.f32 %v9960, %v10392
      %v10479 = vadd.f32 %v9961, %v10401
      %v10480 = vadd.f32 %v9962, %v10406
      %v10481 = vadd.f32 %v9963, %v10415
      %v10482 = vadd.f32 %v9964, %v10420
      %v10483 = vadd.f32 %v9965, %v10429
      %v10484 = vadd.f32 %v9966, %v10434
      %v10485 = vadd.f32 %v9967, %v10443
      %v10486 = vadd.f32 %v9968, %v10448
      %v10487 = vld [vmem:[#allocation2 + $0x32] sm:$0xff]
      %v10488 = vld [vmem:[#allocation2 + $0x3a] sm:$0xff]
      %v10489 = vld [vmem:[#allocation2 + $0x42] sm:$0xff]
      %v10490 = vld [vmem:[#allocation2 + $0x4a] sm:$0xff]
      %v10491 = vld [vmem:[#allocation2 + $0x52] sm:$0xff]
      %v10492 = vld [vmem:[#allocation2 + $0x5a] sm:$0xff]
      %v10493 = vld [vmem:[#allocation2 + $0x62] sm:$0xff]
      %v10494 = vld [vmem:[#allocation2 + $0x6a] sm:$0xff]
      %v10495 = vld [vmem:[#allocation2 + $0x72] sm:$0xff]
      %v10496 = vld [vmem:[#allocation2 + $0x7a] sm:$0xff]
      %v10497 = vld [vmem:[#allocation2 + $0x82] sm:$0xff]
      %v10498 = vld [vmem:[#allocation2 + $0x8a] sm:$0xff]
      %v10499 = vld [vmem:[#allocation2 + $0x92] sm:$0xff]
      %v10500 = vld [vmem:[#allocation2 + $0x9a] sm:$0xff]
      %v10501 = vld [vmem:[#allocation2 + $0xa2] sm:$0xff]
      %v10502 = vld [vmem:[#allocation2 + $0xaa] sm:$0xff]
      %v10503 = vld [vmem:[#allocation2 + $0xb2] sm:$0xff]
      %v10504 = vld [vmem:[#allocation2 + $0xba] sm:$0xff]
      %v10505 = vld [vmem:[#allocation2 + $0xc2] sm:$0xff]
      %v10506 = vld [vmem:[#allocation2 + $0xca] sm:$0xff]
      %v10507 = vld [vmem:[#allocation2 + $0xd2] sm:$0xff]
      %v10508 = vld [vmem:[#allocation2 + $0xda] sm:$0xff]
      %v10509 = vld [vmem:[#allocation2 + $0xe2] sm:$0xff]
      %v10510 = vld [vmem:[#allocation2 + $0xea] sm:$0xff]
      %v10511 = vld [vmem:[#allocation2 + $0xf2] sm:$0xff]
      %v10512 = vld [vmem:[#allocation2 + $0xfa] sm:$0xff]
      %v10513 = vld [vmem:[#allocation2 + $0x102] sm:$0xff]
      %v10514 = vld [vmem:[#allocation2 + $0x10a] sm:$0xff]
      %v10515 = vld [vmem:[#allocation2 + $0x112] sm:$0xff]
      %v10516 = vld [vmem:[#allocation2 + $0x11a] sm:$0xff]
      %v10517 = vld [vmem:[#allocation2 + $0x122] sm:$0xff]
      %v10518 = vld [vmem:[#allocation2 + $0x12a] sm:$0xff]
      %v10519 = vld [vmem:[#allocation2 + $0x132] sm:$0xff]
      %v10520 = vld [vmem:[#allocation2 + $0x13a] sm:$0xff]
      %v10521 = vld [vmem:[#allocation2 + $0x142] sm:$0xff]
      %v10522 = vld [vmem:[#allocation2 + $0x14a] sm:$0xff]
      %v10523 = vld [vmem:[#allocation2 + $0x152] sm:$0xff]
      %v10524 = vld [vmem:[#allocation2 + $0x15a] sm:$0xff]
      %v10525 = vld [vmem:[#allocation2 + $0x162] sm:$0xff]
      %v10526 = vld [vmem:[#allocation2 + $0x16a] sm:$0xff]
      %v10527 = vld [vmem:[#allocation2 + $0x172] sm:$0xff]
      %v10528 = vld [vmem:[#allocation2 + $0x17a] sm:$0xff]
      %v10529 = vld [vmem:[#allocation2 + $0x182] sm:$0xff]
      %v10530 = vld [vmem:[#allocation2 + $0x18a] sm:$0xff]
      %v10531 = vld [vmem:[#allocation2 + $0x192] sm:$0xff]
      %v10532 = vld [vmem:[#allocation2 + $0x19a] sm:$0xff]
      %v10533 = vld [vmem:[#allocation2 + $0x1a2] sm:$0xff]
      %v10534 = vld [vmem:[#allocation2 + $0x1aa] sm:$0xff]
      %s10535 = scalar_lea.vmem %s5, 32
      %v10536 = vld [vmem:[%s10535] sm:$0xf]
      %v10538 = vsel %vm417, %v10487, 0
      %v10541 = vsel %vm417, %v10488, 0
      %v10544 = vsel %vm417, %v10489, 0
      %v10547 = vsel %vm417, %v10490, 0
      %v10550 = vsel %vm417, %v10491, 0
      %v10553 = vsel %vm417, %v10492, 0
      %v10556 = vsel %vm417, %v10493, 0
      %v10559 = vsel %vm417, %v10494, 0
      %v10562 = vsel %vm417, %v10495, 0
      %v10565 = vsel %vm417, %v10496, 0
      %v10568 = vsel %vm417, %v10497, 0
      %v10571 = vsel %vm417, %v10498, 0
      %v10574 = vsel %vm417, %v10499, 0
      %v10577 = vsel %vm417, %v10500, 0
      %v10580 = vsel %vm417, %v10501, 0
      %v10583 = vsel %vm417, %v10502, 0
      %v10586 = vsel %vm417, %v10503, 0
      %v10589 = vsel %vm417, %v10504, 0
      %v10592 = vsel %vm417, %v10505, 0
      %v10595 = vsel %vm417, %v10506, 0
      %v10598 = vsel %vm417, %v10507, 0
      %v10601 = vsel %vm417, %v10508, 0
      %v10604 = vsel %vm417, %v10509, 0
      %v10607 = vsel %vm417, %v10510, 0
      %v10610 = vsel %vm417, %v10511, 0
      %v10613 = vsel %vm417, %v10512, 0
      %v10616 = vsel %vm417, %v10513, 0
      %v10619 = vsel %vm417, %v10514, 0
      %v10622 = vsel %vm417, %v10515, 0
      %v10625 = vsel %vm417, %v10516, 0
      %v10628 = vsel %vm417, %v10517, 0
      %v10631 = vsel %vm417, %v10518, 0
      %v10634 = vsel %vm417, %v10519, 0
      %v10637 = vsel %vm417, %v10520, 0
      %v10640 = vsel %vm417, %v10521, 0
      %v10643 = vsel %vm417, %v10522, 0
      %v10646 = vsel %vm417, %v10523, 0
      %v10649 = vsel %vm417, %v10524, 0
      %v10652 = vsel %vm417, %v10525, 0
      %v10655 = vsel %vm417, %v10526, 0
      %v10658 = vsel %vm417, %v10527, 0
      %v10661 = vsel %vm417, %v10528, 0
      %v10664 = vsel %vm417, %v10529, 0
      %v10667 = vsel %vm417, %v10530, 0
      %v10670 = vsel %vm417, %v10531, 0
      %v10673 = vsel %vm417, %v10532, 0
      %v10676 = vsel %vm417, %v10533, 0
      %v10679 = vsel %vm417, %v10534, 0
      %v10682 = vsel %vm580, %v10536, 0
      %10684 = vmatprep.subr.mxu0 0.0
      %10685 = vmatpush1.msra.mxu0 %v10682
      %10686 = vmatprep.subr.mxu0 0.0
      %10687 = vmatpush1.msra.mxu0 0.0
      %10688 = vmatprep.subr.mxu0 0.0
      %10689 = vmatpush1.msra.mxu0 0.0
      %10690 = vmatprep.subr.mxu0 0.0
      %10691 = vmatpush1.msra.mxu0 0.0
      %10692 = vmatprep.subr.mxu0 0.0
      %10693 = vmatpush1.msra.mxu0 0.0
      %10694 = vmatprep.subr.mxu0 0.0
      %10695 = vmatpush1.msra.mxu0 0.0
      %10696 = vmatprep.subr.mxu0 0.0
      %10697 = vmatpush1.msra.mxu0 0.0
      %10698 = vmatprep.subr.mxu0 0.0
      %10699 = vmatpush1.msra.mxu0 0.0
      %10700 = vmatprep.subr.mxu0 0.0
      %10701 = vmatpush1.msra.mxu0 0.0
      %10702 = vmatprep.subr.mxu0 0.0
      %10703 = vmatpush1.msra.mxu0 0.0
      %10704 = vmatprep.subr.mxu0 0.0
      %10705 = vmatpush1.msra.mxu0 0.0
      %10706 = vmatprep.subr.mxu0 0.0
      %10707 = vmatpush1.msra.mxu0 0.0
      %10708 = vmatprep.subr.mxu0 0.0
      %10709 = vmatpush1.msra.mxu0 0.0
      %10710 = vmatprep.subr.mxu0 0.0
      %10711 = vmatpush1.msra.mxu0 0.0
      %10712 = vmatprep.subr.mxu0 0.0
      %10713 = vmatpush1.msra.mxu0 0.0
      %10714 = vmatprep.subr.mxu0 0.0
      %10715 = vmatpush1.msra.mxu0 0.0
      %10716 = vmatprep.subr.mxu0 0.0
      %10717 = vmatpush1.msra.mxu0 0.0
      %10718 = vmatprep.subr.mxu0 0.0
      %10719 = vmatpush1.msra.mxu0 0.0
      %10720 = vmatprep.subr.mxu0 0.0
      %10721 = vmatpush1.msra.mxu0 0.0
      %10722 = vmatprep.subr.mxu0 0.0
      %10723 = vmatpush1.msra.mxu0 0.0
      %10724 = vmatprep.subr.mxu0 0.0
      %10725 = vmatpush1.msra.mxu0 0.0
      %10726 = vmatprep.subr.mxu0 0.0
      %10727 = vmatpush1.msra.mxu0 0.0
      %10728 = vmatprep.subr.mxu0 0.0
      %10729 = vmatpush1.msra.mxu0 0.0
      %10730 = vmatprep.subr.mxu0 0.0
      %10731 = vmatpush1.msra.mxu0 0.0
      %10732 = vmatprep.subr.mxu0 0.0
      %10733 = vmatpush1.msra.mxu0 0.0
      %10734 = vmatprep.subr.mxu0 0.0
      %10735 = vmatpush1.msra.mxu0 0.0
      %10736 = vmatprep.subr.mxu0 0.0
      %10737 = vmatpush1.msra.mxu0 0.0
      %10738 = vmatprep.subr.mxu0 0.0
      %10739 = vmatpush1.msra.mxu0 0.0
      %10740 = vmatprep.subr.mxu0 0.0
      %10741 = vmatpush1.msra.mxu0 0.0
      %10742 = vmatprep.subr.mxu0 0.0
      %10743 = vmatpush1.msra.mxu0 0.0
      %10744 = vmatprep.subr.mxu0 0.0
      %10745 = vmatpush1.msra.mxu0 0.0
      %10746 = vmatprep.subr.mxu0 0.0
      %10747 = vmatpush1.msra.mxu0 0.0
      %10748 = vmatprep.mubr.f32.mxu0 0.0
      %10749 = vmatmul.mubr.f32.gmra.mrb[0].mxu0 %v10538
      %v10750 = vpop.f32.mrb[0].mxu0
      %v10751 = vadd.f32 0.0, %v10750
      %v10752 = vpop.f32.mrb[0].mxu0
      %10753 = vmatprep.mubr.f32.mxu0 0.0
      %10754 = vmatmul.mubr.f32.gmra.mrb[0].mxu0 %v10541
      %v10755 = vpop.f32.mrb[0].mxu0
      %v10756 = vadd.f32 0.0, %v10755
      %v10757 = vpop.f32.mrb[0].mxu0
      %10758 = vmatprep.mubr.f32.mxu0 0.0
      %10759 = vmatmul.mubr.f32.gmra.mrb[0].mxu0 %v10544
      %v10760 = vpop.f32.mrb[0].mxu0
      %v10761 = vpop.f32.mrb[0].mxu0
      %10762 = vmatprep.mubr.f32.mxu0 0.0
      %10763 = vmatmul.mubr.f32.gmra.mrb[0].mxu0 %v10547
      %v10764 = vpop.f32.mrb[0].mxu0
      %v10765 = vadd.f32 0.0, %v10764
      %v10766 = vpop.f32.mrb[0].mxu0
      %10767 = vmatprep.mubr.f32.mxu0 0.0
      %10768 = vmatmul.mubr.f32.gmra.mrb[0].mxu0 %v10550
      %v10769 = vpop.f32.mrb[0].mxu0
      %v10770 = vadd.f32 0.0, %v10769
      %v10771 = vpop.f32.mrb[0].mxu0
      %10772 = vmatprep.mubr.f32.mxu0 0.0
      %10773 = vmatmul.mubr.f32.gmra.mrb[0].mxu0 %v10553
      %v10774 = vpop.f32.mrb[0].mxu0
      %v10775 = vpop.f32.mrb[0].mxu0
      %10776 = vmatprep.mubr.f32.mxu0 0.0
      %10777 = vmatmul.mubr.f32.gmra.mrb[0].mxu0 %v10556
      %v10778 = vpop.f32.mrb[0].mxu0
      %v10779 = vadd.f32 0.0, %v10778
      %v10780 = vpop.f32.mrb[0].mxu0
      %10781 = vmatprep.mubr.f32.mxu0 0.0
      %10782 = vmatmul.mubr.f32.gmra.mrb[0].mxu0 %v10559
      %v10783 = vpop.f32.mrb[0].mxu0
      %v10784 = vadd.f32 0.0, %v10783
      %v10785 = vpop.f32.mrb[0].mxu0
      %10786 = vmatprep.mubr.f32.mxu0 0.0
      %10787 = vmatmul.mubr.f32.gmra.mrb[0].mxu0 %v10562
      %v10788 = vpop.f32.mrb[0].mxu0
      %v10789 = vpop.f32.mrb[0].mxu0
      %10790 = vmatprep.mubr.f32.mxu0 0.0
      %10791 = vmatmul.mubr.f32.gmra.mrb[0].mxu0 %v10565
      %v10792 = vpop.f32.mrb[0].mxu0
      %v10793 = vadd.f32 0.0, %v10792
      %v10794 = vpop.f32.mrb[0].mxu0
      %10795 = vmatprep.mubr.f32.mxu0 0.0
      %10796 = vmatmul.mubr.f32.gmra.mrb[0].mxu0 %v10568
      %v10797 = vpop.f32.mrb[0].mxu0
      %v10798 = vadd.f32 0.0, %v10797
      %v10799 = vpop.f32.mrb[0].mxu0
      %10800 = vmatprep.mubr.f32.mxu0 0.0
      %10801 = vmatmul.mubr.f32.gmra.mrb[0].mxu0 %v10571
      %v10802 = vpop.f32.mrb[0].mxu0
      %v10803 = vpop.f32.mrb[0].mxu0
      %10804 = vmatprep.mubr.f32.mxu0 0.0
      %10805 = vmatmul.mubr.f32.gmra.mrb[0].mxu0 %v10574
      %v10806 = vpop.f32.mrb[0].mxu0
      %v10807 = vadd.f32 0.0, %v10806
      %v10808 = vpop.f32.mrb[0].mxu0
      %10809 = vmatprep.mubr.f32.mxu0 0.0
      %10810 = vmatmul.mubr.f32.gmra.mrb[0].mxu0 %v10577
      %v10811 = vpop.f32.mrb[0].mxu0
      %v10812 = vadd.f32 0.0, %v10811
      %v10813 = vpop.f32.mrb[0].mxu0
      %10814 = vmatprep.mubr.f32.mxu0 0.0
      %10815 = vmatmul.mubr.f32.gmra.mrb[0].mxu0 %v10580
      %v10816 = vpop.f32.mrb[0].mxu0
      %v10817 = vpop.f32.mrb[0].mxu0
      %10818 = vmatprep.mubr.f32.mxu0 0.0
      %10819 = vmatmul.mubr.f32.gmra.mrb[0].mxu0 %v10583
      %v10820 = vpop.f32.mrb[0].mxu0
      %v10821 = vadd.f32 0.0, %v10820
      %v10822 = vpop.f32.mrb[0].mxu0
      %10823 = vmatprep.mubr.f32.mxu0 0.0
      %10824 = vmatmul.mubr.f32.gmra.mrb[0].mxu0 %v10586
      %v10825 = vpop.f32.mrb[0].mxu0
      %v10826 = vadd.f32 0.0, %v10825
      %v10827 = vpop.f32.mrb[0].mxu0
      %10828 = vmatprep.mubr.f32.mxu0 0.0
      %10829 = vmatmul.mubr.f32.gmra.mrb[0].mxu0 %v10589
      %v10830 = vpop.f32.mrb[0].mxu0
      %v10831 = vpop.f32.mrb[0].mxu0
      %10832 = vmatprep.mubr.f32.mxu0 0.0
      %10833 = vmatmul.mubr.f32.gmra.mrb[0].mxu0 %v10592
      %v10834 = vpop.f32.mrb[0].mxu0
      %v10835 = vadd.f32 0.0, %v10834
      %v10836 = vpop.f32.mrb[0].mxu0
      %10837 = vmatprep.mubr.f32.mxu0 0.0
      %10838 = vmatmul.mubr.f32.gmra.mrb[0].mxu0 %v10595
      %v10839 = vpop.f32.mrb[0].mxu0
      %v10840 = vadd.f32 0.0, %v10839
      %v10841 = vpop.f32.mrb[0].mxu0
      %10842 = vmatprep.mubr.f32.mxu0 0.0
      %10843 = vmatmul.mubr.f32.gmra.mrb[0].mxu0 %v10598
      %v10844 = vpop.f32.mrb[0].mxu0
      %v10845 = vpop.f32.mrb[0].mxu0
      %10846 = vmatprep.mubr.f32.mxu0 0.0
      %10847 = vmatmul.mubr.f32.gmra.mrb[0].mxu0 %v10601
      %v10848 = vpop.f32.mrb[0].mxu0
      %v10849 = vadd.f32 0.0, %v10848
      %v10850 = vpop.f32.mrb[0].mxu0
      %10851 = vmatprep.mubr.f32.mxu0 0.0
      %10852 = vmatmul.mubr.f32.gmra.mrb[0].mxu0 %v10604
      %v10853 = vpop.f32.mrb[0].mxu0
      %v10854 = vadd.f32 0.0, %v10853
      %v10855 = vpop.f32.mrb[0].mxu0
      %10856 = vmatprep.mubr.f32.mxu0 0.0
      %10857 = vmatmul.mubr.f32.gmra.mrb[0].mxu0 %v10607
      %v10858 = vpop.f32.mrb[0].mxu0
      %v10859 = vpop.f32.mrb[0].mxu0
      %10860 = vmatprep.mubr.f32.mxu0 0.0
      %10861 = vmatmul.mubr.f32.gmra.mrb[0].mxu0 %v10610
      %v10862 = vpop.f32.mrb[0].mxu0
      %v10863 = vadd.f32 0.0, %v10862
      %v10864 = vpop.f32.mrb[0].mxu0
      %10865 = vmatprep.mubr.f32.mxu0 0.0
      %10866 = vmatmul.mubr.f32.gmra.mrb[0].mxu0 %v10613
      %v10867 = vpop.f32.mrb[0].mxu0
      %v10868 = vadd.f32 0.0, %v10867
      %v10869 = vpop.f32.mrb[0].mxu0
      %10870 = vmatprep.mubr.f32.mxu0 0.0
      %10871 = vmatmul.mubr.f32.gmra.mrb[0].mxu0 %v10616
      %v10872 = vpop.f32.mrb[0].mxu0
      %v10873 = vpop.f32.mrb[0].mxu0
      %10874 = vmatprep.mubr.f32.mxu0 0.0
      %10875 = vmatmul.mubr.f32.gmra.mrb[0].mxu0 %v10619
      %v10876 = vpop.f32.mrb[0].mxu0
      %v10877 = vadd.f32 0.0, %v10876
      %v10878 = vpop.f32.mrb[0].mxu0
      %10879 = vmatprep.mubr.f32.mxu0 0.0
      %10880 = vmatmul.mubr.f32.gmra.mrb[0].mxu0 %v10622
      %v10881 = vpop.f32.mrb[0].mxu0
      %v10882 = vadd.f32 0.0, %v10881
      %v10883 = vpop.f32.mrb[0].mxu0
      %10884 = vmatprep.mubr.f32.mxu0 0.0
      %10885 = vmatmul.mubr.f32.gmra.mrb[0].mxu0 %v10625
      %v10886 = vpop.f32.mrb[0].mxu0
      %v10887 = vpop.f32.mrb[0].mxu0
      %10888 = vmatprep.mubr.f32.mxu0 0.0
      %10889 = vmatmul.mubr.f32.gmra.mrb[0].mxu0 %v10628
      %v10890 = vpop.f32.mrb[0].mxu0
      %v10891 = vadd.f32 0.0, %v10890
      %v10892 = vpop.f32.mrb[0].mxu0
      %10893 = vmatprep.mubr.f32.mxu0 0.0
      %10894 = vmatmul.mubr.f32.gmra.mrb[0].mxu0 %v10631
      %v10895 = vpop.f32.mrb[0].mxu0
      %v10896 = vadd.f32 0.0, %v10895
      %v10897 = vpop.f32.mrb[0].mxu0
      %10898 = vmatprep.mubr.f32.mxu0 0.0
      %10899 = vmatmul.mubr.f32.gmra.mrb[0].mxu0 %v10634
      %v10900 = vpop.f32.mrb[0].mxu0
      %v10901 = vpop.f32.mrb[0].mxu0
      %10902 = vmatprep.mubr.f32.mxu0 0.0
      %10903 = vmatmul.mubr.f32.gmra.mrb[0].mxu0 %v10637
      %v10904 = vpop.f32.mrb[0].mxu0
      %v10905 = vadd.f32 0.0, %v10904
      %v10906 = vpop.f32.mrb[0].mxu0
      %10907 = vmatprep.mubr.f32.mxu0 0.0
      %10908 = vmatmul.mubr.f32.gmra.mrb[0].mxu0 %v10640
      %v10909 = vpop.f32.mrb[0].mxu0
      %v10910 = vadd.f32 0.0, %v10909
      %v10911 = vpop.f32.mrb[0].mxu0
      %10912 = vmatprep.mubr.f32.mxu0 0.0
      %10913 = vmatmul.mubr.f32.gmra.mrb[0].mxu0 %v10643
      %v10914 = vpop.f32.mrb[0].mxu0
      %v10915 = vpop.f32.mrb[0].mxu0
      %10916 = vmatprep.mubr.f32.mxu0 0.0
      %10917 = vmatmul.mubr.f32.gmra.mrb[0].mxu0 %v10646
      %v10918 = vpop.f32.mrb[0].mxu0
      %v10919 = vadd.f32 0.0, %v10918
      %v10920 = vpop.f32.mrb[0].mxu0
      %10921 = vmatprep.mubr.f32.mxu0 0.0
      %10922 = vmatmul.mubr.f32.gmra.mrb[0].mxu0 %v10649
      %v10923 = vpop.f32.mrb[0].mxu0
      %v10924 = vadd.f32 0.0, %v10923
      %v10925 = vpop.f32.mrb[0].mxu0
      %10926 = vmatprep.mubr.f32.mxu0 0.0
      %10927 = vmatmul.mubr.f32.gmra.mrb[0].mxu0 %v10652
      %v10928 = vpop.f32.mrb[0].mxu0
      %v10929 = vpop.f32.mrb[0].mxu0
      %10930 = vmatprep.mubr.f32.mxu0 0.0
      %10931 = vmatmul.mubr.f32.gmra.mrb[0].mxu0 %v10655
      %v10932 = vpop.f32.mrb[0].mxu0
      %v10933 = vadd.f32 0.0, %v10932
      %v10934 = vpop.f32.mrb[0].mxu0
      %10935 = vmatprep.mubr.f32.mxu0 0.0
      %10936 = vmatmul.mubr.f32.gmra.mrb[0].mxu0 %v10658
      %v10937 = vpop.f32.mrb[0].mxu0
      %v10938 = vadd.f32 0.0, %v10937
      %v10939 = vpop.f32.mrb[0].mxu0
      %10940 = vmatprep.mubr.f32.mxu0 0.0
      %10941 = vmatmul.mubr.f32.gmra.mrb[0].mxu0 %v10661
      %v10942 = vpop.f32.mrb[0].mxu0
      %v10943 = vpop.f32.mrb[0].mxu0
      %10944 = vmatprep.mubr.f32.mxu0 0.0
      %10945 = vmatmul.mubr.f32.gmra.mrb[0].mxu0 %v10664
      %v10946 = vpop.f32.mrb[0].mxu0
      %v10947 = vadd.f32 0.0, %v10946
      %v10948 = vpop.f32.mrb[0].mxu0
      %10949 = vmatprep.mubr.f32.mxu0 0.0
      %10950 = vmatmul.mubr.f32.gmra.mrb[0].mxu0 %v10667
      %v10951 = vpop.f32.mrb[0].mxu0
      %v10952 = vadd.f32 0.0, %v10951
      %v10953 = vpop.f32.mrb[0].mxu0
      %10954 = vmatprep.mubr.f32.mxu0 0.0
      %10955 = vmatmul.mubr.f32.gmra.mrb[0].mxu0 %v10670
      %v10956 = vpop.f32.mrb[0].mxu0
      %v10957 = vpop.f32.mrb[0].mxu0
      %10958 = vmatprep.mubr.f32.mxu0 0.0
      %10959 = vmatmul.mubr.f32.gmra.mrb[0].mxu0 %v10673
      %v10960 = vpop.f32.mrb[0].mxu0
      %v10961 = vadd.f32 0.0, %v10960
      %v10962 = vpop.f32.mrb[0].mxu0
      %10963 = vmatprep.mubr.f32.mxu0 0.0
      %10964 = vmatmul.mubr.f32.gmra.mrb[0].mxu0 %v10676
      %v10965 = vpop.f32.mrb[0].mxu0
      %v10966 = vadd.f32 0.0, %v10965
      %v10967 = vpop.f32.mrb[0].mxu0
      %10968 = vmatprep.mubr.f32.mxu0 0.0
      %10969 = vmatmul.mubr.f32.gmra.mrb[0].mxu0 %v10679
      %v10970 = vpop.f32.mrb[0].mxu0
      %v10971 = vpop.f32.mrb[0].mxu0
      %10972 = vdwg.mxu0
      %v10973 = vadd.f32 %v10455, %v10751
      %v10974 = vadd.f32 %v10456, %v10756
      %v10975 = vadd.f32 %v10457, %v10765
      %v10976 = vadd.f32 %v10458, %v10770
      %v10977 = vadd.f32 %v10459, %v10779
      %v10978 = vadd.f32 %v10460, %v10784
      %v10979 = vadd.f32 %v10461, %v10793
      %v10980 = vadd.f32 %v10462, %v10798
      %v10981 = vadd.f32 %v10463, %v10807
      %v10982 = vadd.f32 %v10464, %v10812
      %v10983 = vadd.f32 %v10465, %v10821
      %v10984 = vadd.f32 %v10466, %v10826
      %v10985 = vadd.f32 %v10467, %v10835
      %v10986 = vadd.f32 %v10468, %v10840
      %v10987 = vadd.f32 %v10469, %v10849
      %v10988 = vadd.f32 %v10470, %v10854
      %v10989 = vadd.f32 %v10471, %v10863
      %v10990 = vadd.f32 %v10472, %v10868
      %v10991 = vadd.f32 %v10473, %v10877
      %v10992 = vadd.f32 %v10474, %v10882
      %v10993 = vadd.f32 %v10475, %v10891
      %v10994 = vadd.f32 %v10476, %v10896
      %v10995 = vadd.f32 %v10477, %v10905
      %v10996 = vadd.f32 %v10478, %v10910
      %v10997 = vadd.f32 %v10479, %v10919
      %v10998 = vadd.f32 %v10480, %v10924
      %v10999 = vadd.f32 %v10481, %v10933
      %v11000 = vadd.f32 %v10482, %v10938
      %v11001 = vadd.f32 %v10483, %v10947
      %v11002 = vadd.f32 %v10484, %v10952
      %v11003 = vadd.f32 %v10485, %v10961
      %v11004 = vadd.f32 %v10486, %v10966
      %v11005 = vld [vmem:[%s6] sm:$0x1]
      %v11007 = vlaneseq
      %v11008 = vshrl.u32 %v11007, 7
      %v11009 = vsub.s32 0, %v11008
      %v11010 = vrot.slane %v11005, %v11009
      %v11012 = vmul.f32 %v10973, %v11010
      %v11013 = vmul.f32 %v10974, %v11010
      %v11014 = vmul.f32 %v10975, %v11010
      %v11015 = vmul.f32 %v10976, %v11010
      %v11016 = vmul.f32 %v10977, %v11010
      %v11017 = vmul.f32 %v10978, %v11010
      %v11018 = vmul.f32 %v10979, %v11010
      %v11019 = vmul.f32 %v10980, %v11010
      %v11020 = vmul.f32 %v10981, %v11010
      %v11021 = vmul.f32 %v10982, %v11010
      %v11022 = vmul.f32 %v10983, %v11010
      %v11023 = vmul.f32 %v10984, %v11010
      %v11024 = vmul.f32 %v10985, %v11010
      %v11025 = vmul.f32 %v10986, %v11010
      %v11026 = vmul.f32 %v10987, %v11010
      %v11027 = vmul.f32 %v10988, %v11010
      %v11028 = vmul.f32 %v10989, %v11010
      %v11029 = vmul.f32 %v10990, %v11010
      %v11030 = vmul.f32 %v10991, %v11010
      %v11031 = vmul.f32 %v10992, %v11010
      %v11032 = vmul.f32 %v10993, %v11010
      %v11033 = vmul.f32 %v10994, %v11010
      %v11034 = vmul.f32 %v10995, %v11010
      %v11035 = vmul.f32 %v10996, %v11010
      %v11036 = vmul.f32 %v10997, %v11010
      %v11037 = vmul.f32 %v10998, %v11010
      %v11038 = vmul.f32 %v10999, %v11010
      %v11039 = vmul.f32 %v11000, %v11010
      %v11040 = vmul.f32 %v11001, %v11010
      %v11041 = vmul.f32 %v11002, %v11010
      %v11042 = vmul.f32 %v11003, %v11010
      %v11043 = vmul.f32 %v11004, %v11010
      %v11044 = vld [vmem:[%s7] sm:$0x1]
      %v11046 = vlaneseq
      %v11047 = vshrl.u32 %v11046, 7
      %v11048 = vsub.s32 0, %v11047
      %v11049 = vrot.slane %v11044, %v11048
      %v11051 = vadd.f32 %v11012, %v11049
      %v11052 = vadd.f32 %v11013, %v11049
      %v11053 = vadd.f32 %v11014, %v11049
      %v11054 = vadd.f32 %v11015, %v11049
      %v11055 = vadd.f32 %v11016, %v11049
      %v11056 = vadd.f32 %v11017, %v11049
      %v11057 = vadd.f32 %v11018, %v11049
      %v11058 = vadd.f32 %v11019, %v11049
      %v11059 = vadd.f32 %v11020, %v11049
      %v11060 = vadd.f32 %v11021, %v11049
      %v11061 = vadd.f32 %v11022, %v11049
      %v11062 = vadd.f32 %v11023, %v11049
      %v11063 = vadd.f32 %v11024, %v11049
      %v11064 = vadd.f32 %v11025, %v11049
      %v11065 = vadd.f32 %v11026, %v11049
      %v11066 = vadd.f32 %v11027, %v11049
      %v11067 = vadd.f32 %v11028, %v11049
      %v11068 = vadd.f32 %v11029, %v11049
      %v11069 = vadd.f32 %v11030, %v11049
      %v11070 = vadd.f32 %v11031, %v11049
      %v11071 = vadd.f32 %v11032, %v11049
      %v11072 = vadd.f32 %v11033, %v11049
      %v11073 = vadd.f32 %v11034, %v11049
      %v11074 = vadd.f32 %v11035, %v11049
      %v11075 = vadd.f32 %v11036, %v11049
      %v11076 = vadd.f32 %v11037, %v11049
      %v11077 = vadd.f32 %v11038, %v11049
      %v11078 = vadd.f32 %v11039, %v11049
      %v11079 = vadd.f32 %v11040, %v11049
      %v11080 = vadd.f32 %v11041, %v11049
      %v11081 = vadd.f32 %v11042, %v11049
      %v11082 = vadd.f32 %v11043, %v11049
      %v11083 = vld [vmem:[%s300 + $0x32] sm:$0xff]
      %v11084 = vld [vmem:[%s300 + $0x3a] sm:$0xff]
      %v11085 = vld [vmem:[%s300 + $0x4a] sm:$0xff]
      %v11086 = vld [vmem:[%s300 + $0x52] sm:$0xff]
      %v11087 = vld [vmem:[%s300 + $0x62] sm:$0xff]
      %v11088 = vld [vmem:[%s300 + $0x6a] sm:$0xff]
      %v11089 = vld [vmem:[%s300 + $0x7a] sm:$0xff]
      %v11090 = vld [vmem:[%s300 + $0x82] sm:$0xff]
      %v11091 = vld [vmem:[%s300 + $0x92] sm:$0xff]
      %v11092 = vld [vmem:[%s300 + $0x9a] sm:$0xff]
      %v11093 = vld [vmem:[%s300 + $0xaa] sm:$0xff]
      %v11094 = vld [vmem:[%s300 + $0xb2] sm:$0xff]
      %v11095 = vld [vmem:[%s300 + $0xc2] sm:$0xff]
      %v11096 = vld [vmem:[%s300 + $0xca] sm:$0xff]
      %v11097 = vld [vmem:[%s300 + $0xda] sm:$0xff]
      %v11098 = vld [vmem:[%s300 + $0xe2] sm:$0xff]
      %v11099 = vld [vmem:[%s300 + $0xf2] sm:$0xff]
      %v11100 = vld [vmem:[%s300 + $0xfa] sm:$0xff]
      %v11101 = vld [vmem:[%s300 + $0x10a] sm:$0xff]
      %v11102 = vld [vmem:[%s300 + $0x112] sm:$0xff]
      %v11103 = vld [vmem:[%s300 + $0x122] sm:$0xff]
      %v11104 = vld [vmem:[%s300 + $0x12a] sm:$0xff]
      %v11105 = vld [vmem:[%s300 + $0x13a] sm:$0xff]
      %v11106 = vld [vmem:[%s300 + $0x142] sm:$0xff]
      %v11107 = vld [vmem:[%s300 + $0x152] sm:$0xff]
      %v11108 = vld [vmem:[%s300 + $0x15a] sm:$0xff]
      %v11109 = vld [vmem:[%s300 + $0x16a] sm:$0xff]
      %v11110 = vld [vmem:[%s300 + $0x172] sm:$0xff]
      %v11111 = vld [vmem:[%s300 + $0x182] sm:$0xff]
      %v11112 = vld [vmem:[%s300 + $0x18a] sm:$0xff]
      %v11113 = vld [vmem:[%s300 + $0x19a] sm:$0xff]
      %v11114 = vld [vmem:[%s300 + $0x1a2] sm:$0xff]
      %v11115 = vadd.f32 %v11051, %v11083
      %v11116 = vadd.f32 %v11052, %v11084
      %v11117 = vadd.f32 %v11053, %v11085
      %v11118 = vadd.f32 %v11054, %v11086
      %v11119 = vadd.f32 %v11055, %v11087
      %v11120 = vadd.f32 %v11056, %v11088
      %v11121 = vadd.f32 %v11057, %v11089
      %v11122 = vadd.f32 %v11058, %v11090
      %v11123 = vadd.f32 %v11059, %v11091
      %v11124 = vadd.f32 %v11060, %v11092
      %v11125 = vadd.f32 %v11061, %v11093
      %v11126 = vadd.f32 %v11062, %v11094
      %v11127 = vadd.f32 %v11063, %v11095
      %v11128 = vadd.f32 %v11064, %v11096
      %v11129 = vadd.f32 %v11065, %v11097
      %v11130 = vadd.f32 %v11066, %v11098
      %v11131 = vadd.f32 %v11067, %v11099
      %v11132 = vadd.f32 %v11068, %v11100
      %v11133 = vadd.f32 %v11069, %v11101
      %v11134 = vadd.f32 %v11070, %v11102
      %v11135 = vadd.f32 %v11071, %v11103
      %v11136 = vadd.f32 %v11072, %v11104
      %v11137 = vadd.f32 %v11073, %v11105
      %v11138 = vadd.f32 %v11074, %v11106
      %v11139 = vadd.f32 %v11075, %v11107
      %v11140 = vadd.f32 %v11076, %v11108
      %v11141 = vadd.f32 %v11077, %v11109
      %v11142 = vadd.f32 %v11078, %v11110
      %v11143 = vadd.f32 %v11079, %v11111
      %v11144 = vadd.f32 %v11080, %v11112
      %v11145 = vadd.f32 %v11081, %v11113
      %v11146 = vadd.f32 %v11082, %v11114
      %vm11147 = vcmp.ge.f32.partialorder %v11115, 0.0
      %vm11148 = vcmp.ge.f32.partialorder %v11116, 0.0
      %vm11149 = vcmp.ge.f32.partialorder %v11117, 0.0
      %vm11150 = vcmp.ge.f32.partialorder %v11118, 0.0
      %vm11151 = vcmp.ge.f32.partialorder %v11119, 0.0
      %vm11152 = vcmp.ge.f32.partialorder %v11120, 0.0
      %vm11153 = vcmp.ge.f32.partialorder %v11121, 0.0
      %vm11154 = vcmp.ge.f32.partialorder %v11122, 0.0
      %vm11155 = vcmp.ge.f32.partialorder %v11123, 0.0
      %vm11156 = vcmp.ge.f32.partialorder %v11124, 0.0
      %vm11157 = vcmp.ge.f32.partialorder %v11125, 0.0
      %vm11158 = vcmp.ge.f32.partialorder %v11126, 0.0
      %vm11159 = vcmp.ge.f32.partialorder %v11127, 0.0
      %vm11160 = vcmp.ge.f32.partialorder %v11128, 0.0
      %vm11161 = vcmp.ge.f32.partialorder %v11129, 0.0
      %vm11162 = vcmp.ge.f32.partialorder %v11130, 0.0
      %vm11163 = vcmp.ge.f32.partialorder %v11131, 0.0
      %vm11164 = vcmp.ge.f32.partialorder %v11132, 0.0
      %vm11165 = vcmp.ge.f32.partialorder %v11133, 0.0
      %vm11166 = vcmp.ge.f32.partialorder %v11134, 0.0
      %vm11167 = vcmp.ge.f32.partialorder %v11135, 0.0
      %vm11168 = vcmp.ge.f32.partialorder %v11136, 0.0
      %vm11169 = vcmp.ge.f32.partialorder %v11137, 0.0
      %vm11170 = vcmp.ge.f32.partialorder %v11138, 0.0
      %vm11171 = vcmp.ge.f32.partialorder %v11139, 0.0
      %vm11172 = vcmp.ge.f32.partialorder %v11140, 0.0
      %vm11173 = vcmp.ge.f32.partialorder %v11141, 0.0
      %vm11174 = vcmp.ge.f32.partialorder %v11142, 0.0
      %vm11175 = vcmp.ge.f32.partialorder %v11143, 0.0
      %vm11176 = vcmp.ge.f32.partialorder %v11144, 0.0
      %vm11177 = vcmp.ge.f32.partialorder %v11145, 0.0
      %vm11178 = vcmp.ge.f32.partialorder %v11146, 0.0
      %v11179 = vmul.f32 %v11115, 0.01
      %v11180 = vmul.f32 %v11116, 0.01
      %v11181 = vmul.f32 %v11117, 0.01
      %v11182 = vmul.f32 %v11118, 0.01
      %v11183 = vmul.f32 %v11119, 0.01
      %v11184 = vmul.f32 %v11120, 0.01
      %v11185 = vmul.f32 %v11121, 0.01
      %v11186 = vmul.f32 %v11122, 0.01
      %v11187 = vmul.f32 %v11123, 0.01
      %v11188 = vmul.f32 %v11124, 0.01
      %v11189 = vmul.f32 %v11125, 0.01
      %v11190 = vmul.f32 %v11126, 0.01
      %v11191 = vmul.f32 %v11127, 0.01
      %v11192 = vmul.f32 %v11128, 0.01
      %v11193 = vmul.f32 %v11129, 0.01
      %v11194 = vmul.f32 %v11130, 0.01
      %v11195 = vmul.f32 %v11131, 0.01
      %v11196 = vmul.f32 %v11132, 0.01
      %v11197 = vmul.f32 %v11133, 0.01
      %v11198 = vmul.f32 %v11134, 0.01
      %v11199 = vmul.f32 %v11135, 0.01
      %v11200 = vmul.f32 %v11136, 0.01
      %v11201 = vmul.f32 %v11137, 0.01
      %v11202 = vmul.f32 %v11138, 0.01
      %v11203 = vmul.f32 %v11139, 0.01
      %v11204 = vmul.f32 %v11140, 0.01
      %v11205 = vmul.f32 %v11141, 0.01
      %v11206 = vmul.f32 %v11142, 0.01
      %v11207 = vmul.f32 %v11143, 0.01
      %v11208 = vmul.f32 %v11144, 0.01
      %v11209 = vmul.f32 %v11145, 0.01
      %v11210 = vmul.f32 %v11146, 0.01
      %v11211 = vsel %vm11147, %v11115, %v11179
      %v11212 = vsel %vm11148, %v11116, %v11180
      %v11213 = vsel %vm11149, %v11117, %v11181
      %v11214 = vsel %vm11150, %v11118, %v11182
      %v11215 = vsel %vm11151, %v11119, %v11183
      %v11216 = vsel %vm11152, %v11120, %v11184
      %v11217 = vsel %vm11153, %v11121, %v11185
      %v11218 = vsel %vm11154, %v11122, %v11186
      %v11219 = vsel %vm11155, %v11123, %v11187
      %v11220 = vsel %vm11156, %v11124, %v11188
      %v11221 = vsel %vm11157, %v11125, %v11189
      %v11222 = vsel %vm11158, %v11126, %v11190
      %v11223 = vsel %vm11159, %v11127, %v11191
      %v11224 = vsel %vm11160, %v11128, %v11192
      %v11225 = vsel %vm11161, %v11129, %v11193
      %v11226 = vsel %vm11162, %v11130, %v11194
      %v11227 = vsel %vm11163, %v11131, %v11195
      %v11228 = vsel %vm11164, %v11132, %v11196
      %v11229 = vsel %vm11165, %v11133, %v11197
      %v11230 = vsel %vm11166, %v11134, %v11198
      %v11231 = vsel %vm11167, %v11135, %v11199
      %v11232 = vsel %vm11168, %v11136, %v11200
      %v11233 = vsel %vm11169, %v11137, %v11201
      %v11234 = vsel %vm11170, %v11138, %v11202
      %v11235 = vsel %vm11171, %v11139, %v11203
      %v11236 = vsel %vm11172, %v11140, %v11204
      %v11237 = vsel %vm11173, %v11141, %v11205
      %v11238 = vsel %vm11174, %v11142, %v11206
      %v11239 = vsel %vm11175, %v11143, %v11207
      %v11240 = vsel %vm11176, %v11144, %v11208
      %v11241 = vsel %vm11177, %v11145, %v11209
      %v11242 = vsel %vm11178, %v11146, %v11210
      %11243 = vst.msk [vmem:[%s305] sm:$0xff] %vm417, %v11211
      %11244 = vst.msk [vmem:[%s305 + $0x8] sm:$0xff] %vm417, %v11212
      %s11245 = scalar_lea.vmem %s305, 16
      %11246 = vst.msk [vmem:[%s11245] sm:$0xff] %vm417, %v11213
      %11247 = vst.msk [vmem:[%s11245 + $0x8] sm:$0xff] %vm417, %v11214
      %s11248 = scalar_lea.vmem %s305, 32
      %11249 = vst.msk [vmem:[%s11248] sm:$0xff] %vm417, %v11215
      %11250 = vst.msk [vmem:[%s11248 + $0x8] sm:$0xff] %vm417, %v11216
      %s11251 = scalar_lea.vmem %s305, 48
      %11252 = vst.msk [vmem:[%s11251] sm:$0xff] %vm417, %v11217
      %11253 = vst.msk [vmem:[%s11251 + $0x8] sm:$0xff] %vm417, %v11218
      %s11254 = scalar_lea.vmem %s305, 64
      %11255 = vst.msk [vmem:[%s11254] sm:$0xff] %vm417, %v11219
      %11256 = vst.msk [vmem:[%s11254 + $0x8] sm:$0xff] %vm417, %v11220
      %s11257 = scalar_lea.vmem %s305, 80
      %11258 = vst.msk [vmem:[%s11257] sm:$0xff] %vm417, %v11221
      %11259 = vst.msk [vmem:[%s11257 + $0x8] sm:$0xff] %vm417, %v11222
      %s11260 = scalar_lea.vmem %s305, 96
      %11261 = vst.msk [vmem:[%s11260] sm:$0xff] %vm417, %v11223
      %11262 = vst.msk [vmem:[%s11260 + $0x8] sm:$0xff] %vm417, %v11224
      %s11263 = scalar_lea.vmem %s305, 112
      %11264 = vst.msk [vmem:[%s11263] sm:$0xff] %vm417, %v11225
      %11265 = vst.msk [vmem:[%s11263 + $0x8] sm:$0xff] %vm417, %v11226
      %s11266 = scalar_lea.vmem %s305, 128
      %11267 = vst.msk [vmem:[%s11266] sm:$0xff] %vm417, %v11227
      %11268 = vst.msk [vmem:[%s11266 + $0x8] sm:$0xff] %vm417, %v11228
      %s11269 = scalar_lea.vmem %s305, 144
      %11270 = vst.msk [vmem:[%s11269] sm:$0xff] %vm417, %v11229
      %11271 = vst.msk [vmem:[%s11269 + $0x8] sm:$0xff] %vm417, %v11230
      %s11272 = scalar_lea.vmem %s305, 160
      %11273 = vst.msk [vmem:[%s11272] sm:$0xff] %vm417, %v11231
      %11274 = vst.msk [vmem:[%s11272 + $0x8] sm:$0xff] %vm417, %v11232
      %s11275 = scalar_lea.vmem %s305, 176
      %11276 = vst.msk [vmem:[%s11275] sm:$0xff] %vm417, %v11233
      %11277 = vst.msk [vmem:[%s11275 + $0x8] sm:$0xff] %vm417, %v11234
      %s11278 = scalar_lea.vmem %s305, 192
      %11279 = vst.msk [vmem:[%s11278] sm:$0xff] %vm417, %v11235
      %11280 = vst.msk [vmem:[%s11278 + $0x8] sm:$0xff] %vm417, %v11236
      %s11281 = scalar_lea.vmem %s305, 208
      %11282 = vst.msk [vmem:[%s11281] sm:$0xff] %vm417, %v11237
      %11283 = vst.msk [vmem:[%s11281 + $0x8] sm:$0xff] %vm417, %v11238
      %s11284 = scalar_lea.vmem %s305, 224
      %11285 = vst.msk [vmem:[%s11284] sm:$0xff] %vm417, %v11239
      %11286 = vst.msk [vmem:[%s11284 + $0x8] sm:$0xff] %vm417, %v11240
      %s11287 = scalar_lea.vmem %s305, 240
      %11288 = vst.msk [vmem:[%s11287] sm:$0xff] %vm417, %v11241
      %11289 = vst.msk [vmem:[%s11287 + $0x8] sm:$0xff] %vm417, %v11242
      %p11290 = scmp.lt.s32.totalorder %s19, 1
      %s11291 = scalar_select %p11290, %s19, 1
      %s11292 = smul.addr %s11291, 32
      %s11293 = smul.addr %s11292, 8
      %s11294 = scalar_lea.vmem %s8, %s11293
      // Predicated region
      $region53: #{tpu_custom_call.1} parent=51 // pred_check
        %p11295 = pneg %p210
      $region54: #{tpu_custom_call.1} parent=51 // pred_check_branch
        %11297 = sbr.rel (%p11295) target = $region56
      $region55: #{tpu_custom_call.1} parent=51 // pred_region
        _
      $region56: #{tpu_custom_call.1} parent=51 // pred_fallthru
        _
    $region52: #{tpu_custom_call.1} parent=5 // pred_fallthru
      _
    %p11298 = scmp.le.s32.totalorder 2, %s14
    // Predicated region
    $region57: #{tpu_custom_call.1} parent=5 // pred_check
      %p11299 = pneg %p11298
    $region58: #{tpu_custom_call.1} parent=5 // pred_check_branch
      %11301 = sbr.rel (%p11299) target = $region60
    $region59: #{tpu_custom_call.1} parent=5 // pred_region
      %s11302 = ssub.s32 %s14, 2
      // Predicated region
      $region61: #{tpu_custom_call.1} parent=59 // pred_check
        %p11303 = pneg %p216
      $region62: #{tpu_custom_call.1} parent=59 // pred_check_branch
        %11305 = sbr.rel (%p11303) target = $region64
      $region63: #{tpu_custom_call.1} parent=59 // pred_region
        %p11306 = scmp.lt.s32.totalorder %s20, 1
        %s11307 = scalar_select %p11306, %s20, 1
        %s11308 = smul.addr %s11307, 32
        %s11309 = smul.addr %s11308, 8
        %s11310 = scalar_lea.vmem %s8, %s11309
      $region64: #{tpu_custom_call.1} parent=59 // pred_fallthru
        _
    $region60: #{tpu_custom_call.1} parent=5 // pred_fallthru
      _
  $region6: #{tpu_custom_call.1} parent=0 // loop_footer
    %s18 = sadd.s32 1, %s14
  $region7: #{tpu_custom_call.1} parent=0 // loop_footer_branch
    %13 = sbr.rel target = $region3
  $region8: #{tpu_custom_call.1} parent=0 // loop_exit
    _

</llo_original>
